<compile_context>
chip_gen: v7x
topology: tpu7x:2x2x1
jax: 0.10.0
libtpu: 0.0.40
codegen_flags: <defaults>
</compile_context>

<pallas_src>
import jax
import jax.numpy as jnp
from jax import lax
from jax.experimental import pallas as pl
from jax.experimental.pallas import tpu as pltpu


def _gru_gates(xg, hg, h, H):
    """PyTorch GRU cell gate math; gate order along the 3H axis is (r, z, n)."""
    r = jax.nn.sigmoid(xg[:, 0:H] + hg[:, 0:H])
    z = jax.nn.sigmoid(xg[:, H:2 * H] + hg[:, H:2 * H])
    n = jnp.tanh(xg[:, 2 * H:3 * H] + r * hg[:, 2 * H:3 * H])
    return (1.0 - z) * n + z * h


def audio_bilstm_forward(x, p):
    """x: [B, T, E] float32 (batch_first, like the PyTorch module). Returns [B, C] probs."""
    B, T, E = x.shape
    H = p['whh0'].shape[0]
    C = p['wfc2'].shape[1]
    BP = max(8, ((B + 7) // 8) * 8)        # batch padded to a sublane multiple
    TBP = T * BP
    f32, bf16 = jnp.float32, jnp.bfloat16

    # ---------- operand packing (7 operands instead of 15 => fewer DMA issues) ----------
    # time-major, batch padded to BP, flattened to (T*BP, E); timestep t = rows [t*BP, (t+1)*BP).
    x_tm = jnp.transpose(x, (1, 0, 2)).astype(f32)                                 # (T, B, E)
    x_flat = jnp.zeros((T, BP, E), f32).at[:, :B, :].set(x_tm).reshape(TBP, E)
    ln = jnp.concatenate([p['ln_g'], p['ln_b']], axis=0)                           # (2, E)   f32
    w0 = jnp.concatenate([p['wih0'], p['whh0']], axis=0).astype(bf16)              # (E+H,3H) bf16
    w1 = jnp.concatenate([p['wih1'], p['whh1']], axis=0).astype(bf16)              # (2H, 3H) bf16
    bg = jnp.concatenate([p['bih0'], p['bhh0'], p['bih1'], p['bhh1']], axis=0)     # (4, 3H)  f32
    wfc2_pad = jnp.zeros((H, H), f32).at[:, :C].set(p['wfc2'])
    wfc = jnp.concatenate([p['wfc1'], wfc2_pad], axis=0).astype(bf16)              # (2H, H)  bf16
    bfc = jnp.zeros((2, H), f32).at[0, :].set(p['bfc1'][0]).at[1, :C].set(p['bfc2'][0])

    def kernel(x_ref, ln_ref, w0_ref, w1_ref, bg_ref, wfc_ref, bfc_ref,
               out_ref, h0_ref):
        # ---- nn.LayerNorm(E), eps=1e-5, affine — single pass (var = E[x^2] - mu^2) ----
        xv = x_ref[...]                                                    # (TBP, E) f32
        mu = jnp.mean(xv, axis=-1, keepdims=True)
        var = jnp.mean(xv * xv, axis=-1, keepdims=True) - mu * mu
        xln = (xv - mu) * lax.rsqrt(var + 1e-5) * ln_ref[0:1, :] + ln_ref[1:2, :]

        # ---- GRU layer 0: batched input projection (one MXU call), then recurrence ----
        xg0 = jnp.dot(xln.astype(bf16), w0_ref[0:E, :],
                      preferred_element_type=f32) + bg_ref[0:1, :]         # (TBP, 3H)
        whh0 = w0_ref[E:E + H, :]                                          # resident bf16 (H,3H)
        bhh0 = bg_ref[1:2, :]

        h = jnp.zeros((BP, H), f32)
        for t in range(T):                                                 # static unroll
            hg = jnp.dot(h.astype(bf16), whh0, preferred_element_type=f32) + bhh0
            h = _gru_gates(xg0[t * BP:(t + 1) * BP, :], hg, h, H)
            h0_ref[t * BP:(t + 1) * BP, :] = h                             # sublane-aligned store

        # ---- GRU layer 1: batched input projection, recurrence fused with time-mean ----
        # TODO(synk): inter-layer GRU dropout (p=0.5) is train-only; eval semantics = identity.
        xg1 = jnp.dot(h0_ref[...].astype(bf16), w1_ref[0:H, :],
                      preferred_element_type=f32) + bg_ref[2:3, :]         # (TBP, 3H)
        whh1 = w1_ref[H:2 * H, :]
        bhh1 = bg_ref[3:4, :]

        h = jnp.zeros((BP, H), f32)
        acc = jnp.zeros((BP, H), f32)
        for t in range(T):                                                 # static unroll
            hg = jnp.dot(h.astype(bf16), whh1, preferred_element_type=f32) + bhh1
            h = _gru_gates(xg1[t * BP:(t + 1) * BP, :], hg, h, H)
            acc = acc + h
        hmean = acc * (1.0 / T)                                            # x.mean(dim=1)

        # ---- fc_audio: (Dropout) Linear -> ReLU -> (Dropout) Linear -> Softmax(dim=1) ----
        y = jnp.maximum(
            jnp.dot(hmean.astype(bf16), wfc_ref[0:H, :],
                    preferred_element_type=f32) + bfc_ref[0:1, :], 0.0)
        logits = jnp.dot(y.astype(bf16), wfc_ref[H:2 * H, 0:C],
                         preferred_element_type=f32) + bfc_ref[1:2, 0:C]
        m = jnp.max(logits, axis=-1, keepdims=True)
        e = jnp.exp(logits - m)
        out_ref[...] = e / jnp.sum(e, axis=-1, keepdims=True)

    out_pad = pl.pallas_call(
        kernel,
        out_shape=jax.ShapeDtypeStruct((BP, C), jnp.float32),
        scratch_shapes=[pltpu.VMEM((TBP, H), jnp.float32)],   # GRU layer-0 output sequence
    )(x_flat, ln, w0, w1, bg, wfc, bfc)
    return out_pad[:B, :]


def init_params(key, E, H, C):
    """Matches AudioBiLSTM.init_weight: xavier-uniform weights, zero biases, ln = (1, 0)."""
    ks = jax.random.split(key, 6)

    def xavier(k, shape):
        lim = (6.0 / (shape[0] + shape[1])) ** 0.5
        return jax.random.uniform(k, shape, jnp.float32, -lim, lim)

    return dict(
        ln_g=jnp.ones((1, E), jnp.float32),
        ln_b=jnp.zeros((1, E), jnp.float32),
        wih0=xavier(ks[0], (E, 3 * H)), whh0=xavier(ks[1], (H, 3 * H)),
        bih0=jnp.zeros((1, 3 * H), jnp.float32), bhh0=jnp.zeros((1, 3 * H), jnp.float32),
        wih1=xavier(ks[2], (H, 3 * H)), whh1=xavier(ks[3], (H, 3 * H)),
        bih1=jnp.zeros((1, 3 * H), jnp.float32), bhh1=jnp.zeros((1, 3 * H), jnp.float32),
        wfc1=xavier(ks[4], (H, H)), bfc1=jnp.zeros((1, H), jnp.float32),
        wfc2=xavier(ks[5], (H, C)), bfc2=jnp.zeros((1, C), jnp.float32),
    )


def reference_forward(x, p):
    """Pure-JAX reference of the same forward pass (eval mode, same bf16-operand /
    f32-accumulate matmul quantization as the kernel)."""
    B, T, E = x.shape
    H = p['whh0'].shape[0]
    f32, bf16 = jnp.float32, jnp.bfloat16

    def bdot(a, w):
        return jnp.dot(a.astype(bf16), w.astype(bf16), preferred_element_type=f32)

    mu = x.mean(-1, keepdims=True)
    var = ((x - mu) ** 2).mean(-1, keepdims=True)
    xln = (x - mu) / jnp.sqrt(var + 1e-5) * p['ln_g'][0] + p['ln_b'][0]

    def run_layer(seq, wih, whh, bih, bhh):
        def step(h, xt):
            xg = bdot(xt, wih) + bih[0]
            hg = bdot(h, whh) + bhh[0]
            h_new = _gru_gates(xg, hg, h, H)
            return h_new, h_new
        _, out = lax.scan(step, jnp.zeros((B, H), f32), jnp.transpose(seq, (1, 0, 2)))
        return jnp.transpose(out, (1, 0, 2))

    y0 = run_layer(xln, p['wih0'], p['whh0'], p['bih0'], p['bhh0'])
    y1 = run_layer(y0, p['wih1'], p['whh1'], p['bih1'], p['bhh1'])
    hmean = y1.mean(axis=1)
    h1 = jax.nn.relu(bdot(hmean, p['wfc1']) + p['bfc1'][0])
    logits = bdot(h1, p['wfc2']) + p['bfc2'][0]
    return jax.nn.softmax(logits, axis=1)


if __name__ == "__main__":
    B, T, E, H, C = 2, 8, 256, 256, 2   # batch, seq, embedding_size, hidden_dims, num_classes
    key = jax.random.PRNGKey(0)
    kx, kp = jax.random.split(key)
    x = jax.random.normal(kx, (B, T, E), jnp.float32)
    params = init_params(kp, E, H, C)

    out = jax.block_until_ready(audio_bilstm_forward(x, params))
    ref = jax.block_until_ready(reference_forward(x, params))

    assert out.shape == (B, C)
    assert bool(jnp.all(jnp.isfinite(out)))
    assert jnp.allclose(out, ref, atol=2e-3, rtol=2e-3), (out, ref)
    print("KERNEL_OK")
</pallas_src>

<mosaic_0001>
module attributes {stable_mosaic.version = 11 : i64} {
  func.func @kernel(%arg0: memref<64x256xf32, #tpu.memory_space<vmem>>, %arg1: memref<2x256xf32, #tpu.memory_space<vmem>>, %arg2: memref<512x768xbf16, #tpu.memory_space<vmem>>, %arg3: memref<512x768xbf16, #tpu.memory_space<vmem>>, %arg4: memref<4x768xf32, #tpu.memory_space<vmem>>, %arg5: memref<512x256xbf16, #tpu.memory_space<vmem>>, %arg6: memref<2x256xf32, #tpu.memory_space<vmem>>, %arg7: memref<8x2xf32, #tpu.memory_space<vmem>>, %arg8: memref<64x256xf32, #tpu.memory_space<vmem>>) attributes {dimension_semantics = [], scalar_prefetch = 0 : i64, scratch_operands = 1 : i64, tpu.core_type = #tpu.core_type<tc>} {
    %c0 = arith.constant 0 : index
    %c0_0 = arith.constant 0 : index
    %0 = vector.load %arg0[%c0, %c0_0] : memref<64x256xf32, #tpu.memory_space<vmem>>, vector<64x256xf32>
    %cst = arith.constant dense<0.000000e+00> : vector<64xf32>
    %1 = vector.multi_reduction <add>, %0, %cst [1] : vector<64x256xf32> to vector<64xf32>
    %2 = vector.shape_cast %1 : vector<64xf32> to vector<64x1xf32>
    %cst_1 = arith.constant 2.560000e+02 : f32
    %3 = vector.broadcast %cst_1 : f32 to vector<64x1xf32>
    %4 = arith.divf %2, %3 : vector<64x1xf32>
    %5 = arith.mulf %0, %0 : vector<64x256xf32>
    %cst_2 = arith.constant dense<0.000000e+00> : vector<64xf32>
    %6 = vector.multi_reduction <add>, %5, %cst_2 [1] : vector<64x256xf32> to vector<64xf32>
    %7 = vector.shape_cast %6 : vector<64xf32> to vector<64x1xf32>
    %cst_3 = arith.constant 2.560000e+02 : f32
    %8 = vector.broadcast %cst_3 : f32 to vector<64x1xf32>
    %9 = arith.divf %7, %8 : vector<64x1xf32>
    %10 = arith.mulf %4, %4 : vector<64x1xf32>
    %11 = arith.subf %9, %10 : vector<64x1xf32>
    %12 = vector.broadcast %4 : vector<64x1xf32> to vector<64x256xf32>
    %13 = arith.subf %0, %12 : vector<64x256xf32>
    %cst_4 = arith.constant 9.99999974E-6 : f32
    %14 = vector.broadcast %cst_4 : f32 to vector<64x1xf32>
    %15 = arith.addf %11, %14 : vector<64x1xf32>
    %16 = math.rsqrt %15 : vector<64x1xf32>
    %17 = vector.broadcast %16 : vector<64x1xf32> to vector<64x256xf32>
    %18 = arith.mulf %13, %17 : vector<64x256xf32>
    %c0_5 = arith.constant 0 : index
    %c0_6 = arith.constant 0 : index
    %19 = vector.load %arg1[%c0_5, %c0_6] : memref<2x256xf32, #tpu.memory_space<vmem>>, vector<1x256xf32>
    %20 = vector.broadcast %19 : vector<1x256xf32> to vector<64x256xf32>
    %21 = arith.mulf %18, %20 : vector<64x256xf32>
    %c1 = arith.constant 1 : index
    %c0_7 = arith.constant 0 : index
    %22 = vector.load %arg1[%c1, %c0_7] : memref<2x256xf32, #tpu.memory_space<vmem>>, vector<1x256xf32>
    %23 = vector.broadcast %22 : vector<1x256xf32> to vector<64x256xf32>
    %24 = arith.addf %21, %23 : vector<64x256xf32>
    %25 = arith.truncf %24 : vector<64x256xf32> to vector<64x256xbf16>
    %c0_8 = arith.constant 0 : index
    %c0_9 = arith.constant 0 : index
    %26 = vector.load %arg2[%c0_8, %c0_9] : memref<512x768xbf16, #tpu.memory_space<vmem>>, vector<256x768xbf16>
    %cst_10 = arith.constant dense<0.000000e+00> : vector<64x768xf32>
    %27 = tpu.matmul %25, %26, %cst_10 {dimension_numbers = #tpu.dot_dimension_numbers<[1], [0], [0], [1], [0, 0, 1, 1], [], []>} : vector<64x256xbf16>, vector<256x768xbf16>, vector<64x768xf32> -> vector<64x768xf32>
    %c0_11 = arith.constant 0 : index
    %c0_12 = arith.constant 0 : index
    %28 = vector.load %arg4[%c0_11, %c0_12] : memref<4x768xf32, #tpu.memory_space<vmem>>, vector<1x768xf32>
    %29 = vector.broadcast %28 : vector<1x768xf32> to vector<64x768xf32>
    %30 = arith.addf %27, %29 : vector<64x768xf32>
    %c256 = arith.constant 256 : index
    %c0_13 = arith.constant 0 : index
    %31 = vector.load %arg2[%c256, %c0_13] : memref<512x768xbf16, #tpu.memory_space<vmem>>, vector<256x768xbf16>
    %c1_14 = arith.constant 1 : index
    %c0_15 = arith.constant 0 : index
    %32 = vector.load %arg4[%c1_14, %c0_15] : memref<4x768xf32, #tpu.memory_space<vmem>>, vector<1x768xf32>
    %cst_16 = arith.constant 0.000000e+00 : f32
    %33 = vector.broadcast %cst_16 : f32 to vector<8x256xf32>
    %34 = arith.truncf %33 : vector<8x256xf32> to vector<8x256xbf16>
    %cst_17 = arith.constant dense<0.000000e+00> : vector<8x768xf32>
    %35 = tpu.matmul %34, %31, %cst_17 {dimension_numbers = #tpu.dot_dimension_numbers<[1], [0], [0], [1], [0, 0, 1, 1], [], []>} : vector<8x256xbf16>, vector<256x768xbf16>, vector<8x768xf32> -> vector<8x768xf32>
    %36 = vector.broadcast %32 : vector<1x768xf32> to vector<8x768xf32>
    %37 = arith.addf %35, %36 : vector<8x768xf32>
    %38 = vector.extract_strided_slice %30 {offsets = [0, 0], sizes = [8, 768], strides = [1, 1]} : vector<64x768xf32> to vector<8x768xf32>
    %39 = vector.extract_strided_slice %38 {offsets = [0, 0], sizes = [8, 256], strides = [1, 1]} : vector<8x768xf32> to vector<8x256xf32>
    %40 = vector.extract_strided_slice %37 {offsets = [0, 0], sizes = [8, 256], strides = [1, 1]} : vector<8x768xf32> to vector<8x256xf32>
    %41 = arith.addf %39, %40 : vector<8x256xf32>
    %42 = arith.negf %41 : vector<8x256xf32>
    %43 = math.exp %42 : vector<8x256xf32>
    %cst_18 = arith.constant 1.000000e+00 : f32
    %44 = vector.broadcast %cst_18 : f32 to vector<8x256xf32>
    %45 = arith.addf %44, %43 : vector<8x256xf32>
    %46 = arith.divf %44, %45 : vector<8x256xf32>
    %47 = vector.extract_strided_slice %38 {offsets = [0, 256], sizes = [8, 256], strides = [1, 1]} : vector<8x768xf32> to vector<8x256xf32>
    %48 = vector.extract_strided_slice %37 {offsets = [0, 256], sizes = [8, 256], strides = [1, 1]} : vector<8x768xf32> to vector<8x256xf32>
    %49 = arith.addf %47, %48 : vector<8x256xf32>
    %50 = arith.negf %49 : vector<8x256xf32>
    %51 = math.exp %50 : vector<8x256xf32>
    %cst_19 = arith.constant 1.000000e+00 : f32
    %52 = vector.broadcast %cst_19 : f32 to vector<8x256xf32>
    %53 = arith.addf %52, %51 : vector<8x256xf32>
    %54 = arith.divf %52, %53 : vector<8x256xf32>
    %55 = vector.extract_strided_slice %38 {offsets = [0, 512], sizes = [8, 256], strides = [1, 1]} : vector<8x768xf32> to vector<8x256xf32>
    %56 = vector.extract_strided_slice %37 {offsets = [0, 512], sizes = [8, 256], strides = [1, 1]} : vector<8x768xf32> to vector<8x256xf32>
    %57 = arith.mulf %46, %56 : vector<8x256xf32>
    %58 = arith.addf %55, %57 : vector<8x256xf32>
    %59 = math.tanh %58 : vector<8x256xf32>
    %cst_20 = arith.constant 1.000000e+00 : f32
    %60 = vector.broadcast %cst_20 : f32 to vector<8x256xf32>
    %61 = arith.subf %60, %54 : vector<8x256xf32>
    %62 = arith.mulf %61, %59 : vector<8x256xf32>
    %63 = arith.mulf %54, %33 : vector<8x256xf32>
    %64 = arith.addf %62, %63 : vector<8x256xf32>
    %c0_21 = arith.constant 0 : index
    %c0_22 = arith.constant 0 : index
    %65 = vector.load %arg8[%c0_21, %c0_22] : memref<64x256xf32, #tpu.memory_space<vmem>>, vector<8x256xf32>
    tpu.vector_store %arg8[%c0_21, %c0_22], %64 {strides = array<i32>} : memref<64x256xf32, #tpu.memory_space<vmem>>, vector<8x256xf32>,
    %66 = arith.truncf %64 : vector<8x256xf32> to vector<8x256xbf16>
    %cst_23 = arith.constant dense<0.000000e+00> : vector<8x768xf32>
    %67 = tpu.matmul %66, %31, %cst_23 {dimension_numbers = #tpu.dot_dimension_numbers<[1], [0], [0], [1], [0, 0, 1, 1], [], []>} : vector<8x256xbf16>, vector<256x768xbf16>, vector<8x768xf32> -> vector<8x768xf32>
    %68 = vector.broadcast %32 : vector<1x768xf32> to vector<8x768xf32>
    %69 = arith.addf %67, %68 : vector<8x768xf32>
    %70 = vector.extract_strided_slice %30 {offsets = [8, 0], sizes = [8, 768], strides = [1, 1]} : vector<64x768xf32> to vector<8x768xf32>
    %71 = vector.extract_strided_slice %70 {offsets = [0, 0], sizes = [8, 256], strides = [1, 1]} : vector<8x768xf32> to vector<8x256xf32>
    %72 = vector.extract_strided_slice %69 {offsets = [0, 0], sizes = [8, 256], strides = [1, 1]} : vector<8x768xf32> to vector<8x256xf32>
    %73 = arith.addf %71, %72 : vector<8x256xf32>
    %74 = arith.negf %73 : vector<8x256xf32>
    %75 = math.exp %74 : vector<8x256xf32>
    %cst_24 = arith.constant 1.000000e+00 : f32
    %76 = vector.broadcast %cst_24 : f32 to vector<8x256xf32>
    %77 = arith.addf %76, %75 : vector<8x256xf32>
    %78 = arith.divf %76, %77 : vector<8x256xf32>
    %79 = vector.extract_strided_slice %70 {offsets = [0, 256], sizes = [8, 256], strides = [1, 1]} : vector<8x768xf32> to vector<8x256xf32>
    %80 = vector.extract_strided_slice %69 {offsets = [0, 256], sizes = [8, 256], strides = [1, 1]} : vector<8x768xf32> to vector<8x256xf32>
    %81 = arith.addf %79, %80 : vector<8x256xf32>
    %82 = arith.negf %81 : vector<8x256xf32>
    %83 = math.exp %82 : vector<8x256xf32>
    %cst_25 = arith.constant 1.000000e+00 : f32
    %84 = vector.broadcast %cst_25 : f32 to vector<8x256xf32>
    %85 = arith.addf %84, %83 : vector<8x256xf32>
    %86 = arith.divf %84, %85 : vector<8x256xf32>
    %87 = vector.extract_strided_slice %70 {offsets = [0, 512], sizes = [8, 256], strides = [1, 1]} : vector<8x768xf32> to vector<8x256xf32>
    %88 = vector.extract_strided_slice %69 {offsets = [0, 512], sizes = [8, 256], strides = [1, 1]} : vector<8x768xf32> to vector<8x256xf32>
    %89 = arith.mulf %78, %88 : vector<8x256xf32>
    %90 = arith.addf %87, %89 : vector<8x256xf32>
    %91 = math.tanh %90 : vector<8x256xf32>
    %cst_26 = arith.constant 1.000000e+00 : f32
    %92 = vector.broadcast %cst_26 : f32 to vector<8x256xf32>
    %93 = arith.subf %92, %86 : vector<8x256xf32>
    %94 = arith.mulf %93, %91 : vector<8x256xf32>
    %95 = arith.mulf %86, %64 : vector<8x256xf32>
    %96 = arith.addf %94, %95 : vector<8x256xf32>
    %c8 = arith.constant 8 : index
    %c0_27 = arith.constant 0 : index
    %97 = vector.load %arg8[%c8, %c0_27] : memref<64x256xf32, #tpu.memory_space<vmem>>, vector<8x256xf32>
    tpu.vector_store %arg8[%c8, %c0_27], %96 {strides = array<i32>} : memref<64x256xf32, #tpu.memory_space<vmem>>, vector<8x256xf32>,
    %98 = arith.truncf %96 : vector<8x256xf32> to vector<8x256xbf16>
    %cst_28 = arith.constant dense<0.000000e+00> : vector<8x768xf32>
    %99 = tpu.matmul %98, %31, %cst_28 {dimension_numbers = #tpu.dot_dimension_numbers<[1], [0], [0], [1], [0, 0, 1, 1], [], []>} : vector<8x256xbf16>, vector<256x768xbf16>, vector<8x768xf32> -> vector<8x768xf32>
    %100 = vector.broadcast %32 : vector<1x768xf32> to vector<8x768xf32>
    %101 = arith.addf %99, %100 : vector<8x768xf32>
    %102 = vector.extract_strided_slice %30 {offsets = [16, 0], sizes = [8, 768], strides = [1, 1]} : vector<64x768xf32> to vector<8x768xf32>
    %103 = vector.extract_strided_slice %102 {offsets = [0, 0], sizes = [8, 256], strides = [1, 1]} : vector<8x768xf32> to vector<8x256xf32>
    %104 = vector.extract_strided_slice %101 {offsets = [0, 0], sizes = [8, 256], strides = [1, 1]} : vector<8x768xf32> to vector<8x256xf32>
    %105 = arith.addf %103, %104 : vector<8x256xf32>
    %106 = arith.negf %105 : vector<8x256xf32>
    %107 = math.exp %106 : vector<8x256xf32>
    %cst_29 = arith.constant 1.000000e+00 : f32
    %108 = vector.broadcast %cst_29 : f32 to vector<8x256xf32>
    %109 = arith.addf %108, %107 : vector<8x256xf32>
    %110 = arith.divf %108, %109 : vector<8x256xf32>
    %111 = vector.extract_strided_slice %102 {offsets = [0, 256], sizes = [8, 256], strides = [1, 1]} : vector<8x768xf32> to vector<8x256xf32>
    %112 = vector.extract_strided_slice %101 {offsets = [0, 256], sizes = [8, 256], strides = [1, 1]} : vector<8x768xf32> to vector<8x256xf32>
    %113 = arith.addf %111, %112 : vector<8x256xf32>
    %114 = arith.negf %113 : vector<8x256xf32>
    %115 = math.exp %114 : vector<8x256xf32>
    %cst_30 = arith.constant 1.000000e+00 : f32
    %116 = vector.broadcast %cst_30 : f32 to vector<8x256xf32>
    %117 = arith.addf %116, %115 : vector<8x256xf32>
    %118 = arith.divf %116, %117 : vector<8x256xf32>
    %119 = vector.extract_strided_slice %102 {offsets = [0, 512], sizes = [8, 256], strides = [1, 1]} : vector<8x768xf32> to vector<8x256xf32>
    %120 = vector.extract_strided_slice %101 {offsets = [0, 512], sizes = [8, 256], strides = [1, 1]} : vector<8x768xf32> to vector<8x256xf32>
    %121 = arith.mulf %110, %120 : vector<8x256xf32>
    %122 = arith.addf %119, %121 : vector<8x256xf32>
    %123 = math.tanh %122 : vector<8x256xf32>
    %cst_31 = arith.constant 1.000000e+00 : f32
    %124 = vector.broadcast %cst_31 : f32 to vector<8x256xf32>
    %125 = arith.subf %124, %118 : vector<8x256xf32>
    %126 = arith.mulf %125, %123 : vector<8x256xf32>
    %127 = arith.mulf %118, %96 : vector<8x256xf32>
    %128 = arith.addf %126, %127 : vector<8x256xf32>
    %c16 = arith.constant 16 : index
    %c0_32 = arith.constant 0 : index
    %129 = vector.load %arg8[%c16, %c0_32] : memref<64x256xf32, #tpu.memory_space<vmem>>, vector<8x256xf32>
    tpu.vector_store %arg8[%c16, %c0_32], %128 {strides = array<i32>} : memref<64x256xf32, #tpu.memory_space<vmem>>, vector<8x256xf32>,
    %130 = arith.truncf %128 : vector<8x256xf32> to vector<8x256xbf16>
    %cst_33 = arith.constant dense<0.000000e+00> : vector<8x768xf32>
    %131 = tpu.matmul %130, %31, %cst_33 {dimension_numbers = #tpu.dot_dimension_numbers<[1], [0], [0], [1], [0, 0, 1, 1], [], []>} : vector<8x256xbf16>, vector<256x768xbf16>, vector<8x768xf32> -> vector<8x768xf32>
    %132 = vector.broadcast %32 : vector<1x768xf32> to vector<8x768xf32>
    %133 = arith.addf %131, %132 : vector<8x768xf32>
    %134 = vector.extract_strided_slice %30 {offsets = [24, 0], sizes = [8, 768], strides = [1, 1]} : vector<64x768xf32> to vector<8x768xf32>
    %135 = vector.extract_strided_slice %134 {offsets = [0, 0], sizes = [8, 256], strides = [1, 1]} : vector<8x768xf32> to vector<8x256xf32>
    %136 = vector.extract_strided_slice %133 {offsets = [0, 0], sizes = [8, 256], strides = [1, 1]} : vector<8x768xf32> to vector<8x256xf32>
    %137 = arith.addf %135, %136 : vector<8x256xf32>
    %138 = arith.negf %137 : vector<8x256xf32>
    %139 = math.exp %138 : vector<8x256xf32>
    %cst_34 = arith.constant 1.000000e+00 : f32
    %140 = vector.broadcast %cst_34 : f32 to vector<8x256xf32>
    %141 = arith.addf %140, %139 : vector<8x256xf32>
    %142 = arith.divf %140, %141 : vector<8x256xf32>
    %143 = vector.extract_strided_slice %134 {offsets = [0, 256], sizes = [8, 256], strides = [1, 1]} : vector<8x768xf32> to vector<8x256xf32>
    %144 = vector.extract_strided_slice %133 {offsets = [0, 256], sizes = [8, 256], strides = [1, 1]} : vector<8x768xf32> to vector<8x256xf32>
    %145 = arith.addf %143, %144 : vector<8x256xf32>
    %146 = arith.negf %145 : vector<8x256xf32>
    %147 = math.exp %146 : vector<8x256xf32>
    %cst_35 = arith.constant 1.000000e+00 : f32
    %148 = vector.broadcast %cst_35 : f32 to vector<8x256xf32>
    %149 = arith.addf %148, %147 : vector<8x256xf32>
    %150 = arith.divf %148, %149 : vector<8x256xf32>
    %151 = vector.extract_strided_slice %134 {offsets = [0, 512], sizes = [8, 256], strides = [1, 1]} : vector<8x768xf32> to vector<8x256xf32>
    %152 = vector.extract_strided_slice %133 {offsets = [0, 512], sizes = [8, 256], strides = [1, 1]} : vector<8x768xf32> to vector<8x256xf32>
    %153 = arith.mulf %142, %152 : vector<8x256xf32>
    %154 = arith.addf %151, %153 : vector<8x256xf32>
    %155 = math.tanh %154 : vector<8x256xf32>
    %cst_36 = arith.constant 1.000000e+00 : f32
    %156 = vector.broadcast %cst_36 : f32 to vector<8x256xf32>
    %157 = arith.subf %156, %150 : vector<8x256xf32>
    %158 = arith.mulf %157, %155 : vector<8x256xf32>
    %159 = arith.mulf %150, %128 : vector<8x256xf32>
    %160 = arith.addf %158, %159 : vector<8x256xf32>
    %c24 = arith.constant 24 : index
    %c0_37 = arith.constant 0 : index
    %161 = vector.load %arg8[%c24, %c0_37] : memref<64x256xf32, #tpu.memory_space<vmem>>, vector<8x256xf32>
    tpu.vector_store %arg8[%c24, %c0_37], %160 {strides = array<i32>} : memref<64x256xf32, #tpu.memory_space<vmem>>, vector<8x256xf32>,
    %162 = arith.truncf %160 : vector<8x256xf32> to vector<8x256xbf16>
    %cst_38 = arith.constant dense<0.000000e+00> : vector<8x768xf32>
    %163 = tpu.matmul %162, %31, %cst_38 {dimension_numbers = #tpu.dot_dimension_numbers<[1], [0], [0], [1], [0, 0, 1, 1], [], []>} : vector<8x256xbf16>, vector<256x768xbf16>, vector<8x768xf32> -> vector<8x768xf32>
    %164 = vector.broadcast %32 : vector<1x768xf32> to vector<8x768xf32>
    %165 = arith.addf %163, %164 : vector<8x768xf32>
    %166 = vector.extract_strided_slice %30 {offsets = [32, 0], sizes = [8, 768], strides = [1, 1]} : vector<64x768xf32> to vector<8x768xf32>
    %167 = vector.extract_strided_slice %166 {offsets = [0, 0], sizes = [8, 256], strides = [1, 1]} : vector<8x768xf32> to vector<8x256xf32>
    %168 = vector.extract_strided_slice %165 {offsets = [0, 0], sizes = [8, 256], strides = [1, 1]} : vector<8x768xf32> to vector<8x256xf32>
    %169 = arith.addf %167, %168 : vector<8x256xf32>
    %170 = arith.negf %169 : vector<8x256xf32>
    %171 = math.exp %170 : vector<8x256xf32>
    %cst_39 = arith.constant 1.000000e+00 : f32
    %172 = vector.broadcast %cst_39 : f32 to vector<8x256xf32>
    %173 = arith.addf %172, %171 : vector<8x256xf32>
    %174 = arith.divf %172, %173 : vector<8x256xf32>
    %175 = vector.extract_strided_slice %166 {offsets = [0, 256], sizes = [8, 256], strides = [1, 1]} : vector<8x768xf32> to vector<8x256xf32>
    %176 = vector.extract_strided_slice %165 {offsets = [0, 256], sizes = [8, 256], strides = [1, 1]} : vector<8x768xf32> to vector<8x256xf32>
    %177 = arith.addf %175, %176 : vector<8x256xf32>
    %178 = arith.negf %177 : vector<8x256xf32>
    %179 = math.exp %178 : vector<8x256xf32>
    %cst_40 = arith.constant 1.000000e+00 : f32
    %180 = vector.broadcast %cst_40 : f32 to vector<8x256xf32>
    %181 = arith.addf %180, %179 : vector<8x256xf32>
    %182 = arith.divf %180, %181 : vector<8x256xf32>
    %183 = vector.extract_strided_slice %166 {offsets = [0, 512], sizes = [8, 256], strides = [1, 1]} : vector<8x768xf32> to vector<8x256xf32>
    %184 = vector.extract_strided_slice %165 {offsets = [0, 512], sizes = [8, 256], strides = [1, 1]} : vector<8x768xf32> to vector<8x256xf32>
    %185 = arith.mulf %174, %184 : vector<8x256xf32>
    %186 = arith.addf %183, %185 : vector<8x256xf32>
    %187 = math.tanh %186 : vector<8x256xf32>
    %cst_41 = arith.constant 1.000000e+00 : f32
    %188 = vector.broadcast %cst_41 : f32 to vector<8x256xf32>
    %189 = arith.subf %188, %182 : vector<8x256xf32>
    %190 = arith.mulf %189, %187 : vector<8x256xf32>
    %191 = arith.mulf %182, %160 : vector<8x256xf32>
    %192 = arith.addf %190, %191 : vector<8x256xf32>
    %c32 = arith.constant 32 : index
    %c0_42 = arith.constant 0 : index
    %193 = vector.load %arg8[%c32, %c0_42] : memref<64x256xf32, #tpu.memory_space<vmem>>, vector<8x256xf32>
    tpu.vector_store %arg8[%c32, %c0_42], %192 {strides = array<i32>} : memref<64x256xf32, #tpu.memory_space<vmem>>, vector<8x256xf32>,
    %194 = arith.truncf %192 : vector<8x256xf32> to vector<8x256xbf16>
    %cst_43 = arith.constant dense<0.000000e+00> : vector<8x768xf32>
    %195 = tpu.matmul %194, %31, %cst_43 {dimension_numbers = #tpu.dot_dimension_numbers<[1], [0], [0], [1], [0, 0, 1, 1], [], []>} : vector<8x256xbf16>, vector<256x768xbf16>, vector<8x768xf32> -> vector<8x768xf32>
    %196 = vector.broadcast %32 : vector<1x768xf32> to vector<8x768xf32>
    %197 = arith.addf %195, %196 : vector<8x768xf32>
    %198 = vector.extract_strided_slice %30 {offsets = [40, 0], sizes = [8, 768], strides = [1, 1]} : vector<64x768xf32> to vector<8x768xf32>
    %199 = vector.extract_strided_slice %198 {offsets = [0, 0], sizes = [8, 256], strides = [1, 1]} : vector<8x768xf32> to vector<8x256xf32>
    %200 = vector.extract_strided_slice %197 {offsets = [0, 0], sizes = [8, 256], strides = [1, 1]} : vector<8x768xf32> to vector<8x256xf32>
    %201 = arith.addf %199, %200 : vector<8x256xf32>
    %202 = arith.negf %201 : vector<8x256xf32>
    %203 = math.exp %202 : vector<8x256xf32>
    %cst_44 = arith.constant 1.000000e+00 : f32
    %204 = vector.broadcast %cst_44 : f32 to vector<8x256xf32>
    %205 = arith.addf %204, %203 : vector<8x256xf32>
    %206 = arith.divf %204, %205 : vector<8x256xf32>
    %207 = vector.extract_strided_slice %198 {offsets = [0, 256], sizes = [8, 256], strides = [1, 1]} : vector<8x768xf32> to vector<8x256xf32>
    %208 = vector.extract_strided_slice %197 {offsets = [0, 256], sizes = [8, 256], strides = [1, 1]} : vector<8x768xf32> to vector<8x256xf32>
    %209 = arith.addf %207, %208 : vector<8x256xf32>
    %210 = arith.negf %209 : vector<8x256xf32>
    %211 = math.exp %210 : vector<8x256xf32>
    %cst_45 = arith.constant 1.000000e+00 : f32
    %212 = vector.broadcast %cst_45 : f32 to vector<8x256xf32>
    %213 = arith.addf %212, %211 : vector<8x256xf32>
    %214 = arith.divf %212, %213 : vector<8x256xf32>
    %215 = vector.extract_strided_slice %198 {offsets = [0, 512], sizes = [8, 256], strides = [1, 1]} : vector<8x768xf32> to vector<8x256xf32>
    %216 = vector.extract_strided_slice %197 {offsets = [0, 512], sizes = [8, 256], strides = [1, 1]} : vector<8x768xf32> to vector<8x256xf32>
    %217 = arith.mulf %206, %216 : vector<8x256xf32>
    %218 = arith.addf %215, %217 : vector<8x256xf32>
    %219 = math.tanh %218 : vector<8x256xf32>
    %cst_46 = arith.constant 1.000000e+00 : f32
    %220 = vector.broadcast %cst_46 : f32 to vector<8x256xf32>
    %221 = arith.subf %220, %214 : vector<8x256xf32>
    %222 = arith.mulf %221, %219 : vector<8x256xf32>
    %223 = arith.mulf %214, %192 : vector<8x256xf32>
    %224 = arith.addf %222, %223 : vector<8x256xf32>
    %c40 = arith.constant 40 : index
    %c0_47 = arith.constant 0 : index
    %225 = vector.load %arg8[%c40, %c0_47] : memref<64x256xf32, #tpu.memory_space<vmem>>, vector<8x256xf32>
    tpu.vector_store %arg8[%c40, %c0_47], %224 {strides = array<i32>} : memref<64x256xf32, #tpu.memory_space<vmem>>, vector<8x256xf32>,
    %226 = arith.truncf %224 : vector<8x256xf32> to vector<8x256xbf16>
    %cst_48 = arith.constant dense<0.000000e+00> : vector<8x768xf32>
    %227 = tpu.matmul %226, %31, %cst_48 {dimension_numbers = #tpu.dot_dimension_numbers<[1], [0], [0], [1], [0, 0, 1, 1], [], []>} : vector<8x256xbf16>, vector<256x768xbf16>, vector<8x768xf32> -> vector<8x768xf32>
    %228 = vector.broadcast %32 : vector<1x768xf32> to vector<8x768xf32>
    %229 = arith.addf %227, %228 : vector<8x768xf32>
    %230 = vector.extract_strided_slice %30 {offsets = [48, 0], sizes = [8, 768], strides = [1, 1]} : vector<64x768xf32> to vector<8x768xf32>
    %231 = vector.extract_strided_slice %230 {offsets = [0, 0], sizes = [8, 256], strides = [1, 1]} : vector<8x768xf32> to vector<8x256xf32>
    %232 = vector.extract_strided_slice %229 {offsets = [0, 0], sizes = [8, 256], strides = [1, 1]} : vector<8x768xf32> to vector<8x256xf32>
    %233 = arith.addf %231, %232 : vector<8x256xf32>
    %234 = arith.negf %233 : vector<8x256xf32>
    %235 = math.exp %234 : vector<8x256xf32>
    %cst_49 = arith.constant 1.000000e+00 : f32
    %236 = vector.broadcast %cst_49 : f32 to vector<8x256xf32>
    %237 = arith.addf %236, %235 : vector<8x256xf32>
    %238 = arith.divf %236, %237 : vector<8x256xf32>
    %239 = vector.extract_strided_slice %230 {offsets = [0, 256], sizes = [8, 256], strides = [1, 1]} : vector<8x768xf32> to vector<8x256xf32>
    %240 = vector.extract_strided_slice %229 {offsets = [0, 256], sizes = [8, 256], strides = [1, 1]} : vector<8x768xf32> to vector<8x256xf32>
    %241 = arith.addf %239, %240 : vector<8x256xf32>
    %242 = arith.negf %241 : vector<8x256xf32>
    %243 = math.exp %242 : vector<8x256xf32>
    %cst_50 = arith.constant 1.000000e+00 : f32
    %244 = vector.broadcast %cst_50 : f32 to vector<8x256xf32>
    %245 = arith.addf %244, %243 : vector<8x256xf32>
    %246 = arith.divf %244, %245 : vector<8x256xf32>
    %247 = vector.extract_strided_slice %230 {offsets = [0, 512], sizes = [8, 256], strides = [1, 1]} : vector<8x768xf32> to vector<8x256xf32>
    %248 = vector.extract_strided_slice %229 {offsets = [0, 512], sizes = [8, 256], strides = [1, 1]} : vector<8x768xf32> to vector<8x256xf32>
    %249 = arith.mulf %238, %248 : vector<8x256xf32>
    %250 = arith.addf %247, %249 : vector<8x256xf32>
    %251 = math.tanh %250 : vector<8x256xf32>
    %cst_51 = arith.constant 1.000000e+00 : f32
    %252 = vector.broadcast %cst_51 : f32 to vector<8x256xf32>
    %253 = arith.subf %252, %246 : vector<8x256xf32>
    %254 = arith.mulf %253, %251 : vector<8x256xf32>
    %255 = arith.mulf %246, %224 : vector<8x256xf32>
    %256 = arith.addf %254, %255 : vector<8x256xf32>
    %c48 = arith.constant 48 : index
    %c0_52 = arith.constant 0 : index
    %257 = vector.load %arg8[%c48, %c0_52] : memref<64x256xf32, #tpu.memory_space<vmem>>, vector<8x256xf32>
    tpu.vector_store %arg8[%c48, %c0_52], %256 {strides = array<i32>} : memref<64x256xf32, #tpu.memory_space<vmem>>, vector<8x256xf32>,
    %258 = arith.truncf %256 : vector<8x256xf32> to vector<8x256xbf16>
    %cst_53 = arith.constant dense<0.000000e+00> : vector<8x768xf32>
    %259 = tpu.matmul %258, %31, %cst_53 {dimension_numbers = #tpu.dot_dimension_numbers<[1], [0], [0], [1], [0, 0, 1, 1], [], []>} : vector<8x256xbf16>, vector<256x768xbf16>, vector<8x768xf32> -> vector<8x768xf32>
    %260 = vector.broadcast %32 : vector<1x768xf32> to vector<8x768xf32>
    %261 = arith.addf %259, %260 : vector<8x768xf32>
    %262 = vector.extract_strided_slice %30 {offsets = [56, 0], sizes = [8, 768], strides = [1, 1]} : vector<64x768xf32> to vector<8x768xf32>
    %263 = vector.extract_strided_slice %262 {offsets = [0, 0], sizes = [8, 256], strides = [1, 1]} : vector<8x768xf32> to vector<8x256xf32>
    %264 = vector.extract_strided_slice %261 {offsets = [0, 0], sizes = [8, 256], strides = [1, 1]} : vector<8x768xf32> to vector<8x256xf32>
    %265 = arith.addf %263, %264 : vector<8x256xf32>
    %266 = arith.negf %265 : vector<8x256xf32>
    %267 = math.exp %266 : vector<8x256xf32>
    %cst_54 = arith.constant 1.000000e+00 : f32
    %268 = vector.broadcast %cst_54 : f32 to vector<8x256xf32>
    %269 = arith.addf %268, %267 : vector<8x256xf32>
    %270 = arith.divf %268, %269 : vector<8x256xf32>
    %271 = vector.extract_strided_slice %262 {offsets = [0, 256], sizes = [8, 256], strides = [1, 1]} : vector<8x768xf32> to vector<8x256xf32>
    %272 = vector.extract_strided_slice %261 {offsets = [0, 256], sizes = [8, 256], strides = [1, 1]} : vector<8x768xf32> to vector<8x256xf32>
    %273 = arith.addf %271, %272 : vector<8x256xf32>
    %274 = arith.negf %273 : vector<8x256xf32>
    %275 = math.exp %274 : vector<8x256xf32>
    %cst_55 = arith.constant 1.000000e+00 : f32
    %276 = vector.broadcast %cst_55 : f32 to vector<8x256xf32>
    %277 = arith.addf %276, %275 : vector<8x256xf32>
    %278 = arith.divf %276, %277 : vector<8x256xf32>
    %279 = vector.extract_strided_slice %262 {offsets = [0, 512], sizes = [8, 256], strides = [1, 1]} : vector<8x768xf32> to vector<8x256xf32>
    %280 = vector.extract_strided_slice %261 {offsets = [0, 512], sizes = [8, 256], strides = [1, 1]} : vector<8x768xf32> to vector<8x256xf32>
    %281 = arith.mulf %270, %280 : vector<8x256xf32>
    %282 = arith.addf %279, %281 : vector<8x256xf32>
    %283 = math.tanh %282 : vector<8x256xf32>
    %cst_56 = arith.constant 1.000000e+00 : f32
    %284 = vector.broadcast %cst_56 : f32 to vector<8x256xf32>
    %285 = arith.subf %284, %278 : vector<8x256xf32>
    %286 = arith.mulf %285, %283 : vector<8x256xf32>
    %287 = arith.mulf %278, %256 : vector<8x256xf32>
    %288 = arith.addf %286, %287 : vector<8x256xf32>
    %c56 = arith.constant 56 : index
    %c0_57 = arith.constant 0 : index
    %289 = vector.load %arg8[%c56, %c0_57] : memref<64x256xf32, #tpu.memory_space<vmem>>, vector<8x256xf32>
    tpu.vector_store %arg8[%c56, %c0_57], %288 {strides = array<i32>} : memref<64x256xf32, #tpu.memory_space<vmem>>, vector<8x256xf32>,
    %c0_58 = arith.constant 0 : index
    %c0_59 = arith.constant 0 : index
    %290 = vector.load %arg8[%c0_58, %c0_59] : memref<64x256xf32, #tpu.memory_space<vmem>>, vector<64x256xf32>
    %291 = arith.truncf %290 : vector<64x256xf32> to vector<64x256xbf16>
    %c0_60 = arith.constant 0 : index
    %c0_61 = arith.constant 0 : index
    %292 = vector.load %arg3[%c0_60, %c0_61] : memref<512x768xbf16, #tpu.memory_space<vmem>>, vector<256x768xbf16>
    %cst_62 = arith.constant dense<0.000000e+00> : vector<64x768xf32>
    %293 = tpu.matmul %291, %292, %cst_62 {dimension_numbers = #tpu.dot_dimension_numbers<[1], [0], [0], [1], [0, 0, 1, 1], [], []>} : vector<64x256xbf16>, vector<256x768xbf16>, vector<64x768xf32> -> vector<64x768xf32>
    %c2 = arith.constant 2 : index
    %c0_63 = arith.constant 0 : index
    %294 = vector.load %arg4[%c2, %c0_63] : memref<4x768xf32, #tpu.memory_space<vmem>>, vector<1x768xf32>
    %295 = vector.broadcast %294 : vector<1x768xf32> to vector<64x768xf32>
    %296 = arith.addf %293, %295 : vector<64x768xf32>
    %c256_64 = arith.constant 256 : index
    %c0_65 = arith.constant 0 : index
    %297 = vector.load %arg3[%c256_64, %c0_65] : memref<512x768xbf16, #tpu.memory_space<vmem>>, vector<256x768xbf16>
    %c3 = arith.constant 3 : index
    %c0_66 = arith.constant 0 : index
    %298 = vector.load %arg4[%c3, %c0_66] : memref<4x768xf32, #tpu.memory_space<vmem>>, vector<1x768xf32>
    %cst_67 = arith.constant 0.000000e+00 : f32
    %299 = vector.broadcast %cst_67 : f32 to vector<8x256xf32>
    %cst_68 = arith.constant 0.000000e+00 : f32
    %300 = vector.broadcast %cst_68 : f32 to vector<8x256xf32>
    %301 = arith.truncf %299 : vector<8x256xf32> to vector<8x256xbf16>
    %cst_69 = arith.constant dense<0.000000e+00> : vector<8x768xf32>
    %302 = tpu.matmul %301, %297, %cst_69 {dimension_numbers = #tpu.dot_dimension_numbers<[1], [0], [0], [1], [0, 0, 1, 1], [], []>} : vector<8x256xbf16>, vector<256x768xbf16>, vector<8x768xf32> -> vector<8x768xf32>
    %303 = vector.broadcast %298 : vector<1x768xf32> to vector<8x768xf32>
    %304 = arith.addf %302, %303 : vector<8x768xf32>
    %305 = vector.extract_strided_slice %296 {offsets = [0, 0], sizes = [8, 768], strides = [1, 1]} : vector<64x768xf32> to vector<8x768xf32>
    %306 = vector.extract_strided_slice %305 {offsets = [0, 0], sizes = [8, 256], strides = [1, 1]} : vector<8x768xf32> to vector<8x256xf32>
    %307 = vector.extract_strided_slice %304 {offsets = [0, 0], sizes = [8, 256], strides = [1, 1]} : vector<8x768xf32> to vector<8x256xf32>
    %308 = arith.addf %306, %307 : vector<8x256xf32>
    %309 = arith.negf %308 : vector<8x256xf32>
    %310 = math.exp %309 : vector<8x256xf32>
    %cst_70 = arith.constant 1.000000e+00 : f32
    %311 = vector.broadcast %cst_70 : f32 to vector<8x256xf32>
    %312 = arith.addf %311, %310 : vector<8x256xf32>
    %313 = arith.divf %311, %312 : vector<8x256xf32>
    %314 = vector.extract_strided_slice %305 {offsets = [0, 256], sizes = [8, 256], strides = [1, 1]} : vector<8x768xf32> to vector<8x256xf32>
    %315 = vector.extract_strided_slice %304 {offsets = [0, 256], sizes = [8, 256], strides = [1, 1]} : vector<8x768xf32> to vector<8x256xf32>
    %316 = arith.addf %314, %315 : vector<8x256xf32>
    %317 = arith.negf %316 : vector<8x256xf32>
    %318 = math.exp %317 : vector<8x256xf32>
    %cst_71 = arith.constant 1.000000e+00 : f32
    %319 = vector.broadcast %cst_71 : f32 to vector<8x256xf32>
    %320 = arith.addf %319, %318 : vector<8x256xf32>
    %321 = arith.divf %319, %320 : vector<8x256xf32>
    %322 = vector.extract_strided_slice %305 {offsets = [0, 512], sizes = [8, 256], strides = [1, 1]} : vector<8x768xf32> to vector<8x256xf32>
    %323 = vector.extract_strided_slice %304 {offsets = [0, 512], sizes = [8, 256], strides = [1, 1]} : vector<8x768xf32> to vector<8x256xf32>
    %324 = arith.mulf %313, %323 : vector<8x256xf32>
    %325 = arith.addf %322, %324 : vector<8x256xf32>
    %326 = math.tanh %325 : vector<8x256xf32>
    %cst_72 = arith.constant 1.000000e+00 : f32
    %327 = vector.broadcast %cst_72 : f32 to vector<8x256xf32>
    %328 = arith.subf %327, %321 : vector<8x256xf32>
    %329 = arith.mulf %328, %326 : vector<8x256xf32>
    %330 = arith.mulf %321, %299 : vector<8x256xf32>
    %331 = arith.addf %329, %330 : vector<8x256xf32>
    %332 = arith.addf %300, %331 : vector<8x256xf32>
    %333 = arith.truncf %331 : vector<8x256xf32> to vector<8x256xbf16>
    %cst_73 = arith.constant dense<0.000000e+00> : vector<8x768xf32>
    %334 = tpu.matmul %333, %297, %cst_73 {dimension_numbers = #tpu.dot_dimension_numbers<[1], [0], [0], [1], [0, 0, 1, 1], [], []>} : vector<8x256xbf16>, vector<256x768xbf16>, vector<8x768xf32> -> vector<8x768xf32>
    %335 = vector.broadcast %298 : vector<1x768xf32> to vector<8x768xf32>
    %336 = arith.addf %334, %335 : vector<8x768xf32>
    %337 = vector.extract_strided_slice %296 {offsets = [8, 0], sizes = [8, 768], strides = [1, 1]} : vector<64x768xf32> to vector<8x768xf32>
    %338 = vector.extract_strided_slice %337 {offsets = [0, 0], sizes = [8, 256], strides = [1, 1]} : vector<8x768xf32> to vector<8x256xf32>
    %339 = vector.extract_strided_slice %336 {offsets = [0, 0], sizes = [8, 256], strides = [1, 1]} : vector<8x768xf32> to vector<8x256xf32>
    %340 = arith.addf %338, %339 : vector<8x256xf32>
    %341 = arith.negf %340 : vector<8x256xf32>
    %342 = math.exp %341 : vector<8x256xf32>
    %cst_74 = arith.constant 1.000000e+00 : f32
    %343 = vector.broadcast %cst_74 : f32 to vector<8x256xf32>
    %344 = arith.addf %343, %342 : vector<8x256xf32>
    %345 = arith.divf %343, %344 : vector<8x256xf32>
    %346 = vector.extract_strided_slice %337 {offsets = [0, 256], sizes = [8, 256], strides = [1, 1]} : vector<8x768xf32> to vector<8x256xf32>
    %347 = vector.extract_strided_slice %336 {offsets = [0, 256], sizes = [8, 256], strides = [1, 1]} : vector<8x768xf32> to vector<8x256xf32>
    %348 = arith.addf %346, %347 : vector<8x256xf32>
    %349 = arith.negf %348 : vector<8x256xf32>
    %350 = math.exp %349 : vector<8x256xf32>
    %cst_75 = arith.constant 1.000000e+00 : f32
    %351 = vector.broadcast %cst_75 : f32 to vector<8x256xf32>
    %352 = arith.addf %351, %350 : vector<8x256xf32>
    %353 = arith.divf %351, %352 : vector<8x256xf32>
    %354 = vector.extract_strided_slice %337 {offsets = [0, 512], sizes = [8, 256], strides = [1, 1]} : vector<8x768xf32> to vector<8x256xf32>
    %355 = vector.extract_strided_slice %336 {offsets = [0, 512], sizes = [8, 256], strides = [1, 1]} : vector<8x768xf32> to vector<8x256xf32>
    %356 = arith.mulf %345, %355 : vector<8x256xf32>
    %357 = arith.addf %354, %356 : vector<8x256xf32>
    %358 = math.tanh %357 : vector<8x256xf32>
    %cst_76 = arith.constant 1.000000e+00 : f32
    %359 = vector.broadcast %cst_76 : f32 to vector<8x256xf32>
    %360 = arith.subf %359, %353 : vector<8x256xf32>
    %361 = arith.mulf %360, %358 : vector<8x256xf32>
    %362 = arith.mulf %353, %331 : vector<8x256xf32>
    %363 = arith.addf %361, %362 : vector<8x256xf32>
    %364 = arith.addf %332, %363 : vector<8x256xf32>
    %365 = arith.truncf %363 : vector<8x256xf32> to vector<8x256xbf16>
    %cst_77 = arith.constant dense<0.000000e+00> : vector<8x768xf32>
    %366 = tpu.matmul %365, %297, %cst_77 {dimension_numbers = #tpu.dot_dimension_numbers<[1], [0], [0], [1], [0, 0, 1, 1], [], []>} : vector<8x256xbf16>, vector<256x768xbf16>, vector<8x768xf32> -> vector<8x768xf32>
    %367 = vector.broadcast %298 : vector<1x768xf32> to vector<8x768xf32>
    %368 = arith.addf %366, %367 : vector<8x768xf32>
    %369 = vector.extract_strided_slice %296 {offsets = [16, 0], sizes = [8, 768], strides = [1, 1]} : vector<64x768xf32> to vector<8x768xf32>
    %370 = vector.extract_strided_slice %369 {offsets = [0, 0], sizes = [8, 256], strides = [1, 1]} : vector<8x768xf32> to vector<8x256xf32>
    %371 = vector.extract_strided_slice %368 {offsets = [0, 0], sizes = [8, 256], strides = [1, 1]} : vector<8x768xf32> to vector<8x256xf32>
    %372 = arith.addf %370, %371 : vector<8x256xf32>
    %373 = arith.negf %372 : vector<8x256xf32>
    %374 = math.exp %373 : vector<8x256xf32>
    %cst_78 = arith.constant 1.000000e+00 : f32
    %375 = vector.broadcast %cst_78 : f32 to vector<8x256xf32>
    %376 = arith.addf %375, %374 : vector<8x256xf32>
    %377 = arith.divf %375, %376 : vector<8x256xf32>
    %378 = vector.extract_strided_slice %369 {offsets = [0, 256], sizes = [8, 256], strides = [1, 1]} : vector<8x768xf32> to vector<8x256xf32>
    %379 = vector.extract_strided_slice %368 {offsets = [0, 256], sizes = [8, 256], strides = [1, 1]} : vector<8x768xf32> to vector<8x256xf32>
    %380 = arith.addf %378, %379 : vector<8x256xf32>
    %381 = arith.negf %380 : vector<8x256xf32>
    %382 = math.exp %381 : vector<8x256xf32>
    %cst_79 = arith.constant 1.000000e+00 : f32
    %383 = vector.broadcast %cst_79 : f32 to vector<8x256xf32>
    %384 = arith.addf %383, %382 : vector<8x256xf32>
    %385 = arith.divf %383, %384 : vector<8x256xf32>
    %386 = vector.extract_strided_slice %369 {offsets = [0, 512], sizes = [8, 256], strides = [1, 1]} : vector<8x768xf32> to vector<8x256xf32>
    %387 = vector.extract_strided_slice %368 {offsets = [0, 512], sizes = [8, 256], strides = [1, 1]} : vector<8x768xf32> to vector<8x256xf32>
    %388 = arith.mulf %377, %387 : vector<8x256xf32>
    %389 = arith.addf %386, %388 : vector<8x256xf32>
    %390 = math.tanh %389 : vector<8x256xf32>
    %cst_80 = arith.constant 1.000000e+00 : f32
    %391 = vector.broadcast %cst_80 : f32 to vector<8x256xf32>
    %392 = arith.subf %391, %385 : vector<8x256xf32>
    %393 = arith.mulf %392, %390 : vector<8x256xf32>
    %394 = arith.mulf %385, %363 : vector<8x256xf32>
    %395 = arith.addf %393, %394 : vector<8x256xf32>
    %396 = arith.addf %364, %395 : vector<8x256xf32>
    %397 = arith.truncf %395 : vector<8x256xf32> to vector<8x256xbf16>
    %cst_81 = arith.constant dense<0.000000e+00> : vector<8x768xf32>
    %398 = tpu.matmul %397, %297, %cst_81 {dimension_numbers = #tpu.dot_dimension_numbers<[1], [0], [0], [1], [0, 0, 1, 1], [], []>} : vector<8x256xbf16>, vector<256x768xbf16>, vector<8x768xf32> -> vector<8x768xf32>
    %399 = vector.broadcast %298 : vector<1x768xf32> to vector<8x768xf32>
    %400 = arith.addf %398, %399 : vector<8x768xf32>
    %401 = vector.extract_strided_slice %296 {offsets = [24, 0], sizes = [8, 768], strides = [1, 1]} : vector<64x768xf32> to vector<8x768xf32>
    %402 = vector.extract_strided_slice %401 {offsets = [0, 0], sizes = [8, 256], strides = [1, 1]} : vector<8x768xf32> to vector<8x256xf32>
    %403 = vector.extract_strided_slice %400 {offsets = [0, 0], sizes = [8, 256], strides = [1, 1]} : vector<8x768xf32> to vector<8x256xf32>
    %404 = arith.addf %402, %403 : vector<8x256xf32>
    %405 = arith.negf %404 : vector<8x256xf32>
    %406 = math.exp %405 : vector<8x256xf32>
    %cst_82 = arith.constant 1.000000e+00 : f32
    %407 = vector.broadcast %cst_82 : f32 to vector<8x256xf32>
    %408 = arith.addf %407, %406 : vector<8x256xf32>
    %409 = arith.divf %407, %408 : vector<8x256xf32>
    %410 = vector.extract_strided_slice %401 {offsets = [0, 256], sizes = [8, 256], strides = [1, 1]} : vector<8x768xf32> to vector<8x256xf32>
    %411 = vector.extract_strided_slice %400 {offsets = [0, 256], sizes = [8, 256], strides = [1, 1]} : vector<8x768xf32> to vector<8x256xf32>
    %412 = arith.addf %410, %411 : vector<8x256xf32>
    %413 = arith.negf %412 : vector<8x256xf32>
    %414 = math.exp %413 : vector<8x256xf32>
    %cst_83 = arith.constant 1.000000e+00 : f32
    %415 = vector.broadcast %cst_83 : f32 to vector<8x256xf32>
    %416 = arith.addf %415, %414 : vector<8x256xf32>
    %417 = arith.divf %415, %416 : vector<8x256xf32>
    %418 = vector.extract_strided_slice %401 {offsets = [0, 512], sizes = [8, 256], strides = [1, 1]} : vector<8x768xf32> to vector<8x256xf32>
    %419 = vector.extract_strided_slice %400 {offsets = [0, 512], sizes = [8, 256], strides = [1, 1]} : vector<8x768xf32> to vector<8x256xf32>
    %420 = arith.mulf %409, %419 : vector<8x256xf32>
    %421 = arith.addf %418, %420 : vector<8x256xf32>
    %422 = math.tanh %421 : vector<8x256xf32>
    %cst_84 = arith.constant 1.000000e+00 : f32
    %423 = vector.broadcast %cst_84 : f32 to vector<8x256xf32>
    %424 = arith.subf %423, %417 : vector<8x256xf32>
    %425 = arith.mulf %424, %422 : vector<8x256xf32>
    %426 = arith.mulf %417, %395 : vector<8x256xf32>
    %427 = arith.addf %425, %426 : vector<8x256xf32>
    %428 = arith.addf %396, %427 : vector<8x256xf32>
    %429 = arith.truncf %427 : vector<8x256xf32> to vector<8x256xbf16>
    %cst_85 = arith.constant dense<0.000000e+00> : vector<8x768xf32>
    %430 = tpu.matmul %429, %297, %cst_85 {dimension_numbers = #tpu.dot_dimension_numbers<[1], [0], [0], [1], [0, 0, 1, 1], [], []>} : vector<8x256xbf16>, vector<256x768xbf16>, vector<8x768xf32> -> vector<8x768xf32>
    %431 = vector.broadcast %298 : vector<1x768xf32> to vector<8x768xf32>
    %432 = arith.addf %430, %431 : vector<8x768xf32>
    %433 = vector.extract_strided_slice %296 {offsets = [32, 0], sizes = [8, 768], strides = [1, 1]} : vector<64x768xf32> to vector<8x768xf32>
    %434 = vector.extract_strided_slice %433 {offsets = [0, 0], sizes = [8, 256], strides = [1, 1]} : vector<8x768xf32> to vector<8x256xf32>
    %435 = vector.extract_strided_slice %432 {offsets = [0, 0], sizes = [8, 256], strides = [1, 1]} : vector<8x768xf32> to vector<8x256xf32>
    %436 = arith.addf %434, %435 : vector<8x256xf32>
    %437 = arith.negf %436 : vector<8x256xf32>
    %438 = math.exp %437 : vector<8x256xf32>
    %cst_86 = arith.constant 1.000000e+00 : f32
    %439 = vector.broadcast %cst_86 : f32 to vector<8x256xf32>
    %440 = arith.addf %439, %438 : vector<8x256xf32>
    %441 = arith.divf %439, %440 : vector<8x256xf32>
    %442 = vector.extract_strided_slice %433 {offsets = [0, 256], sizes = [8, 256], strides = [1, 1]} : vector<8x768xf32> to vector<8x256xf32>
    %443 = vector.extract_strided_slice %432 {offsets = [0, 256], sizes = [8, 256], strides = [1, 1]} : vector<8x768xf32> to vector<8x256xf32>
    %444 = arith.addf %442, %443 : vector<8x256xf32>
    %445 = arith.negf %444 : vector<8x256xf32>
    %446 = math.exp %445 : vector<8x256xf32>
    %cst_87 = arith.constant 1.000000e+00 : f32
    %447 = vector.broadcast %cst_87 : f32 to vector<8x256xf32>
    %448 = arith.addf %447, %446 : vector<8x256xf32>
    %449 = arith.divf %447, %448 : vector<8x256xf32>
    %450 = vector.extract_strided_slice %433 {offsets = [0, 512], sizes = [8, 256], strides = [1, 1]} : vector<8x768xf32> to vector<8x256xf32>
    %451 = vector.extract_strided_slice %432 {offsets = [0, 512], sizes = [8, 256], strides = [1, 1]} : vector<8x768xf32> to vector<8x256xf32>
    %452 = arith.mulf %441, %451 : vector<8x256xf32>
    %453 = arith.addf %450, %452 : vector<8x256xf32>
    %454 = math.tanh %453 : vector<8x256xf32>
    %cst_88 = arith.constant 1.000000e+00 : f32
    %455 = vector.broadcast %cst_88 : f32 to vector<8x256xf32>
    %456 = arith.subf %455, %449 : vector<8x256xf32>
    %457 = arith.mulf %456, %454 : vector<8x256xf32>
    %458 = arith.mulf %449, %427 : vector<8x256xf32>
    %459 = arith.addf %457, %458 : vector<8x256xf32>
    %460 = arith.addf %428, %459 : vector<8x256xf32>
    %461 = arith.truncf %459 : vector<8x256xf32> to vector<8x256xbf16>
    %cst_89 = arith.constant dense<0.000000e+00> : vector<8x768xf32>
    %462 = tpu.matmul %461, %297, %cst_89 {dimension_numbers = #tpu.dot_dimension_numbers<[1], [0], [0], [1], [0, 0, 1, 1], [], []>} : vector<8x256xbf16>, vector<256x768xbf16>, vector<8x768xf32> -> vector<8x768xf32>
    %463 = vector.broadcast %298 : vector<1x768xf32> to vector<8x768xf32>
    %464 = arith.addf %462, %463 : vector<8x768xf32>
    %465 = vector.extract_strided_slice %296 {offsets = [40, 0], sizes = [8, 768], strides = [1, 1]} : vector<64x768xf32> to vector<8x768xf32>
    %466 = vector.extract_strided_slice %465 {offsets = [0, 0], sizes = [8, 256], strides = [1, 1]} : vector<8x768xf32> to vector<8x256xf32>
    %467 = vector.extract_strided_slice %464 {offsets = [0, 0], sizes = [8, 256], strides = [1, 1]} : vector<8x768xf32> to vector<8x256xf32>
    %468 = arith.addf %466, %467 : vector<8x256xf32>
    %469 = arith.negf %468 : vector<8x256xf32>
    %470 = math.exp %469 : vector<8x256xf32>
    %cst_90 = arith.constant 1.000000e+00 : f32
    %471 = vector.broadcast %cst_90 : f32 to vector<8x256xf32>
    %472 = arith.addf %471, %470 : vector<8x256xf32>
    %473 = arith.divf %471, %472 : vector<8x256xf32>
    %474 = vector.extract_strided_slice %465 {offsets = [0, 256], sizes = [8, 256], strides = [1, 1]} : vector<8x768xf32> to vector<8x256xf32>
    %475 = vector.extract_strided_slice %464 {offsets = [0, 256], sizes = [8, 256], strides = [1, 1]} : vector<8x768xf32> to vector<8x256xf32>
    %476 = arith.addf %474, %475 : vector<8x256xf32>
    %477 = arith.negf %476 : vector<8x256xf32>
    %478 = math.exp %477 : vector<8x256xf32>
    %cst_91 = arith.constant 1.000000e+00 : f32
    %479 = vector.broadcast %cst_91 : f32 to vector<8x256xf32>
    %480 = arith.addf %479, %478 : vector<8x256xf32>
    %481 = arith.divf %479, %480 : vector<8x256xf32>
    %482 = vector.extract_strided_slice %465 {offsets = [0, 512], sizes = [8, 256], strides = [1, 1]} : vector<8x768xf32> to vector<8x256xf32>
    %483 = vector.extract_strided_slice %464 {offsets = [0, 512], sizes = [8, 256], strides = [1, 1]} : vector<8x768xf32> to vector<8x256xf32>
    %484 = arith.mulf %473, %483 : vector<8x256xf32>
    %485 = arith.addf %482, %484 : vector<8x256xf32>
    %486 = math.tanh %485 : vector<8x256xf32>
    %cst_92 = arith.constant 1.000000e+00 : f32
    %487 = vector.broadcast %cst_92 : f32 to vector<8x256xf32>
    %488 = arith.subf %487, %481 : vector<8x256xf32>
    %489 = arith.mulf %488, %486 : vector<8x256xf32>
    %490 = arith.mulf %481, %459 : vector<8x256xf32>
    %491 = arith.addf %489, %490 : vector<8x256xf32>
    %492 = arith.addf %460, %491 : vector<8x256xf32>
    %493 = arith.truncf %491 : vector<8x256xf32> to vector<8x256xbf16>
    %cst_93 = arith.constant dense<0.000000e+00> : vector<8x768xf32>
    %494 = tpu.matmul %493, %297, %cst_93 {dimension_numbers = #tpu.dot_dimension_numbers<[1], [0], [0], [1], [0, 0, 1, 1], [], []>} : vector<8x256xbf16>, vector<256x768xbf16>, vector<8x768xf32> -> vector<8x768xf32>
    %495 = vector.broadcast %298 : vector<1x768xf32> to vector<8x768xf32>
    %496 = arith.addf %494, %495 : vector<8x768xf32>
    %497 = vector.extract_strided_slice %296 {offsets = [48, 0], sizes = [8, 768], strides = [1, 1]} : vector<64x768xf32> to vector<8x768xf32>
    %498 = vector.extract_strided_slice %497 {offsets = [0, 0], sizes = [8, 256], strides = [1, 1]} : vector<8x768xf32> to vector<8x256xf32>
    %499 = vector.extract_strided_slice %496 {offsets = [0, 0], sizes = [8, 256], strides = [1, 1]} : vector<8x768xf32> to vector<8x256xf32>
    %500 = arith.addf %498, %499 : vector<8x256xf32>
    %501 = arith.negf %500 : vector<8x256xf32>
    %502 = math.exp %501 : vector<8x256xf32>
    %cst_94 = arith.constant 1.000000e+00 : f32
    %503 = vector.broadcast %cst_94 : f32 to vector<8x256xf32>
    %504 = arith.addf %503, %502 : vector<8x256xf32>
    %505 = arith.divf %503, %504 : vector<8x256xf32>
    %506 = vector.extract_strided_slice %497 {offsets = [0, 256], sizes = [8, 256], strides = [1, 1]} : vector<8x768xf32> to vector<8x256xf32>
    %507 = vector.extract_strided_slice %496 {offsets = [0, 256], sizes = [8, 256], strides = [1, 1]} : vector<8x768xf32> to vector<8x256xf32>
    %508 = arith.addf %506, %507 : vector<8x256xf32>
    %509 = arith.negf %508 : vector<8x256xf32>
    %510 = math.exp %509 : vector<8x256xf32>
    %cst_95 = arith.constant 1.000000e+00 : f32
    %511 = vector.broadcast %cst_95 : f32 to vector<8x256xf32>
    %512 = arith.addf %511, %510 : vector<8x256xf32>
    %513 = arith.divf %511, %512 : vector<8x256xf32>
    %514 = vector.extract_strided_slice %497 {offsets = [0, 512], sizes = [8, 256], strides = [1, 1]} : vector<8x768xf32> to vector<8x256xf32>
    %515 = vector.extract_strided_slice %496 {offsets = [0, 512], sizes = [8, 256], strides = [1, 1]} : vector<8x768xf32> to vector<8x256xf32>
    %516 = arith.mulf %505, %515 : vector<8x256xf32>
    %517 = arith.addf %514, %516 : vector<8x256xf32>
    %518 = math.tanh %517 : vector<8x256xf32>
    %cst_96 = arith.constant 1.000000e+00 : f32
    %519 = vector.broadcast %cst_96 : f32 to vector<8x256xf32>
    %520 = arith.subf %519, %513 : vector<8x256xf32>
    %521 = arith.mulf %520, %518 : vector<8x256xf32>
    %522 = arith.mulf %513, %491 : vector<8x256xf32>
    %523 = arith.addf %521, %522 : vector<8x256xf32>
    %524 = arith.addf %492, %523 : vector<8x256xf32>
    %525 = arith.truncf %523 : vector<8x256xf32> to vector<8x256xbf16>
    %cst_97 = arith.constant dense<0.000000e+00> : vector<8x768xf32>
    %526 = tpu.matmul %525, %297, %cst_97 {dimension_numbers = #tpu.dot_dimension_numbers<[1], [0], [0], [1], [0, 0, 1, 1], [], []>} : vector<8x256xbf16>, vector<256x768xbf16>, vector<8x768xf32> -> vector<8x768xf32>
    %527 = vector.broadcast %298 : vector<1x768xf32> to vector<8x768xf32>
    %528 = arith.addf %526, %527 : vector<8x768xf32>
    %529 = vector.extract_strided_slice %296 {offsets = [56, 0], sizes = [8, 768], strides = [1, 1]} : vector<64x768xf32> to vector<8x768xf32>
    %530 = vector.extract_strided_slice %529 {offsets = [0, 0], sizes = [8, 256], strides = [1, 1]} : vector<8x768xf32> to vector<8x256xf32>
    %531 = vector.extract_strided_slice %528 {offsets = [0, 0], sizes = [8, 256], strides = [1, 1]} : vector<8x768xf32> to vector<8x256xf32>
    %532 = arith.addf %530, %531 : vector<8x256xf32>
    %533 = arith.negf %532 : vector<8x256xf32>
    %534 = math.exp %533 : vector<8x256xf32>
    %cst_98 = arith.constant 1.000000e+00 : f32
    %535 = vector.broadcast %cst_98 : f32 to vector<8x256xf32>
    %536 = arith.addf %535, %534 : vector<8x256xf32>
    %537 = arith.divf %535, %536 : vector<8x256xf32>
    %538 = vector.extract_strided_slice %529 {offsets = [0, 256], sizes = [8, 256], strides = [1, 1]} : vector<8x768xf32> to vector<8x256xf32>
    %539 = vector.extract_strided_slice %528 {offsets = [0, 256], sizes = [8, 256], strides = [1, 1]} : vector<8x768xf32> to vector<8x256xf32>
    %540 = arith.addf %538, %539 : vector<8x256xf32>
    %541 = arith.negf %540 : vector<8x256xf32>
    %542 = math.exp %541 : vector<8x256xf32>
    %cst_99 = arith.constant 1.000000e+00 : f32
    %543 = vector.broadcast %cst_99 : f32 to vector<8x256xf32>
    %544 = arith.addf %543, %542 : vector<8x256xf32>
    %545 = arith.divf %543, %544 : vector<8x256xf32>
    %546 = vector.extract_strided_slice %529 {offsets = [0, 512], sizes = [8, 256], strides = [1, 1]} : vector<8x768xf32> to vector<8x256xf32>
    %547 = vector.extract_strided_slice %528 {offsets = [0, 512], sizes = [8, 256], strides = [1, 1]} : vector<8x768xf32> to vector<8x256xf32>
    %548 = arith.mulf %537, %547 : vector<8x256xf32>
    %549 = arith.addf %546, %548 : vector<8x256xf32>
    %550 = math.tanh %549 : vector<8x256xf32>
    %cst_100 = arith.constant 1.000000e+00 : f32
    %551 = vector.broadcast %cst_100 : f32 to vector<8x256xf32>
    %552 = arith.subf %551, %545 : vector<8x256xf32>
    %553 = arith.mulf %552, %550 : vector<8x256xf32>
    %554 = arith.mulf %545, %523 : vector<8x256xf32>
    %555 = arith.addf %553, %554 : vector<8x256xf32>
    %556 = arith.addf %524, %555 : vector<8x256xf32>
    %cst_101 = arith.constant 1.250000e-01 : f32
    %557 = vector.broadcast %cst_101 : f32 to vector<8x256xf32>
    %558 = arith.mulf %556, %557 : vector<8x256xf32>
    %559 = arith.truncf %558 : vector<8x256xf32> to vector<8x256xbf16>
    %c0_102 = arith.constant 0 : index
    %c0_103 = arith.constant 0 : index
    %560 = vector.load %arg5[%c0_102, %c0_103] : memref<512x256xbf16, #tpu.memory_space<vmem>>, vector<256x256xbf16>
    %cst_104 = arith.constant dense<0.000000e+00> : vector<8x256xf32>
    %561 = tpu.matmul %559, %560, %cst_104 {dimension_numbers = #tpu.dot_dimension_numbers<[1], [0], [0], [1], [0, 0, 1, 1], [], []>} : vector<8x256xbf16>, vector<256x256xbf16>, vector<8x256xf32> -> vector<8x256xf32>
    %c0_105 = arith.constant 0 : index
    %c0_106 = arith.constant 0 : index
    %562 = vector.load %arg6[%c0_105, %c0_106] : memref<2x256xf32, #tpu.memory_space<vmem>>, vector<1x256xf32>
    %563 = vector.broadcast %562 : vector<1x256xf32> to vector<8x256xf32>
    %564 = arith.addf %561, %563 : vector<8x256xf32>
    %cst_107 = arith.constant 0.000000e+00 : f32
    %565 = vector.broadcast %cst_107 : f32 to vector<8x256xf32>
    %566 = arith.maximumf %564, %565 : vector<8x256xf32>
    %567 = arith.truncf %566 : vector<8x256xf32> to vector<8x256xbf16>
    %c256_108 = arith.constant 256 : index
    %c0_109 = arith.constant 0 : index
    %568 = vector.load %arg5[%c256_108, %c0_109] : memref<512x256xbf16, #tpu.memory_space<vmem>>, vector<256x2xbf16>
    %cst_110 = arith.constant dense<0.000000e+00> : vector<8x2xf32>
    %569 = tpu.matmul %567, %568, %cst_110 {dimension_numbers = #tpu.dot_dimension_numbers<[1], [0], [0], [1], [0, 0, 1, 1], [], []>} : vector<8x256xbf16>, vector<256x2xbf16>, vector<8x2xf32> -> vector<8x2xf32>
    %c1_111 = arith.constant 1 : index
    %c0_112 = arith.constant 0 : index
    %570 = vector.load %arg6[%c1_111, %c0_112] : memref<2x256xf32, #tpu.memory_space<vmem>>, vector<1x2xf32>
    %571 = vector.broadcast %570 : vector<1x2xf32> to vector<8x2xf32>
    %572 = arith.addf %569, %571 : vector<8x2xf32>
    %cst_113 = arith.constant dense<0xFF800000> : vector<8xf32>
    %573 = vector.multi_reduction <maximumf>, %572, %cst_113 [1] : vector<8x2xf32> to vector<8xf32>
    %574 = vector.shape_cast %573 : vector<8xf32> to vector<8x1xf32>
    %575 = vector.broadcast %574 : vector<8x1xf32> to vector<8x2xf32>
    %576 = arith.subf %572, %575 : vector<8x2xf32>
    %577 = math.exp %576 : vector<8x2xf32>
    %cst_114 = arith.constant dense<0.000000e+00> : vector<8xf32>
    %578 = vector.multi_reduction <add>, %577, %cst_114 [1] : vector<8x2xf32> to vector<8xf32>
    %579 = vector.shape_cast %578 : vector<8xf32> to vector<8x1xf32>
    %580 = vector.broadcast %579 : vector<8x1xf32> to vector<8x2xf32>
    %581 = arith.divf %577, %580 : vector<8x2xf32>
    %c0_115 = arith.constant 0 : index
    %c0_116 = arith.constant 0 : index
    %582 = vector.load %arg7[%c0_115, %c0_116] : memref<8x2xf32, #tpu.memory_space<vmem>>, vector<8x2xf32>
    tpu.vector_store %arg7[%c0_115, %c0_116], %581 {strides = array<i32>} : memref<8x2xf32, #tpu.memory_space<vmem>>, vector<8x2xf32>,
    return
  }
}

</mosaic_0001>

<llo_original>
// kernel: tpu_custom_call.1
$region0: #{tpu_custom_call.1}
  #allocation0 [shape = 'u32[]', space=smem, size = 0x4, offset = 0x4, fixed_abs, tag = 'smem constant byte address 0x4 - core index']
  #allocation1 [shape = 'u32[144,128]{1,0:T(1,128)}', space=vmem, size = 0x12000, scoped, tag = 'internal scratch']
  #allocation2 [shape = 'f32[64,256]{1,0:T(8,128)}', space=vmem, size = 0x10000, scoped, tag = 'scratch operand']
  %s0 = inlined_call_operand.hbm [shape: f32[64,256], index: 0, kind: input, shape index: {}]
  %s1 = inlined_call_operand.hbm [shape: f32[2,256], index: 1, kind: input, shape index: {}]
  %s2 = inlined_call_operand.hbm [shape: bf16[512,768], index: 2, kind: input, shape index: {}]
  %s3 = inlined_call_operand.hbm [shape: bf16[512,768], index: 3, kind: input, shape index: {}]
  %s4 = inlined_call_operand.hbm [shape: f32[4,768], index: 4, kind: input, shape index: {}]
  %s5 = inlined_call_operand.hbm [shape: bf16[512,256], index: 5, kind: input, shape index: {}]
  %s6 = inlined_call_operand.vmem [shape: f32[2,256], index: 6, kind: input, shape index: {}]
  %s7 = inlined_call_operand.vmem [shape: f32[8,2], index: 7, kind: output, shape index: {}]
  %s8 = sld [smem:[#allocation0]]
  $region62: #{tpu_custom_call.1} parent=0
    _
  %s10 = ssub.s32 1, %s8
  %s11 = scalar_select 0, %s10, %s8
  $region1: #{tpu_custom_call.1} parent=0
    #allocation3 [shape = 'u8[65536]{0}', space=vmem, size = 0x10000, scoped, tag = 'input window, operand 0, single buffered']
    #allocation4 [shape = 's32[1]{0}', space=sflag, size = 0x4, scoped, tag = 'scoped memory for tpu_custom_call.1']
    #allocation5 [shape = 'u8[2048]{0}', space=vmem, size = 0x800, scoped, tag = 'input window, operand 1, single buffered']
    #allocation6 [shape = 's32[1]{0}', space=sflag, size = 0x4, scoped, tag = 'scoped memory for tpu_custom_call.1']
    #allocation7 [shape = 'u8[786432]{0}', space=vmem, size = 0xc0000, scoped, tag = 'input window, operand 2, single buffered']
    #allocation8 [shape = 'u8[786432]{0}', space=vmem, size = 0xc0000, scoped, tag = 'input window, operand 3, single buffered']
    #allocation9 [shape = 's32[1]{0}', space=sflag, size = 0x4, scoped, tag = 'scoped memory for tpu_custom_call.1']
    #allocation10 [shape = 'u8[12288]{0}', space=vmem, size = 0x3000, scoped, tag = 'input window, operand 4, single buffered']
    #allocation11 [shape = 'u8[262144]{0}', space=vmem, size = 0x40000, scoped, tag = 'input window, operand 5, single buffered']
    #allocation12 [shape = 's32[1]{0}', space=sflag, size = 0x4, scoped, tag = 'scoped memory for tpu_custom_call.1']
    %12 = vsyncpa [#allocation4], 0
    %13 = vsyncpa [#allocation6], 0
    %14 = vsyncpa [#allocation9], 0
    %15 = vsyncpa [#allocation12], 0
    // Predicated region
    $region2: #{tpu_custom_call.1} parent=1 // pred_check
      _
    $region3: #{tpu_custom_call.1} parent=1 // pred_check_branch
      %17 = sbr.rel (0) target = $region5
    $region4: #{tpu_custom_call.1} parent=1 // pred_region
      %s19 = ssub.s32 2048, 2048
      %20 = vsyncadd [#allocation4], %s19
      %s21 = sshll.u32 [#allocation3], 4
      %s22 = int_to_ptr.vmem [resolvable:$true] %s21
      %27 = dma.hbm_to_vmem [thread:$0]  %s0, 2048, %s22, [#allocation4], 256, 256, 16
    $region5: #{tpu_custom_call.1} parent=1 // pred_fallthru
      _
    // Predicated region
    $region6: #{tpu_custom_call.1} parent=1 // pred_check
      _
    $region7: #{tpu_custom_call.1} parent=1 // pred_check_branch
      %29 = sbr.rel (0) target = $region9
    $region8: #{tpu_custom_call.1} parent=1 // pred_region
      %s31 = ssub.s32 64, 64
      %32 = vsyncadd [#allocation6], %s31
      %s34 = sshll.u32 [#allocation5], 4
      %s35 = int_to_ptr.vmem [resolvable:$true] %s34
      %37 = dma.hbm_to_vmem [thread:$0]  %s1, 64, %s35, [#allocation6]
    $region9: #{tpu_custom_call.1} parent=1 // pred_fallthru
      _
    // Predicated region
    $region10: #{tpu_custom_call.1} parent=1 // pred_check
      _
    $region11: #{tpu_custom_call.1} parent=1 // pred_check_branch
      %39 = sbr.rel (0) target = $region13
    $region12: #{tpu_custom_call.1} parent=1 // pred_region
      %s41 = ssub.s32 24576, 24576
      %42 = vsyncadd [#allocation6], %s41
      %s43 = sshll.u32 [#allocation7], 4
      %s44 = int_to_ptr.vmem [resolvable:$true] %s43
      %49 = dma.hbm_to_vmem [thread:$0]  %s2, 24576, %s44, [#allocation6], 384, 384, 24
    $region13: #{tpu_custom_call.1} parent=1 // pred_fallthru
      _
    // Predicated region
    $region14: #{tpu_custom_call.1} parent=1 // pred_check
      _
    $region15: #{tpu_custom_call.1} parent=1 // pred_check_branch
      %51 = sbr.rel (0) target = $region17
    $region16: #{tpu_custom_call.1} parent=1 // pred_region
      %s53 = ssub.s32 24576, 24576
      %54 = vsyncadd [#allocation9], %s53
      %s55 = sshll.u32 [#allocation8], 4
      %s56 = int_to_ptr.vmem [resolvable:$true] %s55
      %61 = dma.hbm_to_vmem [thread:$0]  %s3, 24576, %s56, [#allocation9], 384, 384, 24
    $region17: #{tpu_custom_call.1} parent=1 // pred_fallthru
      _
    // Predicated region
    $region18: #{tpu_custom_call.1} parent=1 // pred_check
      _
    $region19: #{tpu_custom_call.1} parent=1 // pred_check_branch
      %63 = sbr.rel (0) target = $region21
    $region20: #{tpu_custom_call.1} parent=1 // pred_region
      %s65 = ssub.s32 384, 384
      %66 = vsyncadd [#allocation9], %s65
      %s68 = sshll.u32 [#allocation10], 4
      %s69 = int_to_ptr.vmem [resolvable:$true] %s68
      %71 = dma.hbm_to_vmem [thread:$0]  %s4, 384, %s69, [#allocation9]
    $region21: #{tpu_custom_call.1} parent=1 // pred_fallthru
      _
    // Predicated region
    $region22: #{tpu_custom_call.1} parent=1 // pred_check
      _
    $region23: #{tpu_custom_call.1} parent=1 // pred_check_branch
      %73 = sbr.rel (0) target = $region25
    $region24: #{tpu_custom_call.1} parent=1 // pred_region
      %s75 = ssub.s32 8192, 8192
      %76 = vsyncadd [#allocation12], %s75
      %s77 = sshll.u32 [#allocation11], 4
      %s78 = int_to_ptr.vmem [resolvable:$true] %s77
      %83 = dma.hbm_to_vmem [thread:$0]  %s5, 8192, %s78, [#allocation12], 128, 128, 8
    $region25: #{tpu_custom_call.1} parent=1 // pred_fallthru
      _
    // Predicated region
    $region26: #{tpu_custom_call.1} parent=1 // pred_check
      _
    $region27: #{tpu_custom_call.1} parent=1 // pred_check_branch
      %85 = sbr.rel (0) target = $region29
    $region28: #{tpu_custom_call.1} parent=1 // pred_region
      _
    $region29: #{tpu_custom_call.1} parent=1 // pred_fallthru
      _
    // Predicated region
    $region30: #{tpu_custom_call.1} parent=1 // pred_check
      _
    $region31: #{tpu_custom_call.1} parent=1 // pred_check_branch
      %87 = sbr.rel (0) target = $region33
    $region32: #{tpu_custom_call.1} parent=1 // pred_region
      %88 = dma.done [#allocation4], 2048
    $region33: #{tpu_custom_call.1} parent=1 // pred_fallthru
      _
    // Predicated region
    $region34: #{tpu_custom_call.1} parent=1 // pred_check
      _
    $region35: #{tpu_custom_call.1} parent=1 // pred_check_branch
      %90 = sbr.rel (0) target = $region37
    $region36: #{tpu_custom_call.1} parent=1 // pred_region
      %91 = dma.done [#allocation6], 64
    $region37: #{tpu_custom_call.1} parent=1 // pred_fallthru
      _
    // Predicated region
    $region38: #{tpu_custom_call.1} parent=1 // pred_check
      _
    $region39: #{tpu_custom_call.1} parent=1 // pred_check_branch
      %93 = sbr.rel (0) target = $region41
    $region40: #{tpu_custom_call.1} parent=1 // pred_region
      %94 = dma.done [#allocation6], 24576
    $region41: #{tpu_custom_call.1} parent=1 // pred_fallthru
      _
    // Predicated region
    $region42: #{tpu_custom_call.1} parent=1 // pred_check
      _
    $region43: #{tpu_custom_call.1} parent=1 // pred_check_branch
      %96 = sbr.rel (0) target = $region45
    $region44: #{tpu_custom_call.1} parent=1 // pred_region
      %97 = dma.done [#allocation9], 24576
    $region45: #{tpu_custom_call.1} parent=1 // pred_fallthru
      _
    // Predicated region
    $region46: #{tpu_custom_call.1} parent=1 // pred_check
      _
    $region47: #{tpu_custom_call.1} parent=1 // pred_check_branch
      %99 = sbr.rel (0) target = $region49
    $region48: #{tpu_custom_call.1} parent=1 // pred_region
      %100 = dma.done [#allocation9], 384
    $region49: #{tpu_custom_call.1} parent=1 // pred_fallthru
      _
    // Predicated region
    $region50: #{tpu_custom_call.1} parent=1 // pred_check
      _
    $region51: #{tpu_custom_call.1} parent=1 // pred_check_branch
      %102 = sbr.rel (0) target = $region53
    $region52: #{tpu_custom_call.1} parent=1 // pred_region
      %103 = dma.done [#allocation12], 8192
    $region53: #{tpu_custom_call.1} parent=1 // pred_fallthru
      _
    %v105 = vld [vmem:[#allocation3] sm:$0xff]
    %v106 = vld [vmem:[#allocation3 + $0x8] sm:$0xff]
    %v107 = vld [vmem:[#allocation3 + $0x10] sm:$0xff]
    %v108 = vld [vmem:[#allocation3 + $0x18] sm:$0xff]
    %v109 = vld [vmem:[#allocation3 + $0x20] sm:$0xff]
    %v110 = vld [vmem:[#allocation3 + $0x28] sm:$0xff]
    %v111 = vld [vmem:[#allocation3 + $0x30] sm:$0xff]
    %v112 = vld [vmem:[#allocation3 + $0x38] sm:$0xff]
    %v113 = vld [vmem:[#allocation3 + $0x40] sm:$0xff]
    %v114 = vld [vmem:[#allocation3 + $0x48] sm:$0xff]
    %v115 = vld [vmem:[#allocation3 + $0x50] sm:$0xff]
    %v116 = vld [vmem:[#allocation3 + $0x58] sm:$0xff]
    %v117 = vld [vmem:[#allocation3 + $0x60] sm:$0xff]
    %v118 = vld [vmem:[#allocation3 + $0x68] sm:$0xff]
    %v119 = vld [vmem:[#allocation3 + $0x70] sm:$0xff]
    %v120 = vld [vmem:[#allocation3 + $0x78] sm:$0xff]
    %v121 = vadd.f32 %v105, %v106
    %122 = vadd.xlane.f32.xlu0 %v121
    %v123 = vpop.xlane.xlu0 %122
    %v124 = vadd.f32 %v107, %v108
    %125 = vadd.xlane.f32.xlu0 %v124
    %v126 = vpop.xlane.xlu0 %125
    %v127 = vadd.f32 %v109, %v110
    %128 = vadd.xlane.f32.xlu0 %v127
    %v129 = vpop.xlane.xlu0 %128
    %v130 = vadd.f32 %v111, %v112
    %131 = vadd.xlane.f32.xlu0 %v130
    %v132 = vpop.xlane.xlu0 %131
    %v133 = vadd.f32 %v113, %v114
    %134 = vadd.xlane.f32.xlu0 %v133
    %v135 = vpop.xlane.xlu0 %134
    %v136 = vadd.f32 %v115, %v116
    %137 = vadd.xlane.f32.xlu0 %v136
    %v138 = vpop.xlane.xlu0 %137
    %v139 = vadd.f32 %v117, %v118
    %140 = vadd.xlane.f32.xlu0 %v139
    %v141 = vpop.xlane.xlu0 %140
    %v142 = vadd.f32 %v119, %v120
    %143 = vadd.xlane.f32.xlu0 %v142
    %v144 = vpop.xlane.xlu0 %143
    %v145 = vrcp.pop 256.0
    %v146 = vmul.f32 %v123, %v145
    %v147 = vmul.f32 %v126, %v145
    %v148 = vmul.f32 %v129, %v145
    %v149 = vmul.f32 %v132, %v145
    %v150 = vmul.f32 %v135, %v145
    %v151 = vmul.f32 %v138, %v145
    %v152 = vmul.f32 %v141, %v145
    %v153 = vmul.f32 %v144, %v145
    %v154 = vmul.f32 %v105, %v105
    %v155 = vmul.f32 %v106, %v106
    %v156 = vmul.f32 %v107, %v107
    %v157 = vmul.f32 %v108, %v108
    %v158 = vmul.f32 %v109, %v109
    %v159 = vmul.f32 %v110, %v110
    %v160 = vmul.f32 %v111, %v111
    %v161 = vmul.f32 %v112, %v112
    %v162 = vmul.f32 %v113, %v113
    %v163 = vmul.f32 %v114, %v114
    %v164 = vmul.f32 %v115, %v115
    %v165 = vmul.f32 %v116, %v116
    %v166 = vmul.f32 %v117, %v117
    %v167 = vmul.f32 %v118, %v118
    %v168 = vmul.f32 %v119, %v119
    %v169 = vmul.f32 %v120, %v120
    %v170 = vadd.f32 %v154, %v155
    %171 = vadd.xlane.f32.xlu0 %v170
    %v172 = vpop.xlane.xlu0 %171
    %v173 = vadd.f32 %v156, %v157
    %174 = vadd.xlane.f32.xlu0 %v173
    %v175 = vpop.xlane.xlu0 %174
    %v176 = vadd.f32 %v158, %v159
    %177 = vadd.xlane.f32.xlu0 %v176
    %v178 = vpop.xlane.xlu0 %177
    %v179 = vadd.f32 %v160, %v161
    %180 = vadd.xlane.f32.xlu0 %v179
    %v181 = vpop.xlane.xlu0 %180
    %v182 = vadd.f32 %v162, %v163
    %183 = vadd.xlane.f32.xlu0 %v182
    %v184 = vpop.xlane.xlu0 %183
    %v185 = vadd.f32 %v164, %v165
    %186 = vadd.xlane.f32.xlu0 %v185
    %v187 = vpop.xlane.xlu0 %186
    %v188 = vadd.f32 %v166, %v167
    %189 = vadd.xlane.f32.xlu0 %v188
    %v190 = vpop.xlane.xlu0 %189
    %v191 = vadd.f32 %v168, %v169
    %192 = vadd.xlane.f32.xlu0 %v191
    %v193 = vpop.xlane.xlu0 %192
    %v194 = vmul.f32 %v172, %v145
    %v195 = vmul.f32 %v175, %v145
    %v196 = vmul.f32 %v178, %v145
    %v197 = vmul.f32 %v181, %v145
    %v198 = vmul.f32 %v184, %v145
    %v199 = vmul.f32 %v187, %v145
    %v200 = vmul.f32 %v190, %v145
    %v201 = vmul.f32 %v193, %v145
    %v202 = vmul.f32 %v146, %v146
    %v203 = vmul.f32 %v147, %v147
    %v204 = vmul.f32 %v148, %v148
    %v205 = vmul.f32 %v149, %v149
    %v206 = vmul.f32 %v150, %v150
    %v207 = vmul.f32 %v151, %v151
    %v208 = vmul.f32 %v152, %v152
    %v209 = vmul.f32 %v153, %v153
    %v210 = vsub.f32 %v194, %v202
    %v211 = vsub.f32 %v195, %v203
    %v212 = vsub.f32 %v196, %v204
    %v213 = vsub.f32 %v197, %v205
    %v214 = vsub.f32 %v198, %v206
    %v215 = vsub.f32 %v199, %v207
    %v216 = vsub.f32 %v200, %v208
    %v217 = vsub.f32 %v201, %v209
    %v218 = vsub.f32 %v105, %v146
    %v219 = vsub.f32 %v106, %v146
    %v220 = vsub.f32 %v107, %v147
    %v221 = vsub.f32 %v108, %v147
    %v222 = vsub.f32 %v109, %v148
    %v223 = vsub.f32 %v110, %v148
    %v224 = vsub.f32 %v111, %v149
    %v225 = vsub.f32 %v112, %v149
    %v226 = vsub.f32 %v113, %v150
    %v227 = vsub.f32 %v114, %v150
    %v228 = vsub.f32 %v115, %v151
    %v229 = vsub.f32 %v116, %v151
    %v230 = vsub.f32 %v117, %v152
    %v231 = vsub.f32 %v118, %v152
    %v232 = vsub.f32 %v119, %v153
    %v233 = vsub.f32 %v120, %v153
    %v234 = vadd.f32 %v210, 1e-05
    %v235 = vadd.f32 %v211, 1e-05
    %v236 = vadd.f32 %v212, 1e-05
    %v237 = vadd.f32 %v213, 1e-05
    %v238 = vadd.f32 %v214, 1e-05
    %v239 = vadd.f32 %v215, 1e-05
    %v240 = vadd.f32 %v216, 1e-05
    %v241 = vadd.f32 %v217, 1e-05
    %v242 = vrsqrt.pop %v234
    %v243 = vrsqrt.pop %v235
    %v244 = vrsqrt.pop %v236
    %v245 = vrsqrt.pop %v237
    %v246 = vrsqrt.pop %v238
    %v247 = vrsqrt.pop %v239
    %v248 = vrsqrt.pop %v240
    %v249 = vrsqrt.pop %v241
    %v250 = vmul.f32 %v218, %v242
    %v251 = vmul.f32 %v219, %v242
    %v252 = vmul.f32 %v220, %v243
    %v253 = vmul.f32 %v221, %v243
    %v254 = vmul.f32 %v222, %v244
    %v255 = vmul.f32 %v223, %v244
    %v256 = vmul.f32 %v224, %v245
    %v257 = vmul.f32 %v225, %v245
    %v258 = vmul.f32 %v226, %v246
    %v259 = vmul.f32 %v227, %v246
    %v260 = vmul.f32 %v228, %v247
    %v261 = vmul.f32 %v229, %v247
    %v262 = vmul.f32 %v230, %v248
    %v263 = vmul.f32 %v231, %v248
    %v264 = vmul.f32 %v232, %v249
    %v265 = vmul.f32 %v233, %v249
    %v266 = vld [vmem:[#allocation5] ss:$2 sm:$0x3]
    %v268 = vlaneseq
    %v269 = vshrl.u32 %v268, 7
    %v270 = vsub.s32 0, %v269
    %v271 = vrot.slane %v266, %v270
    %v272 = vlaneseq
    %v273 = vshrl.u32 %v272, 7
    %v274 = vsub.s32 1, %v273
    %v275 = vrot.slane %v266, %v274
    %v278 = vmul.f32 %v250, %v271
    %v279 = vmul.f32 %v251, %v275
    %v280 = vmul.f32 %v252, %v271
    %v281 = vmul.f32 %v253, %v275
    %v282 = vmul.f32 %v254, %v271
    %v283 = vmul.f32 %v255, %v275
    %v284 = vmul.f32 %v256, %v271
    %v285 = vmul.f32 %v257, %v275
    %v286 = vmul.f32 %v258, %v271
    %v287 = vmul.f32 %v259, %v275
    %v288 = vmul.f32 %v260, %v271
    %v289 = vmul.f32 %v261, %v275
    %v290 = vmul.f32 %v262, %v271
    %v291 = vmul.f32 %v263, %v275
    %v292 = vmul.f32 %v264, %v271
    %v293 = vmul.f32 %v265, %v275
    %s294 = scalar_lea.vmem [#allocation5], 1
    %v295 = vld [vmem:[%s294] ss:$2 sm:$0x3]
    %v297 = vlaneseq
    %v298 = vshrl.u32 %v297, 7
    %v299 = vsub.s32 0, %v298
    %v300 = vrot.slane %v295, %v299
    %v301 = vlaneseq
    %v302 = vshrl.u32 %v301, 7
    %v303 = vsub.s32 1, %v302
    %v304 = vrot.slane %v295, %v303
    %v307 = vadd.f32 %v278, %v300
    %v308 = vadd.f32 %v279, %v304
    %v309 = vadd.f32 %v280, %v300
    %v310 = vadd.f32 %v281, %v304
    %v311 = vadd.f32 %v282, %v300
    %v312 = vadd.f32 %v283, %v304
    %v313 = vadd.f32 %v284, %v300
    %v314 = vadd.f32 %v285, %v304
    %v315 = vadd.f32 %v286, %v300
    %v316 = vadd.f32 %v287, %v304
    %v317 = vadd.f32 %v288, %v300
    %v318 = vadd.f32 %v289, %v304
    %v319 = vadd.f32 %v290, %v300
    %v320 = vadd.f32 %v291, %v304
    %v321 = vadd.f32 %v292, %v300
    %v322 = vadd.f32 %v293, %v304
    %v323 = vpack.c.bf16 %v309, %v307
    %v324 = vpack.c.bf16 %v310, %v308
    %v325 = vpack.c.bf16 %v313, %v311
    %v326 = vpack.c.bf16 %v314, %v312
    %v327 = vpack.c.bf16 %v317, %v315
    %v328 = vpack.c.bf16 %v318, %v316
    %v329 = vpack.c.bf16 %v321, %v319
    %v330 = vpack.c.bf16 %v322, %v320
    %v331 = vld [vmem:[#allocation7] sm:$0xff]
    %v332 = vld [vmem:[#allocation7 + $0x8] sm:$0xff]
    %v333 = vld [vmem:[#allocation7 + $0x10] sm:$0xff]
    %v334 = vld [vmem:[#allocation7 + $0x18] sm:$0xff]
    %v335 = vld [vmem:[#allocation7 + $0x20] sm:$0xff]
    %v336 = vld [vmem:[#allocation7 + $0x28] sm:$0xff]
    %v337 = vld [vmem:[#allocation7 + $0x30] sm:$0xff]
    %v338 = vld [vmem:[#allocation7 + $0x38] sm:$0xff]
    %v339 = vld [vmem:[#allocation7 + $0x40] sm:$0xff]
    %v340 = vld [vmem:[#allocation7 + $0x48] sm:$0xff]
    %v341 = vld [vmem:[#allocation7 + $0x50] sm:$0xff]
    %v342 = vld [vmem:[#allocation7 + $0x58] sm:$0xff]
    %v343 = vld [vmem:[#allocation7 + $0x60] sm:$0xff]
    %v344 = vld [vmem:[#allocation7 + $0x68] sm:$0xff]
    %v345 = vld [vmem:[#allocation7 + $0x70] sm:$0xff]
    %v346 = vld [vmem:[#allocation7 + $0x78] sm:$0xff]
    %v347 = vld [vmem:[#allocation7 + $0x80] sm:$0xff]
    %v348 = vld [vmem:[#allocation7 + $0x88] sm:$0xff]
    %v349 = vld [vmem:[#allocation7 + $0x90] sm:$0xff]
    %v350 = vld [vmem:[#allocation7 + $0x98] sm:$0xff]
    %v351 = vld [vmem:[#allocation7 + $0xa0] sm:$0xff]
    %v352 = vld [vmem:[#allocation7 + $0xa8] sm:$0xff]
    %v353 = vld [vmem:[#allocation7 + $0xb0] sm:$0xff]
    %v354 = vld [vmem:[#allocation7 + $0xb8] sm:$0xff]
    %v355 = vld [vmem:[#allocation7 + $0xc0] sm:$0xff]
    %v356 = vld [vmem:[#allocation7 + $0xc8] sm:$0xff]
    %v357 = vld [vmem:[#allocation7 + $0xd0] sm:$0xff]
    %v358 = vld [vmem:[#allocation7 + $0xd8] sm:$0xff]
    %v359 = vld [vmem:[#allocation7 + $0xe0] sm:$0xff]
    %v360 = vld [vmem:[#allocation7 + $0xe8] sm:$0xff]
    %v361 = vld [vmem:[#allocation7 + $0xf0] sm:$0xff]
    %v362 = vld [vmem:[#allocation7 + $0xf8] sm:$0xff]
    %v363 = vld [vmem:[#allocation7 + $0x100] sm:$0xff]
    %v364 = vld [vmem:[#allocation7 + $0x108] sm:$0xff]
    %v365 = vld [vmem:[#allocation7 + $0x110] sm:$0xff]
    %v366 = vld [vmem:[#allocation7 + $0x118] sm:$0xff]
    %v367 = vld [vmem:[#allocation7 + $0x120] sm:$0xff]
    %v368 = vld [vmem:[#allocation7 + $0x128] sm:$0xff]
    %v369 = vld [vmem:[#allocation7 + $0x130] sm:$0xff]
    %v370 = vld [vmem:[#allocation7 + $0x138] sm:$0xff]
    %v371 = vld [vmem:[#allocation7 + $0x140] sm:$0xff]
    %v372 = vld [vmem:[#allocation7 + $0x148] sm:$0xff]
    %v373 = vld [vmem:[#allocation7 + $0x150] sm:$0xff]
    %v374 = vld [vmem:[#allocation7 + $0x158] sm:$0xff]
    %v375 = vld [vmem:[#allocation7 + $0x160] sm:$0xff]
    %v376 = vld [vmem:[#allocation7 + $0x168] sm:$0xff]
    %v377 = vld [vmem:[#allocation7 + $0x170] sm:$0xff]
    %v378 = vld [vmem:[#allocation7 + $0x178] sm:$0xff]
    %v379 = vld [vmem:[#allocation7 + $0x180] sm:$0xff]
    %v380 = vld [vmem:[#allocation7 + $0x188] sm:$0xff]
    %v381 = vld [vmem:[#allocation7 + $0x190] sm:$0xff]
    %v382 = vld [vmem:[#allocation7 + $0x198] sm:$0xff]
    %v383 = vld [vmem:[#allocation7 + $0x1a0] sm:$0xff]
    %v384 = vld [vmem:[#allocation7 + $0x1a8] sm:$0xff]
    %v385 = vld [vmem:[#allocation7 + $0x1b0] sm:$0xff]
    %v386 = vld [vmem:[#allocation7 + $0x1b8] sm:$0xff]
    %v387 = vld [vmem:[#allocation7 + $0x1c0] sm:$0xff]
    %v388 = vld [vmem:[#allocation7 + $0x1c8] sm:$0xff]
    %v389 = vld [vmem:[#allocation7 + $0x1d0] sm:$0xff]
    %v390 = vld [vmem:[#allocation7 + $0x1d8] sm:$0xff]
    %v391 = vld [vmem:[#allocation7 + $0x1e0] sm:$0xff]
    %v392 = vld [vmem:[#allocation7 + $0x1e8] sm:$0xff]
    %v393 = vld [vmem:[#allocation7 + $0x1f0] sm:$0xff]
    %v394 = vld [vmem:[#allocation7 + $0x1f8] sm:$0xff]
    %v395 = vld [vmem:[#allocation7 + $0x200] sm:$0xff]
    %v396 = vld [vmem:[#allocation7 + $0x208] sm:$0xff]
    %v397 = vld [vmem:[#allocation7 + $0x210] sm:$0xff]
    %v398 = vld [vmem:[#allocation7 + $0x218] sm:$0xff]
    %v399 = vld [vmem:[#allocation7 + $0x220] sm:$0xff]
    %v400 = vld [vmem:[#allocation7 + $0x228] sm:$0xff]
    %v401 = vld [vmem:[#allocation7 + $0x230] sm:$0xff]
    %v402 = vld [vmem:[#allocation7 + $0x238] sm:$0xff]
    %v403 = vld [vmem:[#allocation7 + $0x240] sm:$0xff]
    %v404 = vld [vmem:[#allocation7 + $0x248] sm:$0xff]
    %v405 = vld [vmem:[#allocation7 + $0x250] sm:$0xff]
    %v406 = vld [vmem:[#allocation7 + $0x258] sm:$0xff]
    %v407 = vld [vmem:[#allocation7 + $0x260] sm:$0xff]
    %v408 = vld [vmem:[#allocation7 + $0x268] sm:$0xff]
    %v409 = vld [vmem:[#allocation7 + $0x270] sm:$0xff]
    %v410 = vld [vmem:[#allocation7 + $0x278] sm:$0xff]
    %v411 = vld [vmem:[#allocation7 + $0x280] sm:$0xff]
    %v412 = vld [vmem:[#allocation7 + $0x288] sm:$0xff]
    %v413 = vld [vmem:[#allocation7 + $0x290] sm:$0xff]
    %v414 = vld [vmem:[#allocation7 + $0x298] sm:$0xff]
    %v415 = vld [vmem:[#allocation7 + $0x2a0] sm:$0xff]
    %v416 = vld [vmem:[#allocation7 + $0x2a8] sm:$0xff]
    %v417 = vld [vmem:[#allocation7 + $0x2b0] sm:$0xff]
    %v418 = vld [vmem:[#allocation7 + $0x2b8] sm:$0xff]
    %v419 = vld [vmem:[#allocation7 + $0x2c0] sm:$0xff]
    %v420 = vld [vmem:[#allocation7 + $0x2c8] sm:$0xff]
    %v421 = vld [vmem:[#allocation7 + $0x2d0] sm:$0xff]
    %v422 = vld [vmem:[#allocation7 + $0x2d8] sm:$0xff]
    %v423 = vld [vmem:[#allocation7 + $0x2e0] sm:$0xff]
    %v424 = vld [vmem:[#allocation7 + $0x2e8] sm:$0xff]
    %v425 = vld [vmem:[#allocation7 + $0x2f0] sm:$0xff]
    %v426 = vld [vmem:[#allocation7 + $0x2f8] sm:$0xff]
    %v427 = vld [vmem:[#allocation10] ss:$4 sm:$0x3f]
    %v429 = vlaneseq
    %v430 = vshrl.u32 %v429, 7
    %v431 = vsub.s32 0, %v430
    %v432 = vrot.slane %v427, %v431
    %v433 = vlaneseq
    %v434 = vshrl.u32 %v433, 7
    %v435 = vsub.s32 1, %v434
    %v436 = vrot.slane %v427, %v435
    %v437 = vlaneseq
    %v438 = vshrl.u32 %v437, 7
    %v439 = vsub.s32 2, %v438
    %v440 = vrot.slane %v427, %v439
    %v441 = vlaneseq
    %v442 = vshrl.u32 %v441, 7
    %v443 = vsub.s32 3, %v442
    %v444 = vrot.slane %v427, %v443
    %v445 = vlaneseq
    %v446 = vshrl.u32 %v445, 7
    %v447 = vsub.s32 4, %v446
    %v448 = vrot.slane %v427, %v447
    %v449 = vlaneseq
    %v450 = vshrl.u32 %v449, 7
    %v451 = vsub.s32 5, %v450
    %v452 = vrot.slane %v427, %v451
    %v555 = vunpack.c.l.b16 %v331
    %v556 = vunpack.c.h.b16 %v331
    %v557 = vunpack.c.l.b16 %v332
    %v558 = vunpack.c.h.b16 %v332
    %v559 = vunpack.c.l.b16 %v333
    %v560 = vunpack.c.h.b16 %v333
    %v561 = vunpack.c.l.b16 %v334
    %v562 = vunpack.c.h.b16 %v334
    %v563 = vunpack.c.l.b16 %v335
    %v564 = vunpack.c.h.b16 %v335
    %v565 = vunpack.c.l.b16 %v336
    %v566 = vunpack.c.h.b16 %v336
    %v567 = vunpack.c.l.b16 %v337
    %v568 = vunpack.c.h.b16 %v337
    %v569 = vunpack.c.l.b16 %v338
    %v570 = vunpack.c.h.b16 %v338
    %v571 = vunpack.c.l.b16 %v339
    %v572 = vunpack.c.h.b16 %v339
    %v573 = vunpack.c.l.b16 %v340
    %v574 = vunpack.c.h.b16 %v340
    %v575 = vunpack.c.l.b16 %v341
    %v576 = vunpack.c.h.b16 %v341
    %v577 = vunpack.c.l.b16 %v342
    %v578 = vunpack.c.h.b16 %v342
    %v579 = vunpack.c.l.b16 %v343
    %v580 = vunpack.c.h.b16 %v343
    %v581 = vunpack.c.l.b16 %v344
    %v582 = vunpack.c.h.b16 %v344
    %v583 = vunpack.c.l.b16 %v345
    %v584 = vunpack.c.h.b16 %v345
    %v585 = vunpack.c.l.b16 %v346
    %v586 = vunpack.c.h.b16 %v346
    %v587 = vunpack.c.l.b16 %v347
    %v588 = vunpack.c.h.b16 %v347
    %v589 = vunpack.c.l.b16 %v348
    %v590 = vunpack.c.h.b16 %v348
    %v591 = vunpack.c.l.b16 %v349
    %v592 = vunpack.c.h.b16 %v349
    %v593 = vunpack.c.l.b16 %v350
    %v594 = vunpack.c.h.b16 %v350
    %v595 = vunpack.c.l.b16 %v351
    %v596 = vunpack.c.h.b16 %v351
    %v597 = vunpack.c.l.b16 %v352
    %v598 = vunpack.c.h.b16 %v352
    %v599 = vunpack.c.l.b16 %v353
    %v600 = vunpack.c.h.b16 %v353
    %v601 = vunpack.c.l.b16 %v354
    %v602 = vunpack.c.h.b16 %v354
    %v603 = vunpack.c.l.b16 %v355
    %v604 = vunpack.c.h.b16 %v355
    %v605 = vunpack.c.l.b16 %v356
    %v606 = vunpack.c.h.b16 %v356
    %v607 = vunpack.c.l.b16 %v357
    %v608 = vunpack.c.h.b16 %v357
    %v609 = vunpack.c.l.b16 %v358
    %v610 = vunpack.c.h.b16 %v358
    %v611 = vunpack.c.l.b16 %v359
    %v612 = vunpack.c.h.b16 %v359
    %v613 = vunpack.c.l.b16 %v360
    %v614 = vunpack.c.h.b16 %v360
    %v615 = vunpack.c.l.b16 %v361
    %v616 = vunpack.c.h.b16 %v361
    %v617 = vunpack.c.l.b16 %v362
    %v618 = vunpack.c.h.b16 %v362
    %v619 = vunpack.c.l.b16 %v363
    %v620 = vunpack.c.h.b16 %v363
    %v621 = vunpack.c.l.b16 %v364
    %v622 = vunpack.c.h.b16 %v364
    %v623 = vunpack.c.l.b16 %v365
    %v624 = vunpack.c.h.b16 %v365
    %v625 = vunpack.c.l.b16 %v366
    %v626 = vunpack.c.h.b16 %v366
    %v627 = vunpack.c.l.b16 %v367
    %v628 = vunpack.c.h.b16 %v367
    %v629 = vunpack.c.l.b16 %v368
    %v630 = vunpack.c.h.b16 %v368
    %v631 = vunpack.c.l.b16 %v369
    %v632 = vunpack.c.h.b16 %v369
    %v633 = vunpack.c.l.b16 %v370
    %v634 = vunpack.c.h.b16 %v370
    %v635 = vunpack.c.l.b16 %v371
    %v636 = vunpack.c.h.b16 %v371
    %v637 = vunpack.c.l.b16 %v372
    %v638 = vunpack.c.h.b16 %v372
    %v639 = vunpack.c.l.b16 %v373
    %v640 = vunpack.c.h.b16 %v373
    %v641 = vunpack.c.l.b16 %v374
    %v642 = vunpack.c.h.b16 %v374
    %v643 = vunpack.c.l.b16 %v375
    %v644 = vunpack.c.h.b16 %v375
    %v645 = vunpack.c.l.b16 %v376
    %v646 = vunpack.c.h.b16 %v376
    %v647 = vunpack.c.l.b16 %v377
    %v648 = vunpack.c.h.b16 %v377
    %v649 = vunpack.c.l.b16 %v378
    %v650 = vunpack.c.h.b16 %v378
    %v651 = vunpack.c.l.b16 %v379
    %v652 = vunpack.c.h.b16 %v379
    %v653 = vunpack.c.l.b16 %v380
    %v654 = vunpack.c.h.b16 %v380
    %v655 = vunpack.c.l.b16 %v381
    %v656 = vunpack.c.h.b16 %v381
    %v657 = vunpack.c.l.b16 %v382
    %v658 = vunpack.c.h.b16 %v382
    %v659 = vunpack.c.l.b16 %v383
    %v660 = vunpack.c.h.b16 %v383
    %v661 = vunpack.c.l.b16 %v384
    %v662 = vunpack.c.h.b16 %v384
    %v663 = vunpack.c.l.b16 %v385
    %v664 = vunpack.c.h.b16 %v385
    %v665 = vunpack.c.l.b16 %v386
    %v666 = vunpack.c.h.b16 %v386
    %v667 = vunpack.c.l.b16 %v387
    %v668 = vunpack.c.h.b16 %v387
    %v669 = vunpack.c.l.b16 %v388
    %v670 = vunpack.c.h.b16 %v388
    %v671 = vunpack.c.l.b16 %v389
    %v672 = vunpack.c.h.b16 %v389
    %v673 = vunpack.c.l.b16 %v390
    %v674 = vunpack.c.h.b16 %v390
    %v675 = vunpack.c.l.b16 %v391
    %v676 = vunpack.c.h.b16 %v391
    %v677 = vunpack.c.l.b16 %v392
    %v678 = vunpack.c.h.b16 %v392
    %v679 = vunpack.c.l.b16 %v393
    %v680 = vunpack.c.h.b16 %v393
    %v681 = vunpack.c.l.b16 %v394
    %v682 = vunpack.c.h.b16 %v394
    %v683 = vunpack.c.l.b16 %v395
    %v684 = vunpack.c.h.b16 %v395
    %v685 = vunpack.c.l.b16 %v396
    %v686 = vunpack.c.h.b16 %v396
    %v687 = vunpack.c.l.b16 %v397
    %v688 = vunpack.c.h.b16 %v397
    %v689 = vunpack.c.l.b16 %v398
    %v690 = vunpack.c.h.b16 %v398
    %v691 = vunpack.c.l.b16 %v399
    %v692 = vunpack.c.h.b16 %v399
    %v693 = vunpack.c.l.b16 %v400
    %v694 = vunpack.c.h.b16 %v400
    %v695 = vunpack.c.l.b16 %v401
    %v696 = vunpack.c.h.b16 %v401
    %v697 = vunpack.c.l.b16 %v402
    %v698 = vunpack.c.h.b16 %v402
    %v699 = vunpack.c.l.b16 %v403
    %v700 = vunpack.c.h.b16 %v403
    %v701 = vunpack.c.l.b16 %v404
    %v702 = vunpack.c.h.b16 %v404
    %v703 = vunpack.c.l.b16 %v405
    %v704 = vunpack.c.h.b16 %v405
    %v705 = vunpack.c.l.b16 %v406
    %v706 = vunpack.c.h.b16 %v406
    %v707 = vunpack.c.l.b16 %v407
    %v708 = vunpack.c.h.b16 %v407
    %v709 = vunpack.c.l.b16 %v408
    %v710 = vunpack.c.h.b16 %v408
    %v711 = vunpack.c.l.b16 %v409
    %v712 = vunpack.c.h.b16 %v409
    %v713 = vunpack.c.l.b16 %v410
    %v714 = vunpack.c.h.b16 %v410
    %v715 = vunpack.c.l.b16 %v411
    %v716 = vunpack.c.h.b16 %v411
    %v717 = vunpack.c.l.b16 %v412
    %v718 = vunpack.c.h.b16 %v412
    %v719 = vunpack.c.l.b16 %v413
    %v720 = vunpack.c.h.b16 %v413
    %v721 = vunpack.c.l.b16 %v414
    %v722 = vunpack.c.h.b16 %v414
    %v723 = vunpack.c.l.b16 %v415
    %v724 = vunpack.c.h.b16 %v415
    %v725 = vunpack.c.l.b16 %v416
    %v726 = vunpack.c.h.b16 %v416
    %v727 = vunpack.c.l.b16 %v417
    %v728 = vunpack.c.h.b16 %v417
    %v729 = vunpack.c.l.b16 %v418
    %v730 = vunpack.c.h.b16 %v418
    %v731 = vunpack.c.l.b16 %v419
    %v732 = vunpack.c.h.b16 %v419
    %v733 = vunpack.c.l.b16 %v420
    %v734 = vunpack.c.h.b16 %v420
    %v735 = vunpack.c.l.b16 %v421
    %v736 = vunpack.c.h.b16 %v421
    %v737 = vunpack.c.l.b16 %v422
    %v738 = vunpack.c.h.b16 %v422
    %v739 = vunpack.c.l.b16 %v423
    %v740 = vunpack.c.h.b16 %v423
    %v741 = vunpack.c.l.b16 %v424
    %v742 = vunpack.c.h.b16 %v424
    %v743 = vunpack.c.l.b16 %v425
    %v744 = vunpack.c.h.b16 %v425
    %v745 = vunpack.c.l.b16 %v426
    %v746 = vunpack.c.h.b16 %v426
    %v747 = vpack.c.b16 %v561, %v555
    %v748 = vpack.c.b16 %v562, %v556
    %v749 = vpack.c.b16 %v563, %v557
    %v750 = vpack.c.b16 %v564, %v558
    %v751 = vpack.c.b16 %v565, %v559
    %v752 = vpack.c.b16 %v566, %v560
    %v753 = vpack.c.b16 %v573, %v567
    %v754 = vpack.c.b16 %v574, %v568
    %v755 = vpack.c.b16 %v575, %v569
    %v756 = vpack.c.b16 %v576, %v570
    %v757 = vpack.c.b16 %v577, %v571
    %v758 = vpack.c.b16 %v578, %v572
    %v759 = vpack.c.b16 %v585, %v579
    %v760 = vpack.c.b16 %v586, %v580
    %v761 = vpack.c.b16 %v587, %v581
    %v762 = vpack.c.b16 %v588, %v582
    %v763 = vpack.c.b16 %v589, %v583
    %v764 = vpack.c.b16 %v590, %v584
    %v765 = vpack.c.b16 %v597, %v591
    %v766 = vpack.c.b16 %v598, %v592
    %v767 = vpack.c.b16 %v599, %v593
    %v768 = vpack.c.b16 %v600, %v594
    %v769 = vpack.c.b16 %v601, %v595
    %v770 = vpack.c.b16 %v602, %v596
    %v771 = vpack.c.b16 %v609, %v603
    %v772 = vpack.c.b16 %v610, %v604
    %v773 = vpack.c.b16 %v611, %v605
    %v774 = vpack.c.b16 %v612, %v606
    %v775 = vpack.c.b16 %v613, %v607
    %v776 = vpack.c.b16 %v614, %v608
    %v777 = vpack.c.b16 %v621, %v615
    %v778 = vpack.c.b16 %v622, %v616
    %v779 = vpack.c.b16 %v623, %v617
    %v780 = vpack.c.b16 %v624, %v618
    %v781 = vpack.c.b16 %v625, %v619
    %v782 = vpack.c.b16 %v626, %v620
    %v783 = vpack.c.b16 %v633, %v627
    %v784 = vpack.c.b16 %v634, %v628
    %v785 = vpack.c.b16 %v635, %v629
    %v786 = vpack.c.b16 %v636, %v630
    %v787 = vpack.c.b16 %v637, %v631
    %v788 = vpack.c.b16 %v638, %v632
    %v789 = vpack.c.b16 %v645, %v639
    %v790 = vpack.c.b16 %v646, %v640
    %v791 = vpack.c.b16 %v647, %v641
    %v792 = vpack.c.b16 %v648, %v642
    %v793 = vpack.c.b16 %v649, %v643
    %v794 = vpack.c.b16 %v650, %v644
    %v795 = vpack.c.b16 %v657, %v651
    %v796 = vpack.c.b16 %v658, %v652
    %v797 = vpack.c.b16 %v659, %v653
    %v798 = vpack.c.b16 %v660, %v654
    %v799 = vpack.c.b16 %v661, %v655
    %v800 = vpack.c.b16 %v662, %v656
    %v801 = vpack.c.b16 %v669, %v663
    %v802 = vpack.c.b16 %v670, %v664
    %v803 = vpack.c.b16 %v671, %v665
    %v804 = vpack.c.b16 %v672, %v666
    %v805 = vpack.c.b16 %v673, %v667
    %v806 = vpack.c.b16 %v674, %v668
    %v807 = vpack.c.b16 %v681, %v675
    %v808 = vpack.c.b16 %v682, %v676
    %v809 = vpack.c.b16 %v683, %v677
    %v810 = vpack.c.b16 %v684, %v678
    %v811 = vpack.c.b16 %v685, %v679
    %v812 = vpack.c.b16 %v686, %v680
    %v813 = vpack.c.b16 %v693, %v687
    %v814 = vpack.c.b16 %v694, %v688
    %v815 = vpack.c.b16 %v695, %v689
    %v816 = vpack.c.b16 %v696, %v690
    %v817 = vpack.c.b16 %v697, %v691
    %v818 = vpack.c.b16 %v698, %v692
    %v819 = vpack.c.b16 %v705, %v699
    %v820 = vpack.c.b16 %v706, %v700
    %v821 = vpack.c.b16 %v707, %v701
    %v822 = vpack.c.b16 %v708, %v702
    %v823 = vpack.c.b16 %v709, %v703
    %v824 = vpack.c.b16 %v710, %v704
    %v825 = vpack.c.b16 %v717, %v711
    %v826 = vpack.c.b16 %v718, %v712
    %v827 = vpack.c.b16 %v719, %v713
    %v828 = vpack.c.b16 %v720, %v714
    %v829 = vpack.c.b16 %v721, %v715
    %v830 = vpack.c.b16 %v722, %v716
    %v831 = vpack.c.b16 %v729, %v723
    %v832 = vpack.c.b16 %v730, %v724
    %v833 = vpack.c.b16 %v731, %v725
    %v834 = vpack.c.b16 %v732, %v726
    %v835 = vpack.c.b16 %v733, %v727
    %v836 = vpack.c.b16 %v734, %v728
    %v837 = vpack.c.b16 %v741, %v735
    %v838 = vpack.c.b16 %v742, %v736
    %v839 = vpack.c.b16 %v743, %v737
    %v840 = vpack.c.b16 %v744, %v738
    %v841 = vpack.c.b16 %v745, %v739
    %v842 = vpack.c.b16 %v746, %v740
    %939 = vmatprep.subr.bf16.mxu0 %v748
    %940 = vmatpush1.bf16.msra.mxu0 %v747
    %941 = vmatprep.subr.bf16.mxu0 %v754
    %942 = vmatpush1.bf16.msra.mxu0 %v753
    %943 = vmatprep.subr.bf16.mxu0 %v760
    %944 = vmatpush1.bf16.msra.mxu0 %v759
    %945 = vmatprep.subr.bf16.mxu0 %v766
    %946 = vmatpush1.bf16.msra.mxu0 %v765
    %947 = vmatprep.subr.bf16.mxu0 %v772
    %948 = vmatpush1.bf16.msra.mxu0 %v771
    %949 = vmatprep.subr.bf16.mxu0 %v778
    %950 = vmatpush1.bf16.msra.mxu0 %v777
    %951 = vmatprep.subr.bf16.mxu0 %v784
    %952 = vmatpush1.bf16.msra.mxu0 %v783
    %953 = vmatprep.subr.bf16.mxu0 %v790
    %954 = vmatpush1.bf16.msra.mxu0 %v789
    %955 = vmatprep.subr.bf16.mxu0 %v796
    %956 = vmatpush1.bf16.msra.mxu0 %v795
    %957 = vmatprep.subr.bf16.mxu0 %v802
    %958 = vmatpush1.bf16.msra.mxu0 %v801
    %959 = vmatprep.subr.bf16.mxu0 %v808
    %960 = vmatpush1.bf16.msra.mxu0 %v807
    %961 = vmatprep.subr.bf16.mxu0 %v814
    %962 = vmatpush1.bf16.msra.mxu0 %v813
    %963 = vmatprep.subr.bf16.mxu0 %v820
    %964 = vmatpush1.bf16.msra.mxu0 %v819
    %965 = vmatprep.subr.bf16.mxu0 %v826
    %966 = vmatpush1.bf16.msra.mxu0 %v825
    %967 = vmatprep.subr.bf16.mxu0 %v832
    %968 = vmatpush1.bf16.msra.mxu0 %v831
    %969 = vmatprep.subr.bf16.mxu0 %v838
    %970 = vmatpush1.bf16.msra.mxu0 %v837
    %971 = vmatprep.mubr.bf16.mxu0 %v324
    %972 = vmatmul.mubr.bf16.gmra.mrb[0].mxu0 %v323
    %v973 = vpop.f32.mrb[0].mxu0
    %v974 = vadd.f32 %v432, %v973
    %v975 = vpop.f32.mrb[0].mxu0
    %v976 = vadd.f32 %v436, %v975
    %v977 = vpop.f32.mrb[0].mxu0
    %v978 = vadd.f32 %v432, %v977
    %v979 = vpop.f32.mrb[0].mxu0
    %v980 = vadd.f32 %v436, %v979
    %981 = vmatprep.mubr.bf16.mxu0 %v326
    %982 = vmatmul.mubr.bf16.gmra.mrb[0].mxu0 %v325
    %v983 = vpop.f32.mrb[0].mxu0
    %v984 = vadd.f32 %v432, %v983
    %v985 = vpop.f32.mrb[0].mxu0
    %v986 = vadd.f32 %v436, %v985
    %v987 = vpop.f32.mrb[0].mxu0
    %v988 = vadd.f32 %v432, %v987
    %v989 = vpop.f32.mrb[0].mxu0
    %v990 = vadd.f32 %v436, %v989
    %991 = vmatprep.mubr.bf16.mxu0 %v328
    %992 = vmatmul.mubr.bf16.gmra.mrb[0].mxu0 %v327
    %v993 = vpop.f32.mrb[0].mxu0
    %v994 = vadd.f32 %v432, %v993
    %v995 = vpop.f32.mrb[0].mxu0
    %v996 = vadd.f32 %v436, %v995
    %v997 = vpop.f32.mrb[0].mxu0
    %v998 = vadd.f32 %v432, %v997
    %v999 = vpop.f32.mrb[0].mxu0
    %v1000 = vadd.f32 %v436, %v999
    %1001 = vmatprep.mubr.bf16.mxu0 %v330
    %1002 = vmatmul.mubr.bf16.gmra.mrb[0].mxu0 %v329
    %v1003 = vpop.f32.mrb[0].mxu0
    %v1004 = vadd.f32 %v432, %v1003
    %v1005 = vpop.f32.mrb[0].mxu0
    %v1006 = vadd.f32 %v436, %v1005
    %v1007 = vpop.f32.mrb[0].mxu0
    %v1008 = vadd.f32 %v432, %v1007
    %v1009 = vpop.f32.mrb[0].mxu0
    %v1010 = vadd.f32 %v436, %v1009
    %1011 = vdwg.mxu0
    %1012 = vmatprep.subr.bf16.mxu0 %v750
    %1013 = vmatpush1.bf16.msra.mxu0 %v749
    %1014 = vmatprep.subr.bf16.mxu0 %v756
    %1015 = vmatpush1.bf16.msra.mxu0 %v755
    %1016 = vmatprep.subr.bf16.mxu0 %v762
    %1017 = vmatpush1.bf16.msra.mxu0 %v761
    %1018 = vmatprep.subr.bf16.mxu0 %v768
    %1019 = vmatpush1.bf16.msra.mxu0 %v767
    %1020 = vmatprep.subr.bf16.mxu0 %v774
    %1021 = vmatpush1.bf16.msra.mxu0 %v773
    %1022 = vmatprep.subr.bf16.mxu0 %v780
    %1023 = vmatpush1.bf16.msra.mxu0 %v779
    %1024 = vmatprep.subr.bf16.mxu0 %v786
    %1025 = vmatpush1.bf16.msra.mxu0 %v785
    %1026 = vmatprep.subr.bf16.mxu0 %v792
    %1027 = vmatpush1.bf16.msra.mxu0 %v791
    %1028 = vmatprep.subr.bf16.mxu0 %v798
    %1029 = vmatpush1.bf16.msra.mxu0 %v797
    %1030 = vmatprep.subr.bf16.mxu0 %v804
    %1031 = vmatpush1.bf16.msra.mxu0 %v803
    %1032 = vmatprep.subr.bf16.mxu0 %v810
    %1033 = vmatpush1.bf16.msra.mxu0 %v809
    %1034 = vmatprep.subr.bf16.mxu0 %v816
    %1035 = vmatpush1.bf16.msra.mxu0 %v815
    %1036 = vmatprep.subr.bf16.mxu0 %v822
    %1037 = vmatpush1.bf16.msra.mxu0 %v821
    %1038 = vmatprep.subr.bf16.mxu0 %v828
    %1039 = vmatpush1.bf16.msra.mxu0 %v827
    %1040 = vmatprep.subr.bf16.mxu0 %v834
    %1041 = vmatpush1.bf16.msra.mxu0 %v833
    %1042 = vmatprep.subr.bf16.mxu0 %v840
    %1043 = vmatpush1.bf16.msra.mxu0 %v839
    %1044 = vmatprep.mubr.bf16.mxu0 %v324
    %1045 = vmatmul.mubr.bf16.gmra.mrb[0].mxu0 %v323
    %v1046 = vpop.f32.mrb[0].mxu0
    %v1047 = vadd.f32 %v440, %v1046
    %v1048 = vpop.f32.mrb[0].mxu0
    %v1049 = vadd.f32 %v444, %v1048
    %v1050 = vpop.f32.mrb[0].mxu0
    %v1051 = vadd.f32 %v440, %v1050
    %v1052 = vpop.f32.mrb[0].mxu0
    %v1053 = vadd.f32 %v444, %v1052
    %1054 = vmatprep.mubr.bf16.mxu0 %v326
    %1055 = vmatmul.mubr.bf16.gmra.mrb[0].mxu0 %v325
    %v1056 = vpop.f32.mrb[0].mxu0
    %v1057 = vadd.f32 %v440, %v1056
    %v1058 = vpop.f32.mrb[0].mxu0
    %v1059 = vadd.f32 %v444, %v1058
    %v1060 = vpop.f32.mrb[0].mxu0
    %v1061 = vadd.f32 %v440, %v1060
    %v1062 = vpop.f32.mrb[0].mxu0
    %v1063 = vadd.f32 %v444, %v1062
    %1064 = vmatprep.mubr.bf16.mxu0 %v328
    %1065 = vmatmul.mubr.bf16.gmra.mrb[0].mxu0 %v327
    %v1066 = vpop.f32.mrb[0].mxu0
    %v1067 = vadd.f32 %v440, %v1066
    %v1068 = vpop.f32.mrb[0].mxu0
    %v1069 = vadd.f32 %v444, %v1068
    %v1070 = vpop.f32.mrb[0].mxu0
    %v1071 = vadd.f32 %v440, %v1070
    %v1072 = vpop.f32.mrb[0].mxu0
    %v1073 = vadd.f32 %v444, %v1072
    %1074 = vmatprep.mubr.bf16.mxu0 %v330
    %1075 = vmatmul.mubr.bf16.gmra.mrb[0].mxu0 %v329
    %v1076 = vpop.f32.mrb[0].mxu0
    %v1077 = vadd.f32 %v440, %v1076
    %v1078 = vpop.f32.mrb[0].mxu0
    %v1079 = vadd.f32 %v444, %v1078
    %v1080 = vpop.f32.mrb[0].mxu0
    %v1081 = vadd.f32 %v440, %v1080
    %v1082 = vpop.f32.mrb[0].mxu0
    %v1083 = vadd.f32 %v444, %v1082
    %1084 = vdwg.mxu0
    %1085 = vmatprep.subr.bf16.mxu0 %v752
    %1086 = vmatpush1.bf16.msra.mxu0 %v751
    %1087 = vmatprep.subr.bf16.mxu0 %v758
    %1088 = vmatpush1.bf16.msra.mxu0 %v757
    %1089 = vmatprep.subr.bf16.mxu0 %v764
    %1090 = vmatpush1.bf16.msra.mxu0 %v763
    %1091 = vmatprep.subr.bf16.mxu0 %v770
    %1092 = vmatpush1.bf16.msra.mxu0 %v769
    %1093 = vmatprep.subr.bf16.mxu0 %v776
    %1094 = vmatpush1.bf16.msra.mxu0 %v775
    %1095 = vmatprep.subr.bf16.mxu0 %v782
    %1096 = vmatpush1.bf16.msra.mxu0 %v781
    %1097 = vmatprep.subr.bf16.mxu0 %v788
    %1098 = vmatpush1.bf16.msra.mxu0 %v787
    %1099 = vmatprep.subr.bf16.mxu0 %v794
    %1100 = vmatpush1.bf16.msra.mxu0 %v793
    %1101 = vmatprep.subr.bf16.mxu0 %v800
    %1102 = vmatpush1.bf16.msra.mxu0 %v799
    %1103 = vmatprep.subr.bf16.mxu0 %v806
    %1104 = vmatpush1.bf16.msra.mxu0 %v805
    %1105 = vmatprep.subr.bf16.mxu0 %v812
    %1106 = vmatpush1.bf16.msra.mxu0 %v811
    %1107 = vmatprep.subr.bf16.mxu0 %v818
    %1108 = vmatpush1.bf16.msra.mxu0 %v817
    %1109 = vmatprep.subr.bf16.mxu0 %v824
    %1110 = vmatpush1.bf16.msra.mxu0 %v823
    %1111 = vmatprep.subr.bf16.mxu0 %v830
    %1112 = vmatpush1.bf16.msra.mxu0 %v829
    %1113 = vmatprep.subr.bf16.mxu0 %v836
    %1114 = vmatpush1.bf16.msra.mxu0 %v835
    %1115 = vmatprep.subr.bf16.mxu0 %v842
    %1116 = vmatpush1.bf16.msra.mxu0 %v841
    %1117 = vmatprep.mubr.bf16.mxu0 %v324
    %1118 = vmatmul.mubr.bf16.gmra.mrb[0].mxu0 %v323
    %v1119 = vpop.f32.mrb[0].mxu0
    %v1120 = vadd.f32 %v448, %v1119
    %v1121 = vpop.f32.mrb[0].mxu0
    %v1122 = vadd.f32 %v452, %v1121
    %v1123 = vpop.f32.mrb[0].mxu0
    %v1124 = vadd.f32 %v448, %v1123
    %v1125 = vpop.f32.mrb[0].mxu0
    %v1126 = vadd.f32 %v452, %v1125
    %1127 = vmatprep.mubr.bf16.mxu0 %v326
    %1128 = vmatmul.mubr.bf16.gmra.mrb[0].mxu0 %v325
    %v1129 = vpop.f32.mrb[0].mxu0
    %v1130 = vadd.f32 %v448, %v1129
    %v1131 = vpop.f32.mrb[0].mxu0
    %v1132 = vadd.f32 %v452, %v1131
    %v1133 = vpop.f32.mrb[0].mxu0
    %v1134 = vadd.f32 %v448, %v1133
    %v1135 = vpop.f32.mrb[0].mxu0
    %v1136 = vadd.f32 %v452, %v1135
    %1137 = vmatprep.mubr.bf16.mxu0 %v328
    %1138 = vmatmul.mubr.bf16.gmra.mrb[0].mxu0 %v327
    %v1139 = vpop.f32.mrb[0].mxu0
    %v1140 = vadd.f32 %v448, %v1139
    %v1141 = vpop.f32.mrb[0].mxu0
    %v1142 = vadd.f32 %v452, %v1141
    %v1143 = vpop.f32.mrb[0].mxu0
    %v1144 = vadd.f32 %v448, %v1143
    %v1145 = vpop.f32.mrb[0].mxu0
    %v1146 = vadd.f32 %v452, %v1145
    %1147 = vmatprep.mubr.bf16.mxu0 %v330
    %1148 = vmatmul.mubr.bf16.gmra.mrb[0].mxu0 %v329
    %v1149 = vpop.f32.mrb[0].mxu0
    %v1150 = vadd.f32 %v448, %v1149
    %v1151 = vpop.f32.mrb[0].mxu0
    %v1152 = vadd.f32 %v452, %v1151
    %v1153 = vpop.f32.mrb[0].mxu0
    %v1154 = vadd.f32 %v448, %v1153
    %v1155 = vpop.f32.mrb[0].mxu0
    %v1156 = vadd.f32 %v452, %v1155
    %1157 = vdwg.mxu0
    %v1158 = vld [vmem:[#allocation7 + $0x300] sm:$0xff]
    %v1159 = vld [vmem:[#allocation7 + $0x308] sm:$0xff]
    %v1160 = vld [vmem:[#allocation7 + $0x310] sm:$0xff]
    %v1161 = vld [vmem:[#allocation7 + $0x318] sm:$0xff]
    %v1162 = vld [vmem:[#allocation7 + $0x320] sm:$0xff]
    %v1163 = vld [vmem:[#allocation7 + $0x328] sm:$0xff]
    %v1164 = vld [vmem:[#allocation7 + $0x330] sm:$0xff]
    %v1165 = vld [vmem:[#allocation7 + $0x338] sm:$0xff]
    %v1166 = vld [vmem:[#allocation7 + $0x340] sm:$0xff]
    %v1167 = vld [vmem:[#allocation7 + $0x348] sm:$0xff]
    %v1168 = vld [vmem:[#allocation7 + $0x350] sm:$0xff]
    %v1169 = vld [vmem:[#allocation7 + $0x358] sm:$0xff]
    %v1170 = vld [vmem:[#allocation7 + $0x360] sm:$0xff]
    %v1171 = vld [vmem:[#allocation7 + $0x368] sm:$0xff]
    %v1172 = vld [vmem:[#allocation7 + $0x370] sm:$0xff]
    %v1173 = vld [vmem:[#allocation7 + $0x378] sm:$0xff]
    %v1174 = vld [vmem:[#allocation7 + $0x380] sm:$0xff]
    %v1175 = vld [vmem:[#allocation7 + $0x388] sm:$0xff]
    %v1176 = vld [vmem:[#allocation7 + $0x390] sm:$0xff]
    %v1177 = vld [vmem:[#allocation7 + $0x398] sm:$0xff]
    %v1178 = vld [vmem:[#allocation7 + $0x3a0] sm:$0xff]
    %v1179 = vld [vmem:[#allocation7 + $0x3a8] sm:$0xff]
    %v1180 = vld [vmem:[#allocation7 + $0x3b0] sm:$0xff]
    %v1181 = vld [vmem:[#allocation7 + $0x3b8] sm:$0xff]
    %v1182 = vld [vmem:[#allocation7 + $0x3c0] sm:$0xff]
    %v1183 = vld [vmem:[#allocation7 + $0x3c8] sm:$0xff]
    %v1184 = vld [vmem:[#allocation7 + $0x3d0] sm:$0xff]
    %v1185 = vld [vmem:[#allocation7 + $0x3d8] sm:$0xff]
    %v1186 = vld [vmem:[#allocation7 + $0x3e0] sm:$0xff]
    %v1187 = vld [vmem:[#allocation7 + $0x3e8] sm:$0xff]
    %v1188 = vld [vmem:[#allocation7 + $0x3f0] sm:$0xff]
    %v1189 = vld [vmem:[#allocation7 + $0x3f8] sm:$0xff]
    %v1190 = vld [vmem:[#allocation7 + $0x400] sm:$0xff]
    %v1191 = vld [vmem:[#allocation7 + $0x408] sm:$0xff]
    %v1192 = vld [vmem:[#allocation7 + $0x410] sm:$0xff]
    %v1193 = vld [vmem:[#allocation7 + $0x418] sm:$0xff]
    %v1194 = vld [vmem:[#allocation7 + $0x420] sm:$0xff]
    %v1195 = vld [vmem:[#allocation7 + $0x428] sm:$0xff]
    %v1196 = vld [vmem:[#allocation7 + $0x430] sm:$0xff]
    %v1197 = vld [vmem:[#allocation7 + $0x438] sm:$0xff]
    %v1198 = vld [vmem:[#allocation7 + $0x440] sm:$0xff]
    %v1199 = vld [vmem:[#allocation7 + $0x448] sm:$0xff]
    %v1200 = vld [vmem:[#allocation7 + $0x450] sm:$0xff]
    %v1201 = vld [vmem:[#allocation7 + $0x458] sm:$0xff]
    %v1202 = vld [vmem:[#allocation7 + $0x460] sm:$0xff]
    %v1203 = vld [vmem:[#allocation7 + $0x468] sm:$0xff]
    %v1204 = vld [vmem:[#allocation7 + $0x470] sm:$0xff]
    %v1205 = vld [vmem:[#allocation7 + $0x478] sm:$0xff]
    %v1206 = vld [vmem:[#allocation7 + $0x480] sm:$0xff]
    %v1207 = vld [vmem:[#allocation7 + $0x488] sm:$0xff]
    %v1208 = vld [vmem:[#allocation7 + $0x490] sm:$0xff]
    %v1209 = vld [vmem:[#allocation7 + $0x498] sm:$0xff]
    %v1210 = vld [vmem:[#allocation7 + $0x4a0] sm:$0xff]
    %v1211 = vld [vmem:[#allocation7 + $0x4a8] sm:$0xff]
    %v1212 = vld [vmem:[#allocation7 + $0x4b0] sm:$0xff]
    %v1213 = vld [vmem:[#allocation7 + $0x4b8] sm:$0xff]
    %v1214 = vld [vmem:[#allocation7 + $0x4c0] sm:$0xff]
    %v1215 = vld [vmem:[#allocation7 + $0x4c8] sm:$0xff]
    %v1216 = vld [vmem:[#allocation7 + $0x4d0] sm:$0xff]
    %v1217 = vld [vmem:[#allocation7 + $0x4d8] sm:$0xff]
    %v1218 = vld [vmem:[#allocation7 + $0x4e0] sm:$0xff]
    %v1219 = vld [vmem:[#allocation7 + $0x4e8] sm:$0xff]
    %v1220 = vld [vmem:[#allocation7 + $0x4f0] sm:$0xff]
    %v1221 = vld [vmem:[#allocation7 + $0x4f8] sm:$0xff]
    %v1222 = vld [vmem:[#allocation7 + $0x500] sm:$0xff]
    %v1223 = vld [vmem:[#allocation7 + $0x508] sm:$0xff]
    %v1224 = vld [vmem:[#allocation7 + $0x510] sm:$0xff]
    %v1225 = vld [vmem:[#allocation7 + $0x518] sm:$0xff]
    %v1226 = vld [vmem:[#allocation7 + $0x520] sm:$0xff]
    %v1227 = vld [vmem:[#allocation7 + $0x528] sm:$0xff]
    %v1228 = vld [vmem:[#allocation7 + $0x530] sm:$0xff]
    %v1229 = vld [vmem:[#allocation7 + $0x538] sm:$0xff]
    %v1230 = vld [vmem:[#allocation7 + $0x540] sm:$0xff]
    %v1231 = vld [vmem:[#allocation7 + $0x548] sm:$0xff]
    %v1232 = vld [vmem:[#allocation7 + $0x550] sm:$0xff]
    %v1233 = vld [vmem:[#allocation7 + $0x558] sm:$0xff]
    %v1234 = vld [vmem:[#allocation7 + $0x560] sm:$0xff]
    %v1235 = vld [vmem:[#allocation7 + $0x568] sm:$0xff]
    %v1236 = vld [vmem:[#allocation7 + $0x570] sm:$0xff]
    %v1237 = vld [vmem:[#allocation7 + $0x578] sm:$0xff]
    %v1238 = vld [vmem:[#allocation7 + $0x580] sm:$0xff]
    %v1239 = vld [vmem:[#allocation7 + $0x588] sm:$0xff]
    %v1240 = vld [vmem:[#allocation7 + $0x590] sm:$0xff]
    %v1241 = vld [vmem:[#allocation7 + $0x598] sm:$0xff]
    %v1242 = vld [vmem:[#allocation7 + $0x5a0] sm:$0xff]
    %v1243 = vld [vmem:[#allocation7 + $0x5a8] sm:$0xff]
    %v1244 = vld [vmem:[#allocation7 + $0x5b0] sm:$0xff]
    %v1245 = vld [vmem:[#allocation7 + $0x5b8] sm:$0xff]
    %v1246 = vld [vmem:[#allocation7 + $0x5c0] sm:$0xff]
    %v1247 = vld [vmem:[#allocation7 + $0x5c8] sm:$0xff]
    %v1248 = vld [vmem:[#allocation7 + $0x5d0] sm:$0xff]
    %v1249 = vld [vmem:[#allocation7 + $0x5d8] sm:$0xff]
    %v1250 = vld [vmem:[#allocation7 + $0x5e0] sm:$0xff]
    %v1251 = vld [vmem:[#allocation7 + $0x5e8] sm:$0xff]
    %v1252 = vld [vmem:[#allocation7 + $0x5f0] sm:$0xff]
    %v1253 = vld [vmem:[#allocation7 + $0x5f8] sm:$0xff]
    %s1254 = scalar_lea.vmem [#allocation10], 1
    %v1255 = vld [vmem:[%s1254] ss:$4 sm:$0x3f]
    %v1257 = vlaneseq
    %v1258 = vshrl.u32 %v1257, 7
    %v1259 = vsub.s32 0, %v1258
    %v1260 = vrot.slane %v1255, %v1259
    %v1261 = vlaneseq
    %v1262 = vshrl.u32 %v1261, 7
    %v1263 = vsub.s32 1, %v1262
    %v1264 = vrot.slane %v1255, %v1263
    %v1265 = vlaneseq
    %v1266 = vshrl.u32 %v1265, 7
    %v1267 = vsub.s32 2, %v1266
    %v1268 = vrot.slane %v1255, %v1267
    %v1269 = vlaneseq
    %v1270 = vshrl.u32 %v1269, 7
    %v1271 = vsub.s32 3, %v1270
    %v1272 = vrot.slane %v1255, %v1271
    %v1273 = vlaneseq
    %v1274 = vshrl.u32 %v1273, 7
    %v1275 = vsub.s32 4, %v1274
    %v1276 = vrot.slane %v1255, %v1275
    %v1277 = vlaneseq
    %v1278 = vshrl.u32 %v1277, 7
    %v1279 = vsub.s32 5, %v1278
    %v1280 = vrot.slane %v1255, %v1279
    %v1383 = vunpack.c.l.b16 %v1158
    %v1384 = vunpack.c.h.b16 %v1158
    %v1385 = vunpack.c.l.b16 %v1159
    %v1386 = vunpack.c.h.b16 %v1159
    %v1387 = vunpack.c.l.b16 %v1160
    %v1388 = vunpack.c.h.b16 %v1160
    %v1389 = vunpack.c.l.b16 %v1161
    %v1390 = vunpack.c.h.b16 %v1161
    %v1391 = vunpack.c.l.b16 %v1162
    %v1392 = vunpack.c.h.b16 %v1162
    %v1393 = vunpack.c.l.b16 %v1163
    %v1394 = vunpack.c.h.b16 %v1163
    %v1395 = vunpack.c.l.b16 %v1164
    %v1396 = vunpack.c.h.b16 %v1164
    %v1397 = vunpack.c.l.b16 %v1165
    %v1398 = vunpack.c.h.b16 %v1165
    %v1399 = vunpack.c.l.b16 %v1166
    %v1400 = vunpack.c.h.b16 %v1166
    %v1401 = vunpack.c.l.b16 %v1167
    %v1402 = vunpack.c.h.b16 %v1167
    %v1403 = vunpack.c.l.b16 %v1168
    %v1404 = vunpack.c.h.b16 %v1168
    %v1405 = vunpack.c.l.b16 %v1169
    %v1406 = vunpack.c.h.b16 %v1169
    %v1407 = vunpack.c.l.b16 %v1170
    %v1408 = vunpack.c.h.b16 %v1170
    %v1409 = vunpack.c.l.b16 %v1171
    %v1410 = vunpack.c.h.b16 %v1171
    %v1411 = vunpack.c.l.b16 %v1172
    %v1412 = vunpack.c.h.b16 %v1172
    %v1413 = vunpack.c.l.b16 %v1173
    %v1414 = vunpack.c.h.b16 %v1173
    %v1415 = vunpack.c.l.b16 %v1174
    %v1416 = vunpack.c.h.b16 %v1174
    %v1417 = vunpack.c.l.b16 %v1175
    %v1418 = vunpack.c.h.b16 %v1175
    %v1419 = vunpack.c.l.b16 %v1176
    %v1420 = vunpack.c.h.b16 %v1176
    %v1421 = vunpack.c.l.b16 %v1177
    %v1422 = vunpack.c.h.b16 %v1177
    %v1423 = vunpack.c.l.b16 %v1178
    %v1424 = vunpack.c.h.b16 %v1178
    %v1425 = vunpack.c.l.b16 %v1179
    %v1426 = vunpack.c.h.b16 %v1179
    %v1427 = vunpack.c.l.b16 %v1180
    %v1428 = vunpack.c.h.b16 %v1180
    %v1429 = vunpack.c.l.b16 %v1181
    %v1430 = vunpack.c.h.b16 %v1181
    %v1431 = vunpack.c.l.b16 %v1182
    %v1432 = vunpack.c.h.b16 %v1182
    %v1433 = vunpack.c.l.b16 %v1183
    %v1434 = vunpack.c.h.b16 %v1183
    %v1435 = vunpack.c.l.b16 %v1184
    %v1436 = vunpack.c.h.b16 %v1184
    %v1437 = vunpack.c.l.b16 %v1185
    %v1438 = vunpack.c.h.b16 %v1185
    %v1439 = vunpack.c.l.b16 %v1186
    %v1440 = vunpack.c.h.b16 %v1186
    %v1441 = vunpack.c.l.b16 %v1187
    %v1442 = vunpack.c.h.b16 %v1187
    %v1443 = vunpack.c.l.b16 %v1188
    %v1444 = vunpack.c.h.b16 %v1188
    %v1445 = vunpack.c.l.b16 %v1189
    %v1446 = vunpack.c.h.b16 %v1189
    %v1447 = vunpack.c.l.b16 %v1190
    %v1448 = vunpack.c.h.b16 %v1190
    %v1449 = vunpack.c.l.b16 %v1191
    %v1450 = vunpack.c.h.b16 %v1191
    %v1451 = vunpack.c.l.b16 %v1192
    %v1452 = vunpack.c.h.b16 %v1192
    %v1453 = vunpack.c.l.b16 %v1193
    %v1454 = vunpack.c.h.b16 %v1193
    %v1455 = vunpack.c.l.b16 %v1194
    %v1456 = vunpack.c.h.b16 %v1194
    %v1457 = vunpack.c.l.b16 %v1195
    %v1458 = vunpack.c.h.b16 %v1195
    %v1459 = vunpack.c.l.b16 %v1196
    %v1460 = vunpack.c.h.b16 %v1196
    %v1461 = vunpack.c.l.b16 %v1197
    %v1462 = vunpack.c.h.b16 %v1197
    %v1463 = vunpack.c.l.b16 %v1198
    %v1464 = vunpack.c.h.b16 %v1198
    %v1465 = vunpack.c.l.b16 %v1199
    %v1466 = vunpack.c.h.b16 %v1199
    %v1467 = vunpack.c.l.b16 %v1200
    %v1468 = vunpack.c.h.b16 %v1200
    %v1469 = vunpack.c.l.b16 %v1201
    %v1470 = vunpack.c.h.b16 %v1201
    %v1471 = vunpack.c.l.b16 %v1202
    %v1472 = vunpack.c.h.b16 %v1202
    %v1473 = vunpack.c.l.b16 %v1203
    %v1474 = vunpack.c.h.b16 %v1203
    %v1475 = vunpack.c.l.b16 %v1204
    %v1476 = vunpack.c.h.b16 %v1204
    %v1477 = vunpack.c.l.b16 %v1205
    %v1478 = vunpack.c.h.b16 %v1205
    %v1479 = vunpack.c.l.b16 %v1206
    %v1480 = vunpack.c.h.b16 %v1206
    %v1481 = vunpack.c.l.b16 %v1207
    %v1482 = vunpack.c.h.b16 %v1207
    %v1483 = vunpack.c.l.b16 %v1208
    %v1484 = vunpack.c.h.b16 %v1208
    %v1485 = vunpack.c.l.b16 %v1209
    %v1486 = vunpack.c.h.b16 %v1209
    %v1487 = vunpack.c.l.b16 %v1210
    %v1488 = vunpack.c.h.b16 %v1210
    %v1489 = vunpack.c.l.b16 %v1211
    %v1490 = vunpack.c.h.b16 %v1211
    %v1491 = vunpack.c.l.b16 %v1212
    %v1492 = vunpack.c.h.b16 %v1212
    %v1493 = vunpack.c.l.b16 %v1213
    %v1494 = vunpack.c.h.b16 %v1213
    %v1495 = vunpack.c.l.b16 %v1214
    %v1496 = vunpack.c.h.b16 %v1214
    %v1497 = vunpack.c.l.b16 %v1215
    %v1498 = vunpack.c.h.b16 %v1215
    %v1499 = vunpack.c.l.b16 %v1216
    %v1500 = vunpack.c.h.b16 %v1216
    %v1501 = vunpack.c.l.b16 %v1217
    %v1502 = vunpack.c.h.b16 %v1217
    %v1503 = vunpack.c.l.b16 %v1218
    %v1504 = vunpack.c.h.b16 %v1218
    %v1505 = vunpack.c.l.b16 %v1219
    %v1506 = vunpack.c.h.b16 %v1219
    %v1507 = vunpack.c.l.b16 %v1220
    %v1508 = vunpack.c.h.b16 %v1220
    %v1509 = vunpack.c.l.b16 %v1221
    %v1510 = vunpack.c.h.b16 %v1221
    %v1511 = vunpack.c.l.b16 %v1222
    %v1512 = vunpack.c.h.b16 %v1222
    %v1513 = vunpack.c.l.b16 %v1223
    %v1514 = vunpack.c.h.b16 %v1223
    %v1515 = vunpack.c.l.b16 %v1224
    %v1516 = vunpack.c.h.b16 %v1224
    %v1517 = vunpack.c.l.b16 %v1225
    %v1518 = vunpack.c.h.b16 %v1225
    %v1519 = vunpack.c.l.b16 %v1226
    %v1520 = vunpack.c.h.b16 %v1226
    %v1521 = vunpack.c.l.b16 %v1227
    %v1522 = vunpack.c.h.b16 %v1227
    %v1523 = vunpack.c.l.b16 %v1228
    %v1524 = vunpack.c.h.b16 %v1228
    %v1525 = vunpack.c.l.b16 %v1229
    %v1526 = vunpack.c.h.b16 %v1229
    %v1527 = vunpack.c.l.b16 %v1230
    %v1528 = vunpack.c.h.b16 %v1230
    %v1529 = vunpack.c.l.b16 %v1231
    %v1530 = vunpack.c.h.b16 %v1231
    %v1531 = vunpack.c.l.b16 %v1232
    %v1532 = vunpack.c.h.b16 %v1232
    %v1533 = vunpack.c.l.b16 %v1233
    %v1534 = vunpack.c.h.b16 %v1233
    %v1535 = vunpack.c.l.b16 %v1234
    %v1536 = vunpack.c.h.b16 %v1234
    %v1537 = vunpack.c.l.b16 %v1235
    %v1538 = vunpack.c.h.b16 %v1235
    %v1539 = vunpack.c.l.b16 %v1236
    %v1540 = vunpack.c.h.b16 %v1236
    %v1541 = vunpack.c.l.b16 %v1237
    %v1542 = vunpack.c.h.b16 %v1237
    %v1543 = vunpack.c.l.b16 %v1238
    %v1544 = vunpack.c.h.b16 %v1238
    %v1545 = vunpack.c.l.b16 %v1239
    %v1546 = vunpack.c.h.b16 %v1239
    %v1547 = vunpack.c.l.b16 %v1240
    %v1548 = vunpack.c.h.b16 %v1240
    %v1549 = vunpack.c.l.b16 %v1241
    %v1550 = vunpack.c.h.b16 %v1241
    %v1551 = vunpack.c.l.b16 %v1242
    %v1552 = vunpack.c.h.b16 %v1242
    %v1553 = vunpack.c.l.b16 %v1243
    %v1554 = vunpack.c.h.b16 %v1243
    %v1555 = vunpack.c.l.b16 %v1244
    %v1556 = vunpack.c.h.b16 %v1244
    %v1557 = vunpack.c.l.b16 %v1245
    %v1558 = vunpack.c.h.b16 %v1245
    %v1559 = vunpack.c.l.b16 %v1246
    %v1560 = vunpack.c.h.b16 %v1246
    %v1561 = vunpack.c.l.b16 %v1247
    %v1562 = vunpack.c.h.b16 %v1247
    %v1563 = vunpack.c.l.b16 %v1248
    %v1564 = vunpack.c.h.b16 %v1248
    %v1565 = vunpack.c.l.b16 %v1249
    %v1566 = vunpack.c.h.b16 %v1249
    %v1567 = vunpack.c.l.b16 %v1250
    %v1568 = vunpack.c.h.b16 %v1250
    %v1569 = vunpack.c.l.b16 %v1251
    %v1570 = vunpack.c.h.b16 %v1251
    %v1571 = vunpack.c.l.b16 %v1252
    %v1572 = vunpack.c.h.b16 %v1252
    %v1573 = vunpack.c.l.b16 %v1253
    %v1574 = vunpack.c.h.b16 %v1253
    %v1575 = vpack.c.b16 %v1389, %v1383
    %v1576 = vpack.c.b16 %v1390, %v1384
    %v1577 = vpack.c.b16 %v1391, %v1385
    %v1578 = vpack.c.b16 %v1392, %v1386
    %v1579 = vpack.c.b16 %v1393, %v1387
    %v1580 = vpack.c.b16 %v1394, %v1388
    %v1581 = vpack.c.b16 %v1401, %v1395
    %v1582 = vpack.c.b16 %v1402, %v1396
    %v1583 = vpack.c.b16 %v1403, %v1397
    %v1584 = vpack.c.b16 %v1404, %v1398
    %v1585 = vpack.c.b16 %v1405, %v1399
    %v1586 = vpack.c.b16 %v1406, %v1400
    %v1587 = vpack.c.b16 %v1413, %v1407
    %v1588 = vpack.c.b16 %v1414, %v1408
    %v1589 = vpack.c.b16 %v1415, %v1409
    %v1590 = vpack.c.b16 %v1416, %v1410
    %v1591 = vpack.c.b16 %v1417, %v1411
    %v1592 = vpack.c.b16 %v1418, %v1412
    %v1593 = vpack.c.b16 %v1425, %v1419
    %v1594 = vpack.c.b16 %v1426, %v1420
    %v1595 = vpack.c.b16 %v1427, %v1421
    %v1596 = vpack.c.b16 %v1428, %v1422
    %v1597 = vpack.c.b16 %v1429, %v1423
    %v1598 = vpack.c.b16 %v1430, %v1424
    %v1599 = vpack.c.b16 %v1437, %v1431
    %v1600 = vpack.c.b16 %v1438, %v1432
    %v1601 = vpack.c.b16 %v1439, %v1433
    %v1602 = vpack.c.b16 %v1440, %v1434
    %v1603 = vpack.c.b16 %v1441, %v1435
    %v1604 = vpack.c.b16 %v1442, %v1436
    %v1605 = vpack.c.b16 %v1449, %v1443
    %v1606 = vpack.c.b16 %v1450, %v1444
    %v1607 = vpack.c.b16 %v1451, %v1445
    %v1608 = vpack.c.b16 %v1452, %v1446
    %v1609 = vpack.c.b16 %v1453, %v1447
    %v1610 = vpack.c.b16 %v1454, %v1448
    %v1611 = vpack.c.b16 %v1461, %v1455
    %v1612 = vpack.c.b16 %v1462, %v1456
    %v1613 = vpack.c.b16 %v1463, %v1457
    %v1614 = vpack.c.b16 %v1464, %v1458
    %v1615 = vpack.c.b16 %v1465, %v1459
    %v1616 = vpack.c.b16 %v1466, %v1460
    %v1617 = vpack.c.b16 %v1473, %v1467
    %v1618 = vpack.c.b16 %v1474, %v1468
    %v1619 = vpack.c.b16 %v1475, %v1469
    %v1620 = vpack.c.b16 %v1476, %v1470
    %v1621 = vpack.c.b16 %v1477, %v1471
    %v1622 = vpack.c.b16 %v1478, %v1472
    %v1623 = vpack.c.b16 %v1485, %v1479
    %v1624 = vpack.c.b16 %v1486, %v1480
    %v1625 = vpack.c.b16 %v1487, %v1481
    %v1626 = vpack.c.b16 %v1488, %v1482
    %v1627 = vpack.c.b16 %v1489, %v1483
    %v1628 = vpack.c.b16 %v1490, %v1484
    %v1629 = vpack.c.b16 %v1497, %v1491
    %v1630 = vpack.c.b16 %v1498, %v1492
    %v1631 = vpack.c.b16 %v1499, %v1493
    %v1632 = vpack.c.b16 %v1500, %v1494
    %v1633 = vpack.c.b16 %v1501, %v1495
    %v1634 = vpack.c.b16 %v1502, %v1496
    %v1635 = vpack.c.b16 %v1509, %v1503
    %v1636 = vpack.c.b16 %v1510, %v1504
    %v1637 = vpack.c.b16 %v1511, %v1505
    %v1638 = vpack.c.b16 %v1512, %v1506
    %v1639 = vpack.c.b16 %v1513, %v1507
    %v1640 = vpack.c.b16 %v1514, %v1508
    %v1641 = vpack.c.b16 %v1521, %v1515
    %v1642 = vpack.c.b16 %v1522, %v1516
    %v1643 = vpack.c.b16 %v1523, %v1517
    %v1644 = vpack.c.b16 %v1524, %v1518
    %v1645 = vpack.c.b16 %v1525, %v1519
    %v1646 = vpack.c.b16 %v1526, %v1520
    %v1647 = vpack.c.b16 %v1533, %v1527
    %v1648 = vpack.c.b16 %v1534, %v1528
    %v1649 = vpack.c.b16 %v1535, %v1529
    %v1650 = vpack.c.b16 %v1536, %v1530
    %v1651 = vpack.c.b16 %v1537, %v1531
    %v1652 = vpack.c.b16 %v1538, %v1532
    %v1653 = vpack.c.b16 %v1545, %v1539
    %v1654 = vpack.c.b16 %v1546, %v1540
    %v1655 = vpack.c.b16 %v1547, %v1541
    %v1656 = vpack.c.b16 %v1548, %v1542
    %v1657 = vpack.c.b16 %v1549, %v1543
    %v1658 = vpack.c.b16 %v1550, %v1544
    %v1659 = vpack.c.b16 %v1557, %v1551
    %v1660 = vpack.c.b16 %v1558, %v1552
    %v1661 = vpack.c.b16 %v1559, %v1553
    %v1662 = vpack.c.b16 %v1560, %v1554
    %v1663 = vpack.c.b16 %v1561, %v1555
    %v1664 = vpack.c.b16 %v1562, %v1556
    %v1665 = vpack.c.b16 %v1569, %v1563
    %v1666 = vpack.c.b16 %v1570, %v1564
    %v1667 = vpack.c.b16 %v1571, %v1565
    %v1668 = vpack.c.b16 %v1572, %v1566
    %v1669 = vpack.c.b16 %v1573, %v1567
    %v1670 = vpack.c.b16 %v1574, %v1568
    %1767 = vmatprep.subr.bf16.mxu0 %v1576
    %1768 = vmatpush1.bf16.msra.mxu0 %v1575
    %1769 = vmatprep.subr.bf16.mxu0 %v1582
    %1770 = vmatpush1.bf16.msra.mxu0 %v1581
    %1771 = vmatprep.subr.bf16.mxu0 %v1588
    %1772 = vmatpush1.bf16.msra.mxu0 %v1587
    %1773 = vmatprep.subr.bf16.mxu0 %v1594
    %1774 = vmatpush1.bf16.msra.mxu0 %v1593
    %1775 = vmatprep.subr.bf16.mxu0 %v1600
    %1776 = vmatpush1.bf16.msra.mxu0 %v1599
    %1777 = vmatprep.subr.bf16.mxu0 %v1606
    %1778 = vmatpush1.bf16.msra.mxu0 %v1605
    %1779 = vmatprep.subr.bf16.mxu0 %v1612
    %1780 = vmatpush1.bf16.msra.mxu0 %v1611
    %1781 = vmatprep.subr.bf16.mxu0 %v1618
    %1782 = vmatpush1.bf16.msra.mxu0 %v1617
    %1783 = vmatprep.subr.bf16.mxu0 %v1624
    %1784 = vmatpush1.bf16.msra.mxu0 %v1623
    %1785 = vmatprep.subr.bf16.mxu0 %v1630
    %1786 = vmatpush1.bf16.msra.mxu0 %v1629
    %1787 = vmatprep.subr.bf16.mxu0 %v1636
    %1788 = vmatpush1.bf16.msra.mxu0 %v1635
    %1789 = vmatprep.subr.bf16.mxu0 %v1642
    %1790 = vmatpush1.bf16.msra.mxu0 %v1641
    %1791 = vmatprep.subr.bf16.mxu0 %v1648
    %1792 = vmatpush1.bf16.msra.mxu0 %v1647
    %1793 = vmatprep.subr.bf16.mxu0 %v1654
    %1794 = vmatpush1.bf16.msra.mxu0 %v1653
    %1795 = vmatprep.subr.bf16.mxu0 %v1660
    %1796 = vmatpush1.bf16.msra.mxu0 %v1659
    %1797 = vmatprep.subr.bf16.mxu0 %v1666
    %1798 = vmatpush1.bf16.msra.mxu0 %v1665
    %1799 = vmatprep.mubr.bf16.mxu0 0
    %1800 = vmatmul.mubr.bf16.gmra.mrb[0].mxu0 0
    %v1801 = vpop.f32.mrb[0].mxu0
    %v1802 = vadd.f32 %v1260, %v1801
    %v1803 = vpop.f32.mrb[0].mxu0
    %v1804 = vadd.f32 %v1264, %v1803
    %v1805 = vpop.f32.mrb[0].mxu0
    %v1806 = vpop.f32.mrb[0].mxu0
    %1807 = vdwg.mxu0
    %1808 = vmatprep.subr.bf16.mxu0 %v1578
    %1809 = vmatpush1.bf16.msra.mxu0 %v1577
    %1810 = vmatprep.subr.bf16.mxu0 %v1584
    %1811 = vmatpush1.bf16.msra.mxu0 %v1583
    %1812 = vmatprep.subr.bf16.mxu0 %v1590
    %1813 = vmatpush1.bf16.msra.mxu0 %v1589
    %1814 = vmatprep.subr.bf16.mxu0 %v1596
    %1815 = vmatpush1.bf16.msra.mxu0 %v1595
    %1816 = vmatprep.subr.bf16.mxu0 %v1602
    %1817 = vmatpush1.bf16.msra.mxu0 %v1601
    %1818 = vmatprep.subr.bf16.mxu0 %v1608
    %1819 = vmatpush1.bf16.msra.mxu0 %v1607
    %1820 = vmatprep.subr.bf16.mxu0 %v1614
    %1821 = vmatpush1.bf16.msra.mxu0 %v1613
    %1822 = vmatprep.subr.bf16.mxu0 %v1620
    %1823 = vmatpush1.bf16.msra.mxu0 %v1619
    %1824 = vmatprep.subr.bf16.mxu0 %v1626
    %1825 = vmatpush1.bf16.msra.mxu0 %v1625
    %1826 = vmatprep.subr.bf16.mxu0 %v1632
    %1827 = vmatpush1.bf16.msra.mxu0 %v1631
    %1828 = vmatprep.subr.bf16.mxu0 %v1638
    %1829 = vmatpush1.bf16.msra.mxu0 %v1637
    %1830 = vmatprep.subr.bf16.mxu0 %v1644
    %1831 = vmatpush1.bf16.msra.mxu0 %v1643
    %1832 = vmatprep.subr.bf16.mxu0 %v1650
    %1833 = vmatpush1.bf16.msra.mxu0 %v1649
    %1834 = vmatprep.subr.bf16.mxu0 %v1656
    %1835 = vmatpush1.bf16.msra.mxu0 %v1655
    %1836 = vmatprep.subr.bf16.mxu0 %v1662
    %1837 = vmatpush1.bf16.msra.mxu0 %v1661
    %1838 = vmatprep.subr.bf16.mxu0 %v1668
    %1839 = vmatpush1.bf16.msra.mxu0 %v1667
    %1840 = vmatprep.mubr.bf16.mxu0 0
    %1841 = vmatmul.mubr.bf16.gmra.mrb[0].mxu0 0
    %v1842 = vpop.f32.mrb[0].mxu0
    %v1843 = vadd.f32 %v1268, %v1842
    %v1844 = vpop.f32.mrb[0].mxu0
    %v1845 = vadd.f32 %v1272, %v1844
    %v1846 = vpop.f32.mrb[0].mxu0
    %v1847 = vpop.f32.mrb[0].mxu0
    %1848 = vdwg.mxu0
    %1849 = vmatprep.subr.bf16.mxu0 %v1580
    %1850 = vmatpush1.bf16.msra.mxu0 %v1579
    %1851 = vmatprep.subr.bf16.mxu0 %v1586
    %1852 = vmatpush1.bf16.msra.mxu0 %v1585
    %1853 = vmatprep.subr.bf16.mxu0 %v1592
    %1854 = vmatpush1.bf16.msra.mxu0 %v1591
    %1855 = vmatprep.subr.bf16.mxu0 %v1598
    %1856 = vmatpush1.bf16.msra.mxu0 %v1597
    %1857 = vmatprep.subr.bf16.mxu0 %v1604
    %1858 = vmatpush1.bf16.msra.mxu0 %v1603
    %1859 = vmatprep.subr.bf16.mxu0 %v1610
    %1860 = vmatpush1.bf16.msra.mxu0 %v1609
    %1861 = vmatprep.subr.bf16.mxu0 %v1616
    %1862 = vmatpush1.bf16.msra.mxu0 %v1615
    %1863 = vmatprep.subr.bf16.mxu0 %v1622
    %1864 = vmatpush1.bf16.msra.mxu0 %v1621
    %1865 = vmatprep.subr.bf16.mxu0 %v1628
    %1866 = vmatpush1.bf16.msra.mxu0 %v1627
    %1867 = vmatprep.subr.bf16.mxu0 %v1634
    %1868 = vmatpush1.bf16.msra.mxu0 %v1633
    %1869 = vmatprep.subr.bf16.mxu0 %v1640
    %1870 = vmatpush1.bf16.msra.mxu0 %v1639
    %1871 = vmatprep.subr.bf16.mxu0 %v1646
    %1872 = vmatpush1.bf16.msra.mxu0 %v1645
    %1873 = vmatprep.subr.bf16.mxu0 %v1652
    %1874 = vmatpush1.bf16.msra.mxu0 %v1651
    %1875 = vmatprep.subr.bf16.mxu0 %v1658
    %1876 = vmatpush1.bf16.msra.mxu0 %v1657
    %1877 = vmatprep.subr.bf16.mxu0 %v1664
    %1878 = vmatpush1.bf16.msra.mxu0 %v1663
    %1879 = vmatprep.subr.bf16.mxu0 %v1670
    %1880 = vmatpush1.bf16.msra.mxu0 %v1669
    %1881 = vmatprep.mubr.bf16.mxu0 0
    %1882 = vmatmul.mubr.bf16.gmra.mrb[0].mxu0 0
    %v1883 = vpop.f32.mrb[0].mxu0
    %v1884 = vadd.f32 %v1276, %v1883
    %v1885 = vpop.f32.mrb[0].mxu0
    %v1886 = vadd.f32 %v1280, %v1885
    %v1887 = vpop.f32.mrb[0].mxu0
    %v1888 = vpop.f32.mrb[0].mxu0
    %1889 = vdwg.mxu0
    %v1890 = vadd.f32 %v974, %v1802
    %v1891 = vadd.f32 %v976, %v1804
    %v1892 = vxor.u32 %v1890, 2147483648
    %v1893 = vxor.u32 %v1891, 2147483648
    %v1894 = vmul.f32 %v1892, 1.442695
    %v1895 = vpow.pop %v1894
    %v1896 = vmul.f32 %v1893, 1.442695
    %v1897 = vpow.pop %v1896
    %v1898 = vadd.f32 %v1895, 1.0
    %v1899 = vadd.f32 %v1897, 1.0
    %v1900 = vrcp.pop %v1898
    %v1901 = vmul.f32 1.0, %v1900
    %v1902 = vrcp.pop %v1899
    %v1903 = vmul.f32 1.0, %v1902
    %v1904 = vadd.f32 %v1047, %v1843
    %v1905 = vadd.f32 %v1049, %v1845
    %v1906 = vxor.u32 %v1904, 2147483648
    %v1907 = vxor.u32 %v1905, 2147483648
    %v1908 = vmul.f32 %v1906, 1.442695
    %v1909 = vpow.pop %v1908
    %v1910 = vmul.f32 %v1907, 1.442695
    %v1911 = vpow.pop %v1910
    %v1912 = vadd.f32 %v1909, 1.0
    %v1913 = vadd.f32 %v1911, 1.0
    %v1914 = vrcp.pop %v1912
    %v1915 = vmul.f32 1.0, %v1914
    %v1916 = vrcp.pop %v1913
    %v1917 = vmul.f32 1.0, %v1916
    %v1918 = vmul.f32 %v1901, %v1884
    %v1919 = vmul.f32 %v1903, %v1886
    %v1920 = vadd.f32 %v1120, %v1918
    %v1921 = vadd.f32 %v1122, %v1919
    %v1922 = vtanh.pop %v1920
    %v1923 = vtanh.pop %v1921
    %v1924 = vsub.f32 1.0, %v1915
    %v1925 = vsub.f32 1.0, %v1917
    %v1926 = vmul.f32 %v1924, %v1922
    %v1927 = vmul.f32 %v1925, %v1923
    %v1928 = vmul.f32 %v1915, 0.0
    %v1929 = vmul.f32 %v1917, 0.0
    %v1930 = vadd.f32 %v1926, %v1928
    %v1931 = vadd.f32 %v1927, %v1929
    %1932 = vst [vmem:[#allocation2] sm:$0xff] %v1930
    %1933 = vst [vmem:[#allocation2 + $0x8] sm:$0xff] %v1931
    %v1934 = vpack.c.bf16 %v1930, %v1930
    %v1935 = vpack.c.bf16 %v1931, %v1931
    %1936 = vmatprep.subr.bf16.mxu0 %v1576
    %1937 = vmatpush1.bf16.msra.mxu0 %v1575
    %1938 = vmatprep.subr.bf16.mxu0 %v1582
    %1939 = vmatpush1.bf16.msra.mxu0 %v1581
    %1940 = vmatprep.subr.bf16.mxu0 %v1588
    %1941 = vmatpush1.bf16.msra.mxu0 %v1587
    %1942 = vmatprep.subr.bf16.mxu0 %v1594
    %1943 = vmatpush1.bf16.msra.mxu0 %v1593
    %1944 = vmatprep.subr.bf16.mxu0 %v1600
    %1945 = vmatpush1.bf16.msra.mxu0 %v1599
    %1946 = vmatprep.subr.bf16.mxu0 %v1606
    %1947 = vmatpush1.bf16.msra.mxu0 %v1605
    %1948 = vmatprep.subr.bf16.mxu0 %v1612
    %1949 = vmatpush1.bf16.msra.mxu0 %v1611
    %1950 = vmatprep.subr.bf16.mxu0 %v1618
    %1951 = vmatpush1.bf16.msra.mxu0 %v1617
    %1952 = vmatprep.subr.bf16.mxu0 %v1624
    %1953 = vmatpush1.bf16.msra.mxu0 %v1623
    %1954 = vmatprep.subr.bf16.mxu0 %v1630
    %1955 = vmatpush1.bf16.msra.mxu0 %v1629
    %1956 = vmatprep.subr.bf16.mxu0 %v1636
    %1957 = vmatpush1.bf16.msra.mxu0 %v1635
    %1958 = vmatprep.subr.bf16.mxu0 %v1642
    %1959 = vmatpush1.bf16.msra.mxu0 %v1641
    %1960 = vmatprep.subr.bf16.mxu0 %v1648
    %1961 = vmatpush1.bf16.msra.mxu0 %v1647
    %1962 = vmatprep.subr.bf16.mxu0 %v1654
    %1963 = vmatpush1.bf16.msra.mxu0 %v1653
    %1964 = vmatprep.subr.bf16.mxu0 %v1660
    %1965 = vmatpush1.bf16.msra.mxu0 %v1659
    %1966 = vmatprep.subr.bf16.mxu0 %v1666
    %1967 = vmatpush1.bf16.msra.mxu0 %v1665
    %1968 = vmatprep.mubr.bf16.mxu0 %v1935
    %1969 = vmatmul.mubr.bf16.gmra.mrb[0].mxu0 %v1934
    %v1970 = vpop.f32.mrb[0].mxu0
    %v1971 = vadd.f32 %v1260, %v1970
    %v1972 = vpop.f32.mrb[0].mxu0
    %v1973 = vadd.f32 %v1264, %v1972
    %v1974 = vpop.f32.mrb[0].mxu0
    %v1975 = vpop.f32.mrb[0].mxu0
    %1976 = vdwg.mxu0
    %1977 = vmatprep.subr.bf16.mxu0 %v1578
    %1978 = vmatpush1.bf16.msra.mxu0 %v1577
    %1979 = vmatprep.subr.bf16.mxu0 %v1584
    %1980 = vmatpush1.bf16.msra.mxu0 %v1583
    %1981 = vmatprep.subr.bf16.mxu0 %v1590
    %1982 = vmatpush1.bf16.msra.mxu0 %v1589
    %1983 = vmatprep.subr.bf16.mxu0 %v1596
    %1984 = vmatpush1.bf16.msra.mxu0 %v1595
    %1985 = vmatprep.subr.bf16.mxu0 %v1602
    %1986 = vmatpush1.bf16.msra.mxu0 %v1601
    %1987 = vmatprep.subr.bf16.mxu0 %v1608
    %1988 = vmatpush1.bf16.msra.mxu0 %v1607
    %1989 = vmatprep.subr.bf16.mxu0 %v1614
    %1990 = vmatpush1.bf16.msra.mxu0 %v1613
    %1991 = vmatprep.subr.bf16.mxu0 %v1620
    %1992 = vmatpush1.bf16.msra.mxu0 %v1619
    %1993 = vmatprep.subr.bf16.mxu0 %v1626
    %1994 = vmatpush1.bf16.msra.mxu0 %v1625
    %1995 = vmatprep.subr.bf16.mxu0 %v1632
    %1996 = vmatpush1.bf16.msra.mxu0 %v1631
    %1997 = vmatprep.subr.bf16.mxu0 %v1638
    %1998 = vmatpush1.bf16.msra.mxu0 %v1637
    %1999 = vmatprep.subr.bf16.mxu0 %v1644
    %2000 = vmatpush1.bf16.msra.mxu0 %v1643
    %2001 = vmatprep.subr.bf16.mxu0 %v1650
    %2002 = vmatpush1.bf16.msra.mxu0 %v1649
    %2003 = vmatprep.subr.bf16.mxu0 %v1656
    %2004 = vmatpush1.bf16.msra.mxu0 %v1655
    %2005 = vmatprep.subr.bf16.mxu0 %v1662
    %2006 = vmatpush1.bf16.msra.mxu0 %v1661
    %2007 = vmatprep.subr.bf16.mxu0 %v1668
    %2008 = vmatpush1.bf16.msra.mxu0 %v1667
    %2009 = vmatprep.mubr.bf16.mxu0 %v1935
    %2010 = vmatmul.mubr.bf16.gmra.mrb[0].mxu0 %v1934
    %v2011 = vpop.f32.mrb[0].mxu0
    %v2012 = vadd.f32 %v1268, %v2011
    %v2013 = vpop.f32.mrb[0].mxu0
    %v2014 = vadd.f32 %v1272, %v2013
    %v2015 = vpop.f32.mrb[0].mxu0
    %v2016 = vpop.f32.mrb[0].mxu0
    %2017 = vdwg.mxu0
    %2018 = vmatprep.subr.bf16.mxu0 %v1580
    %2019 = vmatpush1.bf16.msra.mxu0 %v1579
    %2020 = vmatprep.subr.bf16.mxu0 %v1586
    %2021 = vmatpush1.bf16.msra.mxu0 %v1585
    %2022 = vmatprep.subr.bf16.mxu0 %v1592
    %2023 = vmatpush1.bf16.msra.mxu0 %v1591
    %2024 = vmatprep.subr.bf16.mxu0 %v1598
    %2025 = vmatpush1.bf16.msra.mxu0 %v1597
    %2026 = vmatprep.subr.bf16.mxu0 %v1604
    %2027 = vmatpush1.bf16.msra.mxu0 %v1603
    %2028 = vmatprep.subr.bf16.mxu0 %v1610
    %2029 = vmatpush1.bf16.msra.mxu0 %v1609
    %2030 = vmatprep.subr.bf16.mxu0 %v1616
    %2031 = vmatpush1.bf16.msra.mxu0 %v1615
    %2032 = vmatprep.subr.bf16.mxu0 %v1622
    %2033 = vmatpush1.bf16.msra.mxu0 %v1621
    %2034 = vmatprep.subr.bf16.mxu0 %v1628
    %2035 = vmatpush1.bf16.msra.mxu0 %v1627
    %2036 = vmatprep.subr.bf16.mxu0 %v1634
    %2037 = vmatpush1.bf16.msra.mxu0 %v1633
    %2038 = vmatprep.subr.bf16.mxu0 %v1640
    %2039 = vmatpush1.bf16.msra.mxu0 %v1639
    %2040 = vmatprep.subr.bf16.mxu0 %v1646
    %2041 = vmatpush1.bf16.msra.mxu0 %v1645
    %2042 = vmatprep.subr.bf16.mxu0 %v1652
    %2043 = vmatpush1.bf16.msra.mxu0 %v1651
    %2044 = vmatprep.subr.bf16.mxu0 %v1658
    %2045 = vmatpush1.bf16.msra.mxu0 %v1657
    %2046 = vmatprep.subr.bf16.mxu0 %v1664
    %2047 = vmatpush1.bf16.msra.mxu0 %v1663
    %2048 = vmatprep.subr.bf16.mxu0 %v1670
    %2049 = vmatpush1.bf16.msra.mxu0 %v1669
    %2050 = vmatprep.mubr.bf16.mxu0 %v1935
    %2051 = vmatmul.mubr.bf16.gmra.mrb[0].mxu0 %v1934
    %v2052 = vpop.f32.mrb[0].mxu0
    %v2053 = vadd.f32 %v1276, %v2052
    %v2054 = vpop.f32.mrb[0].mxu0
    %v2055 = vadd.f32 %v1280, %v2054
    %v2056 = vpop.f32.mrb[0].mxu0
    %v2057 = vpop.f32.mrb[0].mxu0
    %2058 = vdwg.mxu0
    %v2059 = vadd.f32 %v978, %v1971
    %v2060 = vadd.f32 %v980, %v1973
    %v2061 = vxor.u32 %v2059, 2147483648
    %v2062 = vxor.u32 %v2060, 2147483648
    %v2063 = vmul.f32 %v2061, 1.442695
    %v2064 = vpow.pop %v2063
    %v2065 = vmul.f32 %v2062, 1.442695
    %v2066 = vpow.pop %v2065
    %v2067 = vadd.f32 %v2064, 1.0
    %v2068 = vadd.f32 %v2066, 1.0
    %v2069 = vrcp.pop %v2067
    %v2070 = vmul.f32 1.0, %v2069
    %v2071 = vrcp.pop %v2068
    %v2072 = vmul.f32 1.0, %v2071
    %v2073 = vadd.f32 %v1051, %v2012
    %v2074 = vadd.f32 %v1053, %v2014
    %v2075 = vxor.u32 %v2073, 2147483648
    %v2076 = vxor.u32 %v2074, 2147483648
    %v2077 = vmul.f32 %v2075, 1.442695
    %v2078 = vpow.pop %v2077
    %v2079 = vmul.f32 %v2076, 1.442695
    %v2080 = vpow.pop %v2079
    %v2081 = vadd.f32 %v2078, 1.0
    %v2082 = vadd.f32 %v2080, 1.0
    %v2083 = vrcp.pop %v2081
    %v2084 = vmul.f32 1.0, %v2083
    %v2085 = vrcp.pop %v2082
    %v2086 = vmul.f32 1.0, %v2085
    %v2087 = vmul.f32 %v2070, %v2053
    %v2088 = vmul.f32 %v2072, %v2055
    %v2089 = vadd.f32 %v1124, %v2087
    %v2090 = vadd.f32 %v1126, %v2088
    %v2091 = vtanh.pop %v2089
    %v2092 = vtanh.pop %v2090
    %v2093 = vsub.f32 1.0, %v2084
    %v2094 = vsub.f32 1.0, %v2086
    %v2095 = vmul.f32 %v2093, %v2091
    %v2096 = vmul.f32 %v2094, %v2092
    %v2097 = vmul.f32 %v2084, %v1930
    %v2098 = vmul.f32 %v2086, %v1931
    %v2099 = vadd.f32 %v2095, %v2097
    %v2100 = vadd.f32 %v2096, %v2098
    %2101 = vst [vmem:[#allocation2 + $0x10] sm:$0xff] %v2099
    %2102 = vst [vmem:[#allocation2 + $0x18] sm:$0xff] %v2100
    %v2103 = vpack.c.bf16 %v2099, %v2099
    %v2104 = vpack.c.bf16 %v2100, %v2100
    %2105 = vmatprep.subr.bf16.mxu0 %v1576
    %2106 = vmatpush1.bf16.msra.mxu0 %v1575
    %2107 = vmatprep.subr.bf16.mxu0 %v1582
    %2108 = vmatpush1.bf16.msra.mxu0 %v1581
    %2109 = vmatprep.subr.bf16.mxu0 %v1588
    %2110 = vmatpush1.bf16.msra.mxu0 %v1587
    %2111 = vmatprep.subr.bf16.mxu0 %v1594
    %2112 = vmatpush1.bf16.msra.mxu0 %v1593
    %2113 = vmatprep.subr.bf16.mxu0 %v1600
    %2114 = vmatpush1.bf16.msra.mxu0 %v1599
    %2115 = vmatprep.subr.bf16.mxu0 %v1606
    %2116 = vmatpush1.bf16.msra.mxu0 %v1605
    %2117 = vmatprep.subr.bf16.mxu0 %v1612
    %2118 = vmatpush1.bf16.msra.mxu0 %v1611
    %2119 = vmatprep.subr.bf16.mxu0 %v1618
    %2120 = vmatpush1.bf16.msra.mxu0 %v1617
    %2121 = vmatprep.subr.bf16.mxu0 %v1624
    %2122 = vmatpush1.bf16.msra.mxu0 %v1623
    %2123 = vmatprep.subr.bf16.mxu0 %v1630
    %2124 = vmatpush1.bf16.msra.mxu0 %v1629
    %2125 = vmatprep.subr.bf16.mxu0 %v1636
    %2126 = vmatpush1.bf16.msra.mxu0 %v1635
    %2127 = vmatprep.subr.bf16.mxu0 %v1642
    %2128 = vmatpush1.bf16.msra.mxu0 %v1641
    %2129 = vmatprep.subr.bf16.mxu0 %v1648
    %2130 = vmatpush1.bf16.msra.mxu0 %v1647
    %2131 = vmatprep.subr.bf16.mxu0 %v1654
    %2132 = vmatpush1.bf16.msra.mxu0 %v1653
    %2133 = vmatprep.subr.bf16.mxu0 %v1660
    %2134 = vmatpush1.bf16.msra.mxu0 %v1659
    %2135 = vmatprep.subr.bf16.mxu0 %v1666
    %2136 = vmatpush1.bf16.msra.mxu0 %v1665
    %2137 = vmatprep.mubr.bf16.mxu0 %v2104
    %2138 = vmatmul.mubr.bf16.gmra.mrb[0].mxu0 %v2103
    %v2139 = vpop.f32.mrb[0].mxu0
    %v2140 = vadd.f32 %v1260, %v2139
    %v2141 = vpop.f32.mrb[0].mxu0
    %v2142 = vadd.f32 %v1264, %v2141
    %v2143 = vpop.f32.mrb[0].mxu0
    %v2144 = vpop.f32.mrb[0].mxu0
    %2145 = vdwg.mxu0
    %2146 = vmatprep.subr.bf16.mxu0 %v1578
    %2147 = vmatpush1.bf16.msra.mxu0 %v1577
    %2148 = vmatprep.subr.bf16.mxu0 %v1584
    %2149 = vmatpush1.bf16.msra.mxu0 %v1583
    %2150 = vmatprep.subr.bf16.mxu0 %v1590
    %2151 = vmatpush1.bf16.msra.mxu0 %v1589
    %2152 = vmatprep.subr.bf16.mxu0 %v1596
    %2153 = vmatpush1.bf16.msra.mxu0 %v1595
    %2154 = vmatprep.subr.bf16.mxu0 %v1602
    %2155 = vmatpush1.bf16.msra.mxu0 %v1601
    %2156 = vmatprep.subr.bf16.mxu0 %v1608
    %2157 = vmatpush1.bf16.msra.mxu0 %v1607
    %2158 = vmatprep.subr.bf16.mxu0 %v1614
    %2159 = vmatpush1.bf16.msra.mxu0 %v1613
    %2160 = vmatprep.subr.bf16.mxu0 %v1620
    %2161 = vmatpush1.bf16.msra.mxu0 %v1619
    %2162 = vmatprep.subr.bf16.mxu0 %v1626
    %2163 = vmatpush1.bf16.msra.mxu0 %v1625
    %2164 = vmatprep.subr.bf16.mxu0 %v1632
    %2165 = vmatpush1.bf16.msra.mxu0 %v1631
    %2166 = vmatprep.subr.bf16.mxu0 %v1638
    %2167 = vmatpush1.bf16.msra.mxu0 %v1637
    %2168 = vmatprep.subr.bf16.mxu0 %v1644
    %2169 = vmatpush1.bf16.msra.mxu0 %v1643
    %2170 = vmatprep.subr.bf16.mxu0 %v1650
    %2171 = vmatpush1.bf16.msra.mxu0 %v1649
    %2172 = vmatprep.subr.bf16.mxu0 %v1656
    %2173 = vmatpush1.bf16.msra.mxu0 %v1655
    %2174 = vmatprep.subr.bf16.mxu0 %v1662
    %2175 = vmatpush1.bf16.msra.mxu0 %v1661
    %2176 = vmatprep.subr.bf16.mxu0 %v1668
    %2177 = vmatpush1.bf16.msra.mxu0 %v1667
    %2178 = vmatprep.mubr.bf16.mxu0 %v2104
    %2179 = vmatmul.mubr.bf16.gmra.mrb[0].mxu0 %v2103
    %v2180 = vpop.f32.mrb[0].mxu0
    %v2181 = vadd.f32 %v1268, %v2180
    %v2182 = vpop.f32.mrb[0].mxu0
    %v2183 = vadd.f32 %v1272, %v2182
    %v2184 = vpop.f32.mrb[0].mxu0
    %v2185 = vpop.f32.mrb[0].mxu0
    %2186 = vdwg.mxu0
    %2187 = vmatprep.subr.bf16.mxu0 %v1580
    %2188 = vmatpush1.bf16.msra.mxu0 %v1579
    %2189 = vmatprep.subr.bf16.mxu0 %v1586
    %2190 = vmatpush1.bf16.msra.mxu0 %v1585
    %2191 = vmatprep.subr.bf16.mxu0 %v1592
    %2192 = vmatpush1.bf16.msra.mxu0 %v1591
    %2193 = vmatprep.subr.bf16.mxu0 %v1598
    %2194 = vmatpush1.bf16.msra.mxu0 %v1597
    %2195 = vmatprep.subr.bf16.mxu0 %v1604
    %2196 = vmatpush1.bf16.msra.mxu0 %v1603
    %2197 = vmatprep.subr.bf16.mxu0 %v1610
    %2198 = vmatpush1.bf16.msra.mxu0 %v1609
    %2199 = vmatprep.subr.bf16.mxu0 %v1616
    %2200 = vmatpush1.bf16.msra.mxu0 %v1615
    %2201 = vmatprep.subr.bf16.mxu0 %v1622
    %2202 = vmatpush1.bf16.msra.mxu0 %v1621
    %2203 = vmatprep.subr.bf16.mxu0 %v1628
    %2204 = vmatpush1.bf16.msra.mxu0 %v1627
    %2205 = vmatprep.subr.bf16.mxu0 %v1634
    %2206 = vmatpush1.bf16.msra.mxu0 %v1633
    %2207 = vmatprep.subr.bf16.mxu0 %v1640
    %2208 = vmatpush1.bf16.msra.mxu0 %v1639
    %2209 = vmatprep.subr.bf16.mxu0 %v1646
    %2210 = vmatpush1.bf16.msra.mxu0 %v1645
    %2211 = vmatprep.subr.bf16.mxu0 %v1652
    %2212 = vmatpush1.bf16.msra.mxu0 %v1651
    %2213 = vmatprep.subr.bf16.mxu0 %v1658
    %2214 = vmatpush1.bf16.msra.mxu0 %v1657
    %2215 = vmatprep.subr.bf16.mxu0 %v1664
    %2216 = vmatpush1.bf16.msra.mxu0 %v1663
    %2217 = vmatprep.subr.bf16.mxu0 %v1670
    %2218 = vmatpush1.bf16.msra.mxu0 %v1669
    %2219 = vmatprep.mubr.bf16.mxu0 %v2104
    %2220 = vmatmul.mubr.bf16.gmra.mrb[0].mxu0 %v2103
    %v2221 = vpop.f32.mrb[0].mxu0
    %v2222 = vadd.f32 %v1276, %v2221
    %v2223 = vpop.f32.mrb[0].mxu0
    %v2224 = vadd.f32 %v1280, %v2223
    %v2225 = vpop.f32.mrb[0].mxu0
    %v2226 = vpop.f32.mrb[0].mxu0
    %2227 = vdwg.mxu0
    %v2228 = vadd.f32 %v984, %v2140
    %v2229 = vadd.f32 %v986, %v2142
    %v2230 = vxor.u32 %v2228, 2147483648
    %v2231 = vxor.u32 %v2229, 2147483648
    %v2232 = vmul.f32 %v2230, 1.442695
    %v2233 = vpow.pop %v2232
    %v2234 = vmul.f32 %v2231, 1.442695
    %v2235 = vpow.pop %v2234
    %v2236 = vadd.f32 %v2233, 1.0
    %v2237 = vadd.f32 %v2235, 1.0
    %v2238 = vrcp.pop %v2236
    %v2239 = vmul.f32 1.0, %v2238
    %v2240 = vrcp.pop %v2237
    %v2241 = vmul.f32 1.0, %v2240
    %v2242 = vadd.f32 %v1057, %v2181
    %v2243 = vadd.f32 %v1059, %v2183
    %v2244 = vxor.u32 %v2242, 2147483648
    %v2245 = vxor.u32 %v2243, 2147483648
    %v2246 = vmul.f32 %v2244, 1.442695
    %v2247 = vpow.pop %v2246
    %v2248 = vmul.f32 %v2245, 1.442695
    %v2249 = vpow.pop %v2248
    %v2250 = vadd.f32 %v2247, 1.0
    %v2251 = vadd.f32 %v2249, 1.0
    %v2252 = vrcp.pop %v2250
    %v2253 = vmul.f32 1.0, %v2252
    %v2254 = vrcp.pop %v2251
    %v2255 = vmul.f32 1.0, %v2254
    %v2256 = vmul.f32 %v2239, %v2222
    %v2257 = vmul.f32 %v2241, %v2224
    %v2258 = vadd.f32 %v1130, %v2256
    %v2259 = vadd.f32 %v1132, %v2257
    %v2260 = vtanh.pop %v2258
    %v2261 = vtanh.pop %v2259
    %v2262 = vsub.f32 1.0, %v2253
    %v2263 = vsub.f32 1.0, %v2255
    %v2264 = vmul.f32 %v2262, %v2260
    %v2265 = vmul.f32 %v2263, %v2261
    %v2266 = vmul.f32 %v2253, %v2099
    %v2267 = vmul.f32 %v2255, %v2100
    %v2268 = vadd.f32 %v2264, %v2266
    %v2269 = vadd.f32 %v2265, %v2267
    %2270 = vst [vmem:[#allocation2 + $0x20] sm:$0xff] %v2268
    %2271 = vst [vmem:[#allocation2 + $0x28] sm:$0xff] %v2269
    %v2272 = vpack.c.bf16 %v2268, %v2268
    %v2273 = vpack.c.bf16 %v2269, %v2269
    %2274 = vmatprep.subr.bf16.mxu0 %v1576
    %2275 = vmatpush1.bf16.msra.mxu0 %v1575
    %2276 = vmatprep.subr.bf16.mxu0 %v1582
    %2277 = vmatpush1.bf16.msra.mxu0 %v1581
    %2278 = vmatprep.subr.bf16.mxu0 %v1588
    %2279 = vmatpush1.bf16.msra.mxu0 %v1587
    %2280 = vmatprep.subr.bf16.mxu0 %v1594
    %2281 = vmatpush1.bf16.msra.mxu0 %v1593
    %2282 = vmatprep.subr.bf16.mxu0 %v1600
    %2283 = vmatpush1.bf16.msra.mxu0 %v1599
    %2284 = vmatprep.subr.bf16.mxu0 %v1606
    %2285 = vmatpush1.bf16.msra.mxu0 %v1605
    %2286 = vmatprep.subr.bf16.mxu0 %v1612
    %2287 = vmatpush1.bf16.msra.mxu0 %v1611
    %2288 = vmatprep.subr.bf16.mxu0 %v1618
    %2289 = vmatpush1.bf16.msra.mxu0 %v1617
    %2290 = vmatprep.subr.bf16.mxu0 %v1624
    %2291 = vmatpush1.bf16.msra.mxu0 %v1623
    %2292 = vmatprep.subr.bf16.mxu0 %v1630
    %2293 = vmatpush1.bf16.msra.mxu0 %v1629
    %2294 = vmatprep.subr.bf16.mxu0 %v1636
    %2295 = vmatpush1.bf16.msra.mxu0 %v1635
    %2296 = vmatprep.subr.bf16.mxu0 %v1642
    %2297 = vmatpush1.bf16.msra.mxu0 %v1641
    %2298 = vmatprep.subr.bf16.mxu0 %v1648
    %2299 = vmatpush1.bf16.msra.mxu0 %v1647
    %2300 = vmatprep.subr.bf16.mxu0 %v1654
    %2301 = vmatpush1.bf16.msra.mxu0 %v1653
    %2302 = vmatprep.subr.bf16.mxu0 %v1660
    %2303 = vmatpush1.bf16.msra.mxu0 %v1659
    %2304 = vmatprep.subr.bf16.mxu0 %v1666
    %2305 = vmatpush1.bf16.msra.mxu0 %v1665
    %2306 = vmatprep.mubr.bf16.mxu0 %v2273
    %2307 = vmatmul.mubr.bf16.gmra.mrb[0].mxu0 %v2272
    %v2308 = vpop.f32.mrb[0].mxu0
    %v2309 = vadd.f32 %v1260, %v2308
    %v2310 = vpop.f32.mrb[0].mxu0
    %v2311 = vadd.f32 %v1264, %v2310
    %v2312 = vpop.f32.mrb[0].mxu0
    %v2313 = vpop.f32.mrb[0].mxu0
    %2314 = vdwg.mxu0
    %2315 = vmatprep.subr.bf16.mxu0 %v1578
    %2316 = vmatpush1.bf16.msra.mxu0 %v1577
    %2317 = vmatprep.subr.bf16.mxu0 %v1584
    %2318 = vmatpush1.bf16.msra.mxu0 %v1583
    %2319 = vmatprep.subr.bf16.mxu0 %v1590
    %2320 = vmatpush1.bf16.msra.mxu0 %v1589
    %2321 = vmatprep.subr.bf16.mxu0 %v1596
    %2322 = vmatpush1.bf16.msra.mxu0 %v1595
    %2323 = vmatprep.subr.bf16.mxu0 %v1602
    %2324 = vmatpush1.bf16.msra.mxu0 %v1601
    %2325 = vmatprep.subr.bf16.mxu0 %v1608
    %2326 = vmatpush1.bf16.msra.mxu0 %v1607
    %2327 = vmatprep.subr.bf16.mxu0 %v1614
    %2328 = vmatpush1.bf16.msra.mxu0 %v1613
    %2329 = vmatprep.subr.bf16.mxu0 %v1620
    %2330 = vmatpush1.bf16.msra.mxu0 %v1619
    %2331 = vmatprep.subr.bf16.mxu0 %v1626
    %2332 = vmatpush1.bf16.msra.mxu0 %v1625
    %2333 = vmatprep.subr.bf16.mxu0 %v1632
    %2334 = vmatpush1.bf16.msra.mxu0 %v1631
    %2335 = vmatprep.subr.bf16.mxu0 %v1638
    %2336 = vmatpush1.bf16.msra.mxu0 %v1637
    %2337 = vmatprep.subr.bf16.mxu0 %v1644
    %2338 = vmatpush1.bf16.msra.mxu0 %v1643
    %2339 = vmatprep.subr.bf16.mxu0 %v1650
    %2340 = vmatpush1.bf16.msra.mxu0 %v1649
    %2341 = vmatprep.subr.bf16.mxu0 %v1656
    %2342 = vmatpush1.bf16.msra.mxu0 %v1655
    %2343 = vmatprep.subr.bf16.mxu0 %v1662
    %2344 = vmatpush1.bf16.msra.mxu0 %v1661
    %2345 = vmatprep.subr.bf16.mxu0 %v1668
    %2346 = vmatpush1.bf16.msra.mxu0 %v1667
    %2347 = vmatprep.mubr.bf16.mxu0 %v2273
    %2348 = vmatmul.mubr.bf16.gmra.mrb[0].mxu0 %v2272
    %v2349 = vpop.f32.mrb[0].mxu0
    %v2350 = vadd.f32 %v1268, %v2349
    %v2351 = vpop.f32.mrb[0].mxu0
    %v2352 = vadd.f32 %v1272, %v2351
    %v2353 = vpop.f32.mrb[0].mxu0
    %v2354 = vpop.f32.mrb[0].mxu0
    %2355 = vdwg.mxu0
    %2356 = vmatprep.subr.bf16.mxu0 %v1580
    %2357 = vmatpush1.bf16.msra.mxu0 %v1579
    %2358 = vmatprep.subr.bf16.mxu0 %v1586
    %2359 = vmatpush1.bf16.msra.mxu0 %v1585
    %2360 = vmatprep.subr.bf16.mxu0 %v1592
    %2361 = vmatpush1.bf16.msra.mxu0 %v1591
    %2362 = vmatprep.subr.bf16.mxu0 %v1598
    %2363 = vmatpush1.bf16.msra.mxu0 %v1597
    %2364 = vmatprep.subr.bf16.mxu0 %v1604
    %2365 = vmatpush1.bf16.msra.mxu0 %v1603
    %2366 = vmatprep.subr.bf16.mxu0 %v1610
    %2367 = vmatpush1.bf16.msra.mxu0 %v1609
    %2368 = vmatprep.subr.bf16.mxu0 %v1616
    %2369 = vmatpush1.bf16.msra.mxu0 %v1615
    %2370 = vmatprep.subr.bf16.mxu0 %v1622
    %2371 = vmatpush1.bf16.msra.mxu0 %v1621
    %2372 = vmatprep.subr.bf16.mxu0 %v1628
    %2373 = vmatpush1.bf16.msra.mxu0 %v1627
    %2374 = vmatprep.subr.bf16.mxu0 %v1634
    %2375 = vmatpush1.bf16.msra.mxu0 %v1633
    %2376 = vmatprep.subr.bf16.mxu0 %v1640
    %2377 = vmatpush1.bf16.msra.mxu0 %v1639
    %2378 = vmatprep.subr.bf16.mxu0 %v1646
    %2379 = vmatpush1.bf16.msra.mxu0 %v1645
    %2380 = vmatprep.subr.bf16.mxu0 %v1652
    %2381 = vmatpush1.bf16.msra.mxu0 %v1651
    %2382 = vmatprep.subr.bf16.mxu0 %v1658
    %2383 = vmatpush1.bf16.msra.mxu0 %v1657
    %2384 = vmatprep.subr.bf16.mxu0 %v1664
    %2385 = vmatpush1.bf16.msra.mxu0 %v1663
    %2386 = vmatprep.subr.bf16.mxu0 %v1670
    %2387 = vmatpush1.bf16.msra.mxu0 %v1669
    %2388 = vmatprep.mubr.bf16.mxu0 %v2273
    %2389 = vmatmul.mubr.bf16.gmra.mrb[0].mxu0 %v2272
    %v2390 = vpop.f32.mrb[0].mxu0
    %v2391 = vadd.f32 %v1276, %v2390
    %v2392 = vpop.f32.mrb[0].mxu0
    %v2393 = vadd.f32 %v1280, %v2392
    %v2394 = vpop.f32.mrb[0].mxu0
    %v2395 = vpop.f32.mrb[0].mxu0
    %2396 = vdwg.mxu0
    %v2397 = vadd.f32 %v988, %v2309
    %v2398 = vadd.f32 %v990, %v2311
    %v2399 = vxor.u32 %v2397, 2147483648
    %v2400 = vxor.u32 %v2398, 2147483648
    %v2401 = vmul.f32 %v2399, 1.442695
    %v2402 = vpow.pop %v2401
    %v2403 = vmul.f32 %v2400, 1.442695
    %v2404 = vpow.pop %v2403
    %v2405 = vadd.f32 %v2402, 1.0
    %v2406 = vadd.f32 %v2404, 1.0
    %v2407 = vrcp.pop %v2405
    %v2408 = vmul.f32 1.0, %v2407
    %v2409 = vrcp.pop %v2406
    %v2410 = vmul.f32 1.0, %v2409
    %v2411 = vadd.f32 %v1061, %v2350
    %v2412 = vadd.f32 %v1063, %v2352
    %v2413 = vxor.u32 %v2411, 2147483648
    %v2414 = vxor.u32 %v2412, 2147483648
    %v2415 = vmul.f32 %v2413, 1.442695
    %v2416 = vpow.pop %v2415
    %v2417 = vmul.f32 %v2414, 1.442695
    %v2418 = vpow.pop %v2417
    %v2419 = vadd.f32 %v2416, 1.0
    %v2420 = vadd.f32 %v2418, 1.0
    %v2421 = vrcp.pop %v2419
    %v2422 = vmul.f32 1.0, %v2421
    %v2423 = vrcp.pop %v2420
    %v2424 = vmul.f32 1.0, %v2423
    %v2425 = vmul.f32 %v2408, %v2391
    %v2426 = vmul.f32 %v2410, %v2393
    %v2427 = vadd.f32 %v1134, %v2425
    %v2428 = vadd.f32 %v1136, %v2426
    %v2429 = vtanh.pop %v2427
    %v2430 = vtanh.pop %v2428
    %v2431 = vsub.f32 1.0, %v2422
    %v2432 = vsub.f32 1.0, %v2424
    %v2433 = vmul.f32 %v2431, %v2429
    %v2434 = vmul.f32 %v2432, %v2430
    %v2435 = vmul.f32 %v2422, %v2268
    %v2436 = vmul.f32 %v2424, %v2269
    %v2437 = vadd.f32 %v2433, %v2435
    %v2438 = vadd.f32 %v2434, %v2436
    %2439 = vst [vmem:[#allocation2 + $0x30] sm:$0xff] %v2437
    %2440 = vst [vmem:[#allocation2 + $0x38] sm:$0xff] %v2438
    %v2441 = vpack.c.bf16 %v2437, %v2437
    %v2442 = vpack.c.bf16 %v2438, %v2438
    %2443 = vmatprep.subr.bf16.mxu0 %v1576
    %2444 = vmatpush1.bf16.msra.mxu0 %v1575
    %2445 = vmatprep.subr.bf16.mxu0 %v1582
    %2446 = vmatpush1.bf16.msra.mxu0 %v1581
    %2447 = vmatprep.subr.bf16.mxu0 %v1588
    %2448 = vmatpush1.bf16.msra.mxu0 %v1587
    %2449 = vmatprep.subr.bf16.mxu0 %v1594
    %2450 = vmatpush1.bf16.msra.mxu0 %v1593
    %2451 = vmatprep.subr.bf16.mxu0 %v1600
    %2452 = vmatpush1.bf16.msra.mxu0 %v1599
    %2453 = vmatprep.subr.bf16.mxu0 %v1606
    %2454 = vmatpush1.bf16.msra.mxu0 %v1605
    %2455 = vmatprep.subr.bf16.mxu0 %v1612
    %2456 = vmatpush1.bf16.msra.mxu0 %v1611
    %2457 = vmatprep.subr.bf16.mxu0 %v1618
    %2458 = vmatpush1.bf16.msra.mxu0 %v1617
    %2459 = vmatprep.subr.bf16.mxu0 %v1624
    %2460 = vmatpush1.bf16.msra.mxu0 %v1623
    %2461 = vmatprep.subr.bf16.mxu0 %v1630
    %2462 = vmatpush1.bf16.msra.mxu0 %v1629
    %2463 = vmatprep.subr.bf16.mxu0 %v1636
    %2464 = vmatpush1.bf16.msra.mxu0 %v1635
    %2465 = vmatprep.subr.bf16.mxu0 %v1642
    %2466 = vmatpush1.bf16.msra.mxu0 %v1641
    %2467 = vmatprep.subr.bf16.mxu0 %v1648
    %2468 = vmatpush1.bf16.msra.mxu0 %v1647
    %2469 = vmatprep.subr.bf16.mxu0 %v1654
    %2470 = vmatpush1.bf16.msra.mxu0 %v1653
    %2471 = vmatprep.subr.bf16.mxu0 %v1660
    %2472 = vmatpush1.bf16.msra.mxu0 %v1659
    %2473 = vmatprep.subr.bf16.mxu0 %v1666
    %2474 = vmatpush1.bf16.msra.mxu0 %v1665
    %2475 = vmatprep.mubr.bf16.mxu0 %v2442
    %2476 = vmatmul.mubr.bf16.gmra.mrb[0].mxu0 %v2441
    %v2477 = vpop.f32.mrb[0].mxu0
    %v2478 = vadd.f32 %v1260, %v2477
    %v2479 = vpop.f32.mrb[0].mxu0
    %v2480 = vadd.f32 %v1264, %v2479
    %v2481 = vpop.f32.mrb[0].mxu0
    %v2482 = vpop.f32.mrb[0].mxu0
    %2483 = vdwg.mxu0
    %2484 = vmatprep.subr.bf16.mxu0 %v1578
    %2485 = vmatpush1.bf16.msra.mxu0 %v1577
    %2486 = vmatprep.subr.bf16.mxu0 %v1584
    %2487 = vmatpush1.bf16.msra.mxu0 %v1583
    %2488 = vmatprep.subr.bf16.mxu0 %v1590
    %2489 = vmatpush1.bf16.msra.mxu0 %v1589
    %2490 = vmatprep.subr.bf16.mxu0 %v1596
    %2491 = vmatpush1.bf16.msra.mxu0 %v1595
    %2492 = vmatprep.subr.bf16.mxu0 %v1602
    %2493 = vmatpush1.bf16.msra.mxu0 %v1601
    %2494 = vmatprep.subr.bf16.mxu0 %v1608
    %2495 = vmatpush1.bf16.msra.mxu0 %v1607
    %2496 = vmatprep.subr.bf16.mxu0 %v1614
    %2497 = vmatpush1.bf16.msra.mxu0 %v1613
    %2498 = vmatprep.subr.bf16.mxu0 %v1620
    %2499 = vmatpush1.bf16.msra.mxu0 %v1619
    %2500 = vmatprep.subr.bf16.mxu0 %v1626
    %2501 = vmatpush1.bf16.msra.mxu0 %v1625
    %2502 = vmatprep.subr.bf16.mxu0 %v1632
    %2503 = vmatpush1.bf16.msra.mxu0 %v1631
    %2504 = vmatprep.subr.bf16.mxu0 %v1638
    %2505 = vmatpush1.bf16.msra.mxu0 %v1637
    %2506 = vmatprep.subr.bf16.mxu0 %v1644
    %2507 = vmatpush1.bf16.msra.mxu0 %v1643
    %2508 = vmatprep.subr.bf16.mxu0 %v1650
    %2509 = vmatpush1.bf16.msra.mxu0 %v1649
    %2510 = vmatprep.subr.bf16.mxu0 %v1656
    %2511 = vmatpush1.bf16.msra.mxu0 %v1655
    %2512 = vmatprep.subr.bf16.mxu0 %v1662
    %2513 = vmatpush1.bf16.msra.mxu0 %v1661
    %2514 = vmatprep.subr.bf16.mxu0 %v1668
    %2515 = vmatpush1.bf16.msra.mxu0 %v1667
    %2516 = vmatprep.mubr.bf16.mxu0 %v2442
    %2517 = vmatmul.mubr.bf16.gmra.mrb[0].mxu0 %v2441
    %v2518 = vpop.f32.mrb[0].mxu0
    %v2519 = vadd.f32 %v1268, %v2518
    %v2520 = vpop.f32.mrb[0].mxu0
    %v2521 = vadd.f32 %v1272, %v2520
    %v2522 = vpop.f32.mrb[0].mxu0
    %v2523 = vpop.f32.mrb[0].mxu0
    %2524 = vdwg.mxu0
    %2525 = vmatprep.subr.bf16.mxu0 %v1580
    %2526 = vmatpush1.bf16.msra.mxu0 %v1579
    %2527 = vmatprep.subr.bf16.mxu0 %v1586
    %2528 = vmatpush1.bf16.msra.mxu0 %v1585
    %2529 = vmatprep.subr.bf16.mxu0 %v1592
    %2530 = vmatpush1.bf16.msra.mxu0 %v1591
    %2531 = vmatprep.subr.bf16.mxu0 %v1598
    %2532 = vmatpush1.bf16.msra.mxu0 %v1597
    %2533 = vmatprep.subr.bf16.mxu0 %v1604
    %2534 = vmatpush1.bf16.msra.mxu0 %v1603
    %2535 = vmatprep.subr.bf16.mxu0 %v1610
    %2536 = vmatpush1.bf16.msra.mxu0 %v1609
    %2537 = vmatprep.subr.bf16.mxu0 %v1616
    %2538 = vmatpush1.bf16.msra.mxu0 %v1615
    %2539 = vmatprep.subr.bf16.mxu0 %v1622
    %2540 = vmatpush1.bf16.msra.mxu0 %v1621
    %2541 = vmatprep.subr.bf16.mxu0 %v1628
    %2542 = vmatpush1.bf16.msra.mxu0 %v1627
    %2543 = vmatprep.subr.bf16.mxu0 %v1634
    %2544 = vmatpush1.bf16.msra.mxu0 %v1633
    %2545 = vmatprep.subr.bf16.mxu0 %v1640
    %2546 = vmatpush1.bf16.msra.mxu0 %v1639
    %2547 = vmatprep.subr.bf16.mxu0 %v1646
    %2548 = vmatpush1.bf16.msra.mxu0 %v1645
    %2549 = vmatprep.subr.bf16.mxu0 %v1652
    %2550 = vmatpush1.bf16.msra.mxu0 %v1651
    %2551 = vmatprep.subr.bf16.mxu0 %v1658
    %2552 = vmatpush1.bf16.msra.mxu0 %v1657
    %2553 = vmatprep.subr.bf16.mxu0 %v1664
    %2554 = vmatpush1.bf16.msra.mxu0 %v1663
    %2555 = vmatprep.subr.bf16.mxu0 %v1670
    %2556 = vmatpush1.bf16.msra.mxu0 %v1669
    %2557 = vmatprep.mubr.bf16.mxu0 %v2442
    %2558 = vmatmul.mubr.bf16.gmra.mrb[0].mxu0 %v2441
    %v2559 = vpop.f32.mrb[0].mxu0
    %v2560 = vadd.f32 %v1276, %v2559
    %v2561 = vpop.f32.mrb[0].mxu0
    %v2562 = vadd.f32 %v1280, %v2561
    %v2563 = vpop.f32.mrb[0].mxu0
    %v2564 = vpop.f32.mrb[0].mxu0
    %2565 = vdwg.mxu0
    %v2566 = vadd.f32 %v994, %v2478
    %v2567 = vadd.f32 %v996, %v2480
    %v2568 = vxor.u32 %v2566, 2147483648
    %v2569 = vxor.u32 %v2567, 2147483648
    %v2570 = vmul.f32 %v2568, 1.442695
    %v2571 = vpow.pop %v2570
    %v2572 = vmul.f32 %v2569, 1.442695
    %v2573 = vpow.pop %v2572
    %v2574 = vadd.f32 %v2571, 1.0
    %v2575 = vadd.f32 %v2573, 1.0
    %v2576 = vrcp.pop %v2574
    %v2577 = vmul.f32 1.0, %v2576
    %v2578 = vrcp.pop %v2575
    %v2579 = vmul.f32 1.0, %v2578
    %v2580 = vadd.f32 %v1067, %v2519
    %v2581 = vadd.f32 %v1069, %v2521
    %v2582 = vxor.u32 %v2580, 2147483648
    %v2583 = vxor.u32 %v2581, 2147483648
    %v2584 = vmul.f32 %v2582, 1.442695
    %v2585 = vpow.pop %v2584
    %v2586 = vmul.f32 %v2583, 1.442695
    %v2587 = vpow.pop %v2586
    %v2588 = vadd.f32 %v2585, 1.0
    %v2589 = vadd.f32 %v2587, 1.0
    %v2590 = vrcp.pop %v2588
    %v2591 = vmul.f32 1.0, %v2590
    %v2592 = vrcp.pop %v2589
    %v2593 = vmul.f32 1.0, %v2592
    %v2594 = vmul.f32 %v2577, %v2560
    %v2595 = vmul.f32 %v2579, %v2562
    %v2596 = vadd.f32 %v1140, %v2594
    %v2597 = vadd.f32 %v1142, %v2595
    %v2598 = vtanh.pop %v2596
    %v2599 = vtanh.pop %v2597
    %v2600 = vsub.f32 1.0, %v2591
    %v2601 = vsub.f32 1.0, %v2593
    %v2602 = vmul.f32 %v2600, %v2598
    %v2603 = vmul.f32 %v2601, %v2599
    %v2604 = vmul.f32 %v2591, %v2437
    %v2605 = vmul.f32 %v2593, %v2438
    %v2606 = vadd.f32 %v2602, %v2604
    %v2607 = vadd.f32 %v2603, %v2605
    %2608 = vst [vmem:[#allocation2 + $0x40] sm:$0xff] %v2606
    %2609 = vst [vmem:[#allocation2 + $0x48] sm:$0xff] %v2607
    %v2610 = vpack.c.bf16 %v2606, %v2606
    %v2611 = vpack.c.bf16 %v2607, %v2607
    %2612 = vmatprep.subr.bf16.mxu0 %v1576
    %2613 = vmatpush1.bf16.msra.mxu0 %v1575
    %2614 = vmatprep.subr.bf16.mxu0 %v1582
    %2615 = vmatpush1.bf16.msra.mxu0 %v1581
    %2616 = vmatprep.subr.bf16.mxu0 %v1588
    %2617 = vmatpush1.bf16.msra.mxu0 %v1587
    %2618 = vmatprep.subr.bf16.mxu0 %v1594
    %2619 = vmatpush1.bf16.msra.mxu0 %v1593
    %2620 = vmatprep.subr.bf16.mxu0 %v1600
    %2621 = vmatpush1.bf16.msra.mxu0 %v1599
    %2622 = vmatprep.subr.bf16.mxu0 %v1606
    %2623 = vmatpush1.bf16.msra.mxu0 %v1605
    %2624 = vmatprep.subr.bf16.mxu0 %v1612
    %2625 = vmatpush1.bf16.msra.mxu0 %v1611
    %2626 = vmatprep.subr.bf16.mxu0 %v1618
    %2627 = vmatpush1.bf16.msra.mxu0 %v1617
    %2628 = vmatprep.subr.bf16.mxu0 %v1624
    %2629 = vmatpush1.bf16.msra.mxu0 %v1623
    %2630 = vmatprep.subr.bf16.mxu0 %v1630
    %2631 = vmatpush1.bf16.msra.mxu0 %v1629
    %2632 = vmatprep.subr.bf16.mxu0 %v1636
    %2633 = vmatpush1.bf16.msra.mxu0 %v1635
    %2634 = vmatprep.subr.bf16.mxu0 %v1642
    %2635 = vmatpush1.bf16.msra.mxu0 %v1641
    %2636 = vmatprep.subr.bf16.mxu0 %v1648
    %2637 = vmatpush1.bf16.msra.mxu0 %v1647
    %2638 = vmatprep.subr.bf16.mxu0 %v1654
    %2639 = vmatpush1.bf16.msra.mxu0 %v1653
    %2640 = vmatprep.subr.bf16.mxu0 %v1660
    %2641 = vmatpush1.bf16.msra.mxu0 %v1659
    %2642 = vmatprep.subr.bf16.mxu0 %v1666
    %2643 = vmatpush1.bf16.msra.mxu0 %v1665
    %2644 = vmatprep.mubr.bf16.mxu0 %v2611
    %2645 = vmatmul.mubr.bf16.gmra.mrb[0].mxu0 %v2610
    %v2646 = vpop.f32.mrb[0].mxu0
    %v2647 = vadd.f32 %v1260, %v2646
    %v2648 = vpop.f32.mrb[0].mxu0
    %v2649 = vadd.f32 %v1264, %v2648
    %v2650 = vpop.f32.mrb[0].mxu0
    %v2651 = vpop.f32.mrb[0].mxu0
    %2652 = vdwg.mxu0
    %2653 = vmatprep.subr.bf16.mxu0 %v1578
    %2654 = vmatpush1.bf16.msra.mxu0 %v1577
    %2655 = vmatprep.subr.bf16.mxu0 %v1584
    %2656 = vmatpush1.bf16.msra.mxu0 %v1583
    %2657 = vmatprep.subr.bf16.mxu0 %v1590
    %2658 = vmatpush1.bf16.msra.mxu0 %v1589
    %2659 = vmatprep.subr.bf16.mxu0 %v1596
    %2660 = vmatpush1.bf16.msra.mxu0 %v1595
    %2661 = vmatprep.subr.bf16.mxu0 %v1602
    %2662 = vmatpush1.bf16.msra.mxu0 %v1601
    %2663 = vmatprep.subr.bf16.mxu0 %v1608
    %2664 = vmatpush1.bf16.msra.mxu0 %v1607
    %2665 = vmatprep.subr.bf16.mxu0 %v1614
    %2666 = vmatpush1.bf16.msra.mxu0 %v1613
    %2667 = vmatprep.subr.bf16.mxu0 %v1620
    %2668 = vmatpush1.bf16.msra.mxu0 %v1619
    %2669 = vmatprep.subr.bf16.mxu0 %v1626
    %2670 = vmatpush1.bf16.msra.mxu0 %v1625
    %2671 = vmatprep.subr.bf16.mxu0 %v1632
    %2672 = vmatpush1.bf16.msra.mxu0 %v1631
    %2673 = vmatprep.subr.bf16.mxu0 %v1638
    %2674 = vmatpush1.bf16.msra.mxu0 %v1637
    %2675 = vmatprep.subr.bf16.mxu0 %v1644
    %2676 = vmatpush1.bf16.msra.mxu0 %v1643
    %2677 = vmatprep.subr.bf16.mxu0 %v1650
    %2678 = vmatpush1.bf16.msra.mxu0 %v1649
    %2679 = vmatprep.subr.bf16.mxu0 %v1656
    %2680 = vmatpush1.bf16.msra.mxu0 %v1655
    %2681 = vmatprep.subr.bf16.mxu0 %v1662
    %2682 = vmatpush1.bf16.msra.mxu0 %v1661
    %2683 = vmatprep.subr.bf16.mxu0 %v1668
    %2684 = vmatpush1.bf16.msra.mxu0 %v1667
    %2685 = vmatprep.mubr.bf16.mxu0 %v2611
    %2686 = vmatmul.mubr.bf16.gmra.mrb[0].mxu0 %v2610
    %v2687 = vpop.f32.mrb[0].mxu0
    %v2688 = vadd.f32 %v1268, %v2687
    %v2689 = vpop.f32.mrb[0].mxu0
    %v2690 = vadd.f32 %v1272, %v2689
    %v2691 = vpop.f32.mrb[0].mxu0
    %v2692 = vpop.f32.mrb[0].mxu0
    %2693 = vdwg.mxu0
    %2694 = vmatprep.subr.bf16.mxu0 %v1580
    %2695 = vmatpush1.bf16.msra.mxu0 %v1579
    %2696 = vmatprep.subr.bf16.mxu0 %v1586
    %2697 = vmatpush1.bf16.msra.mxu0 %v1585
    %2698 = vmatprep.subr.bf16.mxu0 %v1592
    %2699 = vmatpush1.bf16.msra.mxu0 %v1591
    %2700 = vmatprep.subr.bf16.mxu0 %v1598
    %2701 = vmatpush1.bf16.msra.mxu0 %v1597
    %2702 = vmatprep.subr.bf16.mxu0 %v1604
    %2703 = vmatpush1.bf16.msra.mxu0 %v1603
    %2704 = vmatprep.subr.bf16.mxu0 %v1610
    %2705 = vmatpush1.bf16.msra.mxu0 %v1609
    %2706 = vmatprep.subr.bf16.mxu0 %v1616
    %2707 = vmatpush1.bf16.msra.mxu0 %v1615
    %2708 = vmatprep.subr.bf16.mxu0 %v1622
    %2709 = vmatpush1.bf16.msra.mxu0 %v1621
    %2710 = vmatprep.subr.bf16.mxu0 %v1628
    %2711 = vmatpush1.bf16.msra.mxu0 %v1627
    %2712 = vmatprep.subr.bf16.mxu0 %v1634
    %2713 = vmatpush1.bf16.msra.mxu0 %v1633
    %2714 = vmatprep.subr.bf16.mxu0 %v1640
    %2715 = vmatpush1.bf16.msra.mxu0 %v1639
    %2716 = vmatprep.subr.bf16.mxu0 %v1646
    %2717 = vmatpush1.bf16.msra.mxu0 %v1645
    %2718 = vmatprep.subr.bf16.mxu0 %v1652
    %2719 = vmatpush1.bf16.msra.mxu0 %v1651
    %2720 = vmatprep.subr.bf16.mxu0 %v1658
    %2721 = vmatpush1.bf16.msra.mxu0 %v1657
    %2722 = vmatprep.subr.bf16.mxu0 %v1664
    %2723 = vmatpush1.bf16.msra.mxu0 %v1663
    %2724 = vmatprep.subr.bf16.mxu0 %v1670
    %2725 = vmatpush1.bf16.msra.mxu0 %v1669
    %2726 = vmatprep.mubr.bf16.mxu0 %v2611
    %2727 = vmatmul.mubr.bf16.gmra.mrb[0].mxu0 %v2610
    %v2728 = vpop.f32.mrb[0].mxu0
    %v2729 = vadd.f32 %v1276, %v2728
    %v2730 = vpop.f32.mrb[0].mxu0
    %v2731 = vadd.f32 %v1280, %v2730
    %v2732 = vpop.f32.mrb[0].mxu0
    %v2733 = vpop.f32.mrb[0].mxu0
    %2734 = vdwg.mxu0
    %v2735 = vadd.f32 %v998, %v2647
    %v2736 = vadd.f32 %v1000, %v2649
    %v2737 = vxor.u32 %v2735, 2147483648
    %v2738 = vxor.u32 %v2736, 2147483648
    %v2739 = vmul.f32 %v2737, 1.442695
    %v2740 = vpow.pop %v2739
    %v2741 = vmul.f32 %v2738, 1.442695
    %v2742 = vpow.pop %v2741
    %v2743 = vadd.f32 %v2740, 1.0
    %v2744 = vadd.f32 %v2742, 1.0
    %v2745 = vrcp.pop %v2743
    %v2746 = vmul.f32 1.0, %v2745
    %v2747 = vrcp.pop %v2744
    %v2748 = vmul.f32 1.0, %v2747
    %v2749 = vadd.f32 %v1071, %v2688
    %v2750 = vadd.f32 %v1073, %v2690
    %v2751 = vxor.u32 %v2749, 2147483648
    %v2752 = vxor.u32 %v2750, 2147483648
    %v2753 = vmul.f32 %v2751, 1.442695
    %v2754 = vpow.pop %v2753
    %v2755 = vmul.f32 %v2752, 1.442695
    %v2756 = vpow.pop %v2755
    %v2757 = vadd.f32 %v2754, 1.0
    %v2758 = vadd.f32 %v2756, 1.0
    %v2759 = vrcp.pop %v2757
    %v2760 = vmul.f32 1.0, %v2759
    %v2761 = vrcp.pop %v2758
    %v2762 = vmul.f32 1.0, %v2761
    %v2763 = vmul.f32 %v2746, %v2729
    %v2764 = vmul.f32 %v2748, %v2731
    %v2765 = vadd.f32 %v1144, %v2763
    %v2766 = vadd.f32 %v1146, %v2764
    %v2767 = vtanh.pop %v2765
    %v2768 = vtanh.pop %v2766
    %v2769 = vsub.f32 1.0, %v2760
    %v2770 = vsub.f32 1.0, %v2762
    %v2771 = vmul.f32 %v2769, %v2767
    %v2772 = vmul.f32 %v2770, %v2768
    %v2773 = vmul.f32 %v2760, %v2606
    %v2774 = vmul.f32 %v2762, %v2607
    %v2775 = vadd.f32 %v2771, %v2773
    %v2776 = vadd.f32 %v2772, %v2774
    %2777 = vst [vmem:[#allocation2 + $0x50] sm:$0xff] %v2775
    %2778 = vst [vmem:[#allocation2 + $0x58] sm:$0xff] %v2776
    %v2779 = vpack.c.bf16 %v2775, %v2775
    %v2780 = vpack.c.bf16 %v2776, %v2776
    %2781 = vmatprep.subr.bf16.mxu0 %v1576
    %2782 = vmatpush1.bf16.msra.mxu0 %v1575
    %2783 = vmatprep.subr.bf16.mxu0 %v1582
    %2784 = vmatpush1.bf16.msra.mxu0 %v1581
    %2785 = vmatprep.subr.bf16.mxu0 %v1588
    %2786 = vmatpush1.bf16.msra.mxu0 %v1587
    %2787 = vmatprep.subr.bf16.mxu0 %v1594
    %2788 = vmatpush1.bf16.msra.mxu0 %v1593
    %2789 = vmatprep.subr.bf16.mxu0 %v1600
    %2790 = vmatpush1.bf16.msra.mxu0 %v1599
    %2791 = vmatprep.subr.bf16.mxu0 %v1606
    %2792 = vmatpush1.bf16.msra.mxu0 %v1605
    %2793 = vmatprep.subr.bf16.mxu0 %v1612
    %2794 = vmatpush1.bf16.msra.mxu0 %v1611
    %2795 = vmatprep.subr.bf16.mxu0 %v1618
    %2796 = vmatpush1.bf16.msra.mxu0 %v1617
    %2797 = vmatprep.subr.bf16.mxu0 %v1624
    %2798 = vmatpush1.bf16.msra.mxu0 %v1623
    %2799 = vmatprep.subr.bf16.mxu0 %v1630
    %2800 = vmatpush1.bf16.msra.mxu0 %v1629
    %2801 = vmatprep.subr.bf16.mxu0 %v1636
    %2802 = vmatpush1.bf16.msra.mxu0 %v1635
    %2803 = vmatprep.subr.bf16.mxu0 %v1642
    %2804 = vmatpush1.bf16.msra.mxu0 %v1641
    %2805 = vmatprep.subr.bf16.mxu0 %v1648
    %2806 = vmatpush1.bf16.msra.mxu0 %v1647
    %2807 = vmatprep.subr.bf16.mxu0 %v1654
    %2808 = vmatpush1.bf16.msra.mxu0 %v1653
    %2809 = vmatprep.subr.bf16.mxu0 %v1660
    %2810 = vmatpush1.bf16.msra.mxu0 %v1659
    %2811 = vmatprep.subr.bf16.mxu0 %v1666
    %2812 = vmatpush1.bf16.msra.mxu0 %v1665
    %2813 = vmatprep.mubr.bf16.mxu0 %v2780
    %2814 = vmatmul.mubr.bf16.gmra.mrb[0].mxu0 %v2779
    %v2815 = vpop.f32.mrb[0].mxu0
    %v2816 = vadd.f32 %v1260, %v2815
    %v2817 = vpop.f32.mrb[0].mxu0
    %v2818 = vadd.f32 %v1264, %v2817
    %v2819 = vpop.f32.mrb[0].mxu0
    %v2820 = vpop.f32.mrb[0].mxu0
    %2821 = vdwg.mxu0
    %2822 = vmatprep.subr.bf16.mxu0 %v1578
    %2823 = vmatpush1.bf16.msra.mxu0 %v1577
    %2824 = vmatprep.subr.bf16.mxu0 %v1584
    %2825 = vmatpush1.bf16.msra.mxu0 %v1583
    %2826 = vmatprep.subr.bf16.mxu0 %v1590
    %2827 = vmatpush1.bf16.msra.mxu0 %v1589
    %2828 = vmatprep.subr.bf16.mxu0 %v1596
    %2829 = vmatpush1.bf16.msra.mxu0 %v1595
    %2830 = vmatprep.subr.bf16.mxu0 %v1602
    %2831 = vmatpush1.bf16.msra.mxu0 %v1601
    %2832 = vmatprep.subr.bf16.mxu0 %v1608
    %2833 = vmatpush1.bf16.msra.mxu0 %v1607
    %2834 = vmatprep.subr.bf16.mxu0 %v1614
    %2835 = vmatpush1.bf16.msra.mxu0 %v1613
    %2836 = vmatprep.subr.bf16.mxu0 %v1620
    %2837 = vmatpush1.bf16.msra.mxu0 %v1619
    %2838 = vmatprep.subr.bf16.mxu0 %v1626
    %2839 = vmatpush1.bf16.msra.mxu0 %v1625
    %2840 = vmatprep.subr.bf16.mxu0 %v1632
    %2841 = vmatpush1.bf16.msra.mxu0 %v1631
    %2842 = vmatprep.subr.bf16.mxu0 %v1638
    %2843 = vmatpush1.bf16.msra.mxu0 %v1637
    %2844 = vmatprep.subr.bf16.mxu0 %v1644
    %2845 = vmatpush1.bf16.msra.mxu0 %v1643
    %2846 = vmatprep.subr.bf16.mxu0 %v1650
    %2847 = vmatpush1.bf16.msra.mxu0 %v1649
    %2848 = vmatprep.subr.bf16.mxu0 %v1656
    %2849 = vmatpush1.bf16.msra.mxu0 %v1655
    %2850 = vmatprep.subr.bf16.mxu0 %v1662
    %2851 = vmatpush1.bf16.msra.mxu0 %v1661
    %2852 = vmatprep.subr.bf16.mxu0 %v1668
    %2853 = vmatpush1.bf16.msra.mxu0 %v1667
    %2854 = vmatprep.mubr.bf16.mxu0 %v2780
    %2855 = vmatmul.mubr.bf16.gmra.mrb[0].mxu0 %v2779
    %v2856 = vpop.f32.mrb[0].mxu0
    %v2857 = vadd.f32 %v1268, %v2856
    %v2858 = vpop.f32.mrb[0].mxu0
    %v2859 = vadd.f32 %v1272, %v2858
    %v2860 = vpop.f32.mrb[0].mxu0
    %v2861 = vpop.f32.mrb[0].mxu0
    %2862 = vdwg.mxu0
    %2863 = vmatprep.subr.bf16.mxu0 %v1580
    %2864 = vmatpush1.bf16.msra.mxu0 %v1579
    %2865 = vmatprep.subr.bf16.mxu0 %v1586
    %2866 = vmatpush1.bf16.msra.mxu0 %v1585
    %2867 = vmatprep.subr.bf16.mxu0 %v1592
    %2868 = vmatpush1.bf16.msra.mxu0 %v1591
    %2869 = vmatprep.subr.bf16.mxu0 %v1598
    %2870 = vmatpush1.bf16.msra.mxu0 %v1597
    %2871 = vmatprep.subr.bf16.mxu0 %v1604
    %2872 = vmatpush1.bf16.msra.mxu0 %v1603
    %2873 = vmatprep.subr.bf16.mxu0 %v1610
    %2874 = vmatpush1.bf16.msra.mxu0 %v1609
    %2875 = vmatprep.subr.bf16.mxu0 %v1616
    %2876 = vmatpush1.bf16.msra.mxu0 %v1615
    %2877 = vmatprep.subr.bf16.mxu0 %v1622
    %2878 = vmatpush1.bf16.msra.mxu0 %v1621
    %2879 = vmatprep.subr.bf16.mxu0 %v1628
    %2880 = vmatpush1.bf16.msra.mxu0 %v1627
    %2881 = vmatprep.subr.bf16.mxu0 %v1634
    %2882 = vmatpush1.bf16.msra.mxu0 %v1633
    %2883 = vmatprep.subr.bf16.mxu0 %v1640
    %2884 = vmatpush1.bf16.msra.mxu0 %v1639
    %2885 = vmatprep.subr.bf16.mxu0 %v1646
    %2886 = vmatpush1.bf16.msra.mxu0 %v1645
    %2887 = vmatprep.subr.bf16.mxu0 %v1652
    %2888 = vmatpush1.bf16.msra.mxu0 %v1651
    %2889 = vmatprep.subr.bf16.mxu0 %v1658
    %2890 = vmatpush1.bf16.msra.mxu0 %v1657
    %2891 = vmatprep.subr.bf16.mxu0 %v1664
    %2892 = vmatpush1.bf16.msra.mxu0 %v1663
    %2893 = vmatprep.subr.bf16.mxu0 %v1670
    %2894 = vmatpush1.bf16.msra.mxu0 %v1669
    %2895 = vmatprep.mubr.bf16.mxu0 %v2780
    %2896 = vmatmul.mubr.bf16.gmra.mrb[0].mxu0 %v2779
    %v2897 = vpop.f32.mrb[0].mxu0
    %v2898 = vadd.f32 %v1276, %v2897
    %v2899 = vpop.f32.mrb[0].mxu0
    %v2900 = vadd.f32 %v1280, %v2899
    %v2901 = vpop.f32.mrb[0].mxu0
    %v2902 = vpop.f32.mrb[0].mxu0
    %2903 = vdwg.mxu0
    %v2904 = vadd.f32 %v1004, %v2816
    %v2905 = vadd.f32 %v1006, %v2818
    %v2906 = vxor.u32 %v2904, 2147483648
    %v2907 = vxor.u32 %v2905, 2147483648
    %v2908 = vmul.f32 %v2906, 1.442695
    %v2909 = vpow.pop %v2908
    %v2910 = vmul.f32 %v2907, 1.442695
    %v2911 = vpow.pop %v2910
    %v2912 = vadd.f32 %v2909, 1.0
    %v2913 = vadd.f32 %v2911, 1.0
    %v2914 = vrcp.pop %v2912
    %v2915 = vmul.f32 1.0, %v2914
    %v2916 = vrcp.pop %v2913
    %v2917 = vmul.f32 1.0, %v2916
    %v2918 = vadd.f32 %v1077, %v2857
    %v2919 = vadd.f32 %v1079, %v2859
    %v2920 = vxor.u32 %v2918, 2147483648
    %v2921 = vxor.u32 %v2919, 2147483648
    %v2922 = vmul.f32 %v2920, 1.442695
    %v2923 = vpow.pop %v2922
    %v2924 = vmul.f32 %v2921, 1.442695
    %v2925 = vpow.pop %v2924
    %v2926 = vadd.f32 %v2923, 1.0
    %v2927 = vadd.f32 %v2925, 1.0
    %v2928 = vrcp.pop %v2926
    %v2929 = vmul.f32 1.0, %v2928
    %v2930 = vrcp.pop %v2927
    %v2931 = vmul.f32 1.0, %v2930
    %v2932 = vmul.f32 %v2915, %v2898
    %v2933 = vmul.f32 %v2917, %v2900
    %v2934 = vadd.f32 %v1150, %v2932
    %v2935 = vadd.f32 %v1152, %v2933
    %v2936 = vtanh.pop %v2934
    %v2937 = vtanh.pop %v2935
    %v2938 = vsub.f32 1.0, %v2929
    %v2939 = vsub.f32 1.0, %v2931
    %v2940 = vmul.f32 %v2938, %v2936
    %v2941 = vmul.f32 %v2939, %v2937
    %v2942 = vmul.f32 %v2929, %v2775
    %v2943 = vmul.f32 %v2931, %v2776
    %v2944 = vadd.f32 %v2940, %v2942
    %v2945 = vadd.f32 %v2941, %v2943
    %2946 = vst [vmem:[#allocation2 + $0x60] sm:$0xff] %v2944
    %2947 = vst [vmem:[#allocation2 + $0x68] sm:$0xff] %v2945
    %v2948 = vpack.c.bf16 %v2944, %v2944
    %v2949 = vpack.c.bf16 %v2945, %v2945
    %2950 = vmatprep.subr.bf16.mxu0 %v1576
    %2951 = vmatpush1.bf16.msra.mxu0 %v1575
    %2952 = vmatprep.subr.bf16.mxu0 %v1582
    %2953 = vmatpush1.bf16.msra.mxu0 %v1581
    %2954 = vmatprep.subr.bf16.mxu0 %v1588
    %2955 = vmatpush1.bf16.msra.mxu0 %v1587
    %2956 = vmatprep.subr.bf16.mxu0 %v1594
    %2957 = vmatpush1.bf16.msra.mxu0 %v1593
    %2958 = vmatprep.subr.bf16.mxu0 %v1600
    %2959 = vmatpush1.bf16.msra.mxu0 %v1599
    %2960 = vmatprep.subr.bf16.mxu0 %v1606
    %2961 = vmatpush1.bf16.msra.mxu0 %v1605
    %2962 = vmatprep.subr.bf16.mxu0 %v1612
    %2963 = vmatpush1.bf16.msra.mxu0 %v1611
    %2964 = vmatprep.subr.bf16.mxu0 %v1618
    %2965 = vmatpush1.bf16.msra.mxu0 %v1617
    %2966 = vmatprep.subr.bf16.mxu0 %v1624
    %2967 = vmatpush1.bf16.msra.mxu0 %v1623
    %2968 = vmatprep.subr.bf16.mxu0 %v1630
    %2969 = vmatpush1.bf16.msra.mxu0 %v1629
    %2970 = vmatprep.subr.bf16.mxu0 %v1636
    %2971 = vmatpush1.bf16.msra.mxu0 %v1635
    %2972 = vmatprep.subr.bf16.mxu0 %v1642
    %2973 = vmatpush1.bf16.msra.mxu0 %v1641
    %2974 = vmatprep.subr.bf16.mxu0 %v1648
    %2975 = vmatpush1.bf16.msra.mxu0 %v1647
    %2976 = vmatprep.subr.bf16.mxu0 %v1654
    %2977 = vmatpush1.bf16.msra.mxu0 %v1653
    %2978 = vmatprep.subr.bf16.mxu0 %v1660
    %2979 = vmatpush1.bf16.msra.mxu0 %v1659
    %2980 = vmatprep.subr.bf16.mxu0 %v1666
    %2981 = vmatpush1.bf16.msra.mxu0 %v1665
    %2982 = vmatprep.mubr.bf16.mxu0 %v2949
    %2983 = vmatmul.mubr.bf16.gmra.mrb[0].mxu0 %v2948
    %v2984 = vpop.f32.mrb[0].mxu0
    %v2985 = vadd.f32 %v1260, %v2984
    %v2986 = vpop.f32.mrb[0].mxu0
    %v2987 = vadd.f32 %v1264, %v2986
    %v2988 = vpop.f32.mrb[0].mxu0
    %v2989 = vpop.f32.mrb[0].mxu0
    %2990 = vdwg.mxu0
    %2991 = vmatprep.subr.bf16.mxu0 %v1578
    %2992 = vmatpush1.bf16.msra.mxu0 %v1577
    %2993 = vmatprep.subr.bf16.mxu0 %v1584
    %2994 = vmatpush1.bf16.msra.mxu0 %v1583
    %2995 = vmatprep.subr.bf16.mxu0 %v1590
    %2996 = vmatpush1.bf16.msra.mxu0 %v1589
    %2997 = vmatprep.subr.bf16.mxu0 %v1596
    %2998 = vmatpush1.bf16.msra.mxu0 %v1595
    %2999 = vmatprep.subr.bf16.mxu0 %v1602
    %3000 = vmatpush1.bf16.msra.mxu0 %v1601
    %3001 = vmatprep.subr.bf16.mxu0 %v1608
    %3002 = vmatpush1.bf16.msra.mxu0 %v1607
    %3003 = vmatprep.subr.bf16.mxu0 %v1614
    %3004 = vmatpush1.bf16.msra.mxu0 %v1613
    %3005 = vmatprep.subr.bf16.mxu0 %v1620
    %3006 = vmatpush1.bf16.msra.mxu0 %v1619
    %3007 = vmatprep.subr.bf16.mxu0 %v1626
    %3008 = vmatpush1.bf16.msra.mxu0 %v1625
    %3009 = vmatprep.subr.bf16.mxu0 %v1632
    %3010 = vmatpush1.bf16.msra.mxu0 %v1631
    %3011 = vmatprep.subr.bf16.mxu0 %v1638
    %3012 = vmatpush1.bf16.msra.mxu0 %v1637
    %3013 = vmatprep.subr.bf16.mxu0 %v1644
    %3014 = vmatpush1.bf16.msra.mxu0 %v1643
    %3015 = vmatprep.subr.bf16.mxu0 %v1650
    %3016 = vmatpush1.bf16.msra.mxu0 %v1649
    %3017 = vmatprep.subr.bf16.mxu0 %v1656
    %3018 = vmatpush1.bf16.msra.mxu0 %v1655
    %3019 = vmatprep.subr.bf16.mxu0 %v1662
    %3020 = vmatpush1.bf16.msra.mxu0 %v1661
    %3021 = vmatprep.subr.bf16.mxu0 %v1668
    %3022 = vmatpush1.bf16.msra.mxu0 %v1667
    %3023 = vmatprep.mubr.bf16.mxu0 %v2949
    %3024 = vmatmul.mubr.bf16.gmra.mrb[0].mxu0 %v2948
    %v3025 = vpop.f32.mrb[0].mxu0
    %v3026 = vadd.f32 %v1268, %v3025
    %v3027 = vpop.f32.mrb[0].mxu0
    %v3028 = vadd.f32 %v1272, %v3027
    %v3029 = vpop.f32.mrb[0].mxu0
    %v3030 = vpop.f32.mrb[0].mxu0
    %3031 = vdwg.mxu0
    %3032 = vmatprep.subr.bf16.mxu0 %v1580
    %3033 = vmatpush1.bf16.msra.mxu0 %v1579
    %3034 = vmatprep.subr.bf16.mxu0 %v1586
    %3035 = vmatpush1.bf16.msra.mxu0 %v1585
    %3036 = vmatprep.subr.bf16.mxu0 %v1592
    %3037 = vmatpush1.bf16.msra.mxu0 %v1591
    %3038 = vmatprep.subr.bf16.mxu0 %v1598
    %3039 = vmatpush1.bf16.msra.mxu0 %v1597
    %3040 = vmatprep.subr.bf16.mxu0 %v1604
    %3041 = vmatpush1.bf16.msra.mxu0 %v1603
    %3042 = vmatprep.subr.bf16.mxu0 %v1610
    %3043 = vmatpush1.bf16.msra.mxu0 %v1609
    %3044 = vmatprep.subr.bf16.mxu0 %v1616
    %3045 = vmatpush1.bf16.msra.mxu0 %v1615
    %3046 = vmatprep.subr.bf16.mxu0 %v1622
    %3047 = vmatpush1.bf16.msra.mxu0 %v1621
    %3048 = vmatprep.subr.bf16.mxu0 %v1628
    %3049 = vmatpush1.bf16.msra.mxu0 %v1627
    %3050 = vmatprep.subr.bf16.mxu0 %v1634
    %3051 = vmatpush1.bf16.msra.mxu0 %v1633
    %3052 = vmatprep.subr.bf16.mxu0 %v1640
    %3053 = vmatpush1.bf16.msra.mxu0 %v1639
    %3054 = vmatprep.subr.bf16.mxu0 %v1646
    %3055 = vmatpush1.bf16.msra.mxu0 %v1645
    %3056 = vmatprep.subr.bf16.mxu0 %v1652
    %3057 = vmatpush1.bf16.msra.mxu0 %v1651
    %3058 = vmatprep.subr.bf16.mxu0 %v1658
    %3059 = vmatpush1.bf16.msra.mxu0 %v1657
    %3060 = vmatprep.subr.bf16.mxu0 %v1664
    %3061 = vmatpush1.bf16.msra.mxu0 %v1663
    %3062 = vmatprep.subr.bf16.mxu0 %v1670
    %3063 = vmatpush1.bf16.msra.mxu0 %v1669
    %3064 = vmatprep.mubr.bf16.mxu0 %v2949
    %3065 = vmatmul.mubr.bf16.gmra.mrb[0].mxu0 %v2948
    %v3066 = vpop.f32.mrb[0].mxu0
    %v3067 = vadd.f32 %v1276, %v3066
    %v3068 = vpop.f32.mrb[0].mxu0
    %v3069 = vadd.f32 %v1280, %v3068
    %v3070 = vpop.f32.mrb[0].mxu0
    %v3071 = vpop.f32.mrb[0].mxu0
    %3072 = vdwg.mxu0
    %v3073 = vadd.f32 %v1008, %v2985
    %v3074 = vadd.f32 %v1010, %v2987
    %v3075 = vxor.u32 %v3073, 2147483648
    %v3076 = vxor.u32 %v3074, 2147483648
    %v3077 = vmul.f32 %v3075, 1.442695
    %v3078 = vpow.pop %v3077
    %v3079 = vmul.f32 %v3076, 1.442695
    %v3080 = vpow.pop %v3079
    %v3081 = vadd.f32 %v3078, 1.0
    %v3082 = vadd.f32 %v3080, 1.0
    %v3083 = vrcp.pop %v3081
    %v3084 = vmul.f32 1.0, %v3083
    %v3085 = vrcp.pop %v3082
    %v3086 = vmul.f32 1.0, %v3085
    %v3087 = vadd.f32 %v1081, %v3026
    %v3088 = vadd.f32 %v1083, %v3028
    %v3089 = vxor.u32 %v3087, 2147483648
    %v3090 = vxor.u32 %v3088, 2147483648
    %v3091 = vmul.f32 %v3089, 1.442695
    %v3092 = vpow.pop %v3091
    %v3093 = vmul.f32 %v3090, 1.442695
    %v3094 = vpow.pop %v3093
    %v3095 = vadd.f32 %v3092, 1.0
    %v3096 = vadd.f32 %v3094, 1.0
    %v3097 = vrcp.pop %v3095
    %v3098 = vmul.f32 1.0, %v3097
    %v3099 = vrcp.pop %v3096
    %v3100 = vmul.f32 1.0, %v3099
    %v3101 = vmul.f32 %v3084, %v3067
    %v3102 = vmul.f32 %v3086, %v3069
    %v3103 = vadd.f32 %v1154, %v3101
    %v3104 = vadd.f32 %v1156, %v3102
    %v3105 = vtanh.pop %v3103
    %v3106 = vtanh.pop %v3104
    %v3107 = vsub.f32 1.0, %v3098
    %v3108 = vsub.f32 1.0, %v3100
    %v3109 = vmul.f32 %v3107, %v3105
    %v3110 = vmul.f32 %v3108, %v3106
    %v3111 = vmul.f32 %v3098, %v2944
    %v3112 = vmul.f32 %v3100, %v2945
    %v3113 = vadd.f32 %v3109, %v3111
    %v3114 = vadd.f32 %v3110, %v3112
    %3115 = vst [vmem:[#allocation2 + $0x70] sm:$0xff] %v3113
    %3116 = vst [vmem:[#allocation2 + $0x78] sm:$0xff] %v3114
    %v3117 = vld [vmem:[#allocation2] sm:$0xff]
    %v3118 = vld [vmem:[#allocation2 + $0x8] sm:$0xff]
    %v3119 = vld [vmem:[#allocation2 + $0x10] sm:$0xff]
    %v3120 = vld [vmem:[#allocation2 + $0x18] sm:$0xff]
    %v3121 = vld [vmem:[#allocation2 + $0x20] sm:$0xff]
    %v3122 = vld [vmem:[#allocation2 + $0x28] sm:$0xff]
    %v3123 = vld [vmem:[#allocation2 + $0x30] sm:$0xff]
    %v3124 = vld [vmem:[#allocation2 + $0x38] sm:$0xff]
    %v3125 = vld [vmem:[#allocation2 + $0x40] sm:$0xff]
    %v3126 = vld [vmem:[#allocation2 + $0x48] sm:$0xff]
    %v3127 = vld [vmem:[#allocation2 + $0x50] sm:$0xff]
    %v3128 = vld [vmem:[#allocation2 + $0x58] sm:$0xff]
    %v3129 = vld [vmem:[#allocation2 + $0x60] sm:$0xff]
    %v3130 = vld [vmem:[#allocation2 + $0x68] sm:$0xff]
    %v3131 = vld [vmem:[#allocation2 + $0x70] sm:$0xff]
    %v3132 = vld [vmem:[#allocation2 + $0x78] sm:$0xff]
    %v3133 = vpack.c.bf16 %v3119, %v3117
    %v3134 = vpack.c.bf16 %v3120, %v3118
    %v3135 = vpack.c.bf16 %v3123, %v3121
    %v3136 = vpack.c.bf16 %v3124, %v3122
    %v3137 = vpack.c.bf16 %v3127, %v3125
    %v3138 = vpack.c.bf16 %v3128, %v3126
    %v3139 = vpack.c.bf16 %v3131, %v3129
    %v3140 = vpack.c.bf16 %v3132, %v3130
    %v3141 = vld [vmem:[#allocation8] sm:$0xff]
    %v3142 = vld [vmem:[#allocation8 + $0x8] sm:$0xff]
    %v3143 = vld [vmem:[#allocation8 + $0x10] sm:$0xff]
    %v3144 = vld [vmem:[#allocation8 + $0x18] sm:$0xff]
    %v3145 = vld [vmem:[#allocation8 + $0x20] sm:$0xff]
    %v3146 = vld [vmem:[#allocation8 + $0x28] sm:$0xff]
    %v3147 = vld [vmem:[#allocation8 + $0x30] sm:$0xff]
    %v3148 = vld [vmem:[#allocation8 + $0x38] sm:$0xff]
    %v3149 = vld [vmem:[#allocation8 + $0x40] sm:$0xff]
    %v3150 = vld [vmem:[#allocation8 + $0x48] sm:$0xff]
    %v3151 = vld [vmem:[#allocation8 + $0x50] sm:$0xff]
    %v3152 = vld [vmem:[#allocation8 + $0x58] sm:$0xff]
    %v3153 = vld [vmem:[#allocation8 + $0x60] sm:$0xff]
    %v3154 = vld [vmem:[#allocation8 + $0x68] sm:$0xff]
    %v3155 = vld [vmem:[#allocation8 + $0x70] sm:$0xff]
    %v3156 = vld [vmem:[#allocation8 + $0x78] sm:$0xff]
    %v3157 = vld [vmem:[#allocation8 + $0x80] sm:$0xff]
    %v3158 = vld [vmem:[#allocation8 + $0x88] sm:$0xff]
    %v3159 = vld [vmem:[#allocation8 + $0x90] sm:$0xff]
    %v3160 = vld [vmem:[#allocation8 + $0x98] sm:$0xff]
    %v3161 = vld [vmem:[#allocation8 + $0xa0] sm:$0xff]
    %v3162 = vld [vmem:[#allocation8 + $0xa8] sm:$0xff]
    %v3163 = vld [vmem:[#allocation8 + $0xb0] sm:$0xff]
    %v3164 = vld [vmem:[#allocation8 + $0xb8] sm:$0xff]
    %v3165 = vld [vmem:[#allocation8 + $0xc0] sm:$0xff]
    %v3166 = vld [vmem:[#allocation8 + $0xc8] sm:$0xff]
    %v3167 = vld [vmem:[#allocation8 + $0xd0] sm:$0xff]
    %v3168 = vld [vmem:[#allocation8 + $0xd8] sm:$0xff]
    %v3169 = vld [vmem:[#allocation8 + $0xe0] sm:$0xff]
    %v3170 = vld [vmem:[#allocation8 + $0xe8] sm:$0xff]
    %v3171 = vld [vmem:[#allocation8 + $0xf0] sm:$0xff]
    %v3172 = vld [vmem:[#allocation8 + $0xf8] sm:$0xff]
    %v3173 = vld [vmem:[#allocation8 + $0x100] sm:$0xff]
    %v3174 = vld [vmem:[#allocation8 + $0x108] sm:$0xff]
    %v3175 = vld [vmem:[#allocation8 + $0x110] sm:$0xff]
    %v3176 = vld [vmem:[#allocation8 + $0x118] sm:$0xff]
    %v3177 = vld [vmem:[#allocation8 + $0x120] sm:$0xff]
    %v3178 = vld [vmem:[#allocation8 + $0x128] sm:$0xff]
    %v3179 = vld [vmem:[#allocation8 + $0x130] sm:$0xff]
    %v3180 = vld [vmem:[#allocation8 + $0x138] sm:$0xff]
    %v3181 = vld [vmem:[#allocation8 + $0x140] sm:$0xff]
    %v3182 = vld [vmem:[#allocation8 + $0x148] sm:$0xff]
    %v3183 = vld [vmem:[#allocation8 + $0x150] sm:$0xff]
    %v3184 = vld [vmem:[#allocation8 + $0x158] sm:$0xff]
    %v3185 = vld [vmem:[#allocation8 + $0x160] sm:$0xff]
    %v3186 = vld [vmem:[#allocation8 + $0x168] sm:$0xff]
    %v3187 = vld [vmem:[#allocation8 + $0x170] sm:$0xff]
    %v3188 = vld [vmem:[#allocation8 + $0x178] sm:$0xff]
    %v3189 = vld [vmem:[#allocation8 + $0x180] sm:$0xff]
    %v3190 = vld [vmem:[#allocation8 + $0x188] sm:$0xff]
    %v3191 = vld [vmem:[#allocation8 + $0x190] sm:$0xff]
    %v3192 = vld [vmem:[#allocation8 + $0x198] sm:$0xff]
    %v3193 = vld [vmem:[#allocation8 + $0x1a0] sm:$0xff]
    %v3194 = vld [vmem:[#allocation8 + $0x1a8] sm:$0xff]
    %v3195 = vld [vmem:[#allocation8 + $0x1b0] sm:$0xff]
    %v3196 = vld [vmem:[#allocation8 + $0x1b8] sm:$0xff]
    %v3197 = vld [vmem:[#allocation8 + $0x1c0] sm:$0xff]
    %v3198 = vld [vmem:[#allocation8 + $0x1c8] sm:$0xff]
    %v3199 = vld [vmem:[#allocation8 + $0x1d0] sm:$0xff]
    %v3200 = vld [vmem:[#allocation8 + $0x1d8] sm:$0xff]
    %v3201 = vld [vmem:[#allocation8 + $0x1e0] sm:$0xff]
    %v3202 = vld [vmem:[#allocation8 + $0x1e8] sm:$0xff]
    %v3203 = vld [vmem:[#allocation8 + $0x1f0] sm:$0xff]
    %v3204 = vld [vmem:[#allocation8 + $0x1f8] sm:$0xff]
    %v3205 = vld [vmem:[#allocation8 + $0x200] sm:$0xff]
    %v3206 = vld [vmem:[#allocation8 + $0x208] sm:$0xff]
    %v3207 = vld [vmem:[#allocation8 + $0x210] sm:$0xff]
    %v3208 = vld [vmem:[#allocation8 + $0x218] sm:$0xff]
    %v3209 = vld [vmem:[#allocation8 + $0x220] sm:$0xff]
    %v3210 = vld [vmem:[#allocation8 + $0x228] sm:$0xff]
    %v3211 = vld [vmem:[#allocation8 + $0x230] sm:$0xff]
    %v3212 = vld [vmem:[#allocation8 + $0x238] sm:$0xff]
    %v3213 = vld [vmem:[#allocation8 + $0x240] sm:$0xff]
    %v3214 = vld [vmem:[#allocation8 + $0x248] sm:$0xff]
    %v3215 = vld [vmem:[#allocation8 + $0x250] sm:$0xff]
    %v3216 = vld [vmem:[#allocation8 + $0x258] sm:$0xff]
    %v3217 = vld [vmem:[#allocation8 + $0x260] sm:$0xff]
    %v3218 = vld [vmem:[#allocation8 + $0x268] sm:$0xff]
    %v3219 = vld [vmem:[#allocation8 + $0x270] sm:$0xff]
    %v3220 = vld [vmem:[#allocation8 + $0x278] sm:$0xff]
    %v3221 = vld [vmem:[#allocation8 + $0x280] sm:$0xff]
    %v3222 = vld [vmem:[#allocation8 + $0x288] sm:$0xff]
    %v3223 = vld [vmem:[#allocation8 + $0x290] sm:$0xff]
    %v3224 = vld [vmem:[#allocation8 + $0x298] sm:$0xff]
    %v3225 = vld [vmem:[#allocation8 + $0x2a0] sm:$0xff]
    %v3226 = vld [vmem:[#allocation8 + $0x2a8] sm:$0xff]
    %v3227 = vld [vmem:[#allocation8 + $0x2b0] sm:$0xff]
    %v3228 = vld [vmem:[#allocation8 + $0x2b8] sm:$0xff]
    %v3229 = vld [vmem:[#allocation8 + $0x2c0] sm:$0xff]
    %v3230 = vld [vmem:[#allocation8 + $0x2c8] sm:$0xff]
    %v3231 = vld [vmem:[#allocation8 + $0x2d0] sm:$0xff]
    %v3232 = vld [vmem:[#allocation8 + $0x2d8] sm:$0xff]
    %v3233 = vld [vmem:[#allocation8 + $0x2e0] sm:$0xff]
    %v3234 = vld [vmem:[#allocation8 + $0x2e8] sm:$0xff]
    %v3235 = vld [vmem:[#allocation8 + $0x2f0] sm:$0xff]
    %v3236 = vld [vmem:[#allocation8 + $0x2f8] sm:$0xff]
    %s3237 = scalar_lea.vmem [#allocation10], 2
    %v3238 = vld [vmem:[%s3237] ss:$4 sm:$0x3f]
    %v3240 = vlaneseq
    %v3241 = vshrl.u32 %v3240, 7
    %v3242 = vsub.s32 0, %v3241
    %v3243 = vrot.slane %v3238, %v3242
    %v3244 = vlaneseq
    %v3245 = vshrl.u32 %v3244, 7
    %v3246 = vsub.s32 1, %v3245
    %v3247 = vrot.slane %v3238, %v3246
    %v3248 = vlaneseq
    %v3249 = vshrl.u32 %v3248, 7
    %v3250 = vsub.s32 2, %v3249
    %v3251 = vrot.slane %v3238, %v3250
    %v3252 = vlaneseq
    %v3253 = vshrl.u32 %v3252, 7
    %v3254 = vsub.s32 3, %v3253
    %v3255 = vrot.slane %v3238, %v3254
    %v3256 = vlaneseq
    %v3257 = vshrl.u32 %v3256, 7
    %v3258 = vsub.s32 4, %v3257
    %v3259 = vrot.slane %v3238, %v3258
    %v3260 = vlaneseq
    %v3261 = vshrl.u32 %v3260, 7
    %v3262 = vsub.s32 5, %v3261
    %v3263 = vrot.slane %v3238, %v3262
    %v3366 = vunpack.c.l.b16 %v3141
    %v3367 = vunpack.c.h.b16 %v3141
    %v3368 = vunpack.c.l.b16 %v3142
    %v3369 = vunpack.c.h.b16 %v3142
    %v3370 = vunpack.c.l.b16 %v3143
    %v3371 = vunpack.c.h.b16 %v3143
    %v3372 = vunpack.c.l.b16 %v3144
    %v3373 = vunpack.c.h.b16 %v3144
    %v3374 = vunpack.c.l.b16 %v3145
    %v3375 = vunpack.c.h.b16 %v3145
    %v3376 = vunpack.c.l.b16 %v3146
    %v3377 = vunpack.c.h.b16 %v3146
    %v3378 = vunpack.c.l.b16 %v3147
    %v3379 = vunpack.c.h.b16 %v3147
    %v3380 = vunpack.c.l.b16 %v3148
    %v3381 = vunpack.c.h.b16 %v3148
    %v3382 = vunpack.c.l.b16 %v3149
    %v3383 = vunpack.c.h.b16 %v3149
    %v3384 = vunpack.c.l.b16 %v3150
    %v3385 = vunpack.c.h.b16 %v3150
    %v3386 = vunpack.c.l.b16 %v3151
    %v3387 = vunpack.c.h.b16 %v3151
    %v3388 = vunpack.c.l.b16 %v3152
    %v3389 = vunpack.c.h.b16 %v3152
    %v3390 = vunpack.c.l.b16 %v3153
    %v3391 = vunpack.c.h.b16 %v3153
    %v3392 = vunpack.c.l.b16 %v3154
    %v3393 = vunpack.c.h.b16 %v3154
    %v3394 = vunpack.c.l.b16 %v3155
    %v3395 = vunpack.c.h.b16 %v3155
    %v3396 = vunpack.c.l.b16 %v3156
    %v3397 = vunpack.c.h.b16 %v3156
    %v3398 = vunpack.c.l.b16 %v3157
    %v3399 = vunpack.c.h.b16 %v3157
    %v3400 = vunpack.c.l.b16 %v3158
    %v3401 = vunpack.c.h.b16 %v3158
    %v3402 = vunpack.c.l.b16 %v3159
    %v3403 = vunpack.c.h.b16 %v3159
    %v3404 = vunpack.c.l.b16 %v3160
    %v3405 = vunpack.c.h.b16 %v3160
    %v3406 = vunpack.c.l.b16 %v3161
    %v3407 = vunpack.c.h.b16 %v3161
    %v3408 = vunpack.c.l.b16 %v3162
    %v3409 = vunpack.c.h.b16 %v3162
    %v3410 = vunpack.c.l.b16 %v3163
    %v3411 = vunpack.c.h.b16 %v3163
    %v3412 = vunpack.c.l.b16 %v3164
    %v3413 = vunpack.c.h.b16 %v3164
    %v3414 = vunpack.c.l.b16 %v3165
    %v3415 = vunpack.c.h.b16 %v3165
    %v3416 = vunpack.c.l.b16 %v3166
    %v3417 = vunpack.c.h.b16 %v3166
    %v3418 = vunpack.c.l.b16 %v3167
    %v3419 = vunpack.c.h.b16 %v3167
    %v3420 = vunpack.c.l.b16 %v3168
    %v3421 = vunpack.c.h.b16 %v3168
    %v3422 = vunpack.c.l.b16 %v3169
    %v3423 = vunpack.c.h.b16 %v3169
    %v3424 = vunpack.c.l.b16 %v3170
    %v3425 = vunpack.c.h.b16 %v3170
    %v3426 = vunpack.c.l.b16 %v3171
    %v3427 = vunpack.c.h.b16 %v3171
    %v3428 = vunpack.c.l.b16 %v3172
    %v3429 = vunpack.c.h.b16 %v3172
    %v3430 = vunpack.c.l.b16 %v3173
    %v3431 = vunpack.c.h.b16 %v3173
    %v3432 = vunpack.c.l.b16 %v3174
    %v3433 = vunpack.c.h.b16 %v3174
    %v3434 = vunpack.c.l.b16 %v3175
    %v3435 = vunpack.c.h.b16 %v3175
    %v3436 = vunpack.c.l.b16 %v3176
    %v3437 = vunpack.c.h.b16 %v3176
    %v3438 = vunpack.c.l.b16 %v3177
    %v3439 = vunpack.c.h.b16 %v3177
    %v3440 = vunpack.c.l.b16 %v3178
    %v3441 = vunpack.c.h.b16 %v3178
    %v3442 = vunpack.c.l.b16 %v3179
    %v3443 = vunpack.c.h.b16 %v3179
    %v3444 = vunpack.c.l.b16 %v3180
    %v3445 = vunpack.c.h.b16 %v3180
    %v3446 = vunpack.c.l.b16 %v3181
    %v3447 = vunpack.c.h.b16 %v3181
    %v3448 = vunpack.c.l.b16 %v3182
    %v3449 = vunpack.c.h.b16 %v3182
    %v3450 = vunpack.c.l.b16 %v3183
    %v3451 = vunpack.c.h.b16 %v3183
    %v3452 = vunpack.c.l.b16 %v3184
    %v3453 = vunpack.c.h.b16 %v3184
    %v3454 = vunpack.c.l.b16 %v3185
    %v3455 = vunpack.c.h.b16 %v3185
    %v3456 = vunpack.c.l.b16 %v3186
    %v3457 = vunpack.c.h.b16 %v3186
    %v3458 = vunpack.c.l.b16 %v3187
    %v3459 = vunpack.c.h.b16 %v3187
    %v3460 = vunpack.c.l.b16 %v3188
    %v3461 = vunpack.c.h.b16 %v3188
    %v3462 = vunpack.c.l.b16 %v3189
    %v3463 = vunpack.c.h.b16 %v3189
    %v3464 = vunpack.c.l.b16 %v3190
    %v3465 = vunpack.c.h.b16 %v3190
    %v3466 = vunpack.c.l.b16 %v3191
    %v3467 = vunpack.c.h.b16 %v3191
    %v3468 = vunpack.c.l.b16 %v3192
    %v3469 = vunpack.c.h.b16 %v3192
    %v3470 = vunpack.c.l.b16 %v3193
    %v3471 = vunpack.c.h.b16 %v3193
    %v3472 = vunpack.c.l.b16 %v3194
    %v3473 = vunpack.c.h.b16 %v3194
    %v3474 = vunpack.c.l.b16 %v3195
    %v3475 = vunpack.c.h.b16 %v3195
    %v3476 = vunpack.c.l.b16 %v3196
    %v3477 = vunpack.c.h.b16 %v3196
    %v3478 = vunpack.c.l.b16 %v3197
    %v3479 = vunpack.c.h.b16 %v3197
    %v3480 = vunpack.c.l.b16 %v3198
    %v3481 = vunpack.c.h.b16 %v3198
    %v3482 = vunpack.c.l.b16 %v3199
    %v3483 = vunpack.c.h.b16 %v3199
    %v3484 = vunpack.c.l.b16 %v3200
    %v3485 = vunpack.c.h.b16 %v3200
    %v3486 = vunpack.c.l.b16 %v3201
    %v3487 = vunpack.c.h.b16 %v3201
    %v3488 = vunpack.c.l.b16 %v3202
    %v3489 = vunpack.c.h.b16 %v3202
    %v3490 = vunpack.c.l.b16 %v3203
    %v3491 = vunpack.c.h.b16 %v3203
    %v3492 = vunpack.c.l.b16 %v3204
    %v3493 = vunpack.c.h.b16 %v3204
    %v3494 = vunpack.c.l.b16 %v3205
    %v3495 = vunpack.c.h.b16 %v3205
    %v3496 = vunpack.c.l.b16 %v3206
    %v3497 = vunpack.c.h.b16 %v3206
    %v3498 = vunpack.c.l.b16 %v3207
    %v3499 = vunpack.c.h.b16 %v3207
    %v3500 = vunpack.c.l.b16 %v3208
    %v3501 = vunpack.c.h.b16 %v3208
    %v3502 = vunpack.c.l.b16 %v3209
    %v3503 = vunpack.c.h.b16 %v3209
    %v3504 = vunpack.c.l.b16 %v3210
    %v3505 = vunpack.c.h.b16 %v3210
    %v3506 = vunpack.c.l.b16 %v3211
    %v3507 = vunpack.c.h.b16 %v3211
    %v3508 = vunpack.c.l.b16 %v3212
    %v3509 = vunpack.c.h.b16 %v3212
    %v3510 = vunpack.c.l.b16 %v3213
    %v3511 = vunpack.c.h.b16 %v3213
    %v3512 = vunpack.c.l.b16 %v3214
    %v3513 = vunpack.c.h.b16 %v3214
    %v3514 = vunpack.c.l.b16 %v3215
    %v3515 = vunpack.c.h.b16 %v3215
    %v3516 = vunpack.c.l.b16 %v3216
    %v3517 = vunpack.c.h.b16 %v3216
    %v3518 = vunpack.c.l.b16 %v3217
    %v3519 = vunpack.c.h.b16 %v3217
    %v3520 = vunpack.c.l.b16 %v3218
    %v3521 = vunpack.c.h.b16 %v3218
    %v3522 = vunpack.c.l.b16 %v3219
    %v3523 = vunpack.c.h.b16 %v3219
    %v3524 = vunpack.c.l.b16 %v3220
    %v3525 = vunpack.c.h.b16 %v3220
    %v3526 = vunpack.c.l.b16 %v3221
    %v3527 = vunpack.c.h.b16 %v3221
    %v3528 = vunpack.c.l.b16 %v3222
    %v3529 = vunpack.c.h.b16 %v3222
    %v3530 = vunpack.c.l.b16 %v3223
    %v3531 = vunpack.c.h.b16 %v3223
    %v3532 = vunpack.c.l.b16 %v3224
    %v3533 = vunpack.c.h.b16 %v3224
    %v3534 = vunpack.c.l.b16 %v3225
    %v3535 = vunpack.c.h.b16 %v3225
    %v3536 = vunpack.c.l.b16 %v3226
    %v3537 = vunpack.c.h.b16 %v3226
    %v3538 = vunpack.c.l.b16 %v3227
    %v3539 = vunpack.c.h.b16 %v3227
    %v3540 = vunpack.c.l.b16 %v3228
    %v3541 = vunpack.c.h.b16 %v3228
    %v3542 = vunpack.c.l.b16 %v3229
    %v3543 = vunpack.c.h.b16 %v3229
    %v3544 = vunpack.c.l.b16 %v3230
    %v3545 = vunpack.c.h.b16 %v3230
    %v3546 = vunpack.c.l.b16 %v3231
    %v3547 = vunpack.c.h.b16 %v3231
    %v3548 = vunpack.c.l.b16 %v3232
    %v3549 = vunpack.c.h.b16 %v3232
    %v3550 = vunpack.c.l.b16 %v3233
    %v3551 = vunpack.c.h.b16 %v3233
    %v3552 = vunpack.c.l.b16 %v3234
    %v3553 = vunpack.c.h.b16 %v3234
    %v3554 = vunpack.c.l.b16 %v3235
    %v3555 = vunpack.c.h.b16 %v3235
    %v3556 = vunpack.c.l.b16 %v3236
    %v3557 = vunpack.c.h.b16 %v3236
    %v3558 = vpack.c.b16 %v3372, %v3366
    %v3559 = vpack.c.b16 %v3373, %v3367
    %v3560 = vpack.c.b16 %v3374, %v3368
    %v3561 = vpack.c.b16 %v3375, %v3369
    %v3562 = vpack.c.b16 %v3376, %v3370
    %v3563 = vpack.c.b16 %v3377, %v3371
    %v3564 = vpack.c.b16 %v3384, %v3378
    %v3565 = vpack.c.b16 %v3385, %v3379
    %v3566 = vpack.c.b16 %v3386, %v3380
    %v3567 = vpack.c.b16 %v3387, %v3381
    %v3568 = vpack.c.b16 %v3388, %v3382
    %v3569 = vpack.c.b16 %v3389, %v3383
    %v3570 = vpack.c.b16 %v3396, %v3390
    %v3571 = vpack.c.b16 %v3397, %v3391
    %v3572 = vpack.c.b16 %v3398, %v3392
    %v3573 = vpack.c.b16 %v3399, %v3393
    %v3574 = vpack.c.b16 %v3400, %v3394
    %v3575 = vpack.c.b16 %v3401, %v3395
    %v3576 = vpack.c.b16 %v3408, %v3402
    %v3577 = vpack.c.b16 %v3409, %v3403
    %v3578 = vpack.c.b16 %v3410, %v3404
    %v3579 = vpack.c.b16 %v3411, %v3405
    %v3580 = vpack.c.b16 %v3412, %v3406
    %v3581 = vpack.c.b16 %v3413, %v3407
    %v3582 = vpack.c.b16 %v3420, %v3414
    %v3583 = vpack.c.b16 %v3421, %v3415
    %v3584 = vpack.c.b16 %v3422, %v3416
    %v3585 = vpack.c.b16 %v3423, %v3417
    %v3586 = vpack.c.b16 %v3424, %v3418
    %v3587 = vpack.c.b16 %v3425, %v3419
    %v3588 = vpack.c.b16 %v3432, %v3426
    %v3589 = vpack.c.b16 %v3433, %v3427
    %v3590 = vpack.c.b16 %v3434, %v3428
    %v3591 = vpack.c.b16 %v3435, %v3429
    %v3592 = vpack.c.b16 %v3436, %v3430
    %v3593 = vpack.c.b16 %v3437, %v3431
    %v3594 = vpack.c.b16 %v3444, %v3438
    %v3595 = vpack.c.b16 %v3445, %v3439
    %v3596 = vpack.c.b16 %v3446, %v3440
    %v3597 = vpack.c.b16 %v3447, %v3441
    %v3598 = vpack.c.b16 %v3448, %v3442
    %v3599 = vpack.c.b16 %v3449, %v3443
    %v3600 = vpack.c.b16 %v3456, %v3450
    %v3601 = vpack.c.b16 %v3457, %v3451
    %v3602 = vpack.c.b16 %v3458, %v3452
    %v3603 = vpack.c.b16 %v3459, %v3453
    %v3604 = vpack.c.b16 %v3460, %v3454
    %v3605 = vpack.c.b16 %v3461, %v3455
    %v3606 = vpack.c.b16 %v3468, %v3462
    %v3607 = vpack.c.b16 %v3469, %v3463
    %v3608 = vpack.c.b16 %v3470, %v3464
    %v3609 = vpack.c.b16 %v3471, %v3465
    %v3610 = vpack.c.b16 %v3472, %v3466
    %v3611 = vpack.c.b16 %v3473, %v3467
    %v3612 = vpack.c.b16 %v3480, %v3474
    %v3613 = vpack.c.b16 %v3481, %v3475
    %v3614 = vpack.c.b16 %v3482, %v3476
    %v3615 = vpack.c.b16 %v3483, %v3477
    %v3616 = vpack.c.b16 %v3484, %v3478
    %v3617 = vpack.c.b16 %v3485, %v3479
    %v3618 = vpack.c.b16 %v3492, %v3486
    %v3619 = vpack.c.b16 %v3493, %v3487
    %v3620 = vpack.c.b16 %v3494, %v3488
    %v3621 = vpack.c.b16 %v3495, %v3489
    %v3622 = vpack.c.b16 %v3496, %v3490
    %v3623 = vpack.c.b16 %v3497, %v3491
    %v3624 = vpack.c.b16 %v3504, %v3498
    %v3625 = vpack.c.b16 %v3505, %v3499
    %v3626 = vpack.c.b16 %v3506, %v3500
    %v3627 = vpack.c.b16 %v3507, %v3501
    %v3628 = vpack.c.b16 %v3508, %v3502
    %v3629 = vpack.c.b16 %v3509, %v3503
    %v3630 = vpack.c.b16 %v3516, %v3510
    %v3631 = vpack.c.b16 %v3517, %v3511
    %v3632 = vpack.c.b16 %v3518, %v3512
    %v3633 = vpack.c.b16 %v3519, %v3513
    %v3634 = vpack.c.b16 %v3520, %v3514
    %v3635 = vpack.c.b16 %v3521, %v3515
    %v3636 = vpack.c.b16 %v3528, %v3522
    %v3637 = vpack.c.b16 %v3529, %v3523
    %v3638 = vpack.c.b16 %v3530, %v3524
    %v3639 = vpack.c.b16 %v3531, %v3525
    %v3640 = vpack.c.b16 %v3532, %v3526
    %v3641 = vpack.c.b16 %v3533, %v3527
    %v3642 = vpack.c.b16 %v3540, %v3534
    %v3643 = vpack.c.b16 %v3541, %v3535
    %v3644 = vpack.c.b16 %v3542, %v3536
    %v3645 = vpack.c.b16 %v3543, %v3537
    %v3646 = vpack.c.b16 %v3544, %v3538
    %v3647 = vpack.c.b16 %v3545, %v3539
    %v3648 = vpack.c.b16 %v3552, %v3546
    %v3649 = vpack.c.b16 %v3553, %v3547
    %v3650 = vpack.c.b16 %v3554, %v3548
    %v3651 = vpack.c.b16 %v3555, %v3549
    %v3652 = vpack.c.b16 %v3556, %v3550
    %v3653 = vpack.c.b16 %v3557, %v3551
    %3750 = vmatprep.subr.bf16.mxu0 %v3559
    %3751 = vmatpush1.bf16.msra.mxu0 %v3558
    %3752 = vmatprep.subr.bf16.mxu0 %v3565
    %3753 = vmatpush1.bf16.msra.mxu0 %v3564
    %3754 = vmatprep.subr.bf16.mxu0 %v3571
    %3755 = vmatpush1.bf16.msra.mxu0 %v3570
    %3756 = vmatprep.subr.bf16.mxu0 %v3577
    %3757 = vmatpush1.bf16.msra.mxu0 %v3576
    %3758 = vmatprep.subr.bf16.mxu0 %v3583
    %3759 = vmatpush1.bf16.msra.mxu0 %v3582
    %3760 = vmatprep.subr.bf16.mxu0 %v3589
    %3761 = vmatpush1.bf16.msra.mxu0 %v3588
    %3762 = vmatprep.subr.bf16.mxu0 %v3595
    %3763 = vmatpush1.bf16.msra.mxu0 %v3594
    %3764 = vmatprep.subr.bf16.mxu0 %v3601
    %3765 = vmatpush1.bf16.msra.mxu0 %v3600
    %3766 = vmatprep.subr.bf16.mxu0 %v3607
    %3767 = vmatpush1.bf16.msra.mxu0 %v3606
    %3768 = vmatprep.subr.bf16.mxu0 %v3613
    %3769 = vmatpush1.bf16.msra.mxu0 %v3612
    %3770 = vmatprep.subr.bf16.mxu0 %v3619
    %3771 = vmatpush1.bf16.msra.mxu0 %v3618
    %3772 = vmatprep.subr.bf16.mxu0 %v3625
    %3773 = vmatpush1.bf16.msra.mxu0 %v3624
    %3774 = vmatprep.subr.bf16.mxu0 %v3631
    %3775 = vmatpush1.bf16.msra.mxu0 %v3630
    %3776 = vmatprep.subr.bf16.mxu0 %v3637
    %3777 = vmatpush1.bf16.msra.mxu0 %v3636
    %3778 = vmatprep.subr.bf16.mxu0 %v3643
    %3779 = vmatpush1.bf16.msra.mxu0 %v3642
    %3780 = vmatprep.subr.bf16.mxu0 %v3649
    %3781 = vmatpush1.bf16.msra.mxu0 %v3648
    %3782 = vmatprep.mubr.bf16.mxu0 %v3134
    %3783 = vmatmul.mubr.bf16.gmra.mrb[0].mxu0 %v3133
    %v3784 = vpop.f32.mrb[0].mxu0
    %v3785 = vadd.f32 %v3243, %v3784
    %v3786 = vpop.f32.mrb[0].mxu0
    %v3787 = vadd.f32 %v3247, %v3786
    %v3788 = vpop.f32.mrb[0].mxu0
    %v3789 = vadd.f32 %v3243, %v3788
    %v3790 = vpop.f32.mrb[0].mxu0
    %v3791 = vadd.f32 %v3247, %v3790
    %3792 = vmatprep.mubr.bf16.mxu0 %v3136
    %3793 = vmatmul.mubr.bf16.gmra.mrb[0].mxu0 %v3135
    %v3794 = vpop.f32.mrb[0].mxu0
    %v3795 = vadd.f32 %v3243, %v3794
    %v3796 = vpop.f32.mrb[0].mxu0
    %v3797 = vadd.f32 %v3247, %v3796
    %v3798 = vpop.f32.mrb[0].mxu0
    %v3799 = vadd.f32 %v3243, %v3798
    %v3800 = vpop.f32.mrb[0].mxu0
    %v3801 = vadd.f32 %v3247, %v3800
    %3802 = vmatprep.mubr.bf16.mxu0 %v3138
    %3803 = vmatmul.mubr.bf16.gmra.mrb[0].mxu0 %v3137
    %v3804 = vpop.f32.mrb[0].mxu0
    %v3805 = vadd.f32 %v3243, %v3804
    %v3806 = vpop.f32.mrb[0].mxu0
    %v3807 = vadd.f32 %v3247, %v3806
    %v3808 = vpop.f32.mrb[0].mxu0
    %v3809 = vadd.f32 %v3243, %v3808
    %v3810 = vpop.f32.mrb[0].mxu0
    %v3811 = vadd.f32 %v3247, %v3810
    %3812 = vmatprep.mubr.bf16.mxu0 %v3140
    %3813 = vmatmul.mubr.bf16.gmra.mrb[0].mxu0 %v3139
    %v3814 = vpop.f32.mrb[0].mxu0
    %v3815 = vadd.f32 %v3243, %v3814
    %v3816 = vpop.f32.mrb[0].mxu0
    %v3817 = vadd.f32 %v3247, %v3816
    %v3818 = vpop.f32.mrb[0].mxu0
    %v3819 = vadd.f32 %v3243, %v3818
    %v3820 = vpop.f32.mrb[0].mxu0
    %v3821 = vadd.f32 %v3247, %v3820
    %3822 = vdwg.mxu0
    %3823 = vmatprep.subr.bf16.mxu0 %v3561
    %3824 = vmatpush1.bf16.msra.mxu0 %v3560
    %3825 = vmatprep.subr.bf16.mxu0 %v3567
    %3826 = vmatpush1.bf16.msra.mxu0 %v3566
    %3827 = vmatprep.subr.bf16.mxu0 %v3573
    %3828 = vmatpush1.bf16.msra.mxu0 %v3572
    %3829 = vmatprep.subr.bf16.mxu0 %v3579
    %3830 = vmatpush1.bf16.msra.mxu0 %v3578
    %3831 = vmatprep.subr.bf16.mxu0 %v3585
    %3832 = vmatpush1.bf16.msra.mxu0 %v3584
    %3833 = vmatprep.subr.bf16.mxu0 %v3591
    %3834 = vmatpush1.bf16.msra.mxu0 %v3590
    %3835 = vmatprep.subr.bf16.mxu0 %v3597
    %3836 = vmatpush1.bf16.msra.mxu0 %v3596
    %3837 = vmatprep.subr.bf16.mxu0 %v3603
    %3838 = vmatpush1.bf16.msra.mxu0 %v3602
    %3839 = vmatprep.subr.bf16.mxu0 %v3609
    %3840 = vmatpush1.bf16.msra.mxu0 %v3608
    %3841 = vmatprep.subr.bf16.mxu0 %v3615
    %3842 = vmatpush1.bf16.msra.mxu0 %v3614
    %3843 = vmatprep.subr.bf16.mxu0 %v3621
    %3844 = vmatpush1.bf16.msra.mxu0 %v3620
    %3845 = vmatprep.subr.bf16.mxu0 %v3627
    %3846 = vmatpush1.bf16.msra.mxu0 %v3626
    %3847 = vmatprep.subr.bf16.mxu0 %v3633
    %3848 = vmatpush1.bf16.msra.mxu0 %v3632
    %3849 = vmatprep.subr.bf16.mxu0 %v3639
    %3850 = vmatpush1.bf16.msra.mxu0 %v3638
    %3851 = vmatprep.subr.bf16.mxu0 %v3645
    %3852 = vmatpush1.bf16.msra.mxu0 %v3644
    %3853 = vmatprep.subr.bf16.mxu0 %v3651
    %3854 = vmatpush1.bf16.msra.mxu0 %v3650
    %3855 = vmatprep.mubr.bf16.mxu0 %v3134
    %3856 = vmatmul.mubr.bf16.gmra.mrb[0].mxu0 %v3133
    %v3857 = vpop.f32.mrb[0].mxu0
    %v3858 = vadd.f32 %v3251, %v3857
    %v3859 = vpop.f32.mrb[0].mxu0
    %v3860 = vadd.f32 %v3255, %v3859
    %v3861 = vpop.f32.mrb[0].mxu0
    %v3862 = vadd.f32 %v3251, %v3861
    %v3863 = vpop.f32.mrb[0].mxu0
    %v3864 = vadd.f32 %v3255, %v3863
    %3865 = vmatprep.mubr.bf16.mxu0 %v3136
    %3866 = vmatmul.mubr.bf16.gmra.mrb[0].mxu0 %v3135
    %v3867 = vpop.f32.mrb[0].mxu0
    %v3868 = vadd.f32 %v3251, %v3867
    %v3869 = vpop.f32.mrb[0].mxu0
    %v3870 = vadd.f32 %v3255, %v3869
    %v3871 = vpop.f32.mrb[0].mxu0
    %v3872 = vadd.f32 %v3251, %v3871
    %v3873 = vpop.f32.mrb[0].mxu0
    %v3874 = vadd.f32 %v3255, %v3873
    %3875 = vmatprep.mubr.bf16.mxu0 %v3138
    %3876 = vmatmul.mubr.bf16.gmra.mrb[0].mxu0 %v3137
    %v3877 = vpop.f32.mrb[0].mxu0
    %v3878 = vadd.f32 %v3251, %v3877
    %v3879 = vpop.f32.mrb[0].mxu0
    %v3880 = vadd.f32 %v3255, %v3879
    %v3881 = vpop.f32.mrb[0].mxu0
    %v3882 = vadd.f32 %v3251, %v3881
    %v3883 = vpop.f32.mrb[0].mxu0
    %v3884 = vadd.f32 %v3255, %v3883
    %3885 = vmatprep.mubr.bf16.mxu0 %v3140
    %3886 = vmatmul.mubr.bf16.gmra.mrb[0].mxu0 %v3139
    %v3887 = vpop.f32.mrb[0].mxu0
    %v3888 = vadd.f32 %v3251, %v3887
    %v3889 = vpop.f32.mrb[0].mxu0
    %v3890 = vadd.f32 %v3255, %v3889
    %v3891 = vpop.f32.mrb[0].mxu0
    %v3892 = vadd.f32 %v3251, %v3891
    %v3893 = vpop.f32.mrb[0].mxu0
    %v3894 = vadd.f32 %v3255, %v3893
    %3895 = vdwg.mxu0
    %3896 = vmatprep.subr.bf16.mxu0 %v3563
    %3897 = vmatpush1.bf16.msra.mxu0 %v3562
    %3898 = vmatprep.subr.bf16.mxu0 %v3569
    %3899 = vmatpush1.bf16.msra.mxu0 %v3568
    %3900 = vmatprep.subr.bf16.mxu0 %v3575
    %3901 = vmatpush1.bf16.msra.mxu0 %v3574
    %3902 = vmatprep.subr.bf16.mxu0 %v3581
    %3903 = vmatpush1.bf16.msra.mxu0 %v3580
    %3904 = vmatprep.subr.bf16.mxu0 %v3587
    %3905 = vmatpush1.bf16.msra.mxu0 %v3586
    %3906 = vmatprep.subr.bf16.mxu0 %v3593
    %3907 = vmatpush1.bf16.msra.mxu0 %v3592
    %3908 = vmatprep.subr.bf16.mxu0 %v3599
    %3909 = vmatpush1.bf16.msra.mxu0 %v3598
    %3910 = vmatprep.subr.bf16.mxu0 %v3605
    %3911 = vmatpush1.bf16.msra.mxu0 %v3604
    %3912 = vmatprep.subr.bf16.mxu0 %v3611
    %3913 = vmatpush1.bf16.msra.mxu0 %v3610
    %3914 = vmatprep.subr.bf16.mxu0 %v3617
    %3915 = vmatpush1.bf16.msra.mxu0 %v3616
    %3916 = vmatprep.subr.bf16.mxu0 %v3623
    %3917 = vmatpush1.bf16.msra.mxu0 %v3622
    %3918 = vmatprep.subr.bf16.mxu0 %v3629
    %3919 = vmatpush1.bf16.msra.mxu0 %v3628
    %3920 = vmatprep.subr.bf16.mxu0 %v3635
    %3921 = vmatpush1.bf16.msra.mxu0 %v3634
    %3922 = vmatprep.subr.bf16.mxu0 %v3641
    %3923 = vmatpush1.bf16.msra.mxu0 %v3640
    %3924 = vmatprep.subr.bf16.mxu0 %v3647
    %3925 = vmatpush1.bf16.msra.mxu0 %v3646
    %3926 = vmatprep.subr.bf16.mxu0 %v3653
    %3927 = vmatpush1.bf16.msra.mxu0 %v3652
    %3928 = vmatprep.mubr.bf16.mxu0 %v3134
    %3929 = vmatmul.mubr.bf16.gmra.mrb[0].mxu0 %v3133
    %v3930 = vpop.f32.mrb[0].mxu0
    %v3931 = vadd.f32 %v3259, %v3930
    %v3932 = vpop.f32.mrb[0].mxu0
    %v3933 = vadd.f32 %v3263, %v3932
    %v3934 = vpop.f32.mrb[0].mxu0
    %v3935 = vadd.f32 %v3259, %v3934
    %v3936 = vpop.f32.mrb[0].mxu0
    %v3937 = vadd.f32 %v3263, %v3936
    %3938 = vmatprep.mubr.bf16.mxu0 %v3136
    %3939 = vmatmul.mubr.bf16.gmra.mrb[0].mxu0 %v3135
    %v3940 = vpop.f32.mrb[0].mxu0
    %v3941 = vadd.f32 %v3259, %v3940
    %v3942 = vpop.f32.mrb[0].mxu0
    %v3943 = vadd.f32 %v3263, %v3942
    %v3944 = vpop.f32.mrb[0].mxu0
    %v3945 = vadd.f32 %v3259, %v3944
    %v3946 = vpop.f32.mrb[0].mxu0
    %v3947 = vadd.f32 %v3263, %v3946
    %3948 = vmatprep.mubr.bf16.mxu0 %v3138
    %3949 = vmatmul.mubr.bf16.gmra.mrb[0].mxu0 %v3137
    %v3950 = vpop.f32.mrb[0].mxu0
    %v3951 = vadd.f32 %v3259, %v3950
    %v3952 = vpop.f32.mrb[0].mxu0
    %v3953 = vadd.f32 %v3263, %v3952
    %v3954 = vpop.f32.mrb[0].mxu0
    %v3955 = vadd.f32 %v3259, %v3954
    %v3956 = vpop.f32.mrb[0].mxu0
    %v3957 = vadd.f32 %v3263, %v3956
    %3958 = vmatprep.mubr.bf16.mxu0 %v3140
    %3959 = vmatmul.mubr.bf16.gmra.mrb[0].mxu0 %v3139
    %v3960 = vpop.f32.mrb[0].mxu0
    %v3961 = vadd.f32 %v3259, %v3960
    %v3962 = vpop.f32.mrb[0].mxu0
    %v3963 = vadd.f32 %v3263, %v3962
    %v3964 = vpop.f32.mrb[0].mxu0
    %v3965 = vadd.f32 %v3259, %v3964
    %v3966 = vpop.f32.mrb[0].mxu0
    %v3967 = vadd.f32 %v3263, %v3966
    %3968 = vdwg.mxu0
    %v3969 = vld [vmem:[#allocation8 + $0x300] sm:$0xff]
    %v3970 = vld [vmem:[#allocation8 + $0x308] sm:$0xff]
    %v3971 = vld [vmem:[#allocation8 + $0x310] sm:$0xff]
    %v3972 = vld [vmem:[#allocation8 + $0x318] sm:$0xff]
    %v3973 = vld [vmem:[#allocation8 + $0x320] sm:$0xff]
    %v3974 = vld [vmem:[#allocation8 + $0x328] sm:$0xff]
    %v3975 = vld [vmem:[#allocation8 + $0x330] sm:$0xff]
    %v3976 = vld [vmem:[#allocation8 + $0x338] sm:$0xff]
    %v3977 = vld [vmem:[#allocation8 + $0x340] sm:$0xff]
    %v3978 = vld [vmem:[#allocation8 + $0x348] sm:$0xff]
    %v3979 = vld [vmem:[#allocation8 + $0x350] sm:$0xff]
    %v3980 = vld [vmem:[#allocation8 + $0x358] sm:$0xff]
    %v3981 = vld [vmem:[#allocation8 + $0x360] sm:$0xff]
    %v3982 = vld [vmem:[#allocation8 + $0x368] sm:$0xff]
    %v3983 = vld [vmem:[#allocation8 + $0x370] sm:$0xff]
    %v3984 = vld [vmem:[#allocation8 + $0x378] sm:$0xff]
    %v3985 = vld [vmem:[#allocation8 + $0x380] sm:$0xff]
    %v3986 = vld [vmem:[#allocation8 + $0x388] sm:$0xff]
    %v3987 = vld [vmem:[#allocation8 + $0x390] sm:$0xff]
    %v3988 = vld [vmem:[#allocation8 + $0x398] sm:$0xff]
    %v3989 = vld [vmem:[#allocation8 + $0x3a0] sm:$0xff]
    %v3990 = vld [vmem:[#allocation8 + $0x3a8] sm:$0xff]
    %v3991 = vld [vmem:[#allocation8 + $0x3b0] sm:$0xff]
    %v3992 = vld [vmem:[#allocation8 + $0x3b8] sm:$0xff]
    %v3993 = vld [vmem:[#allocation8 + $0x3c0] sm:$0xff]
    %v3994 = vld [vmem:[#allocation8 + $0x3c8] sm:$0xff]
    %v3995 = vld [vmem:[#allocation8 + $0x3d0] sm:$0xff]
    %v3996 = vld [vmem:[#allocation8 + $0x3d8] sm:$0xff]
    %v3997 = vld [vmem:[#allocation8 + $0x3e0] sm:$0xff]
    %v3998 = vld [vmem:[#allocation8 + $0x3e8] sm:$0xff]
    %v3999 = vld [vmem:[#allocation8 + $0x3f0] sm:$0xff]
    %v4000 = vld [vmem:[#allocation8 + $0x3f8] sm:$0xff]
    %v4001 = vld [vmem:[#allocation8 + $0x400] sm:$0xff]
    %v4002 = vld [vmem:[#allocation8 + $0x408] sm:$0xff]
    %v4003 = vld [vmem:[#allocation8 + $0x410] sm:$0xff]
    %v4004 = vld [vmem:[#allocation8 + $0x418] sm:$0xff]
    %v4005 = vld [vmem:[#allocation8 + $0x420] sm:$0xff]
    %v4006 = vld [vmem:[#allocation8 + $0x428] sm:$0xff]
    %v4007 = vld [vmem:[#allocation8 + $0x430] sm:$0xff]
    %v4008 = vld [vmem:[#allocation8 + $0x438] sm:$0xff]
    %v4009 = vld [vmem:[#allocation8 + $0x440] sm:$0xff]
    %v4010 = vld [vmem:[#allocation8 + $0x448] sm:$0xff]
    %v4011 = vld [vmem:[#allocation8 + $0x450] sm:$0xff]
    %v4012 = vld [vmem:[#allocation8 + $0x458] sm:$0xff]
    %v4013 = vld [vmem:[#allocation8 + $0x460] sm:$0xff]
    %v4014 = vld [vmem:[#allocation8 + $0x468] sm:$0xff]
    %v4015 = vld [vmem:[#allocation8 + $0x470] sm:$0xff]
    %v4016 = vld [vmem:[#allocation8 + $0x478] sm:$0xff]
    %v4017 = vld [vmem:[#allocation8 + $0x480] sm:$0xff]
    %v4018 = vld [vmem:[#allocation8 + $0x488] sm:$0xff]
    %v4019 = vld [vmem:[#allocation8 + $0x490] sm:$0xff]
    %v4020 = vld [vmem:[#allocation8 + $0x498] sm:$0xff]
    %v4021 = vld [vmem:[#allocation8 + $0x4a0] sm:$0xff]
    %v4022 = vld [vmem:[#allocation8 + $0x4a8] sm:$0xff]
    %v4023 = vld [vmem:[#allocation8 + $0x4b0] sm:$0xff]
    %v4024 = vld [vmem:[#allocation8 + $0x4b8] sm:$0xff]
    %v4025 = vld [vmem:[#allocation8 + $0x4c0] sm:$0xff]
    %v4026 = vld [vmem:[#allocation8 + $0x4c8] sm:$0xff]
    %v4027 = vld [vmem:[#allocation8 + $0x4d0] sm:$0xff]
    %v4028 = vld [vmem:[#allocation8 + $0x4d8] sm:$0xff]
    %v4029 = vld [vmem:[#allocation8 + $0x4e0] sm:$0xff]
    %v4030 = vld [vmem:[#allocation8 + $0x4e8] sm:$0xff]
    %v4031 = vld [vmem:[#allocation8 + $0x4f0] sm:$0xff]
    %v4032 = vld [vmem:[#allocation8 + $0x4f8] sm:$0xff]
    %v4033 = vld [vmem:[#allocation8 + $0x500] sm:$0xff]
    %v4034 = vld [vmem:[#allocation8 + $0x508] sm:$0xff]
    %v4035 = vld [vmem:[#allocation8 + $0x510] sm:$0xff]
    %v4036 = vld [vmem:[#allocation8 + $0x518] sm:$0xff]
    %v4037 = vld [vmem:[#allocation8 + $0x520] sm:$0xff]
    %v4038 = vld [vmem:[#allocation8 + $0x528] sm:$0xff]
    %v4039 = vld [vmem:[#allocation8 + $0x530] sm:$0xff]
    %v4040 = vld [vmem:[#allocation8 + $0x538] sm:$0xff]
    %v4041 = vld [vmem:[#allocation8 + $0x540] sm:$0xff]
    %v4042 = vld [vmem:[#allocation8 + $0x548] sm:$0xff]
    %v4043 = vld [vmem:[#allocation8 + $0x550] sm:$0xff]
    %v4044 = vld [vmem:[#allocation8 + $0x558] sm:$0xff]
    %v4045 = vld [vmem:[#allocation8 + $0x560] sm:$0xff]
    %v4046 = vld [vmem:[#allocation8 + $0x568] sm:$0xff]
    %v4047 = vld [vmem:[#allocation8 + $0x570] sm:$0xff]
    %v4048 = vld [vmem:[#allocation8 + $0x578] sm:$0xff]
    %v4049 = vld [vmem:[#allocation8 + $0x580] sm:$0xff]
    %v4050 = vld [vmem:[#allocation8 + $0x588] sm:$0xff]
    %v4051 = vld [vmem:[#allocation8 + $0x590] sm:$0xff]
    %v4052 = vld [vmem:[#allocation8 + $0x598] sm:$0xff]
    %v4053 = vld [vmem:[#allocation8 + $0x5a0] sm:$0xff]
    %v4054 = vld [vmem:[#allocation8 + $0x5a8] sm:$0xff]
    %v4055 = vld [vmem:[#allocation8 + $0x5b0] sm:$0xff]
    %v4056 = vld [vmem:[#allocation8 + $0x5b8] sm:$0xff]
    %v4057 = vld [vmem:[#allocation8 + $0x5c0] sm:$0xff]
    %v4058 = vld [vmem:[#allocation8 + $0x5c8] sm:$0xff]
    %v4059 = vld [vmem:[#allocation8 + $0x5d0] sm:$0xff]
    %v4060 = vld [vmem:[#allocation8 + $0x5d8] sm:$0xff]
    %v4061 = vld [vmem:[#allocation8 + $0x5e0] sm:$0xff]
    %v4062 = vld [vmem:[#allocation8 + $0x5e8] sm:$0xff]
    %v4063 = vld [vmem:[#allocation8 + $0x5f0] sm:$0xff]
    %v4064 = vld [vmem:[#allocation8 + $0x5f8] sm:$0xff]
    %s4065 = scalar_lea.vmem [#allocation10], 3
    %v4066 = vld [vmem:[%s4065] ss:$4 sm:$0x3f]
    %v4068 = vlaneseq
    %v4069 = vshrl.u32 %v4068, 7
    %v4070 = vsub.s32 0, %v4069
    %v4071 = vrot.slane %v4066, %v4070
    %v4072 = vlaneseq
    %v4073 = vshrl.u32 %v4072, 7
    %v4074 = vsub.s32 1, %v4073
    %v4075 = vrot.slane %v4066, %v4074
    %v4076 = vlaneseq
    %v4077 = vshrl.u32 %v4076, 7
    %v4078 = vsub.s32 2, %v4077
    %v4079 = vrot.slane %v4066, %v4078
    %v4080 = vlaneseq
    %v4081 = vshrl.u32 %v4080, 7
    %v4082 = vsub.s32 3, %v4081
    %v4083 = vrot.slane %v4066, %v4082
    %v4084 = vlaneseq
    %v4085 = vshrl.u32 %v4084, 7
    %v4086 = vsub.s32 4, %v4085
    %v4087 = vrot.slane %v4066, %v4086
    %v4088 = vlaneseq
    %v4089 = vshrl.u32 %v4088, 7
    %v4090 = vsub.s32 5, %v4089
    %v4091 = vrot.slane %v4066, %v4090
    %v4194 = vunpack.c.l.b16 %v3969
    %v4195 = vunpack.c.h.b16 %v3969
    %v4196 = vunpack.c.l.b16 %v3970
    %v4197 = vunpack.c.h.b16 %v3970
    %v4198 = vunpack.c.l.b16 %v3971
    %v4199 = vunpack.c.h.b16 %v3971
    %v4200 = vunpack.c.l.b16 %v3972
    %v4201 = vunpack.c.h.b16 %v3972
    %v4202 = vunpack.c.l.b16 %v3973
    %v4203 = vunpack.c.h.b16 %v3973
    %v4204 = vunpack.c.l.b16 %v3974
    %v4205 = vunpack.c.h.b16 %v3974
    %v4206 = vunpack.c.l.b16 %v3975
    %v4207 = vunpack.c.h.b16 %v3975
    %v4208 = vunpack.c.l.b16 %v3976
    %v4209 = vunpack.c.h.b16 %v3976
    %v4210 = vunpack.c.l.b16 %v3977
    %v4211 = vunpack.c.h.b16 %v3977
    %v4212 = vunpack.c.l.b16 %v3978
    %v4213 = vunpack.c.h.b16 %v3978
    %v4214 = vunpack.c.l.b16 %v3979
    %v4215 = vunpack.c.h.b16 %v3979
    %v4216 = vunpack.c.l.b16 %v3980
    %v4217 = vunpack.c.h.b16 %v3980
    %v4218 = vunpack.c.l.b16 %v3981
    %v4219 = vunpack.c.h.b16 %v3981
    %v4220 = vunpack.c.l.b16 %v3982
    %v4221 = vunpack.c.h.b16 %v3982
    %v4222 = vunpack.c.l.b16 %v3983
    %v4223 = vunpack.c.h.b16 %v3983
    %v4224 = vunpack.c.l.b16 %v3984
    %v4225 = vunpack.c.h.b16 %v3984
    %v4226 = vunpack.c.l.b16 %v3985
    %v4227 = vunpack.c.h.b16 %v3985
    %v4228 = vunpack.c.l.b16 %v3986
    %v4229 = vunpack.c.h.b16 %v3986
    %v4230 = vunpack.c.l.b16 %v3987
    %v4231 = vunpack.c.h.b16 %v3987
    %v4232 = vunpack.c.l.b16 %v3988
    %v4233 = vunpack.c.h.b16 %v3988
    %v4234 = vunpack.c.l.b16 %v3989
    %v4235 = vunpack.c.h.b16 %v3989
    %v4236 = vunpack.c.l.b16 %v3990
    %v4237 = vunpack.c.h.b16 %v3990
    %v4238 = vunpack.c.l.b16 %v3991
    %v4239 = vunpack.c.h.b16 %v3991
    %v4240 = vunpack.c.l.b16 %v3992
    %v4241 = vunpack.c.h.b16 %v3992
    %v4242 = vunpack.c.l.b16 %v3993
    %v4243 = vunpack.c.h.b16 %v3993
    %v4244 = vunpack.c.l.b16 %v3994
    %v4245 = vunpack.c.h.b16 %v3994
    %v4246 = vunpack.c.l.b16 %v3995
    %v4247 = vunpack.c.h.b16 %v3995
    %v4248 = vunpack.c.l.b16 %v3996
    %v4249 = vunpack.c.h.b16 %v3996
    %v4250 = vunpack.c.l.b16 %v3997
    %v4251 = vunpack.c.h.b16 %v3997
    %v4252 = vunpack.c.l.b16 %v3998
    %v4253 = vunpack.c.h.b16 %v3998
    %v4254 = vunpack.c.l.b16 %v3999
    %v4255 = vunpack.c.h.b16 %v3999
    %v4256 = vunpack.c.l.b16 %v4000
    %v4257 = vunpack.c.h.b16 %v4000
    %v4258 = vunpack.c.l.b16 %v4001
    %v4259 = vunpack.c.h.b16 %v4001
    %v4260 = vunpack.c.l.b16 %v4002
    %v4261 = vunpack.c.h.b16 %v4002
    %v4262 = vunpack.c.l.b16 %v4003
    %v4263 = vunpack.c.h.b16 %v4003
    %v4264 = vunpack.c.l.b16 %v4004
    %v4265 = vunpack.c.h.b16 %v4004
    %v4266 = vunpack.c.l.b16 %v4005
    %v4267 = vunpack.c.h.b16 %v4005
    %v4268 = vunpack.c.l.b16 %v4006
    %v4269 = vunpack.c.h.b16 %v4006
    %v4270 = vunpack.c.l.b16 %v4007
    %v4271 = vunpack.c.h.b16 %v4007
    %v4272 = vunpack.c.l.b16 %v4008
    %v4273 = vunpack.c.h.b16 %v4008
    %v4274 = vunpack.c.l.b16 %v4009
    %v4275 = vunpack.c.h.b16 %v4009
    %v4276 = vunpack.c.l.b16 %v4010
    %v4277 = vunpack.c.h.b16 %v4010
    %v4278 = vunpack.c.l.b16 %v4011
    %v4279 = vunpack.c.h.b16 %v4011
    %v4280 = vunpack.c.l.b16 %v4012
    %v4281 = vunpack.c.h.b16 %v4012
    %v4282 = vunpack.c.l.b16 %v4013
    %v4283 = vunpack.c.h.b16 %v4013
    %v4284 = vunpack.c.l.b16 %v4014
    %v4285 = vunpack.c.h.b16 %v4014
    %v4286 = vunpack.c.l.b16 %v4015
    %v4287 = vunpack.c.h.b16 %v4015
    %v4288 = vunpack.c.l.b16 %v4016
    %v4289 = vunpack.c.h.b16 %v4016
    %v4290 = vunpack.c.l.b16 %v4017
    %v4291 = vunpack.c.h.b16 %v4017
    %v4292 = vunpack.c.l.b16 %v4018
    %v4293 = vunpack.c.h.b16 %v4018
    %v4294 = vunpack.c.l.b16 %v4019
    %v4295 = vunpack.c.h.b16 %v4019
    %v4296 = vunpack.c.l.b16 %v4020
    %v4297 = vunpack.c.h.b16 %v4020
    %v4298 = vunpack.c.l.b16 %v4021
    %v4299 = vunpack.c.h.b16 %v4021
    %v4300 = vunpack.c.l.b16 %v4022
    %v4301 = vunpack.c.h.b16 %v4022
    %v4302 = vunpack.c.l.b16 %v4023
    %v4303 = vunpack.c.h.b16 %v4023
    %v4304 = vunpack.c.l.b16 %v4024
    %v4305 = vunpack.c.h.b16 %v4024
    %v4306 = vunpack.c.l.b16 %v4025
    %v4307 = vunpack.c.h.b16 %v4025
    %v4308 = vunpack.c.l.b16 %v4026
    %v4309 = vunpack.c.h.b16 %v4026
    %v4310 = vunpack.c.l.b16 %v4027
    %v4311 = vunpack.c.h.b16 %v4027
    %v4312 = vunpack.c.l.b16 %v4028
    %v4313 = vunpack.c.h.b16 %v4028
    %v4314 = vunpack.c.l.b16 %v4029
    %v4315 = vunpack.c.h.b16 %v4029
    %v4316 = vunpack.c.l.b16 %v4030
    %v4317 = vunpack.c.h.b16 %v4030
    %v4318 = vunpack.c.l.b16 %v4031
    %v4319 = vunpack.c.h.b16 %v4031
    %v4320 = vunpack.c.l.b16 %v4032
    %v4321 = vunpack.c.h.b16 %v4032
    %v4322 = vunpack.c.l.b16 %v4033
    %v4323 = vunpack.c.h.b16 %v4033
    %v4324 = vunpack.c.l.b16 %v4034
    %v4325 = vunpack.c.h.b16 %v4034
    %v4326 = vunpack.c.l.b16 %v4035
    %v4327 = vunpack.c.h.b16 %v4035
    %v4328 = vunpack.c.l.b16 %v4036
    %v4329 = vunpack.c.h.b16 %v4036
    %v4330 = vunpack.c.l.b16 %v4037
    %v4331 = vunpack.c.h.b16 %v4037
    %v4332 = vunpack.c.l.b16 %v4038
    %v4333 = vunpack.c.h.b16 %v4038
    %v4334 = vunpack.c.l.b16 %v4039
    %v4335 = vunpack.c.h.b16 %v4039
    %v4336 = vunpack.c.l.b16 %v4040
    %v4337 = vunpack.c.h.b16 %v4040
    %v4338 = vunpack.c.l.b16 %v4041
    %v4339 = vunpack.c.h.b16 %v4041
    %v4340 = vunpack.c.l.b16 %v4042
    %v4341 = vunpack.c.h.b16 %v4042
    %v4342 = vunpack.c.l.b16 %v4043
    %v4343 = vunpack.c.h.b16 %v4043
    %v4344 = vunpack.c.l.b16 %v4044
    %v4345 = vunpack.c.h.b16 %v4044
    %v4346 = vunpack.c.l.b16 %v4045
    %v4347 = vunpack.c.h.b16 %v4045
    %v4348 = vunpack.c.l.b16 %v4046
    %v4349 = vunpack.c.h.b16 %v4046
    %v4350 = vunpack.c.l.b16 %v4047
    %v4351 = vunpack.c.h.b16 %v4047
    %v4352 = vunpack.c.l.b16 %v4048
    %v4353 = vunpack.c.h.b16 %v4048
    %v4354 = vunpack.c.l.b16 %v4049
    %v4355 = vunpack.c.h.b16 %v4049
    %v4356 = vunpack.c.l.b16 %v4050
    %v4357 = vunpack.c.h.b16 %v4050
    %v4358 = vunpack.c.l.b16 %v4051
    %v4359 = vunpack.c.h.b16 %v4051
    %v4360 = vunpack.c.l.b16 %v4052
    %v4361 = vunpack.c.h.b16 %v4052
    %v4362 = vunpack.c.l.b16 %v4053
    %v4363 = vunpack.c.h.b16 %v4053
    %v4364 = vunpack.c.l.b16 %v4054
    %v4365 = vunpack.c.h.b16 %v4054
    %v4366 = vunpack.c.l.b16 %v4055
    %v4367 = vunpack.c.h.b16 %v4055
    %v4368 = vunpack.c.l.b16 %v4056
    %v4369 = vunpack.c.h.b16 %v4056
    %v4370 = vunpack.c.l.b16 %v4057
    %v4371 = vunpack.c.h.b16 %v4057
    %v4372 = vunpack.c.l.b16 %v4058
    %v4373 = vunpack.c.h.b16 %v4058
    %v4374 = vunpack.c.l.b16 %v4059
    %v4375 = vunpack.c.h.b16 %v4059
    %v4376 = vunpack.c.l.b16 %v4060
    %v4377 = vunpack.c.h.b16 %v4060
    %v4378 = vunpack.c.l.b16 %v4061
    %v4379 = vunpack.c.h.b16 %v4061
    %v4380 = vunpack.c.l.b16 %v4062
    %v4381 = vunpack.c.h.b16 %v4062
    %v4382 = vunpack.c.l.b16 %v4063
    %v4383 = vunpack.c.h.b16 %v4063
    %v4384 = vunpack.c.l.b16 %v4064
    %v4385 = vunpack.c.h.b16 %v4064
    %v4386 = vpack.c.b16 %v4200, %v4194
    %v4387 = vpack.c.b16 %v4201, %v4195
    %v4388 = vpack.c.b16 %v4202, %v4196
    %v4389 = vpack.c.b16 %v4203, %v4197
    %v4390 = vpack.c.b16 %v4204, %v4198
    %v4391 = vpack.c.b16 %v4205, %v4199
    %v4392 = vpack.c.b16 %v4212, %v4206
    %v4393 = vpack.c.b16 %v4213, %v4207
    %v4394 = vpack.c.b16 %v4214, %v4208
    %v4395 = vpack.c.b16 %v4215, %v4209
    %v4396 = vpack.c.b16 %v4216, %v4210
    %v4397 = vpack.c.b16 %v4217, %v4211
    %v4398 = vpack.c.b16 %v4224, %v4218
    %v4399 = vpack.c.b16 %v4225, %v4219
    %v4400 = vpack.c.b16 %v4226, %v4220
    %v4401 = vpack.c.b16 %v4227, %v4221
    %v4402 = vpack.c.b16 %v4228, %v4222
    %v4403 = vpack.c.b16 %v4229, %v4223
    %v4404 = vpack.c.b16 %v4236, %v4230
    %v4405 = vpack.c.b16 %v4237, %v4231
    %v4406 = vpack.c.b16 %v4238, %v4232
    %v4407 = vpack.c.b16 %v4239, %v4233
    %v4408 = vpack.c.b16 %v4240, %v4234
    %v4409 = vpack.c.b16 %v4241, %v4235
    %v4410 = vpack.c.b16 %v4248, %v4242
    %v4411 = vpack.c.b16 %v4249, %v4243
    %v4412 = vpack.c.b16 %v4250, %v4244
    %v4413 = vpack.c.b16 %v4251, %v4245
    %v4414 = vpack.c.b16 %v4252, %v4246
    %v4415 = vpack.c.b16 %v4253, %v4247
    %v4416 = vpack.c.b16 %v4260, %v4254
    %v4417 = vpack.c.b16 %v4261, %v4255
    %v4418 = vpack.c.b16 %v4262, %v4256
    %v4419 = vpack.c.b16 %v4263, %v4257
    %v4420 = vpack.c.b16 %v4264, %v4258
    %v4421 = vpack.c.b16 %v4265, %v4259
    %v4422 = vpack.c.b16 %v4272, %v4266
    %v4423 = vpack.c.b16 %v4273, %v4267
    %v4424 = vpack.c.b16 %v4274, %v4268
    %v4425 = vpack.c.b16 %v4275, %v4269
    %v4426 = vpack.c.b16 %v4276, %v4270
    %v4427 = vpack.c.b16 %v4277, %v4271
    %v4428 = vpack.c.b16 %v4284, %v4278
    %v4429 = vpack.c.b16 %v4285, %v4279
    %v4430 = vpack.c.b16 %v4286, %v4280
    %v4431 = vpack.c.b16 %v4287, %v4281
    %v4432 = vpack.c.b16 %v4288, %v4282
    %v4433 = vpack.c.b16 %v4289, %v4283
    %v4434 = vpack.c.b16 %v4296, %v4290
    %v4435 = vpack.c.b16 %v4297, %v4291
    %v4436 = vpack.c.b16 %v4298, %v4292
    %v4437 = vpack.c.b16 %v4299, %v4293
    %v4438 = vpack.c.b16 %v4300, %v4294
    %v4439 = vpack.c.b16 %v4301, %v4295
    %v4440 = vpack.c.b16 %v4308, %v4302
    %v4441 = vpack.c.b16 %v4309, %v4303
    %v4442 = vpack.c.b16 %v4310, %v4304
    %v4443 = vpack.c.b16 %v4311, %v4305
    %v4444 = vpack.c.b16 %v4312, %v4306
    %v4445 = vpack.c.b16 %v4313, %v4307
    %v4446 = vpack.c.b16 %v4320, %v4314
    %v4447 = vpack.c.b16 %v4321, %v4315
    %v4448 = vpack.c.b16 %v4322, %v4316
    %v4449 = vpack.c.b16 %v4323, %v4317
    %v4450 = vpack.c.b16 %v4324, %v4318
    %v4451 = vpack.c.b16 %v4325, %v4319
    %v4452 = vpack.c.b16 %v4332, %v4326
    %v4453 = vpack.c.b16 %v4333, %v4327
    %v4454 = vpack.c.b16 %v4334, %v4328
    %v4455 = vpack.c.b16 %v4335, %v4329
    %v4456 = vpack.c.b16 %v4336, %v4330
    %v4457 = vpack.c.b16 %v4337, %v4331
    %v4458 = vpack.c.b16 %v4344, %v4338
    %v4459 = vpack.c.b16 %v4345, %v4339
    %v4460 = vpack.c.b16 %v4346, %v4340
    %v4461 = vpack.c.b16 %v4347, %v4341
    %v4462 = vpack.c.b16 %v4348, %v4342
    %v4463 = vpack.c.b16 %v4349, %v4343
    %v4464 = vpack.c.b16 %v4356, %v4350
    %v4465 = vpack.c.b16 %v4357, %v4351
    %v4466 = vpack.c.b16 %v4358, %v4352
    %v4467 = vpack.c.b16 %v4359, %v4353
    %v4468 = vpack.c.b16 %v4360, %v4354
    %v4469 = vpack.c.b16 %v4361, %v4355
    %v4470 = vpack.c.b16 %v4368, %v4362
    %v4471 = vpack.c.b16 %v4369, %v4363
    %v4472 = vpack.c.b16 %v4370, %v4364
    %v4473 = vpack.c.b16 %v4371, %v4365
    %v4474 = vpack.c.b16 %v4372, %v4366
    %v4475 = vpack.c.b16 %v4373, %v4367
    %v4476 = vpack.c.b16 %v4380, %v4374
    %v4477 = vpack.c.b16 %v4381, %v4375
    %v4478 = vpack.c.b16 %v4382, %v4376
    %v4479 = vpack.c.b16 %v4383, %v4377
    %v4480 = vpack.c.b16 %v4384, %v4378
    %v4481 = vpack.c.b16 %v4385, %v4379
    %4578 = vmatprep.subr.bf16.mxu0 %v4387
    %4579 = vmatpush1.bf16.msra.mxu0 %v4386
    %4580 = vmatprep.subr.bf16.mxu0 %v4393
    %4581 = vmatpush1.bf16.msra.mxu0 %v4392
    %4582 = vmatprep.subr.bf16.mxu0 %v4399
    %4583 = vmatpush1.bf16.msra.mxu0 %v4398
    %4584 = vmatprep.subr.bf16.mxu0 %v4405
    %4585 = vmatpush1.bf16.msra.mxu0 %v4404
    %4586 = vmatprep.subr.bf16.mxu0 %v4411
    %4587 = vmatpush1.bf16.msra.mxu0 %v4410
    %4588 = vmatprep.subr.bf16.mxu0 %v4417
    %4589 = vmatpush1.bf16.msra.mxu0 %v4416
    %4590 = vmatprep.subr.bf16.mxu0 %v4423
    %4591 = vmatpush1.bf16.msra.mxu0 %v4422
    %4592 = vmatprep.subr.bf16.mxu0 %v4429
    %4593 = vmatpush1.bf16.msra.mxu0 %v4428
    %4594 = vmatprep.subr.bf16.mxu0 %v4435
    %4595 = vmatpush1.bf16.msra.mxu0 %v4434
    %4596 = vmatprep.subr.bf16.mxu0 %v4441
    %4597 = vmatpush1.bf16.msra.mxu0 %v4440
    %4598 = vmatprep.subr.bf16.mxu0 %v4447
    %4599 = vmatpush1.bf16.msra.mxu0 %v4446
    %4600 = vmatprep.subr.bf16.mxu0 %v4453
    %4601 = vmatpush1.bf16.msra.mxu0 %v4452
    %4602 = vmatprep.subr.bf16.mxu0 %v4459
    %4603 = vmatpush1.bf16.msra.mxu0 %v4458
    %4604 = vmatprep.subr.bf16.mxu0 %v4465
    %4605 = vmatpush1.bf16.msra.mxu0 %v4464
    %4606 = vmatprep.subr.bf16.mxu0 %v4471
    %4607 = vmatpush1.bf16.msra.mxu0 %v4470
    %4608 = vmatprep.subr.bf16.mxu0 %v4477
    %4609 = vmatpush1.bf16.msra.mxu0 %v4476
    %4610 = vmatprep.mubr.bf16.mxu0 0
    %4611 = vmatmul.mubr.bf16.gmra.mrb[0].mxu0 0
    %v4612 = vpop.f32.mrb[0].mxu0
    %v4613 = vadd.f32 %v4071, %v4612
    %v4614 = vpop.f32.mrb[0].mxu0
    %v4615 = vadd.f32 %v4075, %v4614
    %v4616 = vpop.f32.mrb[0].mxu0
    %v4617 = vpop.f32.mrb[0].mxu0
    %4618 = vdwg.mxu0
    %4619 = vmatprep.subr.bf16.mxu0 %v4389
    %4620 = vmatpush1.bf16.msra.mxu0 %v4388
    %4621 = vmatprep.subr.bf16.mxu0 %v4395
    %4622 = vmatpush1.bf16.msra.mxu0 %v4394
    %4623 = vmatprep.subr.bf16.mxu0 %v4401
    %4624 = vmatpush1.bf16.msra.mxu0 %v4400
    %4625 = vmatprep.subr.bf16.mxu0 %v4407
    %4626 = vmatpush1.bf16.msra.mxu0 %v4406
    %4627 = vmatprep.subr.bf16.mxu0 %v4413
    %4628 = vmatpush1.bf16.msra.mxu0 %v4412
    %4629 = vmatprep.subr.bf16.mxu0 %v4419
    %4630 = vmatpush1.bf16.msra.mxu0 %v4418
    %4631 = vmatprep.subr.bf16.mxu0 %v4425
    %4632 = vmatpush1.bf16.msra.mxu0 %v4424
    %4633 = vmatprep.subr.bf16.mxu0 %v4431
    %4634 = vmatpush1.bf16.msra.mxu0 %v4430
    %4635 = vmatprep.subr.bf16.mxu0 %v4437
    %4636 = vmatpush1.bf16.msra.mxu0 %v4436
    %4637 = vmatprep.subr.bf16.mxu0 %v4443
    %4638 = vmatpush1.bf16.msra.mxu0 %v4442
    %4639 = vmatprep.subr.bf16.mxu0 %v4449
    %4640 = vmatpush1.bf16.msra.mxu0 %v4448
    %4641 = vmatprep.subr.bf16.mxu0 %v4455
    %4642 = vmatpush1.bf16.msra.mxu0 %v4454
    %4643 = vmatprep.subr.bf16.mxu0 %v4461
    %4644 = vmatpush1.bf16.msra.mxu0 %v4460
    %4645 = vmatprep.subr.bf16.mxu0 %v4467
    %4646 = vmatpush1.bf16.msra.mxu0 %v4466
    %4647 = vmatprep.subr.bf16.mxu0 %v4473
    %4648 = vmatpush1.bf16.msra.mxu0 %v4472
    %4649 = vmatprep.subr.bf16.mxu0 %v4479
    %4650 = vmatpush1.bf16.msra.mxu0 %v4478
    %4651 = vmatprep.mubr.bf16.mxu0 0
    %4652 = vmatmul.mubr.bf16.gmra.mrb[0].mxu0 0
    %v4653 = vpop.f32.mrb[0].mxu0
    %v4654 = vadd.f32 %v4079, %v4653
    %v4655 = vpop.f32.mrb[0].mxu0
    %v4656 = vadd.f32 %v4083, %v4655
    %v4657 = vpop.f32.mrb[0].mxu0
    %v4658 = vpop.f32.mrb[0].mxu0
    %4659 = vdwg.mxu0
    %4660 = vmatprep.subr.bf16.mxu0 %v4391
    %4661 = vmatpush1.bf16.msra.mxu0 %v4390
    %4662 = vmatprep.subr.bf16.mxu0 %v4397
    %4663 = vmatpush1.bf16.msra.mxu0 %v4396
    %4664 = vmatprep.subr.bf16.mxu0 %v4403
    %4665 = vmatpush1.bf16.msra.mxu0 %v4402
    %4666 = vmatprep.subr.bf16.mxu0 %v4409
    %4667 = vmatpush1.bf16.msra.mxu0 %v4408
    %4668 = vmatprep.subr.bf16.mxu0 %v4415
    %4669 = vmatpush1.bf16.msra.mxu0 %v4414
    %4670 = vmatprep.subr.bf16.mxu0 %v4421
    %4671 = vmatpush1.bf16.msra.mxu0 %v4420
    %4672 = vmatprep.subr.bf16.mxu0 %v4427
    %4673 = vmatpush1.bf16.msra.mxu0 %v4426
    %4674 = vmatprep.subr.bf16.mxu0 %v4433
    %4675 = vmatpush1.bf16.msra.mxu0 %v4432
    %4676 = vmatprep.subr.bf16.mxu0 %v4439
    %4677 = vmatpush1.bf16.msra.mxu0 %v4438
    %4678 = vmatprep.subr.bf16.mxu0 %v4445
    %4679 = vmatpush1.bf16.msra.mxu0 %v4444
    %4680 = vmatprep.subr.bf16.mxu0 %v4451
    %4681 = vmatpush1.bf16.msra.mxu0 %v4450
    %4682 = vmatprep.subr.bf16.mxu0 %v4457
    %4683 = vmatpush1.bf16.msra.mxu0 %v4456
    %4684 = vmatprep.subr.bf16.mxu0 %v4463
    %4685 = vmatpush1.bf16.msra.mxu0 %v4462
    %4686 = vmatprep.subr.bf16.mxu0 %v4469
    %4687 = vmatpush1.bf16.msra.mxu0 %v4468
    %4688 = vmatprep.subr.bf16.mxu0 %v4475
    %4689 = vmatpush1.bf16.msra.mxu0 %v4474
    %4690 = vmatprep.subr.bf16.mxu0 %v4481
    %4691 = vmatpush1.bf16.msra.mxu0 %v4480
    %4692 = vmatprep.mubr.bf16.mxu0 0
    %4693 = vmatmul.mubr.bf16.gmra.mrb[0].mxu0 0
    %v4694 = vpop.f32.mrb[0].mxu0
    %v4695 = vadd.f32 %v4087, %v4694
    %v4696 = vpop.f32.mrb[0].mxu0
    %v4697 = vadd.f32 %v4091, %v4696
    %v4698 = vpop.f32.mrb[0].mxu0
    %v4699 = vpop.f32.mrb[0].mxu0
    %4700 = vdwg.mxu0
    %v4701 = vadd.f32 %v3785, %v4613
    %v4702 = vadd.f32 %v3787, %v4615
    %v4703 = vxor.u32 %v4701, 2147483648
    %v4704 = vxor.u32 %v4702, 2147483648
    %v4705 = vmul.f32 %v4703, 1.442695
    %v4706 = vpow.pop %v4705
    %v4707 = vmul.f32 %v4704, 1.442695
    %v4708 = vpow.pop %v4707
    %v4709 = vadd.f32 %v4706, 1.0
    %v4710 = vadd.f32 %v4708, 1.0
    %v4711 = vrcp.pop %v4709
    %v4712 = vmul.f32 1.0, %v4711
    %v4713 = vrcp.pop %v4710
    %v4714 = vmul.f32 1.0, %v4713
    %v4715 = vadd.f32 %v3858, %v4654
    %v4716 = vadd.f32 %v3860, %v4656
    %v4717 = vxor.u32 %v4715, 2147483648
    %v4718 = vxor.u32 %v4716, 2147483648
    %v4719 = vmul.f32 %v4717, 1.442695
    %v4720 = vpow.pop %v4719
    %v4721 = vmul.f32 %v4718, 1.442695
    %v4722 = vpow.pop %v4721
    %v4723 = vadd.f32 %v4720, 1.0
    %v4724 = vadd.f32 %v4722, 1.0
    %v4725 = vrcp.pop %v4723
    %v4726 = vmul.f32 1.0, %v4725
    %v4727 = vrcp.pop %v4724
    %v4728 = vmul.f32 1.0, %v4727
    %v4729 = vmul.f32 %v4712, %v4695
    %v4730 = vmul.f32 %v4714, %v4697
    %v4731 = vadd.f32 %v3931, %v4729
    %v4732 = vadd.f32 %v3933, %v4730
    %v4733 = vtanh.pop %v4731
    %v4734 = vtanh.pop %v4732
    %v4735 = vsub.f32 1.0, %v4726
    %v4736 = vsub.f32 1.0, %v4728
    %v4737 = vmul.f32 %v4735, %v4733
    %v4738 = vmul.f32 %v4736, %v4734
    %v4739 = vmul.f32 %v4726, 0.0
    %v4740 = vmul.f32 %v4728, 0.0
    %v4741 = vadd.f32 %v4737, %v4739
    %v4742 = vadd.f32 %v4738, %v4740
    %v4743 = vadd.f32 %v4741, 0.0
    %v4744 = vadd.f32 %v4742, 0.0
    %v4745 = vpack.c.bf16 %v4741, %v4741
    %v4746 = vpack.c.bf16 %v4742, %v4742
    %4747 = vmatprep.subr.bf16.mxu0 %v4387
    %4748 = vmatpush1.bf16.msra.mxu0 %v4386
    %4749 = vmatprep.subr.bf16.mxu0 %v4393
    %4750 = vmatpush1.bf16.msra.mxu0 %v4392
    %4751 = vmatprep.subr.bf16.mxu0 %v4399
    %4752 = vmatpush1.bf16.msra.mxu0 %v4398
    %4753 = vmatprep.subr.bf16.mxu0 %v4405
    %4754 = vmatpush1.bf16.msra.mxu0 %v4404
    %4755 = vmatprep.subr.bf16.mxu0 %v4411
    %4756 = vmatpush1.bf16.msra.mxu0 %v4410
    %4757 = vmatprep.subr.bf16.mxu0 %v4417
    %4758 = vmatpush1.bf16.msra.mxu0 %v4416
    %4759 = vmatprep.subr.bf16.mxu0 %v4423
    %4760 = vmatpush1.bf16.msra.mxu0 %v4422
    %4761 = vmatprep.subr.bf16.mxu0 %v4429
    %4762 = vmatpush1.bf16.msra.mxu0 %v4428
    %4763 = vmatprep.subr.bf16.mxu0 %v4435
    %4764 = vmatpush1.bf16.msra.mxu0 %v4434
    %4765 = vmatprep.subr.bf16.mxu0 %v4441
    %4766 = vmatpush1.bf16.msra.mxu0 %v4440
    %4767 = vmatprep.subr.bf16.mxu0 %v4447
    %4768 = vmatpush1.bf16.msra.mxu0 %v4446
    %4769 = vmatprep.subr.bf16.mxu0 %v4453
    %4770 = vmatpush1.bf16.msra.mxu0 %v4452
    %4771 = vmatprep.subr.bf16.mxu0 %v4459
    %4772 = vmatpush1.bf16.msra.mxu0 %v4458
    %4773 = vmatprep.subr.bf16.mxu0 %v4465
    %4774 = vmatpush1.bf16.msra.mxu0 %v4464
    %4775 = vmatprep.subr.bf16.mxu0 %v4471
    %4776 = vmatpush1.bf16.msra.mxu0 %v4470
    %4777 = vmatprep.subr.bf16.mxu0 %v4477
    %4778 = vmatpush1.bf16.msra.mxu0 %v4476
    %4779 = vmatprep.mubr.bf16.mxu0 %v4746
    %4780 = vmatmul.mubr.bf16.gmra.mrb[0].mxu0 %v4745
    %v4781 = vpop.f32.mrb[0].mxu0
    %v4782 = vadd.f32 %v4071, %v4781
    %v4783 = vpop.f32.mrb[0].mxu0
    %v4784 = vadd.f32 %v4075, %v4783
    %v4785 = vpop.f32.mrb[0].mxu0
    %v4786 = vpop.f32.mrb[0].mxu0
    %4787 = vdwg.mxu0
    %4788 = vmatprep.subr.bf16.mxu0 %v4389
    %4789 = vmatpush1.bf16.msra.mxu0 %v4388
    %4790 = vmatprep.subr.bf16.mxu0 %v4395
    %4791 = vmatpush1.bf16.msra.mxu0 %v4394
    %4792 = vmatprep.subr.bf16.mxu0 %v4401
    %4793 = vmatpush1.bf16.msra.mxu0 %v4400
    %4794 = vmatprep.subr.bf16.mxu0 %v4407
    %4795 = vmatpush1.bf16.msra.mxu0 %v4406
    %4796 = vmatprep.subr.bf16.mxu0 %v4413
    %4797 = vmatpush1.bf16.msra.mxu0 %v4412
    %4798 = vmatprep.subr.bf16.mxu0 %v4419
    %4799 = vmatpush1.bf16.msra.mxu0 %v4418
    %4800 = vmatprep.subr.bf16.mxu0 %v4425
    %4801 = vmatpush1.bf16.msra.mxu0 %v4424
    %4802 = vmatprep.subr.bf16.mxu0 %v4431
    %4803 = vmatpush1.bf16.msra.mxu0 %v4430
    %4804 = vmatprep.subr.bf16.mxu0 %v4437
    %4805 = vmatpush1.bf16.msra.mxu0 %v4436
    %4806 = vmatprep.subr.bf16.mxu0 %v4443
    %4807 = vmatpush1.bf16.msra.mxu0 %v4442
    %4808 = vmatprep.subr.bf16.mxu0 %v4449
    %4809 = vmatpush1.bf16.msra.mxu0 %v4448
    %4810 = vmatprep.subr.bf16.mxu0 %v4455
    %4811 = vmatpush1.bf16.msra.mxu0 %v4454
    %4812 = vmatprep.subr.bf16.mxu0 %v4461
    %4813 = vmatpush1.bf16.msra.mxu0 %v4460
    %4814 = vmatprep.subr.bf16.mxu0 %v4467
    %4815 = vmatpush1.bf16.msra.mxu0 %v4466
    %4816 = vmatprep.subr.bf16.mxu0 %v4473
    %4817 = vmatpush1.bf16.msra.mxu0 %v4472
    %4818 = vmatprep.subr.bf16.mxu0 %v4479
    %4819 = vmatpush1.bf16.msra.mxu0 %v4478
    %4820 = vmatprep.mubr.bf16.mxu0 %v4746
    %4821 = vmatmul.mubr.bf16.gmra.mrb[0].mxu0 %v4745
    %v4822 = vpop.f32.mrb[0].mxu0
    %v4823 = vadd.f32 %v4079, %v4822
    %v4824 = vpop.f32.mrb[0].mxu0
    %v4825 = vadd.f32 %v4083, %v4824
    %v4826 = vpop.f32.mrb[0].mxu0
    %v4827 = vpop.f32.mrb[0].mxu0
    %4828 = vdwg.mxu0
    %4829 = vmatprep.subr.bf16.mxu0 %v4391
    %4830 = vmatpush1.bf16.msra.mxu0 %v4390
    %4831 = vmatprep.subr.bf16.mxu0 %v4397
    %4832 = vmatpush1.bf16.msra.mxu0 %v4396
    %4833 = vmatprep.subr.bf16.mxu0 %v4403
    %4834 = vmatpush1.bf16.msra.mxu0 %v4402
    %4835 = vmatprep.subr.bf16.mxu0 %v4409
    %4836 = vmatpush1.bf16.msra.mxu0 %v4408
    %4837 = vmatprep.subr.bf16.mxu0 %v4415
    %4838 = vmatpush1.bf16.msra.mxu0 %v4414
    %4839 = vmatprep.subr.bf16.mxu0 %v4421
    %4840 = vmatpush1.bf16.msra.mxu0 %v4420
    %4841 = vmatprep.subr.bf16.mxu0 %v4427
    %4842 = vmatpush1.bf16.msra.mxu0 %v4426
    %4843 = vmatprep.subr.bf16.mxu0 %v4433
    %4844 = vmatpush1.bf16.msra.mxu0 %v4432
    %4845 = vmatprep.subr.bf16.mxu0 %v4439
    %4846 = vmatpush1.bf16.msra.mxu0 %v4438
    %4847 = vmatprep.subr.bf16.mxu0 %v4445
    %4848 = vmatpush1.bf16.msra.mxu0 %v4444
    %4849 = vmatprep.subr.bf16.mxu0 %v4451
    %4850 = vmatpush1.bf16.msra.mxu0 %v4450
    %4851 = vmatprep.subr.bf16.mxu0 %v4457
    %4852 = vmatpush1.bf16.msra.mxu0 %v4456
    %4853 = vmatprep.subr.bf16.mxu0 %v4463
    %4854 = vmatpush1.bf16.msra.mxu0 %v4462
    %4855 = vmatprep.subr.bf16.mxu0 %v4469
    %4856 = vmatpush1.bf16.msra.mxu0 %v4468
    %4857 = vmatprep.subr.bf16.mxu0 %v4475
    %4858 = vmatpush1.bf16.msra.mxu0 %v4474
    %4859 = vmatprep.subr.bf16.mxu0 %v4481
    %4860 = vmatpush1.bf16.msra.mxu0 %v4480
    %4861 = vmatprep.mubr.bf16.mxu0 %v4746
    %4862 = vmatmul.mubr.bf16.gmra.mrb[0].mxu0 %v4745
    %v4863 = vpop.f32.mrb[0].mxu0
    %v4864 = vadd.f32 %v4087, %v4863
    %v4865 = vpop.f32.mrb[0].mxu0
    %v4866 = vadd.f32 %v4091, %v4865
    %v4867 = vpop.f32.mrb[0].mxu0
    %v4868 = vpop.f32.mrb[0].mxu0
    %4869 = vdwg.mxu0
    %v4870 = vadd.f32 %v3789, %v4782
    %v4871 = vadd.f32 %v3791, %v4784
    %v4872 = vxor.u32 %v4870, 2147483648
    %v4873 = vxor.u32 %v4871, 2147483648
    %v4874 = vmul.f32 %v4872, 1.442695
    %v4875 = vpow.pop %v4874
    %v4876 = vmul.f32 %v4873, 1.442695
    %v4877 = vpow.pop %v4876
    %v4878 = vadd.f32 %v4875, 1.0
    %v4879 = vadd.f32 %v4877, 1.0
    %v4880 = vrcp.pop %v4878
    %v4881 = vmul.f32 1.0, %v4880
    %v4882 = vrcp.pop %v4879
    %v4883 = vmul.f32 1.0, %v4882
    %v4884 = vadd.f32 %v3862, %v4823
    %v4885 = vadd.f32 %v3864, %v4825
    %v4886 = vxor.u32 %v4884, 2147483648
    %v4887 = vxor.u32 %v4885, 2147483648
    %v4888 = vmul.f32 %v4886, 1.442695
    %v4889 = vpow.pop %v4888
    %v4890 = vmul.f32 %v4887, 1.442695
    %v4891 = vpow.pop %v4890
    %v4892 = vadd.f32 %v4889, 1.0
    %v4893 = vadd.f32 %v4891, 1.0
    %v4894 = vrcp.pop %v4892
    %v4895 = vmul.f32 1.0, %v4894
    %v4896 = vrcp.pop %v4893
    %v4897 = vmul.f32 1.0, %v4896
    %v4898 = vmul.f32 %v4881, %v4864
    %v4899 = vmul.f32 %v4883, %v4866
    %v4900 = vadd.f32 %v3935, %v4898
    %v4901 = vadd.f32 %v3937, %v4899
    %v4902 = vtanh.pop %v4900
    %v4903 = vtanh.pop %v4901
    %v4904 = vsub.f32 1.0, %v4895
    %v4905 = vsub.f32 1.0, %v4897
    %v4906 = vmul.f32 %v4904, %v4902
    %v4907 = vmul.f32 %v4905, %v4903
    %v4908 = vmul.f32 %v4895, %v4741
    %v4909 = vmul.f32 %v4897, %v4742
    %v4910 = vadd.f32 %v4906, %v4908
    %v4911 = vadd.f32 %v4907, %v4909
    %v4912 = vadd.f32 %v4743, %v4910
    %v4913 = vadd.f32 %v4744, %v4911
    %v4914 = vpack.c.bf16 %v4910, %v4910
    %v4915 = vpack.c.bf16 %v4911, %v4911
    %4916 = vmatprep.subr.bf16.mxu0 %v4387
    %4917 = vmatpush1.bf16.msra.mxu0 %v4386
    %4918 = vmatprep.subr.bf16.mxu0 %v4393
    %4919 = vmatpush1.bf16.msra.mxu0 %v4392
    %4920 = vmatprep.subr.bf16.mxu0 %v4399
    %4921 = vmatpush1.bf16.msra.mxu0 %v4398
    %4922 = vmatprep.subr.bf16.mxu0 %v4405
    %4923 = vmatpush1.bf16.msra.mxu0 %v4404
    %4924 = vmatprep.subr.bf16.mxu0 %v4411
    %4925 = vmatpush1.bf16.msra.mxu0 %v4410
    %4926 = vmatprep.subr.bf16.mxu0 %v4417
    %4927 = vmatpush1.bf16.msra.mxu0 %v4416
    %4928 = vmatprep.subr.bf16.mxu0 %v4423
    %4929 = vmatpush1.bf16.msra.mxu0 %v4422
    %4930 = vmatprep.subr.bf16.mxu0 %v4429
    %4931 = vmatpush1.bf16.msra.mxu0 %v4428
    %4932 = vmatprep.subr.bf16.mxu0 %v4435
    %4933 = vmatpush1.bf16.msra.mxu0 %v4434
    %4934 = vmatprep.subr.bf16.mxu0 %v4441
    %4935 = vmatpush1.bf16.msra.mxu0 %v4440
    %4936 = vmatprep.subr.bf16.mxu0 %v4447
    %4937 = vmatpush1.bf16.msra.mxu0 %v4446
    %4938 = vmatprep.subr.bf16.mxu0 %v4453
    %4939 = vmatpush1.bf16.msra.mxu0 %v4452
    %4940 = vmatprep.subr.bf16.mxu0 %v4459
    %4941 = vmatpush1.bf16.msra.mxu0 %v4458
    %4942 = vmatprep.subr.bf16.mxu0 %v4465
    %4943 = vmatpush1.bf16.msra.mxu0 %v4464
    %4944 = vmatprep.subr.bf16.mxu0 %v4471
    %4945 = vmatpush1.bf16.msra.mxu0 %v4470
    %4946 = vmatprep.subr.bf16.mxu0 %v4477
    %4947 = vmatpush1.bf16.msra.mxu0 %v4476
    %4948 = vmatprep.mubr.bf16.mxu0 %v4915
    %4949 = vmatmul.mubr.bf16.gmra.mrb[0].mxu0 %v4914
    %v4950 = vpop.f32.mrb[0].mxu0
    %v4951 = vadd.f32 %v4071, %v4950
    %v4952 = vpop.f32.mrb[0].mxu0
    %v4953 = vadd.f32 %v4075, %v4952
    %v4954 = vpop.f32.mrb[0].mxu0
    %v4955 = vpop.f32.mrb[0].mxu0
    %4956 = vdwg.mxu0
    %4957 = vmatprep.subr.bf16.mxu0 %v4389
    %4958 = vmatpush1.bf16.msra.mxu0 %v4388
    %4959 = vmatprep.subr.bf16.mxu0 %v4395
    %4960 = vmatpush1.bf16.msra.mxu0 %v4394
    %4961 = vmatprep.subr.bf16.mxu0 %v4401
    %4962 = vmatpush1.bf16.msra.mxu0 %v4400
    %4963 = vmatprep.subr.bf16.mxu0 %v4407
    %4964 = vmatpush1.bf16.msra.mxu0 %v4406
    %4965 = vmatprep.subr.bf16.mxu0 %v4413
    %4966 = vmatpush1.bf16.msra.mxu0 %v4412
    %4967 = vmatprep.subr.bf16.mxu0 %v4419
    %4968 = vmatpush1.bf16.msra.mxu0 %v4418
    %4969 = vmatprep.subr.bf16.mxu0 %v4425
    %4970 = vmatpush1.bf16.msra.mxu0 %v4424
    %4971 = vmatprep.subr.bf16.mxu0 %v4431
    %4972 = vmatpush1.bf16.msra.mxu0 %v4430
    %4973 = vmatprep.subr.bf16.mxu0 %v4437
    %4974 = vmatpush1.bf16.msra.mxu0 %v4436
    %4975 = vmatprep.subr.bf16.mxu0 %v4443
    %4976 = vmatpush1.bf16.msra.mxu0 %v4442
    %4977 = vmatprep.subr.bf16.mxu0 %v4449
    %4978 = vmatpush1.bf16.msra.mxu0 %v4448
    %4979 = vmatprep.subr.bf16.mxu0 %v4455
    %4980 = vmatpush1.bf16.msra.mxu0 %v4454
    %4981 = vmatprep.subr.bf16.mxu0 %v4461
    %4982 = vmatpush1.bf16.msra.mxu0 %v4460
    %4983 = vmatprep.subr.bf16.mxu0 %v4467
    %4984 = vmatpush1.bf16.msra.mxu0 %v4466
    %4985 = vmatprep.subr.bf16.mxu0 %v4473
    %4986 = vmatpush1.bf16.msra.mxu0 %v4472
    %4987 = vmatprep.subr.bf16.mxu0 %v4479
    %4988 = vmatpush1.bf16.msra.mxu0 %v4478
    %4989 = vmatprep.mubr.bf16.mxu0 %v4915
    %4990 = vmatmul.mubr.bf16.gmra.mrb[0].mxu0 %v4914
    %v4991 = vpop.f32.mrb[0].mxu0
    %v4992 = vadd.f32 %v4079, %v4991
    %v4993 = vpop.f32.mrb[0].mxu0
    %v4994 = vadd.f32 %v4083, %v4993
    %v4995 = vpop.f32.mrb[0].mxu0
    %v4996 = vpop.f32.mrb[0].mxu0
    %4997 = vdwg.mxu0
    %4998 = vmatprep.subr.bf16.mxu0 %v4391
    %4999 = vmatpush1.bf16.msra.mxu0 %v4390
    %5000 = vmatprep.subr.bf16.mxu0 %v4397
    %5001 = vmatpush1.bf16.msra.mxu0 %v4396
    %5002 = vmatprep.subr.bf16.mxu0 %v4403
    %5003 = vmatpush1.bf16.msra.mxu0 %v4402
    %5004 = vmatprep.subr.bf16.mxu0 %v4409
    %5005 = vmatpush1.bf16.msra.mxu0 %v4408
    %5006 = vmatprep.subr.bf16.mxu0 %v4415
    %5007 = vmatpush1.bf16.msra.mxu0 %v4414
    %5008 = vmatprep.subr.bf16.mxu0 %v4421
    %5009 = vmatpush1.bf16.msra.mxu0 %v4420
    %5010 = vmatprep.subr.bf16.mxu0 %v4427
    %5011 = vmatpush1.bf16.msra.mxu0 %v4426
    %5012 = vmatprep.subr.bf16.mxu0 %v4433
    %5013 = vmatpush1.bf16.msra.mxu0 %v4432
    %5014 = vmatprep.subr.bf16.mxu0 %v4439
    %5015 = vmatpush1.bf16.msra.mxu0 %v4438
    %5016 = vmatprep.subr.bf16.mxu0 %v4445
    %5017 = vmatpush1.bf16.msra.mxu0 %v4444
    %5018 = vmatprep.subr.bf16.mxu0 %v4451
    %5019 = vmatpush1.bf16.msra.mxu0 %v4450
    %5020 = vmatprep.subr.bf16.mxu0 %v4457
    %5021 = vmatpush1.bf16.msra.mxu0 %v4456
    %5022 = vmatprep.subr.bf16.mxu0 %v4463
    %5023 = vmatpush1.bf16.msra.mxu0 %v4462
    %5024 = vmatprep.subr.bf16.mxu0 %v4469
    %5025 = vmatpush1.bf16.msra.mxu0 %v4468
    %5026 = vmatprep.subr.bf16.mxu0 %v4475
    %5027 = vmatpush1.bf16.msra.mxu0 %v4474
    %5028 = vmatprep.subr.bf16.mxu0 %v4481
    %5029 = vmatpush1.bf16.msra.mxu0 %v4480
    %5030 = vmatprep.mubr.bf16.mxu0 %v4915
    %5031 = vmatmul.mubr.bf16.gmra.mrb[0].mxu0 %v4914
    %v5032 = vpop.f32.mrb[0].mxu0
    %v5033 = vadd.f32 %v4087, %v5032
    %v5034 = vpop.f32.mrb[0].mxu0
    %v5035 = vadd.f32 %v4091, %v5034
    %v5036 = vpop.f32.mrb[0].mxu0
    %v5037 = vpop.f32.mrb[0].mxu0
    %5038 = vdwg.mxu0
    %v5039 = vadd.f32 %v3795, %v4951
    %v5040 = vadd.f32 %v3797, %v4953
    %v5041 = vxor.u32 %v5039, 2147483648
    %v5042 = vxor.u32 %v5040, 2147483648
    %v5043 = vmul.f32 %v5041, 1.442695
    %v5044 = vpow.pop %v5043
    %v5045 = vmul.f32 %v5042, 1.442695
    %v5046 = vpow.pop %v5045
    %v5047 = vadd.f32 %v5044, 1.0
    %v5048 = vadd.f32 %v5046, 1.0
    %v5049 = vrcp.pop %v5047
    %v5050 = vmul.f32 1.0, %v5049
    %v5051 = vrcp.pop %v5048
    %v5052 = vmul.f32 1.0, %v5051
    %v5053 = vadd.f32 %v3868, %v4992
    %v5054 = vadd.f32 %v3870, %v4994
    %v5055 = vxor.u32 %v5053, 2147483648
    %v5056 = vxor.u32 %v5054, 2147483648
    %v5057 = vmul.f32 %v5055, 1.442695
    %v5058 = vpow.pop %v5057
    %v5059 = vmul.f32 %v5056, 1.442695
    %v5060 = vpow.pop %v5059
    %v5061 = vadd.f32 %v5058, 1.0
    %v5062 = vadd.f32 %v5060, 1.0
    %v5063 = vrcp.pop %v5061
    %v5064 = vmul.f32 1.0, %v5063
    %v5065 = vrcp.pop %v5062
    %v5066 = vmul.f32 1.0, %v5065
    %v5067 = vmul.f32 %v5050, %v5033
    %v5068 = vmul.f32 %v5052, %v5035
    %v5069 = vadd.f32 %v3941, %v5067
    %v5070 = vadd.f32 %v3943, %v5068
    %v5071 = vtanh.pop %v5069
    %v5072 = vtanh.pop %v5070
    %v5073 = vsub.f32 1.0, %v5064
    %v5074 = vsub.f32 1.0, %v5066
    %v5075 = vmul.f32 %v5073, %v5071
    %v5076 = vmul.f32 %v5074, %v5072
    %v5077 = vmul.f32 %v5064, %v4910
    %v5078 = vmul.f32 %v5066, %v4911
    %v5079 = vadd.f32 %v5075, %v5077
    %v5080 = vadd.f32 %v5076, %v5078
    %v5081 = vadd.f32 %v4912, %v5079
    %v5082 = vadd.f32 %v4913, %v5080
    %v5083 = vpack.c.bf16 %v5079, %v5079
    %v5084 = vpack.c.bf16 %v5080, %v5080
    %5085 = vmatprep.subr.bf16.mxu0 %v4387
    %5086 = vmatpush1.bf16.msra.mxu0 %v4386
    %5087 = vmatprep.subr.bf16.mxu0 %v4393
    %5088 = vmatpush1.bf16.msra.mxu0 %v4392
    %5089 = vmatprep.subr.bf16.mxu0 %v4399
    %5090 = vmatpush1.bf16.msra.mxu0 %v4398
    %5091 = vmatprep.subr.bf16.mxu0 %v4405
    %5092 = vmatpush1.bf16.msra.mxu0 %v4404
    %5093 = vmatprep.subr.bf16.mxu0 %v4411
    %5094 = vmatpush1.bf16.msra.mxu0 %v4410
    %5095 = vmatprep.subr.bf16.mxu0 %v4417
    %5096 = vmatpush1.bf16.msra.mxu0 %v4416
    %5097 = vmatprep.subr.bf16.mxu0 %v4423
    %5098 = vmatpush1.bf16.msra.mxu0 %v4422
    %5099 = vmatprep.subr.bf16.mxu0 %v4429
    %5100 = vmatpush1.bf16.msra.mxu0 %v4428
    %5101 = vmatprep.subr.bf16.mxu0 %v4435
    %5102 = vmatpush1.bf16.msra.mxu0 %v4434
    %5103 = vmatprep.subr.bf16.mxu0 %v4441
    %5104 = vmatpush1.bf16.msra.mxu0 %v4440
    %5105 = vmatprep.subr.bf16.mxu0 %v4447
    %5106 = vmatpush1.bf16.msra.mxu0 %v4446
    %5107 = vmatprep.subr.bf16.mxu0 %v4453
    %5108 = vmatpush1.bf16.msra.mxu0 %v4452
    %5109 = vmatprep.subr.bf16.mxu0 %v4459
    %5110 = vmatpush1.bf16.msra.mxu0 %v4458
    %5111 = vmatprep.subr.bf16.mxu0 %v4465
    %5112 = vmatpush1.bf16.msra.mxu0 %v4464
    %5113 = vmatprep.subr.bf16.mxu0 %v4471
    %5114 = vmatpush1.bf16.msra.mxu0 %v4470
    %5115 = vmatprep.subr.bf16.mxu0 %v4477
    %5116 = vmatpush1.bf16.msra.mxu0 %v4476
    %5117 = vmatprep.mubr.bf16.mxu0 %v5084
    %5118 = vmatmul.mubr.bf16.gmra.mrb[0].mxu0 %v5083
    %v5119 = vpop.f32.mrb[0].mxu0
    %v5120 = vadd.f32 %v4071, %v5119
    %v5121 = vpop.f32.mrb[0].mxu0
    %v5122 = vadd.f32 %v4075, %v5121
    %v5123 = vpop.f32.mrb[0].mxu0
    %v5124 = vpop.f32.mrb[0].mxu0
    %5125 = vdwg.mxu0
    %5126 = vmatprep.subr.bf16.mxu0 %v4389
    %5127 = vmatpush1.bf16.msra.mxu0 %v4388
    %5128 = vmatprep.subr.bf16.mxu0 %v4395
    %5129 = vmatpush1.bf16.msra.mxu0 %v4394
    %5130 = vmatprep.subr.bf16.mxu0 %v4401
    %5131 = vmatpush1.bf16.msra.mxu0 %v4400
    %5132 = vmatprep.subr.bf16.mxu0 %v4407
    %5133 = vmatpush1.bf16.msra.mxu0 %v4406
    %5134 = vmatprep.subr.bf16.mxu0 %v4413
    %5135 = vmatpush1.bf16.msra.mxu0 %v4412
    %5136 = vmatprep.subr.bf16.mxu0 %v4419
    %5137 = vmatpush1.bf16.msra.mxu0 %v4418
    %5138 = vmatprep.subr.bf16.mxu0 %v4425
    %5139 = vmatpush1.bf16.msra.mxu0 %v4424
    %5140 = vmatprep.subr.bf16.mxu0 %v4431
    %5141 = vmatpush1.bf16.msra.mxu0 %v4430
    %5142 = vmatprep.subr.bf16.mxu0 %v4437
    %5143 = vmatpush1.bf16.msra.mxu0 %v4436
    %5144 = vmatprep.subr.bf16.mxu0 %v4443
    %5145 = vmatpush1.bf16.msra.mxu0 %v4442
    %5146 = vmatprep.subr.bf16.mxu0 %v4449
    %5147 = vmatpush1.bf16.msra.mxu0 %v4448
    %5148 = vmatprep.subr.bf16.mxu0 %v4455
    %5149 = vmatpush1.bf16.msra.mxu0 %v4454
    %5150 = vmatprep.subr.bf16.mxu0 %v4461
    %5151 = vmatpush1.bf16.msra.mxu0 %v4460
    %5152 = vmatprep.subr.bf16.mxu0 %v4467
    %5153 = vmatpush1.bf16.msra.mxu0 %v4466
    %5154 = vmatprep.subr.bf16.mxu0 %v4473
    %5155 = vmatpush1.bf16.msra.mxu0 %v4472
    %5156 = vmatprep.subr.bf16.mxu0 %v4479
    %5157 = vmatpush1.bf16.msra.mxu0 %v4478
    %5158 = vmatprep.mubr.bf16.mxu0 %v5084
    %5159 = vmatmul.mubr.bf16.gmra.mrb[0].mxu0 %v5083
    %v5160 = vpop.f32.mrb[0].mxu0
    %v5161 = vadd.f32 %v4079, %v5160
    %v5162 = vpop.f32.mrb[0].mxu0
    %v5163 = vadd.f32 %v4083, %v5162
    %v5164 = vpop.f32.mrb[0].mxu0
    %v5165 = vpop.f32.mrb[0].mxu0
    %5166 = vdwg.mxu0
    %5167 = vmatprep.subr.bf16.mxu0 %v4391
    %5168 = vmatpush1.bf16.msra.mxu0 %v4390
    %5169 = vmatprep.subr.bf16.mxu0 %v4397
    %5170 = vmatpush1.bf16.msra.mxu0 %v4396
    %5171 = vmatprep.subr.bf16.mxu0 %v4403
    %5172 = vmatpush1.bf16.msra.mxu0 %v4402
    %5173 = vmatprep.subr.bf16.mxu0 %v4409
    %5174 = vmatpush1.bf16.msra.mxu0 %v4408
    %5175 = vmatprep.subr.bf16.mxu0 %v4415
    %5176 = vmatpush1.bf16.msra.mxu0 %v4414
    %5177 = vmatprep.subr.bf16.mxu0 %v4421
    %5178 = vmatpush1.bf16.msra.mxu0 %v4420
    %5179 = vmatprep.subr.bf16.mxu0 %v4427
    %5180 = vmatpush1.bf16.msra.mxu0 %v4426
    %5181 = vmatprep.subr.bf16.mxu0 %v4433
    %5182 = vmatpush1.bf16.msra.mxu0 %v4432
    %5183 = vmatprep.subr.bf16.mxu0 %v4439
    %5184 = vmatpush1.bf16.msra.mxu0 %v4438
    %5185 = vmatprep.subr.bf16.mxu0 %v4445
    %5186 = vmatpush1.bf16.msra.mxu0 %v4444
    %5187 = vmatprep.subr.bf16.mxu0 %v4451
    %5188 = vmatpush1.bf16.msra.mxu0 %v4450
    %5189 = vmatprep.subr.bf16.mxu0 %v4457
    %5190 = vmatpush1.bf16.msra.mxu0 %v4456
    %5191 = vmatprep.subr.bf16.mxu0 %v4463
    %5192 = vmatpush1.bf16.msra.mxu0 %v4462
    %5193 = vmatprep.subr.bf16.mxu0 %v4469
    %5194 = vmatpush1.bf16.msra.mxu0 %v4468
    %5195 = vmatprep.subr.bf16.mxu0 %v4475
    %5196 = vmatpush1.bf16.msra.mxu0 %v4474
    %5197 = vmatprep.subr.bf16.mxu0 %v4481
    %5198 = vmatpush1.bf16.msra.mxu0 %v4480
    %5199 = vmatprep.mubr.bf16.mxu0 %v5084
    %5200 = vmatmul.mubr.bf16.gmra.mrb[0].mxu0 %v5083
    %v5201 = vpop.f32.mrb[0].mxu0
    %v5202 = vadd.f32 %v4087, %v5201
    %v5203 = vpop.f32.mrb[0].mxu0
    %v5204 = vadd.f32 %v4091, %v5203
    %v5205 = vpop.f32.mrb[0].mxu0
    %v5206 = vpop.f32.mrb[0].mxu0
    %5207 = vdwg.mxu0
    %v5208 = vadd.f32 %v3799, %v5120
    %v5209 = vadd.f32 %v3801, %v5122
    %v5210 = vxor.u32 %v5208, 2147483648
    %v5211 = vxor.u32 %v5209, 2147483648
    %v5212 = vmul.f32 %v5210, 1.442695
    %v5213 = vpow.pop %v5212
    %v5214 = vmul.f32 %v5211, 1.442695
    %v5215 = vpow.pop %v5214
    %v5216 = vadd.f32 %v5213, 1.0
    %v5217 = vadd.f32 %v5215, 1.0
    %v5218 = vrcp.pop %v5216
    %v5219 = vmul.f32 1.0, %v5218
    %v5220 = vrcp.pop %v5217
    %v5221 = vmul.f32 1.0, %v5220
    %v5222 = vadd.f32 %v3872, %v5161
    %v5223 = vadd.f32 %v3874, %v5163
    %v5224 = vxor.u32 %v5222, 2147483648
    %v5225 = vxor.u32 %v5223, 2147483648
    %v5226 = vmul.f32 %v5224, 1.442695
    %v5227 = vpow.pop %v5226
    %v5228 = vmul.f32 %v5225, 1.442695
    %v5229 = vpow.pop %v5228
    %v5230 = vadd.f32 %v5227, 1.0
    %v5231 = vadd.f32 %v5229, 1.0
    %v5232 = vrcp.pop %v5230
    %v5233 = vmul.f32 1.0, %v5232
    %v5234 = vrcp.pop %v5231
    %v5235 = vmul.f32 1.0, %v5234
    %v5236 = vmul.f32 %v5219, %v5202
    %v5237 = vmul.f32 %v5221, %v5204
    %v5238 = vadd.f32 %v3945, %v5236
    %v5239 = vadd.f32 %v3947, %v5237
    %v5240 = vtanh.pop %v5238
    %v5241 = vtanh.pop %v5239
    %v5242 = vsub.f32 1.0, %v5233
    %v5243 = vsub.f32 1.0, %v5235
    %v5244 = vmul.f32 %v5242, %v5240
    %v5245 = vmul.f32 %v5243, %v5241
    %v5246 = vmul.f32 %v5233, %v5079
    %v5247 = vmul.f32 %v5235, %v5080
    %v5248 = vadd.f32 %v5244, %v5246
    %v5249 = vadd.f32 %v5245, %v5247
    %v5250 = vadd.f32 %v5081, %v5248
    %v5251 = vadd.f32 %v5082, %v5249
    %v5252 = vpack.c.bf16 %v5248, %v5248
    %v5253 = vpack.c.bf16 %v5249, %v5249
    %5254 = vmatprep.subr.bf16.mxu0 %v4387
    %5255 = vmatpush1.bf16.msra.mxu0 %v4386
    %5256 = vmatprep.subr.bf16.mxu0 %v4393
    %5257 = vmatpush1.bf16.msra.mxu0 %v4392
    %5258 = vmatprep.subr.bf16.mxu0 %v4399
    %5259 = vmatpush1.bf16.msra.mxu0 %v4398
    %5260 = vmatprep.subr.bf16.mxu0 %v4405
    %5261 = vmatpush1.bf16.msra.mxu0 %v4404
    %5262 = vmatprep.subr.bf16.mxu0 %v4411
    %5263 = vmatpush1.bf16.msra.mxu0 %v4410
    %5264 = vmatprep.subr.bf16.mxu0 %v4417
    %5265 = vmatpush1.bf16.msra.mxu0 %v4416
    %5266 = vmatprep.subr.bf16.mxu0 %v4423
    %5267 = vmatpush1.bf16.msra.mxu0 %v4422
    %5268 = vmatprep.subr.bf16.mxu0 %v4429
    %5269 = vmatpush1.bf16.msra.mxu0 %v4428
    %5270 = vmatprep.subr.bf16.mxu0 %v4435
    %5271 = vmatpush1.bf16.msra.mxu0 %v4434
    %5272 = vmatprep.subr.bf16.mxu0 %v4441
    %5273 = vmatpush1.bf16.msra.mxu0 %v4440
    %5274 = vmatprep.subr.bf16.mxu0 %v4447
    %5275 = vmatpush1.bf16.msra.mxu0 %v4446
    %5276 = vmatprep.subr.bf16.mxu0 %v4453
    %5277 = vmatpush1.bf16.msra.mxu0 %v4452
    %5278 = vmatprep.subr.bf16.mxu0 %v4459
    %5279 = vmatpush1.bf16.msra.mxu0 %v4458
    %5280 = vmatprep.subr.bf16.mxu0 %v4465
    %5281 = vmatpush1.bf16.msra.mxu0 %v4464
    %5282 = vmatprep.subr.bf16.mxu0 %v4471
    %5283 = vmatpush1.bf16.msra.mxu0 %v4470
    %5284 = vmatprep.subr.bf16.mxu0 %v4477
    %5285 = vmatpush1.bf16.msra.mxu0 %v4476
    %5286 = vmatprep.mubr.bf16.mxu0 %v5253
    %5287 = vmatmul.mubr.bf16.gmra.mrb[0].mxu0 %v5252
    %v5288 = vpop.f32.mrb[0].mxu0
    %v5289 = vadd.f32 %v4071, %v5288
    %v5290 = vpop.f32.mrb[0].mxu0
    %v5291 = vadd.f32 %v4075, %v5290
    %v5292 = vpop.f32.mrb[0].mxu0
    %v5293 = vpop.f32.mrb[0].mxu0
    %5294 = vdwg.mxu0
    %5295 = vmatprep.subr.bf16.mxu0 %v4389
    %5296 = vmatpush1.bf16.msra.mxu0 %v4388
    %5297 = vmatprep.subr.bf16.mxu0 %v4395
    %5298 = vmatpush1.bf16.msra.mxu0 %v4394
    %5299 = vmatprep.subr.bf16.mxu0 %v4401
    %5300 = vmatpush1.bf16.msra.mxu0 %v4400
    %5301 = vmatprep.subr.bf16.mxu0 %v4407
    %5302 = vmatpush1.bf16.msra.mxu0 %v4406
    %5303 = vmatprep.subr.bf16.mxu0 %v4413
    %5304 = vmatpush1.bf16.msra.mxu0 %v4412
    %5305 = vmatprep.subr.bf16.mxu0 %v4419
    %5306 = vmatpush1.bf16.msra.mxu0 %v4418
    %5307 = vmatprep.subr.bf16.mxu0 %v4425
    %5308 = vmatpush1.bf16.msra.mxu0 %v4424
    %5309 = vmatprep.subr.bf16.mxu0 %v4431
    %5310 = vmatpush1.bf16.msra.mxu0 %v4430
    %5311 = vmatprep.subr.bf16.mxu0 %v4437
    %5312 = vmatpush1.bf16.msra.mxu0 %v4436
    %5313 = vmatprep.subr.bf16.mxu0 %v4443
    %5314 = vmatpush1.bf16.msra.mxu0 %v4442
    %5315 = vmatprep.subr.bf16.mxu0 %v4449
    %5316 = vmatpush1.bf16.msra.mxu0 %v4448
    %5317 = vmatprep.subr.bf16.mxu0 %v4455
    %5318 = vmatpush1.bf16.msra.mxu0 %v4454
    %5319 = vmatprep.subr.bf16.mxu0 %v4461
    %5320 = vmatpush1.bf16.msra.mxu0 %v4460
    %5321 = vmatprep.subr.bf16.mxu0 %v4467
    %5322 = vmatpush1.bf16.msra.mxu0 %v4466
    %5323 = vmatprep.subr.bf16.mxu0 %v4473
    %5324 = vmatpush1.bf16.msra.mxu0 %v4472
    %5325 = vmatprep.subr.bf16.mxu0 %v4479
    %5326 = vmatpush1.bf16.msra.mxu0 %v4478
    %5327 = vmatprep.mubr.bf16.mxu0 %v5253
    %5328 = vmatmul.mubr.bf16.gmra.mrb[0].mxu0 %v5252
    %v5329 = vpop.f32.mrb[0].mxu0
    %v5330 = vadd.f32 %v4079, %v5329
    %v5331 = vpop.f32.mrb[0].mxu0
    %v5332 = vadd.f32 %v4083, %v5331
    %v5333 = vpop.f32.mrb[0].mxu0
    %v5334 = vpop.f32.mrb[0].mxu0
    %5335 = vdwg.mxu0
    %5336 = vmatprep.subr.bf16.mxu0 %v4391
    %5337 = vmatpush1.bf16.msra.mxu0 %v4390
    %5338 = vmatprep.subr.bf16.mxu0 %v4397
    %5339 = vmatpush1.bf16.msra.mxu0 %v4396
    %5340 = vmatprep.subr.bf16.mxu0 %v4403
    %5341 = vmatpush1.bf16.msra.mxu0 %v4402
    %5342 = vmatprep.subr.bf16.mxu0 %v4409
    %5343 = vmatpush1.bf16.msra.mxu0 %v4408
    %5344 = vmatprep.subr.bf16.mxu0 %v4415
    %5345 = vmatpush1.bf16.msra.mxu0 %v4414
    %5346 = vmatprep.subr.bf16.mxu0 %v4421
    %5347 = vmatpush1.bf16.msra.mxu0 %v4420
    %5348 = vmatprep.subr.bf16.mxu0 %v4427
    %5349 = vmatpush1.bf16.msra.mxu0 %v4426
    %5350 = vmatprep.subr.bf16.mxu0 %v4433
    %5351 = vmatpush1.bf16.msra.mxu0 %v4432
    %5352 = vmatprep.subr.bf16.mxu0 %v4439
    %5353 = vmatpush1.bf16.msra.mxu0 %v4438
    %5354 = vmatprep.subr.bf16.mxu0 %v4445
    %5355 = vmatpush1.bf16.msra.mxu0 %v4444
    %5356 = vmatprep.subr.bf16.mxu0 %v4451
    %5357 = vmatpush1.bf16.msra.mxu0 %v4450
    %5358 = vmatprep.subr.bf16.mxu0 %v4457
    %5359 = vmatpush1.bf16.msra.mxu0 %v4456
    %5360 = vmatprep.subr.bf16.mxu0 %v4463
    %5361 = vmatpush1.bf16.msra.mxu0 %v4462
    %5362 = vmatprep.subr.bf16.mxu0 %v4469
    %5363 = vmatpush1.bf16.msra.mxu0 %v4468
    %5364 = vmatprep.subr.bf16.mxu0 %v4475
    %5365 = vmatpush1.bf16.msra.mxu0 %v4474
    %5366 = vmatprep.subr.bf16.mxu0 %v4481
    %5367 = vmatpush1.bf16.msra.mxu0 %v4480
    %5368 = vmatprep.mubr.bf16.mxu0 %v5253
    %5369 = vmatmul.mubr.bf16.gmra.mrb[0].mxu0 %v5252
    %v5370 = vpop.f32.mrb[0].mxu0
    %v5371 = vadd.f32 %v4087, %v5370
    %v5372 = vpop.f32.mrb[0].mxu0
    %v5373 = vadd.f32 %v4091, %v5372
    %v5374 = vpop.f32.mrb[0].mxu0
    %v5375 = vpop.f32.mrb[0].mxu0
    %5376 = vdwg.mxu0
    %v5377 = vadd.f32 %v3805, %v5289
    %v5378 = vadd.f32 %v3807, %v5291
    %v5379 = vxor.u32 %v5377, 2147483648
    %v5380 = vxor.u32 %v5378, 2147483648
    %v5381 = vmul.f32 %v5379, 1.442695
    %v5382 = vpow.pop %v5381
    %v5383 = vmul.f32 %v5380, 1.442695
    %v5384 = vpow.pop %v5383
    %v5385 = vadd.f32 %v5382, 1.0
    %v5386 = vadd.f32 %v5384, 1.0
    %v5387 = vrcp.pop %v5385
    %v5388 = vmul.f32 1.0, %v5387
    %v5389 = vrcp.pop %v5386
    %v5390 = vmul.f32 1.0, %v5389
    %v5391 = vadd.f32 %v3878, %v5330
    %v5392 = vadd.f32 %v3880, %v5332
    %v5393 = vxor.u32 %v5391, 2147483648
    %v5394 = vxor.u32 %v5392, 2147483648
    %v5395 = vmul.f32 %v5393, 1.442695
    %v5396 = vpow.pop %v5395
    %v5397 = vmul.f32 %v5394, 1.442695
    %v5398 = vpow.pop %v5397
    %v5399 = vadd.f32 %v5396, 1.0
    %v5400 = vadd.f32 %v5398, 1.0
    %v5401 = vrcp.pop %v5399
    %v5402 = vmul.f32 1.0, %v5401
    %v5403 = vrcp.pop %v5400
    %v5404 = vmul.f32 1.0, %v5403
    %v5405 = vmul.f32 %v5388, %v5371
    %v5406 = vmul.f32 %v5390, %v5373
    %v5407 = vadd.f32 %v3951, %v5405
    %v5408 = vadd.f32 %v3953, %v5406
    %v5409 = vtanh.pop %v5407
    %v5410 = vtanh.pop %v5408
    %v5411 = vsub.f32 1.0, %v5402
    %v5412 = vsub.f32 1.0, %v5404
    %v5413 = vmul.f32 %v5411, %v5409
    %v5414 = vmul.f32 %v5412, %v5410
    %v5415 = vmul.f32 %v5402, %v5248
    %v5416 = vmul.f32 %v5404, %v5249
    %v5417 = vadd.f32 %v5413, %v5415
    %v5418 = vadd.f32 %v5414, %v5416
    %v5419 = vadd.f32 %v5250, %v5417
    %v5420 = vadd.f32 %v5251, %v5418
    %v5421 = vpack.c.bf16 %v5417, %v5417
    %v5422 = vpack.c.bf16 %v5418, %v5418
    %5423 = vmatprep.subr.bf16.mxu0 %v4387
    %5424 = vmatpush1.bf16.msra.mxu0 %v4386
    %5425 = vmatprep.subr.bf16.mxu0 %v4393
    %5426 = vmatpush1.bf16.msra.mxu0 %v4392
    %5427 = vmatprep.subr.bf16.mxu0 %v4399
    %5428 = vmatpush1.bf16.msra.mxu0 %v4398
    %5429 = vmatprep.subr.bf16.mxu0 %v4405
    %5430 = vmatpush1.bf16.msra.mxu0 %v4404
    %5431 = vmatprep.subr.bf16.mxu0 %v4411
    %5432 = vmatpush1.bf16.msra.mxu0 %v4410
    %5433 = vmatprep.subr.bf16.mxu0 %v4417
    %5434 = vmatpush1.bf16.msra.mxu0 %v4416
    %5435 = vmatprep.subr.bf16.mxu0 %v4423
    %5436 = vmatpush1.bf16.msra.mxu0 %v4422
    %5437 = vmatprep.subr.bf16.mxu0 %v4429
    %5438 = vmatpush1.bf16.msra.mxu0 %v4428
    %5439 = vmatprep.subr.bf16.mxu0 %v4435
    %5440 = vmatpush1.bf16.msra.mxu0 %v4434
    %5441 = vmatprep.subr.bf16.mxu0 %v4441
    %5442 = vmatpush1.bf16.msra.mxu0 %v4440
    %5443 = vmatprep.subr.bf16.mxu0 %v4447
    %5444 = vmatpush1.bf16.msra.mxu0 %v4446
    %5445 = vmatprep.subr.bf16.mxu0 %v4453
    %5446 = vmatpush1.bf16.msra.mxu0 %v4452
    %5447 = vmatprep.subr.bf16.mxu0 %v4459
    %5448 = vmatpush1.bf16.msra.mxu0 %v4458
    %5449 = vmatprep.subr.bf16.mxu0 %v4465
    %5450 = vmatpush1.bf16.msra.mxu0 %v4464
    %5451 = vmatprep.subr.bf16.mxu0 %v4471
    %5452 = vmatpush1.bf16.msra.mxu0 %v4470
    %5453 = vmatprep.subr.bf16.mxu0 %v4477
    %5454 = vmatpush1.bf16.msra.mxu0 %v4476
    %5455 = vmatprep.mubr.bf16.mxu0 %v5422
    %5456 = vmatmul.mubr.bf16.gmra.mrb[0].mxu0 %v5421
    %v5457 = vpop.f32.mrb[0].mxu0
    %v5458 = vadd.f32 %v4071, %v5457
    %v5459 = vpop.f32.mrb[0].mxu0
    %v5460 = vadd.f32 %v4075, %v5459
    %v5461 = vpop.f32.mrb[0].mxu0
    %v5462 = vpop.f32.mrb[0].mxu0
    %5463 = vdwg.mxu0
    %5464 = vmatprep.subr.bf16.mxu0 %v4389
    %5465 = vmatpush1.bf16.msra.mxu0 %v4388
    %5466 = vmatprep.subr.bf16.mxu0 %v4395
    %5467 = vmatpush1.bf16.msra.mxu0 %v4394
    %5468 = vmatprep.subr.bf16.mxu0 %v4401
    %5469 = vmatpush1.bf16.msra.mxu0 %v4400
    %5470 = vmatprep.subr.bf16.mxu0 %v4407
    %5471 = vmatpush1.bf16.msra.mxu0 %v4406
    %5472 = vmatprep.subr.bf16.mxu0 %v4413
    %5473 = vmatpush1.bf16.msra.mxu0 %v4412
    %5474 = vmatprep.subr.bf16.mxu0 %v4419
    %5475 = vmatpush1.bf16.msra.mxu0 %v4418
    %5476 = vmatprep.subr.bf16.mxu0 %v4425
    %5477 = vmatpush1.bf16.msra.mxu0 %v4424
    %5478 = vmatprep.subr.bf16.mxu0 %v4431
    %5479 = vmatpush1.bf16.msra.mxu0 %v4430
    %5480 = vmatprep.subr.bf16.mxu0 %v4437
    %5481 = vmatpush1.bf16.msra.mxu0 %v4436
    %5482 = vmatprep.subr.bf16.mxu0 %v4443
    %5483 = vmatpush1.bf16.msra.mxu0 %v4442
    %5484 = vmatprep.subr.bf16.mxu0 %v4449
    %5485 = vmatpush1.bf16.msra.mxu0 %v4448
    %5486 = vmatprep.subr.bf16.mxu0 %v4455
    %5487 = vmatpush1.bf16.msra.mxu0 %v4454
    %5488 = vmatprep.subr.bf16.mxu0 %v4461
    %5489 = vmatpush1.bf16.msra.mxu0 %v4460
    %5490 = vmatprep.subr.bf16.mxu0 %v4467
    %5491 = vmatpush1.bf16.msra.mxu0 %v4466
    %5492 = vmatprep.subr.bf16.mxu0 %v4473
    %5493 = vmatpush1.bf16.msra.mxu0 %v4472
    %5494 = vmatprep.subr.bf16.mxu0 %v4479
    %5495 = vmatpush1.bf16.msra.mxu0 %v4478
    %5496 = vmatprep.mubr.bf16.mxu0 %v5422
    %5497 = vmatmul.mubr.bf16.gmra.mrb[0].mxu0 %v5421
    %v5498 = vpop.f32.mrb[0].mxu0
    %v5499 = vadd.f32 %v4079, %v5498
    %v5500 = vpop.f32.mrb[0].mxu0
    %v5501 = vadd.f32 %v4083, %v5500
    %v5502 = vpop.f32.mrb[0].mxu0
    %v5503 = vpop.f32.mrb[0].mxu0
    %5504 = vdwg.mxu0
    %5505 = vmatprep.subr.bf16.mxu0 %v4391
    %5506 = vmatpush1.bf16.msra.mxu0 %v4390
    %5507 = vmatprep.subr.bf16.mxu0 %v4397
    %5508 = vmatpush1.bf16.msra.mxu0 %v4396
    %5509 = vmatprep.subr.bf16.mxu0 %v4403
    %5510 = vmatpush1.bf16.msra.mxu0 %v4402
    %5511 = vmatprep.subr.bf16.mxu0 %v4409
    %5512 = vmatpush1.bf16.msra.mxu0 %v4408
    %5513 = vmatprep.subr.bf16.mxu0 %v4415
    %5514 = vmatpush1.bf16.msra.mxu0 %v4414
    %5515 = vmatprep.subr.bf16.mxu0 %v4421
    %5516 = vmatpush1.bf16.msra.mxu0 %v4420
    %5517 = vmatprep.subr.bf16.mxu0 %v4427
    %5518 = vmatpush1.bf16.msra.mxu0 %v4426
    %5519 = vmatprep.subr.bf16.mxu0 %v4433
    %5520 = vmatpush1.bf16.msra.mxu0 %v4432
    %5521 = vmatprep.subr.bf16.mxu0 %v4439
    %5522 = vmatpush1.bf16.msra.mxu0 %v4438
    %5523 = vmatprep.subr.bf16.mxu0 %v4445
    %5524 = vmatpush1.bf16.msra.mxu0 %v4444
    %5525 = vmatprep.subr.bf16.mxu0 %v4451
    %5526 = vmatpush1.bf16.msra.mxu0 %v4450
    %5527 = vmatprep.subr.bf16.mxu0 %v4457
    %5528 = vmatpush1.bf16.msra.mxu0 %v4456
    %5529 = vmatprep.subr.bf16.mxu0 %v4463
    %5530 = vmatpush1.bf16.msra.mxu0 %v4462
    %5531 = vmatprep.subr.bf16.mxu0 %v4469
    %5532 = vmatpush1.bf16.msra.mxu0 %v4468
    %5533 = vmatprep.subr.bf16.mxu0 %v4475
    %5534 = vmatpush1.bf16.msra.mxu0 %v4474
    %5535 = vmatprep.subr.bf16.mxu0 %v4481
    %5536 = vmatpush1.bf16.msra.mxu0 %v4480
    %5537 = vmatprep.mubr.bf16.mxu0 %v5422
    %5538 = vmatmul.mubr.bf16.gmra.mrb[0].mxu0 %v5421
    %v5539 = vpop.f32.mrb[0].mxu0
    %v5540 = vadd.f32 %v4087, %v5539
    %v5541 = vpop.f32.mrb[0].mxu0
    %v5542 = vadd.f32 %v4091, %v5541
    %v5543 = vpop.f32.mrb[0].mxu0
    %v5544 = vpop.f32.mrb[0].mxu0
    %5545 = vdwg.mxu0
    %v5546 = vadd.f32 %v3809, %v5458
    %v5547 = vadd.f32 %v3811, %v5460
    %v5548 = vxor.u32 %v5546, 2147483648
    %v5549 = vxor.u32 %v5547, 2147483648
    %v5550 = vmul.f32 %v5548, 1.442695
    %v5551 = vpow.pop %v5550
    %v5552 = vmul.f32 %v5549, 1.442695
    %v5553 = vpow.pop %v5552
    %v5554 = vadd.f32 %v5551, 1.0
    %v5555 = vadd.f32 %v5553, 1.0
    %v5556 = vrcp.pop %v5554
    %v5557 = vmul.f32 1.0, %v5556
    %v5558 = vrcp.pop %v5555
    %v5559 = vmul.f32 1.0, %v5558
    %v5560 = vadd.f32 %v3882, %v5499
    %v5561 = vadd.f32 %v3884, %v5501
    %v5562 = vxor.u32 %v5560, 2147483648
    %v5563 = vxor.u32 %v5561, 2147483648
    %v5564 = vmul.f32 %v5562, 1.442695
    %v5565 = vpow.pop %v5564
    %v5566 = vmul.f32 %v5563, 1.442695
    %v5567 = vpow.pop %v5566
    %v5568 = vadd.f32 %v5565, 1.0
    %v5569 = vadd.f32 %v5567, 1.0
    %v5570 = vrcp.pop %v5568
    %v5571 = vmul.f32 1.0, %v5570
    %v5572 = vrcp.pop %v5569
    %v5573 = vmul.f32 1.0, %v5572
    %v5574 = vmul.f32 %v5557, %v5540
    %v5575 = vmul.f32 %v5559, %v5542
    %v5576 = vadd.f32 %v3955, %v5574
    %v5577 = vadd.f32 %v3957, %v5575
    %v5578 = vtanh.pop %v5576
    %v5579 = vtanh.pop %v5577
    %v5580 = vsub.f32 1.0, %v5571
    %v5581 = vsub.f32 1.0, %v5573
    %v5582 = vmul.f32 %v5580, %v5578
    %v5583 = vmul.f32 %v5581, %v5579
    %v5584 = vmul.f32 %v5571, %v5417
    %v5585 = vmul.f32 %v5573, %v5418
    %v5586 = vadd.f32 %v5582, %v5584
    %v5587 = vadd.f32 %v5583, %v5585
    %v5588 = vadd.f32 %v5419, %v5586
    %v5589 = vadd.f32 %v5420, %v5587
    %v5590 = vpack.c.bf16 %v5586, %v5586
    %v5591 = vpack.c.bf16 %v5587, %v5587
    %5592 = vmatprep.subr.bf16.mxu0 %v4387
    %5593 = vmatpush1.bf16.msra.mxu0 %v4386
    %5594 = vmatprep.subr.bf16.mxu0 %v4393
    %5595 = vmatpush1.bf16.msra.mxu0 %v4392
    %5596 = vmatprep.subr.bf16.mxu0 %v4399
    %5597 = vmatpush1.bf16.msra.mxu0 %v4398
    %5598 = vmatprep.subr.bf16.mxu0 %v4405
    %5599 = vmatpush1.bf16.msra.mxu0 %v4404
    %5600 = vmatprep.subr.bf16.mxu0 %v4411
    %5601 = vmatpush1.bf16.msra.mxu0 %v4410
    %5602 = vmatprep.subr.bf16.mxu0 %v4417
    %5603 = vmatpush1.bf16.msra.mxu0 %v4416
    %5604 = vmatprep.subr.bf16.mxu0 %v4423
    %5605 = vmatpush1.bf16.msra.mxu0 %v4422
    %5606 = vmatprep.subr.bf16.mxu0 %v4429
    %5607 = vmatpush1.bf16.msra.mxu0 %v4428
    %5608 = vmatprep.subr.bf16.mxu0 %v4435
    %5609 = vmatpush1.bf16.msra.mxu0 %v4434
    %5610 = vmatprep.subr.bf16.mxu0 %v4441
    %5611 = vmatpush1.bf16.msra.mxu0 %v4440
    %5612 = vmatprep.subr.bf16.mxu0 %v4447
    %5613 = vmatpush1.bf16.msra.mxu0 %v4446
    %5614 = vmatprep.subr.bf16.mxu0 %v4453
    %5615 = vmatpush1.bf16.msra.mxu0 %v4452
    %5616 = vmatprep.subr.bf16.mxu0 %v4459
    %5617 = vmatpush1.bf16.msra.mxu0 %v4458
    %5618 = vmatprep.subr.bf16.mxu0 %v4465
    %5619 = vmatpush1.bf16.msra.mxu0 %v4464
    %5620 = vmatprep.subr.bf16.mxu0 %v4471
    %5621 = vmatpush1.bf16.msra.mxu0 %v4470
    %5622 = vmatprep.subr.bf16.mxu0 %v4477
    %5623 = vmatpush1.bf16.msra.mxu0 %v4476
    %5624 = vmatprep.mubr.bf16.mxu0 %v5591
    %5625 = vmatmul.mubr.bf16.gmra.mrb[0].mxu0 %v5590
    %v5626 = vpop.f32.mrb[0].mxu0
    %v5627 = vadd.f32 %v4071, %v5626
    %v5628 = vpop.f32.mrb[0].mxu0
    %v5629 = vadd.f32 %v4075, %v5628
    %v5630 = vpop.f32.mrb[0].mxu0
    %v5631 = vpop.f32.mrb[0].mxu0
    %5632 = vdwg.mxu0
    %5633 = vmatprep.subr.bf16.mxu0 %v4389
    %5634 = vmatpush1.bf16.msra.mxu0 %v4388
    %5635 = vmatprep.subr.bf16.mxu0 %v4395
    %5636 = vmatpush1.bf16.msra.mxu0 %v4394
    %5637 = vmatprep.subr.bf16.mxu0 %v4401
    %5638 = vmatpush1.bf16.msra.mxu0 %v4400
    %5639 = vmatprep.subr.bf16.mxu0 %v4407
    %5640 = vmatpush1.bf16.msra.mxu0 %v4406
    %5641 = vmatprep.subr.bf16.mxu0 %v4413
    %5642 = vmatpush1.bf16.msra.mxu0 %v4412
    %5643 = vmatprep.subr.bf16.mxu0 %v4419
    %5644 = vmatpush1.bf16.msra.mxu0 %v4418
    %5645 = vmatprep.subr.bf16.mxu0 %v4425
    %5646 = vmatpush1.bf16.msra.mxu0 %v4424
    %5647 = vmatprep.subr.bf16.mxu0 %v4431
    %5648 = vmatpush1.bf16.msra.mxu0 %v4430
    %5649 = vmatprep.subr.bf16.mxu0 %v4437
    %5650 = vmatpush1.bf16.msra.mxu0 %v4436
    %5651 = vmatprep.subr.bf16.mxu0 %v4443
    %5652 = vmatpush1.bf16.msra.mxu0 %v4442
    %5653 = vmatprep.subr.bf16.mxu0 %v4449
    %5654 = vmatpush1.bf16.msra.mxu0 %v4448
    %5655 = vmatprep.subr.bf16.mxu0 %v4455
    %5656 = vmatpush1.bf16.msra.mxu0 %v4454
    %5657 = vmatprep.subr.bf16.mxu0 %v4461
    %5658 = vmatpush1.bf16.msra.mxu0 %v4460
    %5659 = vmatprep.subr.bf16.mxu0 %v4467
    %5660 = vmatpush1.bf16.msra.mxu0 %v4466
    %5661 = vmatprep.subr.bf16.mxu0 %v4473
    %5662 = vmatpush1.bf16.msra.mxu0 %v4472
    %5663 = vmatprep.subr.bf16.mxu0 %v4479
    %5664 = vmatpush1.bf16.msra.mxu0 %v4478
    %5665 = vmatprep.mubr.bf16.mxu0 %v5591
    %5666 = vmatmul.mubr.bf16.gmra.mrb[0].mxu0 %v5590
    %v5667 = vpop.f32.mrb[0].mxu0
    %v5668 = vadd.f32 %v4079, %v5667
    %v5669 = vpop.f32.mrb[0].mxu0
    %v5670 = vadd.f32 %v4083, %v5669
    %v5671 = vpop.f32.mrb[0].mxu0
    %v5672 = vpop.f32.mrb[0].mxu0
    %5673 = vdwg.mxu0
    %5674 = vmatprep.subr.bf16.mxu0 %v4391
    %5675 = vmatpush1.bf16.msra.mxu0 %v4390
    %5676 = vmatprep.subr.bf16.mxu0 %v4397
    %5677 = vmatpush1.bf16.msra.mxu0 %v4396
    %5678 = vmatprep.subr.bf16.mxu0 %v4403
    %5679 = vmatpush1.bf16.msra.mxu0 %v4402
    %5680 = vmatprep.subr.bf16.mxu0 %v4409
    %5681 = vmatpush1.bf16.msra.mxu0 %v4408
    %5682 = vmatprep.subr.bf16.mxu0 %v4415
    %5683 = vmatpush1.bf16.msra.mxu0 %v4414
    %5684 = vmatprep.subr.bf16.mxu0 %v4421
    %5685 = vmatpush1.bf16.msra.mxu0 %v4420
    %5686 = vmatprep.subr.bf16.mxu0 %v4427
    %5687 = vmatpush1.bf16.msra.mxu0 %v4426
    %5688 = vmatprep.subr.bf16.mxu0 %v4433
    %5689 = vmatpush1.bf16.msra.mxu0 %v4432
    %5690 = vmatprep.subr.bf16.mxu0 %v4439
    %5691 = vmatpush1.bf16.msra.mxu0 %v4438
    %5692 = vmatprep.subr.bf16.mxu0 %v4445
    %5693 = vmatpush1.bf16.msra.mxu0 %v4444
    %5694 = vmatprep.subr.bf16.mxu0 %v4451
    %5695 = vmatpush1.bf16.msra.mxu0 %v4450
    %5696 = vmatprep.subr.bf16.mxu0 %v4457
    %5697 = vmatpush1.bf16.msra.mxu0 %v4456
    %5698 = vmatprep.subr.bf16.mxu0 %v4463
    %5699 = vmatpush1.bf16.msra.mxu0 %v4462
    %5700 = vmatprep.subr.bf16.mxu0 %v4469
    %5701 = vmatpush1.bf16.msra.mxu0 %v4468
    %5702 = vmatprep.subr.bf16.mxu0 %v4475
    %5703 = vmatpush1.bf16.msra.mxu0 %v4474
    %5704 = vmatprep.subr.bf16.mxu0 %v4481
    %5705 = vmatpush1.bf16.msra.mxu0 %v4480
    %5706 = vmatprep.mubr.bf16.mxu0 %v5591
    %5707 = vmatmul.mubr.bf16.gmra.mrb[0].mxu0 %v5590
    %v5708 = vpop.f32.mrb[0].mxu0
    %v5709 = vadd.f32 %v4087, %v5708
    %v5710 = vpop.f32.mrb[0].mxu0
    %v5711 = vadd.f32 %v4091, %v5710
    %v5712 = vpop.f32.mrb[0].mxu0
    %v5713 = vpop.f32.mrb[0].mxu0
    %5714 = vdwg.mxu0
    %v5715 = vadd.f32 %v3815, %v5627
    %v5716 = vadd.f32 %v3817, %v5629
    %v5717 = vxor.u32 %v5715, 2147483648
    %v5718 = vxor.u32 %v5716, 2147483648
    %v5719 = vmul.f32 %v5717, 1.442695
    %v5720 = vpow.pop %v5719
    %v5721 = vmul.f32 %v5718, 1.442695
    %v5722 = vpow.pop %v5721
    %v5723 = vadd.f32 %v5720, 1.0
    %v5724 = vadd.f32 %v5722, 1.0
    %v5725 = vrcp.pop %v5723
    %v5726 = vmul.f32 1.0, %v5725
    %v5727 = vrcp.pop %v5724
    %v5728 = vmul.f32 1.0, %v5727
    %v5729 = vadd.f32 %v3888, %v5668
    %v5730 = vadd.f32 %v3890, %v5670
    %v5731 = vxor.u32 %v5729, 2147483648
    %v5732 = vxor.u32 %v5730, 2147483648
    %v5733 = vmul.f32 %v5731, 1.442695
    %v5734 = vpow.pop %v5733
    %v5735 = vmul.f32 %v5732, 1.442695
    %v5736 = vpow.pop %v5735
    %v5737 = vadd.f32 %v5734, 1.0
    %v5738 = vadd.f32 %v5736, 1.0
    %v5739 = vrcp.pop %v5737
    %v5740 = vmul.f32 1.0, %v5739
    %v5741 = vrcp.pop %v5738
    %v5742 = vmul.f32 1.0, %v5741
    %v5743 = vmul.f32 %v5726, %v5709
    %v5744 = vmul.f32 %v5728, %v5711
    %v5745 = vadd.f32 %v3961, %v5743
    %v5746 = vadd.f32 %v3963, %v5744
    %v5747 = vtanh.pop %v5745
    %v5748 = vtanh.pop %v5746
    %v5749 = vsub.f32 1.0, %v5740
    %v5750 = vsub.f32 1.0, %v5742
    %v5751 = vmul.f32 %v5749, %v5747
    %v5752 = vmul.f32 %v5750, %v5748
    %v5753 = vmul.f32 %v5740, %v5586
    %v5754 = vmul.f32 %v5742, %v5587
    %v5755 = vadd.f32 %v5751, %v5753
    %v5756 = vadd.f32 %v5752, %v5754
    %v5757 = vadd.f32 %v5588, %v5755
    %v5758 = vadd.f32 %v5589, %v5756
    %v5759 = vpack.c.bf16 %v5755, %v5755
    %v5760 = vpack.c.bf16 %v5756, %v5756
    %5761 = vmatprep.subr.bf16.mxu0 %v4387
    %5762 = vmatpush1.bf16.msra.mxu0 %v4386
    %5763 = vmatprep.subr.bf16.mxu0 %v4393
    %5764 = vmatpush1.bf16.msra.mxu0 %v4392
    %5765 = vmatprep.subr.bf16.mxu0 %v4399
    %5766 = vmatpush1.bf16.msra.mxu0 %v4398
    %5767 = vmatprep.subr.bf16.mxu0 %v4405
    %5768 = vmatpush1.bf16.msra.mxu0 %v4404
    %5769 = vmatprep.subr.bf16.mxu0 %v4411
    %5770 = vmatpush1.bf16.msra.mxu0 %v4410
    %5771 = vmatprep.subr.bf16.mxu0 %v4417
    %5772 = vmatpush1.bf16.msra.mxu0 %v4416
    %5773 = vmatprep.subr.bf16.mxu0 %v4423
    %5774 = vmatpush1.bf16.msra.mxu0 %v4422
    %5775 = vmatprep.subr.bf16.mxu0 %v4429
    %5776 = vmatpush1.bf16.msra.mxu0 %v4428
    %5777 = vmatprep.subr.bf16.mxu0 %v4435
    %5778 = vmatpush1.bf16.msra.mxu0 %v4434
    %5779 = vmatprep.subr.bf16.mxu0 %v4441
    %5780 = vmatpush1.bf16.msra.mxu0 %v4440
    %5781 = vmatprep.subr.bf16.mxu0 %v4447
    %5782 = vmatpush1.bf16.msra.mxu0 %v4446
    %5783 = vmatprep.subr.bf16.mxu0 %v4453
    %5784 = vmatpush1.bf16.msra.mxu0 %v4452
    %5785 = vmatprep.subr.bf16.mxu0 %v4459
    %5786 = vmatpush1.bf16.msra.mxu0 %v4458
    %5787 = vmatprep.subr.bf16.mxu0 %v4465
    %5788 = vmatpush1.bf16.msra.mxu0 %v4464
    %5789 = vmatprep.subr.bf16.mxu0 %v4471
    %5790 = vmatpush1.bf16.msra.mxu0 %v4470
    %5791 = vmatprep.subr.bf16.mxu0 %v4477
    %5792 = vmatpush1.bf16.msra.mxu0 %v4476
    %5793 = vmatprep.mubr.bf16.mxu0 %v5760
    %5794 = vmatmul.mubr.bf16.gmra.mrb[0].mxu0 %v5759
    %v5795 = vpop.f32.mrb[0].mxu0
    %v5796 = vadd.f32 %v4071, %v5795
    %v5797 = vpop.f32.mrb[0].mxu0
    %v5798 = vadd.f32 %v4075, %v5797
    %v5799 = vpop.f32.mrb[0].mxu0
    %v5800 = vpop.f32.mrb[0].mxu0
    %5801 = vdwg.mxu0
    %5802 = vmatprep.subr.bf16.mxu0 %v4389
    %5803 = vmatpush1.bf16.msra.mxu0 %v4388
    %5804 = vmatprep.subr.bf16.mxu0 %v4395
    %5805 = vmatpush1.bf16.msra.mxu0 %v4394
    %5806 = vmatprep.subr.bf16.mxu0 %v4401
    %5807 = vmatpush1.bf16.msra.mxu0 %v4400
    %5808 = vmatprep.subr.bf16.mxu0 %v4407
    %5809 = vmatpush1.bf16.msra.mxu0 %v4406
    %5810 = vmatprep.subr.bf16.mxu0 %v4413
    %5811 = vmatpush1.bf16.msra.mxu0 %v4412
    %5812 = vmatprep.subr.bf16.mxu0 %v4419
    %5813 = vmatpush1.bf16.msra.mxu0 %v4418
    %5814 = vmatprep.subr.bf16.mxu0 %v4425
    %5815 = vmatpush1.bf16.msra.mxu0 %v4424
    %5816 = vmatprep.subr.bf16.mxu0 %v4431
    %5817 = vmatpush1.bf16.msra.mxu0 %v4430
    %5818 = vmatprep.subr.bf16.mxu0 %v4437
    %5819 = vmatpush1.bf16.msra.mxu0 %v4436
    %5820 = vmatprep.subr.bf16.mxu0 %v4443
    %5821 = vmatpush1.bf16.msra.mxu0 %v4442
    %5822 = vmatprep.subr.bf16.mxu0 %v4449
    %5823 = vmatpush1.bf16.msra.mxu0 %v4448
    %5824 = vmatprep.subr.bf16.mxu0 %v4455
    %5825 = vmatpush1.bf16.msra.mxu0 %v4454
    %5826 = vmatprep.subr.bf16.mxu0 %v4461
    %5827 = vmatpush1.bf16.msra.mxu0 %v4460
    %5828 = vmatprep.subr.bf16.mxu0 %v4467
    %5829 = vmatpush1.bf16.msra.mxu0 %v4466
    %5830 = vmatprep.subr.bf16.mxu0 %v4473
    %5831 = vmatpush1.bf16.msra.mxu0 %v4472
    %5832 = vmatprep.subr.bf16.mxu0 %v4479
    %5833 = vmatpush1.bf16.msra.mxu0 %v4478
    %5834 = vmatprep.mubr.bf16.mxu0 %v5760
    %5835 = vmatmul.mubr.bf16.gmra.mrb[0].mxu0 %v5759
    %v5836 = vpop.f32.mrb[0].mxu0
    %v5837 = vadd.f32 %v4079, %v5836
    %v5838 = vpop.f32.mrb[0].mxu0
    %v5839 = vadd.f32 %v4083, %v5838
    %v5840 = vpop.f32.mrb[0].mxu0
    %v5841 = vpop.f32.mrb[0].mxu0
    %5842 = vdwg.mxu0
    %5843 = vmatprep.subr.bf16.mxu0 %v4391
    %5844 = vmatpush1.bf16.msra.mxu0 %v4390
    %5845 = vmatprep.subr.bf16.mxu0 %v4397
    %5846 = vmatpush1.bf16.msra.mxu0 %v4396
    %5847 = vmatprep.subr.bf16.mxu0 %v4403
    %5848 = vmatpush1.bf16.msra.mxu0 %v4402
    %5849 = vmatprep.subr.bf16.mxu0 %v4409
    %5850 = vmatpush1.bf16.msra.mxu0 %v4408
    %5851 = vmatprep.subr.bf16.mxu0 %v4415
    %5852 = vmatpush1.bf16.msra.mxu0 %v4414
    %5853 = vmatprep.subr.bf16.mxu0 %v4421
    %5854 = vmatpush1.bf16.msra.mxu0 %v4420
    %5855 = vmatprep.subr.bf16.mxu0 %v4427
    %5856 = vmatpush1.bf16.msra.mxu0 %v4426
    %5857 = vmatprep.subr.bf16.mxu0 %v4433
    %5858 = vmatpush1.bf16.msra.mxu0 %v4432
    %5859 = vmatprep.subr.bf16.mxu0 %v4439
    %5860 = vmatpush1.bf16.msra.mxu0 %v4438
    %5861 = vmatprep.subr.bf16.mxu0 %v4445
    %5862 = vmatpush1.bf16.msra.mxu0 %v4444
    %5863 = vmatprep.subr.bf16.mxu0 %v4451
    %5864 = vmatpush1.bf16.msra.mxu0 %v4450
    %5865 = vmatprep.subr.bf16.mxu0 %v4457
    %5866 = vmatpush1.bf16.msra.mxu0 %v4456
    %5867 = vmatprep.subr.bf16.mxu0 %v4463
    %5868 = vmatpush1.bf16.msra.mxu0 %v4462
    %5869 = vmatprep.subr.bf16.mxu0 %v4469
    %5870 = vmatpush1.bf16.msra.mxu0 %v4468
    %5871 = vmatprep.subr.bf16.mxu0 %v4475
    %5872 = vmatpush1.bf16.msra.mxu0 %v4474
    %5873 = vmatprep.subr.bf16.mxu0 %v4481
    %5874 = vmatpush1.bf16.msra.mxu0 %v4480
    %5875 = vmatprep.mubr.bf16.mxu0 %v5760
    %5876 = vmatmul.mubr.bf16.gmra.mrb[0].mxu0 %v5759
    %v5877 = vpop.f32.mrb[0].mxu0
    %v5878 = vadd.f32 %v4087, %v5877
    %v5879 = vpop.f32.mrb[0].mxu0
    %v5880 = vadd.f32 %v4091, %v5879
    %v5881 = vpop.f32.mrb[0].mxu0
    %v5882 = vpop.f32.mrb[0].mxu0
    %5883 = vdwg.mxu0
    %v5884 = vadd.f32 %v3819, %v5796
    %v5885 = vadd.f32 %v3821, %v5798
    %v5886 = vxor.u32 %v5884, 2147483648
    %v5887 = vxor.u32 %v5885, 2147483648
    %v5888 = vmul.f32 %v5886, 1.442695
    %v5889 = vpow.pop %v5888
    %v5890 = vmul.f32 %v5887, 1.442695
    %v5891 = vpow.pop %v5890
    %v5892 = vadd.f32 %v5889, 1.0
    %v5893 = vadd.f32 %v5891, 1.0
    %v5894 = vrcp.pop %v5892
    %v5895 = vmul.f32 1.0, %v5894
    %v5896 = vrcp.pop %v5893
    %v5897 = vmul.f32 1.0, %v5896
    %v5898 = vadd.f32 %v3892, %v5837
    %v5899 = vadd.f32 %v3894, %v5839
    %v5900 = vxor.u32 %v5898, 2147483648
    %v5901 = vxor.u32 %v5899, 2147483648
    %v5902 = vmul.f32 %v5900, 1.442695
    %v5903 = vpow.pop %v5902
    %v5904 = vmul.f32 %v5901, 1.442695
    %v5905 = vpow.pop %v5904
    %v5906 = vadd.f32 %v5903, 1.0
    %v5907 = vadd.f32 %v5905, 1.0
    %v5908 = vrcp.pop %v5906
    %v5909 = vmul.f32 1.0, %v5908
    %v5910 = vrcp.pop %v5907
    %v5911 = vmul.f32 1.0, %v5910
    %v5912 = vmul.f32 %v5895, %v5878
    %v5913 = vmul.f32 %v5897, %v5880
    %v5914 = vadd.f32 %v3965, %v5912
    %v5915 = vadd.f32 %v3967, %v5913
    %v5916 = vtanh.pop %v5914
    %v5917 = vtanh.pop %v5915
    %v5918 = vsub.f32 1.0, %v5909
    %v5919 = vsub.f32 1.0, %v5911
    %v5920 = vmul.f32 %v5918, %v5916
    %v5921 = vmul.f32 %v5919, %v5917
    %v5922 = vmul.f32 %v5909, %v5755
    %v5923 = vmul.f32 %v5911, %v5756
    %v5924 = vadd.f32 %v5920, %v5922
    %v5925 = vadd.f32 %v5921, %v5923
    %v5926 = vadd.f32 %v5757, %v5924
    %v5927 = vadd.f32 %v5758, %v5925
    %v5928 = vmul.f32 %v5926, 0.125
    %v5929 = vmul.f32 %v5927, 0.125
    %v5930 = vpack.c.bf16 %v5928, %v5928
    %v5931 = vpack.c.bf16 %v5929, %v5929
    %v5932 = vld [vmem:[#allocation11] sm:$0xff]
    %v5933 = vld [vmem:[#allocation11 + $0x8] sm:$0xff]
    %v5934 = vld [vmem:[#allocation11 + $0x10] sm:$0xff]
    %v5935 = vld [vmem:[#allocation11 + $0x18] sm:$0xff]
    %v5936 = vld [vmem:[#allocation11 + $0x20] sm:$0xff]
    %v5937 = vld [vmem:[#allocation11 + $0x28] sm:$0xff]
    %v5938 = vld [vmem:[#allocation11 + $0x30] sm:$0xff]
    %v5939 = vld [vmem:[#allocation11 + $0x38] sm:$0xff]
    %v5940 = vld [vmem:[#allocation11 + $0x40] sm:$0xff]
    %v5941 = vld [vmem:[#allocation11 + $0x48] sm:$0xff]
    %v5942 = vld [vmem:[#allocation11 + $0x50] sm:$0xff]
    %v5943 = vld [vmem:[#allocation11 + $0x58] sm:$0xff]
    %v5944 = vld [vmem:[#allocation11 + $0x60] sm:$0xff]
    %v5945 = vld [vmem:[#allocation11 + $0x68] sm:$0xff]
    %v5946 = vld [vmem:[#allocation11 + $0x70] sm:$0xff]
    %v5947 = vld [vmem:[#allocation11 + $0x78] sm:$0xff]
    %v5948 = vld [vmem:[#allocation11 + $0x80] sm:$0xff]
    %v5949 = vld [vmem:[#allocation11 + $0x88] sm:$0xff]
    %v5950 = vld [vmem:[#allocation11 + $0x90] sm:$0xff]
    %v5951 = vld [vmem:[#allocation11 + $0x98] sm:$0xff]
    %v5952 = vld [vmem:[#allocation11 + $0xa0] sm:$0xff]
    %v5953 = vld [vmem:[#allocation11 + $0xa8] sm:$0xff]
    %v5954 = vld [vmem:[#allocation11 + $0xb0] sm:$0xff]
    %v5955 = vld [vmem:[#allocation11 + $0xb8] sm:$0xff]
    %v5956 = vld [vmem:[#allocation11 + $0xc0] sm:$0xff]
    %v5957 = vld [vmem:[#allocation11 + $0xc8] sm:$0xff]
    %v5958 = vld [vmem:[#allocation11 + $0xd0] sm:$0xff]
    %v5959 = vld [vmem:[#allocation11 + $0xd8] sm:$0xff]
    %v5960 = vld [vmem:[#allocation11 + $0xe0] sm:$0xff]
    %v5961 = vld [vmem:[#allocation11 + $0xe8] sm:$0xff]
    %v5962 = vld [vmem:[#allocation11 + $0xf0] sm:$0xff]
    %v5963 = vld [vmem:[#allocation11 + $0xf8] sm:$0xff]
    %v5964 = vld [vmem:[%s6] ss:$2 sm:$0x3]
    %v5966 = vlaneseq
    %v5967 = vshrl.u32 %v5966, 7
    %v5968 = vsub.s32 0, %v5967
    %v5969 = vrot.slane %v5964, %v5968
    %v5970 = vlaneseq
    %v5971 = vshrl.u32 %v5970, 7
    %v5972 = vsub.s32 1, %v5971
    %v5973 = vrot.slane %v5964, %v5972
    %v6008 = vunpack.c.l.b16 %v5932
    %v6009 = vunpack.c.h.b16 %v5932
    %v6010 = vunpack.c.l.b16 %v5933
    %v6011 = vunpack.c.h.b16 %v5933
    %v6012 = vunpack.c.l.b16 %v5934
    %v6013 = vunpack.c.h.b16 %v5934
    %v6014 = vunpack.c.l.b16 %v5935
    %v6015 = vunpack.c.h.b16 %v5935
    %v6016 = vunpack.c.l.b16 %v5936
    %v6017 = vunpack.c.h.b16 %v5936
    %v6018 = vunpack.c.l.b16 %v5937
    %v6019 = vunpack.c.h.b16 %v5937
    %v6020 = vunpack.c.l.b16 %v5938
    %v6021 = vunpack.c.h.b16 %v5938
    %v6022 = vunpack.c.l.b16 %v5939
    %v6023 = vunpack.c.h.b16 %v5939
    %v6024 = vunpack.c.l.b16 %v5940
    %v6025 = vunpack.c.h.b16 %v5940
    %v6026 = vunpack.c.l.b16 %v5941
    %v6027 = vunpack.c.h.b16 %v5941
    %v6028 = vunpack.c.l.b16 %v5942
    %v6029 = vunpack.c.h.b16 %v5942
    %v6030 = vunpack.c.l.b16 %v5943
    %v6031 = vunpack.c.h.b16 %v5943
    %v6032 = vunpack.c.l.b16 %v5944
    %v6033 = vunpack.c.h.b16 %v5944
    %v6034 = vunpack.c.l.b16 %v5945
    %v6035 = vunpack.c.h.b16 %v5945
    %v6036 = vunpack.c.l.b16 %v5946
    %v6037 = vunpack.c.h.b16 %v5946
    %v6038 = vunpack.c.l.b16 %v5947
    %v6039 = vunpack.c.h.b16 %v5947
    %v6040 = vunpack.c.l.b16 %v5948
    %v6041 = vunpack.c.h.b16 %v5948
    %v6042 = vunpack.c.l.b16 %v5949
    %v6043 = vunpack.c.h.b16 %v5949
    %v6044 = vunpack.c.l.b16 %v5950
    %v6045 = vunpack.c.h.b16 %v5950
    %v6046 = vunpack.c.l.b16 %v5951
    %v6047 = vunpack.c.h.b16 %v5951
    %v6048 = vunpack.c.l.b16 %v5952
    %v6049 = vunpack.c.h.b16 %v5952
    %v6050 = vunpack.c.l.b16 %v5953
    %v6051 = vunpack.c.h.b16 %v5953
    %v6052 = vunpack.c.l.b16 %v5954
    %v6053 = vunpack.c.h.b16 %v5954
    %v6054 = vunpack.c.l.b16 %v5955
    %v6055 = vunpack.c.h.b16 %v5955
    %v6056 = vunpack.c.l.b16 %v5956
    %v6057 = vunpack.c.h.b16 %v5956
    %v6058 = vunpack.c.l.b16 %v5957
    %v6059 = vunpack.c.h.b16 %v5957
    %v6060 = vunpack.c.l.b16 %v5958
    %v6061 = vunpack.c.h.b16 %v5958
    %v6062 = vunpack.c.l.b16 %v5959
    %v6063 = vunpack.c.h.b16 %v5959
    %v6064 = vunpack.c.l.b16 %v5960
    %v6065 = vunpack.c.h.b16 %v5960
    %v6066 = vunpack.c.l.b16 %v5961
    %v6067 = vunpack.c.h.b16 %v5961
    %v6068 = vunpack.c.l.b16 %v5962
    %v6069 = vunpack.c.h.b16 %v5962
    %v6070 = vunpack.c.l.b16 %v5963
    %v6071 = vunpack.c.h.b16 %v5963
    %v6072 = vpack.c.b16 %v6010, %v6008
    %v6073 = vpack.c.b16 %v6011, %v6009
    %v6074 = vpack.c.b16 %v6014, %v6012
    %v6075 = vpack.c.b16 %v6015, %v6013
    %v6076 = vpack.c.b16 %v6018, %v6016
    %v6077 = vpack.c.b16 %v6019, %v6017
    %v6078 = vpack.c.b16 %v6022, %v6020
    %v6079 = vpack.c.b16 %v6023, %v6021
    %v6080 = vpack.c.b16 %v6026, %v6024
    %v6081 = vpack.c.b16 %v6027, %v6025
    %v6082 = vpack.c.b16 %v6030, %v6028
    %v6083 = vpack.c.b16 %v6031, %v6029
    %v6084 = vpack.c.b16 %v6034, %v6032
    %v6085 = vpack.c.b16 %v6035, %v6033
    %v6086 = vpack.c.b16 %v6038, %v6036
    %v6087 = vpack.c.b16 %v6039, %v6037
    %v6088 = vpack.c.b16 %v6042, %v6040
    %v6089 = vpack.c.b16 %v6043, %v6041
    %v6090 = vpack.c.b16 %v6046, %v6044
    %v6091 = vpack.c.b16 %v6047, %v6045
    %v6092 = vpack.c.b16 %v6050, %v6048
    %v6093 = vpack.c.b16 %v6051, %v6049
    %v6094 = vpack.c.b16 %v6054, %v6052
    %v6095 = vpack.c.b16 %v6055, %v6053
    %v6096 = vpack.c.b16 %v6058, %v6056
    %v6097 = vpack.c.b16 %v6059, %v6057
    %v6098 = vpack.c.b16 %v6062, %v6060
    %v6099 = vpack.c.b16 %v6063, %v6061
    %v6100 = vpack.c.b16 %v6066, %v6064
    %v6101 = vpack.c.b16 %v6067, %v6065
    %v6102 = vpack.c.b16 %v6070, %v6068
    %v6103 = vpack.c.b16 %v6071, %v6069
    %6136 = vmatprep.subr.bf16.mxu0 %v6073
    %6137 = vmatpush1.bf16.msra.mxu0 %v6072
    %6138 = vmatprep.subr.bf16.mxu0 %v6075
    %6139 = vmatpush1.bf16.msra.mxu0 %v6074
    %6140 = vmatprep.subr.bf16.mxu0 %v6077
    %6141 = vmatpush1.bf16.msra.mxu0 %v6076
    %6142 = vmatprep.subr.bf16.mxu0 %v6079
    %6143 = vmatpush1.bf16.msra.mxu0 %v6078
    %6144 = vmatprep.subr.bf16.mxu0 %v6081
    %6145 = vmatpush1.bf16.msra.mxu0 %v6080
    %6146 = vmatprep.subr.bf16.mxu0 %v6083
    %6147 = vmatpush1.bf16.msra.mxu0 %v6082
    %6148 = vmatprep.subr.bf16.mxu0 %v6085
    %6149 = vmatpush1.bf16.msra.mxu0 %v6084
    %6150 = vmatprep.subr.bf16.mxu0 %v6087
    %6151 = vmatpush1.bf16.msra.mxu0 %v6086
    %6152 = vmatprep.subr.bf16.mxu0 %v6089
    %6153 = vmatpush1.bf16.msra.mxu0 %v6088
    %6154 = vmatprep.subr.bf16.mxu0 %v6091
    %6155 = vmatpush1.bf16.msra.mxu0 %v6090
    %6156 = vmatprep.subr.bf16.mxu0 %v6093
    %6157 = vmatpush1.bf16.msra.mxu0 %v6092
    %6158 = vmatprep.subr.bf16.mxu0 %v6095
    %6159 = vmatpush1.bf16.msra.mxu0 %v6094
    %6160 = vmatprep.subr.bf16.mxu0 %v6097
    %6161 = vmatpush1.bf16.msra.mxu0 %v6096
    %6162 = vmatprep.subr.bf16.mxu0 %v6099
    %6163 = vmatpush1.bf16.msra.mxu0 %v6098
    %6164 = vmatprep.subr.bf16.mxu0 %v6101
    %6165 = vmatpush1.bf16.msra.mxu0 %v6100
    %6166 = vmatprep.subr.bf16.mxu0 %v6103
    %6167 = vmatpush1.bf16.msra.mxu0 %v6102
    %6168 = vmatprep.mubr.bf16.mxu0 %v5931
    %6169 = vmatmul.mubr.bf16.gmra.mrb[0].mxu0 %v5930
    %v6170 = vpop.f32.mrb[0].mxu0
    %v6171 = vadd.f32 %v5969, %v6170
    %v6172 = vpop.f32.mrb[0].mxu0
    %v6173 = vadd.f32 %v5973, %v6172
    %v6174 = vpop.f32.mrb[0].mxu0
    %v6175 = vpop.f32.mrb[0].mxu0
    %6176 = vdwg.mxu0
    %v6177 = vmax.f32 %v6171, 0.0
    %v6178 = vmax.f32 %v6173, 0.0
    %v6179 = vpack.c.bf16 %v6177, %v6177
    %v6180 = vpack.c.bf16 %v6178, %v6178
    %v6181 = vld [vmem:[#allocation11 + $0x100] sm:$0xf]
    %v6182 = vld [vmem:[#allocation11 + $0x108] sm:$0xf]
    %v6183 = vld [vmem:[#allocation11 + $0x110] sm:$0xf]
    %v6184 = vld [vmem:[#allocation11 + $0x118] sm:$0xf]
    %v6185 = vld [vmem:[#allocation11 + $0x120] sm:$0xf]
    %v6186 = vld [vmem:[#allocation11 + $0x128] sm:$0xf]
    %v6187 = vld [vmem:[#allocation11 + $0x130] sm:$0xf]
    %v6188 = vld [vmem:[#allocation11 + $0x138] sm:$0xf]
    %v6189 = vld [vmem:[#allocation11 + $0x140] sm:$0xf]
    %v6190 = vld [vmem:[#allocation11 + $0x148] sm:$0xf]
    %v6191 = vld [vmem:[#allocation11 + $0x150] sm:$0xf]
    %v6192 = vld [vmem:[#allocation11 + $0x158] sm:$0xf]
    %v6193 = vld [vmem:[#allocation11 + $0x160] sm:$0xf]
    %v6194 = vld [vmem:[#allocation11 + $0x168] sm:$0xf]
    %v6195 = vld [vmem:[#allocation11 + $0x170] sm:$0xf]
    %v6196 = vld [vmem:[#allocation11 + $0x178] sm:$0xf]
    %v6197 = vld [vmem:[#allocation11 + $0x180] sm:$0xf]
    %v6198 = vld [vmem:[#allocation11 + $0x188] sm:$0xf]
    %v6199 = vld [vmem:[#allocation11 + $0x190] sm:$0xf]
    %v6200 = vld [vmem:[#allocation11 + $0x198] sm:$0xf]
    %v6201 = vld [vmem:[#allocation11 + $0x1a0] sm:$0xf]
    %v6202 = vld [vmem:[#allocation11 + $0x1a8] sm:$0xf]
    %v6203 = vld [vmem:[#allocation11 + $0x1b0] sm:$0xf]
    %v6204 = vld [vmem:[#allocation11 + $0x1b8] sm:$0xf]
    %v6205 = vld [vmem:[#allocation11 + $0x1c0] sm:$0xf]
    %v6206 = vld [vmem:[#allocation11 + $0x1c8] sm:$0xf]
    %v6207 = vld [vmem:[#allocation11 + $0x1d0] sm:$0xf]
    %v6208 = vld [vmem:[#allocation11 + $0x1d8] sm:$0xf]
    %v6209 = vld [vmem:[#allocation11 + $0x1e0] sm:$0xf]
    %v6210 = vld [vmem:[#allocation11 + $0x1e8] sm:$0xf]
    %v6211 = vld [vmem:[#allocation11 + $0x1f0] sm:$0xf]
    %v6212 = vld [vmem:[#allocation11 + $0x1f8] sm:$0xf]
    %v6213 = vld [vmem:[%s6 + $0x1] sm:$0x1]
    %v6214 = vlaneseq
    %v6215 = vshrl.u32 %v6214, 7
    %v6216 = vsub.s32 0, %v6215
    %v6217 = vrot.slane %v6213, %v6216
    %v6250 = vunpack.c.l.b16 %v6181
    %v6251 = vunpack.c.l.b16 %v6182
    %v6252 = vunpack.c.l.b16 %v6183
    %v6253 = vunpack.c.l.b16 %v6184
    %v6254 = vunpack.c.l.b16 %v6185
    %v6255 = vunpack.c.l.b16 %v6186
    %v6256 = vunpack.c.l.b16 %v6187
    %v6257 = vunpack.c.l.b16 %v6188
    %v6258 = vunpack.c.l.b16 %v6189
    %v6259 = vunpack.c.l.b16 %v6190
    %v6260 = vunpack.c.l.b16 %v6191
    %v6261 = vunpack.c.l.b16 %v6192
    %v6262 = vunpack.c.l.b16 %v6193
    %v6263 = vunpack.c.l.b16 %v6194
    %v6264 = vunpack.c.l.b16 %v6195
    %v6265 = vunpack.c.l.b16 %v6196
    %v6266 = vunpack.c.l.b16 %v6197
    %v6267 = vunpack.c.l.b16 %v6198
    %v6268 = vunpack.c.l.b16 %v6199
    %v6269 = vunpack.c.l.b16 %v6200
    %v6270 = vunpack.c.l.b16 %v6201
    %v6271 = vunpack.c.l.b16 %v6202
    %v6272 = vunpack.c.l.b16 %v6203
    %v6273 = vunpack.c.l.b16 %v6204
    %v6274 = vunpack.c.l.b16 %v6205
    %v6275 = vunpack.c.l.b16 %v6206
    %v6276 = vunpack.c.l.b16 %v6207
    %v6277 = vunpack.c.l.b16 %v6208
    %v6278 = vunpack.c.l.b16 %v6209
    %v6279 = vunpack.c.l.b16 %v6210
    %v6280 = vunpack.c.l.b16 %v6211
    %v6281 = vunpack.c.l.b16 %v6212
    %v6282 = vpack.c.b16 %v6251, %v6250
    %v6283 = vpack.c.b16 %v6253, %v6252
    %v6284 = vpack.c.b16 %v6255, %v6254
    %v6285 = vpack.c.b16 %v6257, %v6256
    %v6286 = vpack.c.b16 %v6259, %v6258
    %v6287 = vpack.c.b16 %v6261, %v6260
    %v6288 = vpack.c.b16 %v6263, %v6262
    %v6289 = vpack.c.b16 %v6265, %v6264
    %v6290 = vpack.c.b16 %v6267, %v6266
    %v6291 = vpack.c.b16 %v6269, %v6268
    %v6292 = vpack.c.b16 %v6271, %v6270
    %v6293 = vpack.c.b16 %v6273, %v6272
    %v6294 = vpack.c.b16 %v6275, %v6274
    %v6295 = vpack.c.b16 %v6277, %v6276
    %v6296 = vpack.c.b16 %v6279, %v6278
    %v6297 = vpack.c.b16 %v6281, %v6280
    %6314 = vmatprep.subr.bf16.mxu0 0
    %6315 = vmatpush1.bf16.msra.mxu0 %v6282
    %6316 = vmatprep.subr.bf16.mxu0 0
    %6317 = vmatpush1.bf16.msra.mxu0 %v6283
    %6318 = vmatprep.subr.bf16.mxu0 0
    %6319 = vmatpush1.bf16.msra.mxu0 %v6284
    %6320 = vmatprep.subr.bf16.mxu0 0
    %6321 = vmatpush1.bf16.msra.mxu0 %v6285
    %6322 = vmatprep.subr.bf16.mxu0 0
    %6323 = vmatpush1.bf16.msra.mxu0 %v6286
    %6324 = vmatprep.subr.bf16.mxu0 0
    %6325 = vmatpush1.bf16.msra.mxu0 %v6287
    %6326 = vmatprep.subr.bf16.mxu0 0
    %6327 = vmatpush1.bf16.msra.mxu0 %v6288
    %6328 = vmatprep.subr.bf16.mxu0 0
    %6329 = vmatpush1.bf16.msra.mxu0 %v6289
    %6330 = vmatprep.subr.bf16.mxu0 0
    %6331 = vmatpush1.bf16.msra.mxu0 %v6290
    %6332 = vmatprep.subr.bf16.mxu0 0
    %6333 = vmatpush1.bf16.msra.mxu0 %v6291
    %6334 = vmatprep.subr.bf16.mxu0 0
    %6335 = vmatpush1.bf16.msra.mxu0 %v6292
    %6336 = vmatprep.subr.bf16.mxu0 0
    %6337 = vmatpush1.bf16.msra.mxu0 %v6293
    %6338 = vmatprep.subr.bf16.mxu0 0
    %6339 = vmatpush1.bf16.msra.mxu0 %v6294
    %6340 = vmatprep.subr.bf16.mxu0 0
    %6341 = vmatpush1.bf16.msra.mxu0 %v6295
    %6342 = vmatprep.subr.bf16.mxu0 0
    %6343 = vmatpush1.bf16.msra.mxu0 %v6296
    %6344 = vmatprep.subr.bf16.mxu0 0
    %6345 = vmatpush1.bf16.msra.mxu0 %v6297
    %6346 = vmatprep.mubr.bf16.mxu0 %v6180
    %6347 = vmatmul.mubr.bf16.gmra.mrb[0].mxu0 %v6179
    %v6348 = vpop.f32.mrb[0].mxu0
    %v6349 = vadd.f32 %v6217, %v6348
    %v6350 = vpop.f32.mrb[0].mxu0
    %v6351 = vpop.f32.mrb[0].mxu0
    %v6352 = vpop.f32.mrb[0].mxu0
    %6353 = vdwg.mxu0
    %vm6354 = vcmask 15360
    %v6355 = vsel %vm6354, %v6349, -inf
    %6356 = vmax.xlane.f32.xlu0 %v6355
    %v6357 = vpop.xlane.xlu0 %6356
    %v6358 = vsub.f32 %v6349, %v6357
    %v6359 = vmul.f32 %v6358, 1.442695
    %v6360 = vpow.pop %v6359
    %v6361 = vsel %vm6354, %v6360, 0.0
    %6362 = vadd.xlane.f32.xlu0 %v6361
    %v6363 = vpop.xlane.xlu0 %6362
    %v6364 = vrcp.pop %v6363
    %v6365 = vmul.f32 %v6360, %v6364
    %6366 = vst.msk [vmem:[%s7] sm:$0xff] %vm6354, %v6365
    // Predicated region
    $region54: #{tpu_custom_call.1} parent=1 // pred_check
      _
    $region55: #{tpu_custom_call.1} parent=1 // pred_check_branch
      %6368 = sbr.rel (0) target = $region57
    $region56: #{tpu_custom_call.1} parent=1 // pred_region
      _
    $region57: #{tpu_custom_call.1} parent=1 // pred_fallthru
      _
    // Predicated region
    $region58: #{tpu_custom_call.1} parent=1 // pred_check
      _
    $region59: #{tpu_custom_call.1} parent=1 // pred_check_branch
      %6370 = sbr.rel (0) target = $region61
    $region60: #{tpu_custom_call.1} parent=1 // pred_region
      _
    $region61: #{tpu_custom_call.1} parent=1 // pred_fallthru
      _
    %6371 = vsyncpa [#allocation4], 1
    %6372 = vsyncpa [#allocation6], 1
    %6373 = vsyncpa [#allocation9], 1
    %6374 = vsyncpa [#allocation12], 1

</llo_original>
